<compile_context>
chip_gen: v7x
topology: tpu7x:2x2x1
jax: 0.10.0
libtpu: 0.0.40
codegen_flags: <defaults>
</compile_context>

<pallas_src>
import functools
import math

import jax
import jax.numpy as jnp
from jax.experimental import pallas as pl
from jax.experimental.pallas import tpu as pltpu


def _round_up(x, m):
    return (x + m - 1) // m * m


def _vmem_limit_bytes():
    # Never request the whole physical VMEM (64 MiB on v7x): leave ~25% headroom for the
    # pipeline's second buffers and Mosaic's internal scratch.
    try:
        cap = int(pltpu.get_tpu_info().vmem_capacity_bytes)
    except Exception:
        cap = 64 * 1024 * 1024
    return min(cap * 3 // 4, 96 * 1024 * 1024)


# --------------------------- kernel A: fused QKV projection ---------------------------

def _qkv_kernel(h_ref, w_ref, qkv_ref):
    qkv_ref[...] = jnp.dot(h_ref[...], w_ref[...],
                           preferred_element_type=jnp.float32).astype(qkv_ref.dtype)


# ------------------ kernel B: flash-style attention + O-proj + residual ----------------

def _attn_kernel(counts_ref, q_ref, k_ref, vaug_ref, mask_ref, cent_ref,
                 vself_ref, hin_ref, wo_ref, bo_ref, h1_ref, acc_ref,
                 *, num_heads, head_dim):
    i = pl.program_id(0)
    kb = pl.program_id(1)
    nkb = pl.num_programs(1)
    H, d = num_heads, head_dim
    dp = d + 1

    @pl.when(kb == 0)
    def _():
        acc_ref[...] = jnp.zeros_like(acc_ref)

    # Block-sparsity: skip all O(tq*tk) score/exp/mask work for tiles with no edges
    # (per-tile counts were scalar-prefetched into SMEM).
    @pl.when(counts_ref[i, kb] > 0)
    def _():
        mask_tile = mask_ref[...] != 0                       # int8 tile -> bool, once per tile
        q = q_ref[...]                                       # [tq, D] bf16 (1/sqrt(d) pre-folded)
        k = k_ref[...]                                       # [tk, D] bf16
        vaug = vaug_ref[...]                                 # [tk, H*(d+1)] bf16, per head [V_h | 1]
        parts = []
        for hd in range(H):
            q_h = q[:, hd * d:(hd + 1) * d]
            k_h = k[:, hd * d:(hd + 1) * d]
            # score[v, u] = q_h[v] . k_h[u]   (bf16 in, f32 accumulate on the MXU)
            s = jax.lax.dot_general(q_h, k_h, (((1,), (1,)), ((), ())),
                                    preferred_element_type=jnp.float32)
            p = jnp.where(mask_tile, jnp.exp(jnp.clip(s, -5.0, 5.0)), 0.0)
            # ones column folded into vaug: one matmul yields [wV | z], no XLU row-sum.
            parts.append(jnp.dot(p.astype(jnp.bfloat16),
                                 vaug[:, hd * dp:(hd + 1) * dp],
                                 preferred_element_type=jnp.float32))
        acc_ref[...] += jnp.concatenate(parts, axis=1)

    @pl.when(kb == nkb - 1)
    def _():
        cent = cent_ref[...]                                 # [tq, 1] f32
        vself = vself_ref[...].astype(jnp.float32)           # [tq, D]  V of the query rows
        acc = acc_ref[...]
        wo = wo_ref[...]
        o = None
        for hd in range(H):
            # self-loop edge added by the module: raw sourcecentrality weight (no exp).
            wv = acc[:, hd * dp:hd * dp + d] + cent * vself[:, hd * d:(hd + 1) * d]
            z = acc[:, hd * dp + d:(hd + 1) * dp] + cent
            head_out = wv * pl.reciprocal(z + 1e-6, approx=True)
            # attn @ Wo == sum_h head_out_h @ Wo[h*d:(h+1)*d, :]  -> lane-dense [tq, D]
            part = jnp.dot(head_out, wo[hd * d:(hd + 1) * d, :],
                           preferred_element_type=jnp.float32)
            o = part if o is None else o + part
        h1_ref[...] = hin_ref[...] + o + bo_ref[...]


# ------------------------ kernel C: BN1-apply + FFN + residual -------------------------

def _ffn_kernel(h1_ref, a1_ref, c1_ref, w1_ref, b1_ref, w2_ref, b2_ref, y_ref):
    t = h1_ref[...] * a1_ref[...] + c1_ref[...]              # BN1 apply (precomputed scale/shift)
    u = jnp.maximum(
        jnp.dot(t, w1_ref[...], preferred_element_type=jnp.float32) + b1_ref[...], 0.0)
    y_ref[...] = t + jnp.dot(u, w2_ref[...],
                             preferred_element_type=jnp.float32) + b2_ref[...]


# --------------------------------- kernel D: BN2-apply ---------------------------------

def _bn_apply_kernel(x_ref, a_ref, c_ref, o_ref):
    o_ref[...] = x_ref[...] * a_ref[...] + c_ref[...]


# -------------------------------------- wrapper ----------------------------------------

@functools.partial(jax.jit, static_argnames=("num_heads", "tq", "tk"))
def graph_transformer_layer(h, mask, centrality, params, *, num_heads, tq=256, tk=512):
    """h: [N, D] f32; mask[v, u] != 0 iff edge u -> v (binary); centrality: [N] f32."""
    N, D = h.shape
    H = num_heads
    d = D // H
    dp = d + 1
    scale = math.sqrt(float(d))
    vmem_limit = _vmem_limit_bytes()

    # ---- tile plan: lane-dense mask tiles; node axis padded so every block is full.
    if N <= 128:
        tq = tk = _round_up(N, 8)                 # single full-dim block
    else:
        tq = max(128, min(int(tq), _round_up(N, 128)))
        tk = max(128, min(int(tk), _round_up(N, 128)))
    Np = _round_up(N, math.lcm(tq, tk))
    nqb, nkb = Np // tq, Np // tk
    assert tq % 8 == 0 and tk % 8 == 0

    def pad_rows(x):
        if x.shape[0] == Np:
            return x
        return jnp.pad(x, ((0, Np - x.shape[0]),) + ((0, 0),) * (x.ndim - 1))

    h_p = pad_rows(h.astype(jnp.float32))                      # [Np, D]
    cent_p = pad_rows(centrality.reshape(N, 1).astype(jnp.float32))
    # Adjacency is pure connectivity in the DGL module -> binary int8 stream (4x less HBM
    # traffic than f32; exactness is by construction since we re-binarize here).
    mask_i8 = (mask != 0).astype(jnp.int8)
    mask_p = mask_i8 if Np == N else jnp.pad(mask_i8, ((0, Np - N), (0, Np - N)))
    # Per-tile edge counts for block-sparse tile skipping (scalar-prefetched into SMEM).
    # TODO(synk): for very large graphs flatten / shard this table to stay inside SMEM.
    counts = mask_p.astype(jnp.int32).reshape(nqb, tq, nkb, tk).sum(axis=(1, 3))

    # One-time parameter prep (XLA): stack Q|K|V, fold 1/sqrt(d) into the Q columns.
    def per_head_to_flat(w):                                   # [H, D, d] -> [D, H*d]
        return jnp.transpose(w, (1, 0, 2)).reshape(D, H * d)

    wqkv = jnp.concatenate(
        [per_head_to_flat(params["Wq"]) / scale,
         per_head_to_flat(params["Wk"]),
         per_head_to_flat(params["Wv"])], axis=1).astype(jnp.float32)   # [D, 3D]

    # ---------------- kernel A: fused QKV projection (weights resident) ----------------
    qkv = pl.pallas_call(
        _qkv_kernel,
        out_shape=jax.ShapeDtypeStruct((Np, 3 * D), jnp.bfloat16),
        grid_spec=pltpu.PrefetchScalarGridSpec(
            num_scalar_prefetch=0, grid=(Np // tq,),
            in_specs=[pl.BlockSpec((tq, D), lambda i: (i, 0)),
                      pl.BlockSpec((D, 3 * D), lambda i: (0, 0))],
            out_specs=pl.BlockSpec((tq, 3 * D), lambda i: (i, 0))),
        compiler_params=pltpu.CompilerParams(
            dimension_semantics=("parallel",), vmem_limit_bytes=vmem_limit),
    )(h_p, wqkv)

    q = qkv[:, :D]                    # bf16, 1/sqrt(d) already folded
    k = qkv[:, D:2 * D]
    v = qkv[:, 2 * D:]
    # per-head [V_h | 1]: score @ vaug_h gives [wV_h | z_h] in a single MXU matmul
    vaug = jnp.concatenate(
        [v.reshape(Np, H, d), jnp.ones((Np, H, 1), jnp.bfloat16)], axis=-1
    ).reshape(Np, H * dp)

    # -------- kernel B: flash-style attention + O-projection + residual #1 -------------
    attn_kernel = functools.partial(_attn_kernel, num_heads=H, head_dim=d)
    h1 = pl.pallas_call(
        attn_kernel,
        out_shape=jax.ShapeDtypeStruct((Np, D), jnp.float32),
        grid_spec=pltpu.PrefetchScalarGridSpec(
            num_scalar_prefetch=1,                           # per-tile edge counts -> SMEM
            grid=(nqb, nkb),
            in_specs=[
                pl.BlockSpec((tq, D), lambda i, kb, c: (i, 0)),        # q (query block)
                pl.BlockSpec((tk, D), lambda i, kb, c: (kb, 0)),       # k (key block)
                pl.BlockSpec((tk, H * dp), lambda i, kb, c: (kb, 0)),  # [V | 1] (key block)
                pl.BlockSpec((tq, tk), lambda i, kb, c: (i, kb)),      # int8 mask stream
                pl.BlockSpec((tq, 1), lambda i, kb, c: (i, 0)),        # centrality
                pl.BlockSpec((tq, D), lambda i, kb, c: (i, 0)),        # V of query rows (self loop)
                pl.BlockSpec((tq, D), lambda i, kb, c: (i, 0)),        # residual input h
                pl.BlockSpec((D, D), lambda i, kb, c: (0, 0)),         # Wo (resident)
                pl.BlockSpec((1, D), lambda i, kb, c: (0, 0)),         # bo (resident)
            ],
            out_specs=pl.BlockSpec((tq, D), lambda i, kb, c: (i, 0)),
            scratch_shapes=[pltpu.VMEM((tq, H * dp), jnp.float32)]),   # running [wV | z]
        compiler_params=pltpu.CompilerParams(
            dimension_semantics=("parallel", "arbitrary"),
            vmem_limit_bytes=vmem_limit),
    )(counts, q, k, vaug, mask_p, cent_p, v, h_p,
      params["Wo"].astype(jnp.float32), params["bo"].astype(jnp.float32))

    # -------- BatchNorm #1 statistics (training mode, biased variance) -----------------
    # Global sum / sum-of-squares pass over the [N, D] activations done in XLA between the
    # tiled kernels: the node axis is streamed, nothing [N, D]-sized is ever VMEM-resident.
    h1_v = h1[:N]
    mean1 = jnp.mean(h1_v, axis=0, keepdims=True)
    var1 = jnp.mean(jnp.square(h1_v - mean1), axis=0, keepdims=True)
    a1 = params["gamma1"] * jax.lax.rsqrt(var1 + 1e-5)
    c1 = params["beta1"] - mean1 * a1

    # -------------- kernel C: BN1 apply + FFN (relu) + residual #2 ---------------------
    y = pl.pallas_call(
        _ffn_kernel,
        out_shape=jax.ShapeDtypeStruct((Np, D), jnp.float32),
        grid_spec=pltpu.PrefetchScalarGridSpec(
            num_scalar_prefetch=0, grid=(Np // tq,),
            in_specs=[
                pl.BlockSpec((tq, D), lambda i: (i, 0)),
                pl.BlockSpec((1, D), lambda i: (0, 0)),
                pl.BlockSpec((1, D), lambda i: (0, 0)),
                pl.BlockSpec((D, 2 * D), lambda i: (0, 0)),     # W1 resident
                pl.BlockSpec((1, 2 * D), lambda i: (0, 0)),
                pl.BlockSpec((2 * D, D), lambda i: (0, 0)),     # W2 resident
                pl.BlockSpec((1, D), lambda i: (0, 0)),
            ],
            out_specs=pl.BlockSpec((tq, D), lambda i: (i, 0))),
        compiler_params=pltpu.CompilerParams(
            dimension_semantics=("parallel",), vmem_limit_bytes=vmem_limit),
    )(h1, a1, c1, params["W1"].astype(jnp.float32), params["b1"].astype(jnp.float32),
      params["W2"].astype(jnp.float32), params["b2"].astype(jnp.float32))

    # ---------------- BatchNorm #2 statistics + apply (kernel D) -----------------------
    y_v = y[:N]
    mean2 = jnp.mean(y_v, axis=0, keepdims=True)
    var2 = jnp.mean(jnp.square(y_v - mean2), axis=0, keepdims=True)
    a2 = params["gamma2"] * jax.lax.rsqrt(var2 + 1e-5)
    c2 = params["beta2"] - mean2 * a2

    out = pl.pallas_call(
        _bn_apply_kernel,
        out_shape=jax.ShapeDtypeStruct((Np, D), jnp.float32),
        grid_spec=pltpu.PrefetchScalarGridSpec(
            num_scalar_prefetch=0, grid=(Np // tq,),
            in_specs=[pl.BlockSpec((tq, D), lambda i: (i, 0)),
                      pl.BlockSpec((1, D), lambda i: (0, 0)),
                      pl.BlockSpec((1, D), lambda i: (0, 0))],
            out_specs=pl.BlockSpec((tq, D), lambda i: (i, 0))),
        compiler_params=pltpu.CompilerParams(
            dimension_semantics=("parallel",), vmem_limit_bytes=vmem_limit),
    )(y, a2, c2)

    return out[:N]


# ------------------------------- pure-JAX reference ------------------------------------

def reference(h, mask, centrality, params, *, num_heads):
    N, D = h.shape
    d = D // num_heads
    cent = centrality.reshape(N, 1)
    outs = []
    for hd in range(num_heads):
        q = h @ params["Wq"][hd]
        k = h @ params["Wk"][hd]
        v = h @ params["Wv"][hd]
        s = jnp.exp(jnp.clip((q @ k.T) / math.sqrt(d), -5.0, 5.0)) * mask
        wv = s @ v + cent * v
        z = s.sum(-1, keepdims=True) + cent
        outs.append(wv / (z + 1e-6))
    attn = jnp.stack(outs, 1).reshape(N, D)

    def bn(x, g, b):
        m = x.mean(0, keepdims=True)
        va = ((x - m) ** 2).mean(0, keepdims=True)
        return (x - m) / jnp.sqrt(va + 1e-5) * g + b

    x = h + (attn @ params["Wo"] + params["bo"])
    x = bn(x, params["gamma1"], params["beta1"])
    x2 = x
    t = jnp.maximum(x @ params["W1"] + params["b1"], 0.0)
    t = t @ params["W2"] + params["b2"]
    x = bn(x2 + t, params["gamma2"], params["beta2"])
    return x


# ---------------------------------------- main -----------------------------------------

if __name__ == "__main__":
    N = 256           # nodes -> a 2x2 grid of 128x128 tiles (exercises the pipeline)
    D = 64            # in_dim == out_dim (residual requires equality)
    H = 8             # num_heads
    d = D // H

    key = jax.random.PRNGKey(0)
    ks = jax.random.split(key, 10)

    h = jax.random.normal(ks[0], (N, D), dtype=jnp.float32)
    # random directed graph: mask[v, u] = 1 iff edge u -> v exists
    mask = (jax.random.uniform(ks[1], (N, N)) < 0.3).astype(jnp.float32)
    # knock out one whole 128x128 tile so the block-sparsity skip path is exercised
    mask = mask.at[:128, 128:].set(0.0)
    centrality = jax.random.uniform(ks[2], (N,), dtype=jnp.float32) + 0.1

    def init(k_, shape, fan_in):
        return jax.random.normal(k_, shape, dtype=jnp.float32) / math.sqrt(fan_in)

    params = {
        # Q/K/V linears, use_bias=False, per head: [H, D, d]
        "Wq": init(ks[3], (H, D, d), D),
        "Wk": init(ks[4], (H, D, d), D),
        "Wv": init(ks[5], (H, D, d), D),
        # O projection (with bias)
        "Wo": init(ks[6], (D, D), D),
        "bo": jnp.zeros((1, D), jnp.float32) + 0.01,
        # BatchNorm1d #1 affine params
        "gamma1": jnp.ones((1, D), jnp.float32),
        "beta1": jnp.zeros((1, D), jnp.float32),
        # FFN
        "W1": init(ks[7], (D, 2 * D), D),
        "b1": jnp.zeros((1, 2 * D), jnp.float32) + 0.01,
        "W2": init(ks[8], (2 * D, D), 2 * D),
        "b2": jnp.zeros((1, D), jnp.float32) + 0.01,
        # BatchNorm1d #2 affine params
        "gamma2": jnp.ones((1, D), jnp.float32),
        "beta2": jnp.zeros((1, D), jnp.float32),
    }

    out = graph_transformer_layer(h, mask, centrality, params,
                                  num_heads=H, tq=128, tk=128)
    out = jax.block_until_ready(out)

    ref = reference(h, mask, centrality, params, num_heads=H)
    assert out.shape == (N, D)
    assert bool(jnp.all(jnp.isfinite(out)))
    # bf16 MXU paths (q/k/v + post-exp scores) introduce ~0.5-1% relative error vs the
    # pure-f32 reference, hence the 2e-2 tolerance.
    max_err = float(jnp.max(jnp.abs(out - ref)))
    assert bool(jnp.allclose(out, ref, atol=2e-2, rtol=2e-2)), (
        f"mismatch vs reference, max abs err = {max_err}")
    print("KERNEL_OK")
</pallas_src>

<mosaic_0001>
module attributes {stable_mosaic.version = 11 : i64} {
  func.func @_qkv_kernel(%arg0: i32, %arg1: memref<128x64xf32, #tpu.memory_space<vmem>>, %arg2: memref<64x192xf32, #tpu.memory_space<vmem>>, %arg3: memref<128x192xbf16, #tpu.memory_space<vmem>>) attributes {dimension_semantics = [#tpu.dimension_semantics<parallel>], iteration_bounds = array<i64: 2>, scalar_prefetch = 0 : i64, scratch_operands = 0 : i64, tpu.core_type = #tpu.core_type<tc>, window_params = [{transform_indices = @transform_0, window_bounds = array<i64: 128, 64>}, {pipeline_mode = #tpu.pipeline_mode<synchronous>, transform_indices = @transform_1, window_bounds = array<i64: 64, 192>}, {transform_indices = @transform_2, window_bounds = array<i64: 128, 192>}]} {
    %c0 = arith.constant 0 : index
    %c0_0 = arith.constant 0 : index
    %0 = vector.load %arg1[%c0, %c0_0] : memref<128x64xf32, #tpu.memory_space<vmem>>, vector<128x64xf32>
    %c0_1 = arith.constant 0 : index
    %c0_2 = arith.constant 0 : index
    %1 = vector.load %arg2[%c0_1, %c0_2] : memref<64x192xf32, #tpu.memory_space<vmem>>, vector<64x192xf32>
    %cst = arith.constant dense<0.000000e+00> : vector<128x192xf32>
    %2 = tpu.matmul %0, %1, %cst {dimension_numbers = #tpu.dot_dimension_numbers<[1], [0], [0], [1], [0, 0, 1, 1], [], []>} : vector<128x64xf32>, vector<64x192xf32>, vector<128x192xf32> -> vector<128x192xf32>
    %3 = arith.truncf %2 : vector<128x192xf32> to vector<128x192xbf16>
    %c0_3 = arith.constant 0 : index
    %c0_4 = arith.constant 0 : index
    %4 = vector.load %arg3[%c0_3, %c0_4] : memref<128x192xbf16, #tpu.memory_space<vmem>>, vector<128x192xbf16>
    tpu.vector_store %arg3[%c0_3, %c0_4], %3 {strides = array<i32>} : memref<128x192xbf16, #tpu.memory_space<vmem>>, vector<128x192xbf16>,
    return
  }
  func.func @transform_0(%arg0: i32) -> (i32, i32) {
    %c0_i32 = arith.constant 0 : i32
    %c0_i32_0 = arith.constant 0 : i32
    return %arg0, %c0_i32 : i32, i32
  }
  func.func @transform_1(%arg0: i32) -> (i32, i32) {
    %c0_i32 = arith.constant 0 : i32
    %c0_i32_0 = arith.constant 0 : i32
    %c0_i32_1 = arith.constant 0 : i32
    return %c0_i32, %c0_i32_0 : i32, i32
  }
  func.func @transform_2(%arg0: i32) -> (i32, i32) {
    %c0_i32 = arith.constant 0 : i32
    %c0_i32_0 = arith.constant 0 : i32
    return %arg0, %c0_i32 : i32, i32
  }
}

module attributes {stable_mosaic.version = 11 : i64} {
  func.func @_attn_kernel(%arg0: i32, %arg1: i32, %arg2: memref<2x2xi32, #tpu.memory_space<smem>>, %arg3: memref<128x64xbf16, #tpu.memory_space<vmem>>, %arg4: memref<128x64xbf16, #tpu.memory_space<vmem>>, %arg5: memref<128x72xbf16, #tpu.memory_space<vmem>>, %arg6: memref<128x128xi8, #tpu.memory_space<vmem>>, %arg7: memref<128x1xf32, #tpu.memory_space<vmem>>, %arg8: memref<128x64xbf16, #tpu.memory_space<vmem>>, %arg9: memref<128x64xf32, #tpu.memory_space<vmem>>, %arg10: memref<64x64xf32, #tpu.memory_space<vmem>>, %arg11: memref<1x64xf32, #tpu.memory_space<vmem>>, %arg12: memref<128x64xf32, #tpu.memory_space<vmem>>, %arg13: memref<128x72xf32, #tpu.memory_space<vmem>>) attributes {dimension_semantics = [#tpu.dimension_semantics<parallel>, #tpu.dimension_semantics<arbitrary>], iteration_bounds = array<i64: 2, 2>, scalar_prefetch = 1 : i64, scratch_operands = 1 : i64, tpu.core_type = #tpu.core_type<tc>, window_params = [{transform_indices = @transform_0, window_bounds = array<i64: 128, 64>}, {transform_indices = @transform_1, window_bounds = array<i64: 128, 64>}, {transform_indices = @transform_2, window_bounds = array<i64: 128, 72>}, {transform_indices = @transform_3, window_bounds = array<i64: 128, 128>}, {transform_indices = @transform_4, window_bounds = array<i64: 128, 1>}, {transform_indices = @transform_5, window_bounds = array<i64: 128, 64>}, {transform_indices = @transform_6, window_bounds = array<i64: 128, 64>}, {pipeline_mode = #tpu.pipeline_mode<synchronous>, transform_indices = @transform_7, window_bounds = array<i64: 64, 64>}, {pipeline_mode = #tpu.pipeline_mode<synchronous>, transform_indices = @transform_8, window_bounds = array<i64: 1, 64>}, {transform_indices = @transform_9, window_bounds = array<i64: 128, 64>}]} {
    %c0_i32 = arith.constant 0 : i32
    %0 = arith.cmpi eq, %arg1, %c0_i32 : i32
    %1 = arith.extui %0 : i1 to i32
    %c0_i32_0 = arith.constant 0 : i32
    %2 = arith.cmpi ne, %1, %c0_i32_0 : i32
    scf.if %2 {
      %cst = arith.constant 0.000000e+00 : f32
      %12 = vector.broadcast %cst : f32 to vector<128x72xf32>
      %c0 = arith.constant 0 : index
      %c0_4 = arith.constant 0 : index
      %13 = vector.load %arg13[%c0, %c0_4] : memref<128x72xf32, #tpu.memory_space<vmem>>, vector<128x72xf32>
      tpu.vector_store %arg13[%c0, %c0_4], %12 {strides = array<i32>} : memref<128x72xf32, #tpu.memory_space<vmem>>, vector<128x72xf32>,
    } else {
    }
    %3 = arith.index_cast %arg0 : i32 to index
    %4 = arith.index_cast %arg1 : i32 to index
    %5 = memref.load %arg2[%3, %4] : memref<2x2xi32, #tpu.memory_space<smem>>
    %c0_i32_1 = arith.constant 0 : i32
    %6 = arith.cmpi sgt, %5, %c0_i32_1 : i32
    %7 = arith.extui %6 : i1 to i32
    %c0_i32_2 = arith.constant 0 : i32
    %8 = arith.cmpi ne, %7, %c0_i32_2 : i32
    scf.if %8 {
      %c0 = arith.constant 0 : index
      %c0_4 = arith.constant 0 : index
      %12 = vector.load %arg6[%c0, %c0_4] : memref<128x128xi8, #tpu.memory_space<vmem>>, vector<128x128xi8>
      %c0_i8 = arith.constant 0 : i8
      %13 = vector.broadcast %c0_i8 : i8 to vector<128x128xi8>
      %14 = arith.cmpi ne, %12, %13 : vector<128x128xi8>
      %c0_5 = arith.constant 0 : index
      %c0_6 = arith.constant 0 : index
      %15 = vector.load %arg3[%c0_5, %c0_6] : memref<128x64xbf16, #tpu.memory_space<vmem>>, vector<128x64xbf16>
      %c0_7 = arith.constant 0 : index
      %c0_8 = arith.constant 0 : index
      %16 = vector.load %arg4[%c0_7, %c0_8] : memref<128x64xbf16, #tpu.memory_space<vmem>>, vector<128x64xbf16>
      %c0_9 = arith.constant 0 : index
      %c0_10 = arith.constant 0 : index
      %17 = vector.load %arg5[%c0_9, %c0_10] : memref<128x72xbf16, #tpu.memory_space<vmem>>, vector<128x72xbf16>
      %18 = vector.extract_strided_slice %15 {offsets = [0, 0], sizes = [128, 8], strides = [1, 1]} : vector<128x64xbf16> to vector<128x8xbf16>
      %19 = vector.extract_strided_slice %16 {offsets = [0, 0], sizes = [128, 8], strides = [1, 1]} : vector<128x64xbf16> to vector<128x8xbf16>
      %cst = arith.constant dense<0.000000e+00> : vector<128x128xf32>
      %20 = tpu.matmul %18, %19, %cst {dimension_numbers = #tpu.dot_dimension_numbers<[1], [1], [0], [0], [0, 0, 1, 0], [], []>} : vector<128x8xbf16>, vector<128x8xbf16>, vector<128x128xf32> -> vector<128x128xf32>
      %cst_11 = arith.constant -5.000000e+00 : f32
      %cst_12 = arith.constant 5.000000e+00 : f32
      %21 = vector.broadcast %cst_11 : f32 to vector<128x128xf32>
      %22 = arith.maximumf %21, %20 : vector<128x128xf32>
      %23 = vector.broadcast %cst_12 : f32 to vector<128x128xf32>
      %24 = arith.minimumf %23, %22 : vector<128x128xf32>
      %25 = math.exp %24 : vector<128x128xf32>
      %cst_13 = arith.constant 0.000000e+00 : f32
      %26 = vector.broadcast %cst_13 : f32 to vector<128x128xf32>
      %27 = arith.select %14, %25, %26 : vector<128x128xi1>, vector<128x128xf32>
      %28 = arith.truncf %27 : vector<128x128xf32> to vector<128x128xbf16>
      %29 = vector.extract_strided_slice %17 {offsets = [0, 0], sizes = [128, 9], strides = [1, 1]} : vector<128x72xbf16> to vector<128x9xbf16>
      %cst_14 = arith.constant dense<0.000000e+00> : vector<128x9xf32>
      %30 = tpu.matmul %28, %29, %cst_14 {dimension_numbers = #tpu.dot_dimension_numbers<[1], [0], [0], [1], [0, 0, 1, 1], [], []>} : vector<128x128xbf16>, vector<128x9xbf16>, vector<128x9xf32> -> vector<128x9xf32>
      %31 = vector.extract_strided_slice %15 {offsets = [0, 8], sizes = [128, 8], strides = [1, 1]} : vector<128x64xbf16> to vector<128x8xbf16>
      %32 = vector.extract_strided_slice %16 {offsets = [0, 8], sizes = [128, 8], strides = [1, 1]} : vector<128x64xbf16> to vector<128x8xbf16>
      %cst_15 = arith.constant dense<0.000000e+00> : vector<128x128xf32>
      %33 = tpu.matmul %31, %32, %cst_15 {dimension_numbers = #tpu.dot_dimension_numbers<[1], [1], [0], [0], [0, 0, 1, 0], [], []>} : vector<128x8xbf16>, vector<128x8xbf16>, vector<128x128xf32> -> vector<128x128xf32>
      %cst_16 = arith.constant -5.000000e+00 : f32
      %cst_17 = arith.constant 5.000000e+00 : f32
      %34 = vector.broadcast %cst_16 : f32 to vector<128x128xf32>
      %35 = arith.maximumf %34, %33 : vector<128x128xf32>
      %36 = vector.broadcast %cst_17 : f32 to vector<128x128xf32>
      %37 = arith.minimumf %36, %35 : vector<128x128xf32>
      %38 = math.exp %37 : vector<128x128xf32>
      %cst_18 = arith.constant 0.000000e+00 : f32
      %39 = vector.broadcast %cst_18 : f32 to vector<128x128xf32>
      %40 = arith.select %14, %38, %39 : vector<128x128xi1>, vector<128x128xf32>
      %41 = arith.truncf %40 : vector<128x128xf32> to vector<128x128xbf16>
      %42 = vector.extract_strided_slice %17 {offsets = [0, 9], sizes = [128, 9], strides = [1, 1]} : vector<128x72xbf16> to vector<128x9xbf16>
      %cst_19 = arith.constant dense<0.000000e+00> : vector<128x9xf32>
      %43 = tpu.matmul %41, %42, %cst_19 {dimension_numbers = #tpu.dot_dimension_numbers<[1], [0], [0], [1], [0, 0, 1, 1], [], []>} : vector<128x128xbf16>, vector<128x9xbf16>, vector<128x9xf32> -> vector<128x9xf32>
      %44 = vector.extract_strided_slice %15 {offsets = [0, 16], sizes = [128, 8], strides = [1, 1]} : vector<128x64xbf16> to vector<128x8xbf16>
      %45 = vector.extract_strided_slice %16 {offsets = [0, 16], sizes = [128, 8], strides = [1, 1]} : vector<128x64xbf16> to vector<128x8xbf16>
      %cst_20 = arith.constant dense<0.000000e+00> : vector<128x128xf32>
      %46 = tpu.matmul %44, %45, %cst_20 {dimension_numbers = #tpu.dot_dimension_numbers<[1], [1], [0], [0], [0, 0, 1, 0], [], []>} : vector<128x8xbf16>, vector<128x8xbf16>, vector<128x128xf32> -> vector<128x128xf32>
      %cst_21 = arith.constant -5.000000e+00 : f32
      %cst_22 = arith.constant 5.000000e+00 : f32
      %47 = vector.broadcast %cst_21 : f32 to vector<128x128xf32>
      %48 = arith.maximumf %47, %46 : vector<128x128xf32>
      %49 = vector.broadcast %cst_22 : f32 to vector<128x128xf32>
      %50 = arith.minimumf %49, %48 : vector<128x128xf32>
      %51 = math.exp %50 : vector<128x128xf32>
      %cst_23 = arith.constant 0.000000e+00 : f32
      %52 = vector.broadcast %cst_23 : f32 to vector<128x128xf32>
      %53 = arith.select %14, %51, %52 : vector<128x128xi1>, vector<128x128xf32>
      %54 = arith.truncf %53 : vector<128x128xf32> to vector<128x128xbf16>
      %55 = vector.extract_strided_slice %17 {offsets = [0, 18], sizes = [128, 9], strides = [1, 1]} : vector<128x72xbf16> to vector<128x9xbf16>
      %cst_24 = arith.constant dense<0.000000e+00> : vector<128x9xf32>
      %56 = tpu.matmul %54, %55, %cst_24 {dimension_numbers = #tpu.dot_dimension_numbers<[1], [0], [0], [1], [0, 0, 1, 1], [], []>} : vector<128x128xbf16>, vector<128x9xbf16>, vector<128x9xf32> -> vector<128x9xf32>
      %57 = vector.extract_strided_slice %15 {offsets = [0, 24], sizes = [128, 8], strides = [1, 1]} : vector<128x64xbf16> to vector<128x8xbf16>
      %58 = vector.extract_strided_slice %16 {offsets = [0, 24], sizes = [128, 8], strides = [1, 1]} : vector<128x64xbf16> to vector<128x8xbf16>
      %cst_25 = arith.constant dense<0.000000e+00> : vector<128x128xf32>
      %59 = tpu.matmul %57, %58, %cst_25 {dimension_numbers = #tpu.dot_dimension_numbers<[1], [1], [0], [0], [0, 0, 1, 0], [], []>} : vector<128x8xbf16>, vector<128x8xbf16>, vector<128x128xf32> -> vector<128x128xf32>
      %cst_26 = arith.constant -5.000000e+00 : f32
      %cst_27 = arith.constant 5.000000e+00 : f32
      %60 = vector.broadcast %cst_26 : f32 to vector<128x128xf32>
      %61 = arith.maximumf %60, %59 : vector<128x128xf32>
      %62 = vector.broadcast %cst_27 : f32 to vector<128x128xf32>
      %63 = arith.minimumf %62, %61 : vector<128x128xf32>
      %64 = math.exp %63 : vector<128x128xf32>
      %cst_28 = arith.constant 0.000000e+00 : f32
      %65 = vector.broadcast %cst_28 : f32 to vector<128x128xf32>
      %66 = arith.select %14, %64, %65 : vector<128x128xi1>, vector<128x128xf32>
      %67 = arith.truncf %66 : vector<128x128xf32> to vector<128x128xbf16>
      %68 = vector.extract_strided_slice %17 {offsets = [0, 27], sizes = [128, 9], strides = [1, 1]} : vector<128x72xbf16> to vector<128x9xbf16>
      %cst_29 = arith.constant dense<0.000000e+00> : vector<128x9xf32>
      %69 = tpu.matmul %67, %68, %cst_29 {dimension_numbers = #tpu.dot_dimension_numbers<[1], [0], [0], [1], [0, 0, 1, 1], [], []>} : vector<128x128xbf16>, vector<128x9xbf16>, vector<128x9xf32> -> vector<128x9xf32>
      %70 = vector.extract_strided_slice %15 {offsets = [0, 32], sizes = [128, 8], strides = [1, 1]} : vector<128x64xbf16> to vector<128x8xbf16>
      %71 = vector.extract_strided_slice %16 {offsets = [0, 32], sizes = [128, 8], strides = [1, 1]} : vector<128x64xbf16> to vector<128x8xbf16>
      %cst_30 = arith.constant dense<0.000000e+00> : vector<128x128xf32>
      %72 = tpu.matmul %70, %71, %cst_30 {dimension_numbers = #tpu.dot_dimension_numbers<[1], [1], [0], [0], [0, 0, 1, 0], [], []>} : vector<128x8xbf16>, vector<128x8xbf16>, vector<128x128xf32> -> vector<128x128xf32>
      %cst_31 = arith.constant -5.000000e+00 : f32
      %cst_32 = arith.constant 5.000000e+00 : f32
      %73 = vector.broadcast %cst_31 : f32 to vector<128x128xf32>
      %74 = arith.maximumf %73, %72 : vector<128x128xf32>
      %75 = vector.broadcast %cst_32 : f32 to vector<128x128xf32>
      %76 = arith.minimumf %75, %74 : vector<128x128xf32>
      %77 = math.exp %76 : vector<128x128xf32>
      %cst_33 = arith.constant 0.000000e+00 : f32
      %78 = vector.broadcast %cst_33 : f32 to vector<128x128xf32>
      %79 = arith.select %14, %77, %78 : vector<128x128xi1>, vector<128x128xf32>
      %80 = arith.truncf %79 : vector<128x128xf32> to vector<128x128xbf16>
      %81 = vector.extract_strided_slice %17 {offsets = [0, 36], sizes = [128, 9], strides = [1, 1]} : vector<128x72xbf16> to vector<128x9xbf16>
      %cst_34 = arith.constant dense<0.000000e+00> : vector<128x9xf32>
      %82 = tpu.matmul %80, %81, %cst_34 {dimension_numbers = #tpu.dot_dimension_numbers<[1], [0], [0], [1], [0, 0, 1, 1], [], []>} : vector<128x128xbf16>, vector<128x9xbf16>, vector<128x9xf32> -> vector<128x9xf32>
      %83 = vector.extract_strided_slice %15 {offsets = [0, 40], sizes = [128, 8], strides = [1, 1]} : vector<128x64xbf16> to vector<128x8xbf16>
      %84 = vector.extract_strided_slice %16 {offsets = [0, 40], sizes = [128, 8], strides = [1, 1]} : vector<128x64xbf16> to vector<128x8xbf16>
      %cst_35 = arith.constant dense<0.000000e+00> : vector<128x128xf32>
      %85 = tpu.matmul %83, %84, %cst_35 {dimension_numbers = #tpu.dot_dimension_numbers<[1], [1], [0], [0], [0, 0, 1, 0], [], []>} : vector<128x8xbf16>, vector<128x8xbf16>, vector<128x128xf32> -> vector<128x128xf32>
      %cst_36 = arith.constant -5.000000e+00 : f32
      %cst_37 = arith.constant 5.000000e+00 : f32
      %86 = vector.broadcast %cst_36 : f32 to vector<128x128xf32>
      %87 = arith.maximumf %86, %85 : vector<128x128xf32>
      %88 = vector.broadcast %cst_37 : f32 to vector<128x128xf32>
      %89 = arith.minimumf %88, %87 : vector<128x128xf32>
      %90 = math.exp %89 : vector<128x128xf32>
      %cst_38 = arith.constant 0.000000e+00 : f32
      %91 = vector.broadcast %cst_38 : f32 to vector<128x128xf32>
      %92 = arith.select %14, %90, %91 : vector<128x128xi1>, vector<128x128xf32>
      %93 = arith.truncf %92 : vector<128x128xf32> to vector<128x128xbf16>
      %94 = vector.extract_strided_slice %17 {offsets = [0, 45], sizes = [128, 9], strides = [1, 1]} : vector<128x72xbf16> to vector<128x9xbf16>
      %cst_39 = arith.constant dense<0.000000e+00> : vector<128x9xf32>
      %95 = tpu.matmul %93, %94, %cst_39 {dimension_numbers = #tpu.dot_dimension_numbers<[1], [0], [0], [1], [0, 0, 1, 1], [], []>} : vector<128x128xbf16>, vector<128x9xbf16>, vector<128x9xf32> -> vector<128x9xf32>
      %96 = vector.extract_strided_slice %15 {offsets = [0, 48], sizes = [128, 8], strides = [1, 1]} : vector<128x64xbf16> to vector<128x8xbf16>
      %97 = vector.extract_strided_slice %16 {offsets = [0, 48], sizes = [128, 8], strides = [1, 1]} : vector<128x64xbf16> to vector<128x8xbf16>
      %cst_40 = arith.constant dense<0.000000e+00> : vector<128x128xf32>
      %98 = tpu.matmul %96, %97, %cst_40 {dimension_numbers = #tpu.dot_dimension_numbers<[1], [1], [0], [0], [0, 0, 1, 0], [], []>} : vector<128x8xbf16>, vector<128x8xbf16>, vector<128x128xf32> -> vector<128x128xf32>
      %cst_41 = arith.constant -5.000000e+00 : f32
      %cst_42 = arith.constant 5.000000e+00 : f32
      %99 = vector.broadcast %cst_41 : f32 to vector<128x128xf32>
      %100 = arith.maximumf %99, %98 : vector<128x128xf32>
      %101 = vector.broadcast %cst_42 : f32 to vector<128x128xf32>
      %102 = arith.minimumf %101, %100 : vector<128x128xf32>
      %103 = math.exp %102 : vector<128x128xf32>
      %cst_43 = arith.constant 0.000000e+00 : f32
      %104 = vector.broadcast %cst_43 : f32 to vector<128x128xf32>
      %105 = arith.select %14, %103, %104 : vector<128x128xi1>, vector<128x128xf32>
      %106 = arith.truncf %105 : vector<128x128xf32> to vector<128x128xbf16>
      %107 = vector.extract_strided_slice %17 {offsets = [0, 54], sizes = [128, 9], strides = [1, 1]} : vector<128x72xbf16> to vector<128x9xbf16>
      %cst_44 = arith.constant dense<0.000000e+00> : vector<128x9xf32>
      %108 = tpu.matmul %106, %107, %cst_44 {dimension_numbers = #tpu.dot_dimension_numbers<[1], [0], [0], [1], [0, 0, 1, 1], [], []>} : vector<128x128xbf16>, vector<128x9xbf16>, vector<128x9xf32> -> vector<128x9xf32>
      %109 = vector.extract_strided_slice %15 {offsets = [0, 56], sizes = [128, 8], strides = [1, 1]} : vector<128x64xbf16> to vector<128x8xbf16>
      %110 = vector.extract_strided_slice %16 {offsets = [0, 56], sizes = [128, 8], strides = [1, 1]} : vector<128x64xbf16> to vector<128x8xbf16>
      %cst_45 = arith.constant dense<0.000000e+00> : vector<128x128xf32>
      %111 = tpu.matmul %109, %110, %cst_45 {dimension_numbers = #tpu.dot_dimension_numbers<[1], [1], [0], [0], [0, 0, 1, 0], [], []>} : vector<128x8xbf16>, vector<128x8xbf16>, vector<128x128xf32> -> vector<128x128xf32>
      %cst_46 = arith.constant -5.000000e+00 : f32
      %cst_47 = arith.constant 5.000000e+00 : f32
      %112 = vector.broadcast %cst_46 : f32 to vector<128x128xf32>
      %113 = arith.maximumf %112, %111 : vector<128x128xf32>
      %114 = vector.broadcast %cst_47 : f32 to vector<128x128xf32>
      %115 = arith.minimumf %114, %113 : vector<128x128xf32>
      %116 = math.exp %115 : vector<128x128xf32>
      %cst_48 = arith.constant 0.000000e+00 : f32
      %117 = vector.broadcast %cst_48 : f32 to vector<128x128xf32>
      %118 = arith.select %14, %116, %117 : vector<128x128xi1>, vector<128x128xf32>
      %119 = arith.truncf %118 : vector<128x128xf32> to vector<128x128xbf16>
      %120 = vector.extract_strided_slice %17 {offsets = [0, 63], sizes = [128, 9], strides = [1, 1]} : vector<128x72xbf16> to vector<128x9xbf16>
      %cst_49 = arith.constant dense<0.000000e+00> : vector<128x9xf32>
      %121 = tpu.matmul %119, %120, %cst_49 {dimension_numbers = #tpu.dot_dimension_numbers<[1], [0], [0], [1], [0, 0, 1, 1], [], []>} : vector<128x128xbf16>, vector<128x9xbf16>, vector<128x9xf32> -> vector<128x9xf32>
      %c0_50 = arith.constant 0 : index
      %c0_51 = arith.constant 0 : index
      %122 = vector.load %arg13[%c0_50, %c0_51] : memref<128x72xf32, #tpu.memory_space<vmem>>, vector<128x72xf32>
      %123 = tpu.concatenate %30, %43, %56, %69, %82, %95, %108, %121 in 1 : vector<128x9xf32>, vector<128x9xf32>, vector<128x9xf32>, vector<128x9xf32>, vector<128x9xf32>, vector<128x9xf32>, vector<128x9xf32>, vector<128x9xf32> -> vector<128x72xf32>
      %124 = arith.addf %122, %123 : vector<128x72xf32>
      %c0_52 = arith.constant 0 : index
      %c0_53 = arith.constant 0 : index
      %125 = vector.load %arg13[%c0_52, %c0_53] : memref<128x72xf32, #tpu.memory_space<vmem>>, vector<128x72xf32>
      tpu.vector_store %arg13[%c0_52, %c0_53], %124 {strides = array<i32>} : memref<128x72xf32, #tpu.memory_space<vmem>>, vector<128x72xf32>,
    } else {
    }
    %c1_i32 = arith.constant 1 : i32
    %9 = arith.cmpi eq, %arg1, %c1_i32 : i32
    %10 = arith.extui %9 : i1 to i32
    %c0_i32_3 = arith.constant 0 : i32
    %11 = arith.cmpi ne, %10, %c0_i32_3 : i32
    scf.if %11 {
      %c0 = arith.constant 0 : index
      %c0_4 = arith.constant 0 : index
      %12 = vector.load %arg7[%c0, %c0_4] : memref<128x1xf32, #tpu.memory_space<vmem>>, vector<128x1xf32>
      %c0_5 = arith.constant 0 : index
      %c0_6 = arith.constant 0 : index
      %13 = vector.load %arg8[%c0_5, %c0_6] : memref<128x64xbf16, #tpu.memory_space<vmem>>, vector<128x64xbf16>
      %14 = arith.extf %13 : vector<128x64xbf16> to vector<128x64xf32>
      %c0_7 = arith.constant 0 : index
      %c0_8 = arith.constant 0 : index
      %15 = vector.load %arg13[%c0_7, %c0_8] : memref<128x72xf32, #tpu.memory_space<vmem>>, vector<128x72xf32>
      %c0_9 = arith.constant 0 : index
      %c0_10 = arith.constant 0 : index
      %16 = vector.load %arg10[%c0_9, %c0_10] : memref<64x64xf32, #tpu.memory_space<vmem>>, vector<64x64xf32>
      %17 = vector.extract_strided_slice %15 {offsets = [0, 0], sizes = [128, 8], strides = [1, 1]} : vector<128x72xf32> to vector<128x8xf32>
      %18 = vector.extract_strided_slice %14 {offsets = [0, 0], sizes = [128, 8], strides = [1, 1]} : vector<128x64xf32> to vector<128x8xf32>
      %19 = vector.broadcast %12 : vector<128x1xf32> to vector<128x8xf32>
      %20 = arith.mulf %19, %18 : vector<128x8xf32>
      %21 = arith.addf %17, %20 : vector<128x8xf32>
      %22 = vector.extract_strided_slice %15 {offsets = [0, 8], sizes = [128, 1], strides = [1, 1]} : vector<128x72xf32> to vector<128x1xf32>
      %23 = arith.addf %22, %12 : vector<128x1xf32>
      %cst = arith.constant 9.99999997E-7 : f32
      %24 = vector.broadcast %cst : f32 to vector<128x1xf32>
      %25 = arith.addf %23, %24 : vector<128x1xf32>
      %26 = tpu.reciprocal %25 {approx = true} : vector<128x1xf32> -> vector<128x1xf32>
      %27 = vector.broadcast %26 : vector<128x1xf32> to vector<128x8xf32>
      %28 = arith.mulf %21, %27 : vector<128x8xf32>
      %29 = vector.extract_strided_slice %16 {offsets = [0, 0], sizes = [8, 64], strides = [1, 1]} : vector<64x64xf32> to vector<8x64xf32>
      %cst_11 = arith.constant dense<0.000000e+00> : vector<128x64xf32>
      %30 = tpu.matmul %28, %29, %cst_11 {dimension_numbers = #tpu.dot_dimension_numbers<[1], [0], [0], [1], [0, 0, 1, 1], [], []>} : vector<128x8xf32>, vector<8x64xf32>, vector<128x64xf32> -> vector<128x64xf32>
      %31 = vector.extract_strided_slice %15 {offsets = [0, 9], sizes = [128, 8], strides = [1, 1]} : vector<128x72xf32> to vector<128x8xf32>
      %32 = vector.extract_strided_slice %14 {offsets = [0, 8], sizes = [128, 8], strides = [1, 1]} : vector<128x64xf32> to vector<128x8xf32>
      %33 = vector.broadcast %12 : vector<128x1xf32> to vector<128x8xf32>
      %34 = arith.mulf %33, %32 : vector<128x8xf32>
      %35 = arith.addf %31, %34 : vector<128x8xf32>
      %36 = vector.extract_strided_slice %15 {offsets = [0, 17], sizes = [128, 1], strides = [1, 1]} : vector<128x72xf32> to vector<128x1xf32>
      %37 = arith.addf %36, %12 : vector<128x1xf32>
      %cst_12 = arith.constant 9.99999997E-7 : f32
      %38 = vector.broadcast %cst_12 : f32 to vector<128x1xf32>
      %39 = arith.addf %37, %38 : vector<128x1xf32>
      %40 = tpu.reciprocal %39 {approx = true} : vector<128x1xf32> -> vector<128x1xf32>
      %41 = vector.broadcast %40 : vector<128x1xf32> to vector<128x8xf32>
      %42 = arith.mulf %35, %41 : vector<128x8xf32>
      %43 = vector.extract_strided_slice %16 {offsets = [8, 0], sizes = [8, 64], strides = [1, 1]} : vector<64x64xf32> to vector<8x64xf32>
      %cst_13 = arith.constant dense<0.000000e+00> : vector<128x64xf32>
      %44 = tpu.matmul %42, %43, %cst_13 {dimension_numbers = #tpu.dot_dimension_numbers<[1], [0], [0], [1], [0, 0, 1, 1], [], []>} : vector<128x8xf32>, vector<8x64xf32>, vector<128x64xf32> -> vector<128x64xf32>
      %45 = arith.addf %30, %44 : vector<128x64xf32>
      %46 = vector.extract_strided_slice %15 {offsets = [0, 18], sizes = [128, 8], strides = [1, 1]} : vector<128x72xf32> to vector<128x8xf32>
      %47 = vector.extract_strided_slice %14 {offsets = [0, 16], sizes = [128, 8], strides = [1, 1]} : vector<128x64xf32> to vector<128x8xf32>
      %48 = vector.broadcast %12 : vector<128x1xf32> to vector<128x8xf32>
      %49 = arith.mulf %48, %47 : vector<128x8xf32>
      %50 = arith.addf %46, %49 : vector<128x8xf32>
      %51 = vector.extract_strided_slice %15 {offsets = [0, 26], sizes = [128, 1], strides = [1, 1]} : vector<128x72xf32> to vector<128x1xf32>
      %52 = arith.addf %51, %12 : vector<128x1xf32>
      %cst_14 = arith.constant 9.99999997E-7 : f32
      %53 = vector.broadcast %cst_14 : f32 to vector<128x1xf32>
      %54 = arith.addf %52, %53 : vector<128x1xf32>
      %55 = tpu.reciprocal %54 {approx = true} : vector<128x1xf32> -> vector<128x1xf32>
      %56 = vector.broadcast %55 : vector<128x1xf32> to vector<128x8xf32>
      %57 = arith.mulf %50, %56 : vector<128x8xf32>
      %58 = vector.extract_strided_slice %16 {offsets = [16, 0], sizes = [8, 64], strides = [1, 1]} : vector<64x64xf32> to vector<8x64xf32>
      %cst_15 = arith.constant dense<0.000000e+00> : vector<128x64xf32>
      %59 = tpu.matmul %57, %58, %cst_15 {dimension_numbers = #tpu.dot_dimension_numbers<[1], [0], [0], [1], [0, 0, 1, 1], [], []>} : vector<128x8xf32>, vector<8x64xf32>, vector<128x64xf32> -> vector<128x64xf32>
      %60 = arith.addf %45, %59 : vector<128x64xf32>
      %61 = vector.extract_strided_slice %15 {offsets = [0, 27], sizes = [128, 8], strides = [1, 1]} : vector<128x72xf32> to vector<128x8xf32>
      %62 = vector.extract_strided_slice %14 {offsets = [0, 24], sizes = [128, 8], strides = [1, 1]} : vector<128x64xf32> to vector<128x8xf32>
      %63 = vector.broadcast %12 : vector<128x1xf32> to vector<128x8xf32>
      %64 = arith.mulf %63, %62 : vector<128x8xf32>
      %65 = arith.addf %61, %64 : vector<128x8xf32>
      %66 = vector.extract_strided_slice %15 {offsets = [0, 35], sizes = [128, 1], strides = [1, 1]} : vector<128x72xf32> to vector<128x1xf32>
      %67 = arith.addf %66, %12 : vector<128x1xf32>
      %cst_16 = arith.constant 9.99999997E-7 : f32
      %68 = vector.broadcast %cst_16 : f32 to vector<128x1xf32>
      %69 = arith.addf %67, %68 : vector<128x1xf32>
      %70 = tpu.reciprocal %69 {approx = true} : vector<128x1xf32> -> vector<128x1xf32>
      %71 = vector.broadcast %70 : vector<128x1xf32> to vector<128x8xf32>
      %72 = arith.mulf %65, %71 : vector<128x8xf32>
      %73 = vector.extract_strided_slice %16 {offsets = [24, 0], sizes = [8, 64], strides = [1, 1]} : vector<64x64xf32> to vector<8x64xf32>
      %cst_17 = arith.constant dense<0.000000e+00> : vector<128x64xf32>
      %74 = tpu.matmul %72, %73, %cst_17 {dimension_numbers = #tpu.dot_dimension_numbers<[1], [0], [0], [1], [0, 0, 1, 1], [], []>} : vector<128x8xf32>, vector<8x64xf32>, vector<128x64xf32> -> vector<128x64xf32>
      %75 = arith.addf %60, %74 : vector<128x64xf32>
      %76 = vector.extract_strided_slice %15 {offsets = [0, 36], sizes = [128, 8], strides = [1, 1]} : vector<128x72xf32> to vector<128x8xf32>
      %77 = vector.extract_strided_slice %14 {offsets = [0, 32], sizes = [128, 8], strides = [1, 1]} : vector<128x64xf32> to vector<128x8xf32>
      %78 = vector.broadcast %12 : vector<128x1xf32> to vector<128x8xf32>
      %79 = arith.mulf %78, %77 : vector<128x8xf32>
      %80 = arith.addf %76, %79 : vector<128x8xf32>
      %81 = vector.extract_strided_slice %15 {offsets = [0, 44], sizes = [128, 1], strides = [1, 1]} : vector<128x72xf32> to vector<128x1xf32>
      %82 = arith.addf %81, %12 : vector<128x1xf32>
      %cst_18 = arith.constant 9.99999997E-7 : f32
      %83 = vector.broadcast %cst_18 : f32 to vector<128x1xf32>
      %84 = arith.addf %82, %83 : vector<128x1xf32>
      %85 = tpu.reciprocal %84 {approx = true} : vector<128x1xf32> -> vector<128x1xf32>
      %86 = vector.broadcast %85 : vector<128x1xf32> to vector<128x8xf32>
      %87 = arith.mulf %80, %86 : vector<128x8xf32>
      %88 = vector.extract_strided_slice %16 {offsets = [32, 0], sizes = [8, 64], strides = [1, 1]} : vector<64x64xf32> to vector<8x64xf32>
      %cst_19 = arith.constant dense<0.000000e+00> : vector<128x64xf32>
      %89 = tpu.matmul %87, %88, %cst_19 {dimension_numbers = #tpu.dot_dimension_numbers<[1], [0], [0], [1], [0, 0, 1, 1], [], []>} : vector<128x8xf32>, vector<8x64xf32>, vector<128x64xf32> -> vector<128x64xf32>
      %90 = arith.addf %75, %89 : vector<128x64xf32>
      %91 = vector.extract_strided_slice %15 {offsets = [0, 45], sizes = [128, 8], strides = [1, 1]} : vector<128x72xf32> to vector<128x8xf32>
      %92 = vector.extract_strided_slice %14 {offsets = [0, 40], sizes = [128, 8], strides = [1, 1]} : vector<128x64xf32> to vector<128x8xf32>
      %93 = vector.broadcast %12 : vector<128x1xf32> to vector<128x8xf32>
      %94 = arith.mulf %93, %92 : vector<128x8xf32>
      %95 = arith.addf %91, %94 : vector<128x8xf32>
      %96 = vector.extract_strided_slice %15 {offsets = [0, 53], sizes = [128, 1], strides = [1, 1]} : vector<128x72xf32> to vector<128x1xf32>
      %97 = arith.addf %96, %12 : vector<128x1xf32>
      %cst_20 = arith.constant 9.99999997E-7 : f32
      %98 = vector.broadcast %cst_20 : f32 to vector<128x1xf32>
      %99 = arith.addf %97, %98 : vector<128x1xf32>
      %100 = tpu.reciprocal %99 {approx = true} : vector<128x1xf32> -> vector<128x1xf32>
      %101 = vector.broadcast %100 : vector<128x1xf32> to vector<128x8xf32>
      %102 = arith.mulf %95, %101 : vector<128x8xf32>
      %103 = vector.extract_strided_slice %16 {offsets = [40, 0], sizes = [8, 64], strides = [1, 1]} : vector<64x64xf32> to vector<8x64xf32>
      %cst_21 = arith.constant dense<0.000000e+00> : vector<128x64xf32>
      %104 = tpu.matmul %102, %103, %cst_21 {dimension_numbers = #tpu.dot_dimension_numbers<[1], [0], [0], [1], [0, 0, 1, 1], [], []>} : vector<128x8xf32>, vector<8x64xf32>, vector<128x64xf32> -> vector<128x64xf32>
      %105 = arith.addf %90, %104 : vector<128x64xf32>
      %106 = vector.extract_strided_slice %15 {offsets = [0, 54], sizes = [128, 8], strides = [1, 1]} : vector<128x72xf32> to vector<128x8xf32>
      %107 = vector.extract_strided_slice %14 {offsets = [0, 48], sizes = [128, 8], strides = [1, 1]} : vector<128x64xf32> to vector<128x8xf32>
      %108 = vector.broadcast %12 : vector<128x1xf32> to vector<128x8xf32>
      %109 = arith.mulf %108, %107 : vector<128x8xf32>
      %110 = arith.addf %106, %109 : vector<128x8xf32>
      %111 = vector.extract_strided_slice %15 {offsets = [0, 62], sizes = [128, 1], strides = [1, 1]} : vector<128x72xf32> to vector<128x1xf32>
      %112 = arith.addf %111, %12 : vector<128x1xf32>
      %cst_22 = arith.constant 9.99999997E-7 : f32
      %113 = vector.broadcast %cst_22 : f32 to vector<128x1xf32>
      %114 = arith.addf %112, %113 : vector<128x1xf32>
      %115 = tpu.reciprocal %114 {approx = true} : vector<128x1xf32> -> vector<128x1xf32>
      %116 = vector.broadcast %115 : vector<128x1xf32> to vector<128x8xf32>
      %117 = arith.mulf %110, %116 : vector<128x8xf32>
      %118 = vector.extract_strided_slice %16 {offsets = [48, 0], sizes = [8, 64], strides = [1, 1]} : vector<64x64xf32> to vector<8x64xf32>
      %cst_23 = arith.constant dense<0.000000e+00> : vector<128x64xf32>
      %119 = tpu.matmul %117, %118, %cst_23 {dimension_numbers = #tpu.dot_dimension_numbers<[1], [0], [0], [1], [0, 0, 1, 1], [], []>} : vector<128x8xf32>, vector<8x64xf32>, vector<128x64xf32> -> vector<128x64xf32>
      %120 = arith.addf %105, %119 : vector<128x64xf32>
      %121 = vector.extract_strided_slice %15 {offsets = [0, 63], sizes = [128, 8], strides = [1, 1]} : vector<128x72xf32> to vector<128x8xf32>
      %122 = vector.extract_strided_slice %14 {offsets = [0, 56], sizes = [128, 8], strides = [1, 1]} : vector<128x64xf32> to vector<128x8xf32>
      %123 = vector.broadcast %12 : vector<128x1xf32> to vector<128x8xf32>
      %124 = arith.mulf %123, %122 : vector<128x8xf32>
      %125 = arith.addf %121, %124 : vector<128x8xf32>
      %126 = vector.extract_strided_slice %15 {offsets = [0, 71], sizes = [128, 1], strides = [1, 1]} : vector<128x72xf32> to vector<128x1xf32>
      %127 = arith.addf %126, %12 : vector<128x1xf32>
      %cst_24 = arith.constant 9.99999997E-7 : f32
      %128 = vector.broadcast %cst_24 : f32 to vector<128x1xf32>
      %129 = arith.addf %127, %128 : vector<128x1xf32>
      %130 = tpu.reciprocal %129 {approx = true} : vector<128x1xf32> -> vector<128x1xf32>
      %131 = vector.broadcast %130 : vector<128x1xf32> to vector<128x8xf32>
      %132 = arith.mulf %125, %131 : vector<128x8xf32>
      %133 = vector.extract_strided_slice %16 {offsets = [56, 0], sizes = [8, 64], strides = [1, 1]} : vector<64x64xf32> to vector<8x64xf32>
      %cst_25 = arith.constant dense<0.000000e+00> : vector<128x64xf32>
      %134 = tpu.matmul %132, %133, %cst_25 {dimension_numbers = #tpu.dot_dimension_numbers<[1], [0], [0], [1], [0, 0, 1, 1], [], []>} : vector<128x8xf32>, vector<8x64xf32>, vector<128x64xf32> -> vector<128x64xf32>
      %135 = arith.addf %120, %134 : vector<128x64xf32>
      %c0_26 = arith.constant 0 : index
      %c0_27 = arith.constant 0 : index
      %136 = vector.load %arg9[%c0_26, %c0_27] : memref<128x64xf32, #tpu.memory_space<vmem>>, vector<128x64xf32>
      %137 = arith.addf %136, %135 : vector<128x64xf32>
      %c0_28 = arith.constant 0 : index
      %c0_29 = arith.constant 0 : index
      %138 = vector.load %arg11[%c0_28, %c0_29] : memref<1x64xf32, #tpu.memory_space<vmem>>, vector<1x64xf32>
      %139 = vector.broadcast %138 : vector<1x64xf32> to vector<128x64xf32>
      %140 = arith.addf %137, %139 : vector<128x64xf32>
      %c0_30 = arith.constant 0 : index
      %c0_31 = arith.constant 0 : index
      %141 = vector.load %arg12[%c0_30, %c0_31] : memref<128x64xf32, #tpu.memory_space<vmem>>, vector<128x64xf32>
      tpu.vector_store %arg12[%c0_30, %c0_31], %140 {strides = array<i32>} : memref<128x64xf32, #tpu.memory_space<vmem>>, vector<128x64xf32>,
    } else {
    }
    return
  }
  func.func @transform_0(%arg0: i32, %arg1: i32, %arg2: memref<2x2xi32, #tpu.memory_space<smem>>) -> (i32, i32) {
    %c0_i32 = arith.constant 0 : i32
    %c0_i32_0 = arith.constant 0 : i32
    return %arg0, %c0_i32 : i32, i32
  }
  func.func @transform_1(%arg0: i32, %arg1: i32, %arg2: memref<2x2xi32, #tpu.memory_space<smem>>) -> (i32, i32) {
    %c0_i32 = arith.constant 0 : i32
    %c0_i32_0 = arith.constant 0 : i32
    return %arg1, %c0_i32 : i32, i32
  }
  func.func @transform_2(%arg0: i32, %arg1: i32, %arg2: memref<2x2xi32, #tpu.memory_space<smem>>) -> (i32, i32) {
    %c0_i32 = arith.constant 0 : i32
    %c0_i32_0 = arith.constant 0 : i32
    return %arg1, %c0_i32 : i32, i32
  }
  func.func @transform_3(%arg0: i32, %arg1: i32, %arg2: memref<2x2xi32, #tpu.memory_space<smem>>) -> (i32, i32) {
    %c0_i32 = arith.constant 0 : i32
    return %arg0, %arg1 : i32, i32
  }
  func.func @transform_4(%arg0: i32, %arg1: i32, %arg2: memref<2x2xi32, #tpu.memory_space<smem>>) -> (i32, i32) {
    %c0_i32 = arith.constant 0 : i32
    %c0_i32_0 = arith.constant 0 : i32
    return %arg0, %c0_i32 : i32, i32
  }
  func.func @transform_5(%arg0: i32, %arg1: i32, %arg2: memref<2x2xi32, #tpu.memory_space<smem>>) -> (i32, i32) {
    %c0_i32 = arith.constant 0 : i32
    %c0_i32_0 = arith.constant 0 : i32
    return %arg0, %c0_i32 : i32, i32
  }
  func.func @transform_6(%arg0: i32, %arg1: i32, %arg2: memref<2x2xi32, #tpu.memory_space<smem>>) -> (i32, i32) {
    %c0_i32 = arith.constant 0 : i32
    %c0_i32_0 = arith.constant 0 : i32
    return %arg0, %c0_i32 : i32, i32
  }
  func.func @transform_7(%arg0: i32, %arg1: i32, %arg2: memref<2x2xi32, #tpu.memory_space<smem>>) -> (i32, i32) {
    %c0_i32 = arith.constant 0 : i32
    %c0_i32_0 = arith.constant 0 : i32
    %c0_i32_1 = arith.constant 0 : i32
    return %c0_i32, %c0_i32_0 : i32, i32
  }
  func.func @transform_8(%arg0: i32, %arg1: i32, %arg2: memref<2x2xi32, #tpu.memory_space<smem>>) -> (i32, i32) {
    %c0_i32 = arith.constant 0 : i32
    %c0_i32_0 = arith.constant 0 : i32
    %c0_i32_1 = arith.constant 0 : i32
    return %c0_i32, %c0_i32_0 : i32, i32
  }
  func.func @transform_9(%arg0: i32, %arg1: i32, %arg2: memref<2x2xi32, #tpu.memory_space<smem>>) -> (i32, i32) {
    %c0_i32 = arith.constant 0 : i32
    %c0_i32_0 = arith.constant 0 : i32
    return %arg0, %c0_i32 : i32, i32
  }
}

module attributes {stable_mosaic.version = 11 : i64} {
  func.func @_ffn_kernel(%arg0: i32, %arg1: memref<128x64xf32, #tpu.memory_space<vmem>>, %arg2: memref<1x64xf32, #tpu.memory_space<vmem>>, %arg3: memref<1x64xf32, #tpu.memory_space<vmem>>, %arg4: memref<64x128xf32, #tpu.memory_space<vmem>>, %arg5: memref<1x128xf32, #tpu.memory_space<vmem>>, %arg6: memref<128x64xf32, #tpu.memory_space<vmem>>, %arg7: memref<1x64xf32, #tpu.memory_space<vmem>>, %arg8: memref<128x64xf32, #tpu.memory_space<vmem>>) attributes {dimension_semantics = [#tpu.dimension_semantics<parallel>], iteration_bounds = array<i64: 2>, scalar_prefetch = 0 : i64, scratch_operands = 0 : i64, tpu.core_type = #tpu.core_type<tc>, window_params = [{transform_indices = @transform_0, window_bounds = array<i64: 128, 64>}, {pipeline_mode = #tpu.pipeline_mode<synchronous>, transform_indices = @transform_1, window_bounds = array<i64: 1, 64>}, {pipeline_mode = #tpu.pipeline_mode<synchronous>, transform_indices = @transform_2, window_bounds = array<i64: 1, 64>}, {pipeline_mode = #tpu.pipeline_mode<synchronous>, transform_indices = @transform_3, window_bounds = array<i64: 64, 128>}, {pipeline_mode = #tpu.pipeline_mode<synchronous>, transform_indices = @transform_4, window_bounds = array<i64: 1, 128>}, {pipeline_mode = #tpu.pipeline_mode<synchronous>, transform_indices = @transform_5, window_bounds = array<i64: 128, 64>}, {pipeline_mode = #tpu.pipeline_mode<synchronous>, transform_indices = @transform_6, window_bounds = array<i64: 1, 64>}, {transform_indices = @transform_7, window_bounds = array<i64: 128, 64>}]} {
    %c0 = arith.constant 0 : index
    %c0_0 = arith.constant 0 : index
    %0 = vector.load %arg1[%c0, %c0_0] : memref<128x64xf32, #tpu.memory_space<vmem>>, vector<128x64xf32>
    %c0_1 = arith.constant 0 : index
    %c0_2 = arith.constant 0 : index
    %1 = vector.load %arg2[%c0_1, %c0_2] : memref<1x64xf32, #tpu.memory_space<vmem>>, vector<1x64xf32>
    %2 = vector.broadcast %1 : vector<1x64xf32> to vector<128x64xf32>
    %3 = arith.mulf %0, %2 : vector<128x64xf32>
    %c0_3 = arith.constant 0 : index
    %c0_4 = arith.constant 0 : index
    %4 = vector.load %arg3[%c0_3, %c0_4] : memref<1x64xf32, #tpu.memory_space<vmem>>, vector<1x64xf32>
    %5 = vector.broadcast %4 : vector<1x64xf32> to vector<128x64xf32>
    %6 = arith.addf %3, %5 : vector<128x64xf32>
    %c0_5 = arith.constant 0 : index
    %c0_6 = arith.constant 0 : index
    %7 = vector.load %arg4[%c0_5, %c0_6] : memref<64x128xf32, #tpu.memory_space<vmem>>, vector<64x128xf32>
    %cst = arith.constant dense<0.000000e+00> : vector<128x128xf32>
    %8 = tpu.matmul %6, %7, %cst {dimension_numbers = #tpu.dot_dimension_numbers<[1], [0], [0], [1], [0, 0, 1, 1], [], []>} : vector<128x64xf32>, vector<64x128xf32>, vector<128x128xf32> -> vector<128x128xf32>
    %c0_7 = arith.constant 0 : index
    %c0_8 = arith.constant 0 : index
    %9 = vector.load %arg5[%c0_7, %c0_8] : memref<1x128xf32, #tpu.memory_space<vmem>>, vector<1x128xf32>
    %10 = vector.broadcast %9 : vector<1x128xf32> to vector<128x128xf32>
    %11 = arith.addf %8, %10 : vector<128x128xf32>
    %cst_9 = arith.constant 0.000000e+00 : f32
    %12 = vector.broadcast %cst_9 : f32 to vector<128x128xf32>
    %13 = arith.maximumf %11, %12 : vector<128x128xf32>
    %c0_10 = arith.constant 0 : index
    %c0_11 = arith.constant 0 : index
    %14 = vector.load %arg6[%c0_10, %c0_11] : memref<128x64xf32, #tpu.memory_space<vmem>>, vector<128x64xf32>
    %cst_12 = arith.constant dense<0.000000e+00> : vector<128x64xf32>
    %15 = tpu.matmul %13, %14, %cst_12 {dimension_numbers = #tpu.dot_dimension_numbers<[1], [0], [0], [1], [0, 0, 1, 1], [], []>} : vector<128x128xf32>, vector<128x64xf32>, vector<128x64xf32> -> vector<128x64xf32>
    %16 = arith.addf %6, %15 : vector<128x64xf32>
    %c0_13 = arith.constant 0 : index
    %c0_14 = arith.constant 0 : index
    %17 = vector.load %arg7[%c0_13, %c0_14] : memref<1x64xf32, #tpu.memory_space<vmem>>, vector<1x64xf32>
    %18 = vector.broadcast %17 : vector<1x64xf32> to vector<128x64xf32>
    %19 = arith.addf %16, %18 : vector<128x64xf32>
    %c0_15 = arith.constant 0 : index
    %c0_16 = arith.constant 0 : index
    %20 = vector.load %arg8[%c0_15, %c0_16] : memref<128x64xf32, #tpu.memory_space<vmem>>, vector<128x64xf32>
    tpu.vector_store %arg8[%c0_15, %c0_16], %19 {strides = array<i32>} : memref<128x64xf32, #tpu.memory_space<vmem>>, vector<128x64xf32>,
    return
  }
  func.func @transform_0(%arg0: i32) -> (i32, i32) {
    %c0_i32 = arith.constant 0 : i32
    %c0_i32_0 = arith.constant 0 : i32
    return %arg0, %c0_i32 : i32, i32
  }
  func.func @transform_1(%arg0: i32) -> (i32, i32) {
    %c0_i32 = arith.constant 0 : i32
    %c0_i32_0 = arith.constant 0 : i32
    %c0_i32_1 = arith.constant 0 : i32
    return %c0_i32, %c0_i32_0 : i32, i32
  }
  func.func @transform_2(%arg0: i32) -> (i32, i32) {
    %c0_i32 = arith.constant 0 : i32
    %c0_i32_0 = arith.constant 0 : i32
    %c0_i32_1 = arith.constant 0 : i32
    return %c0_i32, %c0_i32_0 : i32, i32
  }
  func.func @transform_3(%arg0: i32) -> (i32, i32) {
    %c0_i32 = arith.constant 0 : i32
    %c0_i32_0 = arith.constant 0 : i32
    %c0_i32_1 = arith.constant 0 : i32
    return %c0_i32, %c0_i32_0 : i32, i32
  }
  func.func @transform_4(%arg0: i32) -> (i32, i32) {
    %c0_i32 = arith.constant 0 : i32
    %c0_i32_0 = arith.constant 0 : i32
    %c0_i32_1 = arith.constant 0 : i32
    return %c0_i32, %c0_i32_0 : i32, i32
  }
  func.func @transform_5(%arg0: i32) -> (i32, i32) {
    %c0_i32 = arith.constant 0 : i32
    %c0_i32_0 = arith.constant 0 : i32
    %c0_i32_1 = arith.constant 0 : i32
    return %c0_i32, %c0_i32_0 : i32, i32
  }
  func.func @transform_6(%arg0: i32) -> (i32, i32) {
    %c0_i32 = arith.constant 0 : i32
    %c0_i32_0 = arith.constant 0 : i32
    %c0_i32_1 = arith.constant 0 : i32
    return %c0_i32, %c0_i32_0 : i32, i32
  }
  func.func @transform_7(%arg0: i32) -> (i32, i32) {
    %c0_i32 = arith.constant 0 : i32
    %c0_i32_0 = arith.constant 0 : i32
    return %arg0, %c0_i32 : i32, i32
  }
}

module attributes {stable_mosaic.version = 11 : i64} {
  func.func @_bn_apply_kernel(%arg0: i32, %arg1: memref<128x64xf32, #tpu.memory_space<vmem>>, %arg2: memref<1x64xf32, #tpu.memory_space<vmem>>, %arg3: memref<1x64xf32, #tpu.memory_space<vmem>>, %arg4: memref<128x64xf32, #tpu.memory_space<vmem>>) attributes {dimension_semantics = [#tpu.dimension_semantics<parallel>], iteration_bounds = array<i64: 2>, scalar_prefetch = 0 : i64, scratch_operands = 0 : i64, tpu.core_type = #tpu.core_type<tc>, window_params = [{transform_indices = @transform_0, window_bounds = array<i64: 128, 64>}, {pipeline_mode = #tpu.pipeline_mode<synchronous>, transform_indices = @transform_1, window_bounds = array<i64: 1, 64>}, {pipeline_mode = #tpu.pipeline_mode<synchronous>, transform_indices = @transform_2, window_bounds = array<i64: 1, 64>}, {transform_indices = @transform_3, window_bounds = array<i64: 128, 64>}]} {
    %c0 = arith.constant 0 : index
    %c0_0 = arith.constant 0 : index
    %0 = vector.load %arg1[%c0, %c0_0] : memref<128x64xf32, #tpu.memory_space<vmem>>, vector<128x64xf32>
    %c0_1 = arith.constant 0 : index
    %c0_2 = arith.constant 0 : index
    %1 = vector.load %arg2[%c0_1, %c0_2] : memref<1x64xf32, #tpu.memory_space<vmem>>, vector<1x64xf32>
    %2 = vector.broadcast %1 : vector<1x64xf32> to vector<128x64xf32>
    %3 = arith.mulf %0, %2 : vector<128x64xf32>
    %c0_3 = arith.constant 0 : index
    %c0_4 = arith.constant 0 : index
    %4 = vector.load %arg3[%c0_3, %c0_4] : memref<1x64xf32, #tpu.memory_space<vmem>>, vector<1x64xf32>
    %5 = vector.broadcast %4 : vector<1x64xf32> to vector<128x64xf32>
    %6 = arith.addf %3, %5 : vector<128x64xf32>
    %c0_5 = arith.constant 0 : index
    %c0_6 = arith.constant 0 : index
    %7 = vector.load %arg4[%c0_5, %c0_6] : memref<128x64xf32, #tpu.memory_space<vmem>>, vector<128x64xf32>
    tpu.vector_store %arg4[%c0_5, %c0_6], %6 {strides = array<i32>} : memref<128x64xf32, #tpu.memory_space<vmem>>, vector<128x64xf32>,
    return
  }
  func.func @transform_0(%arg0: i32) -> (i32, i32) {
    %c0_i32 = arith.constant 0 : i32
    %c0_i32_0 = arith.constant 0 : i32
    return %arg0, %c0_i32 : i32, i32
  }
  func.func @transform_1(%arg0: i32) -> (i32, i32) {
    %c0_i32 = arith.constant 0 : i32
    %c0_i32_0 = arith.constant 0 : i32
    %c0_i32_1 = arith.constant 0 : i32
    return %c0_i32, %c0_i32_0 : i32, i32
  }
  func.func @transform_2(%arg0: i32) -> (i32, i32) {
    %c0_i32 = arith.constant 0 : i32
    %c0_i32_0 = arith.constant 0 : i32
    %c0_i32_1 = arith.constant 0 : i32
    return %c0_i32, %c0_i32_0 : i32, i32
  }
  func.func @transform_3(%arg0: i32) -> (i32, i32) {
    %c0_i32 = arith.constant 0 : i32
    %c0_i32_0 = arith.constant 0 : i32
    return %arg0, %c0_i32 : i32, i32
  }
}

</mosaic_0001>

<llo_original>
// kernel: graph_transformer_layer.4
$region0: #{graph_transformer_layer.4}
  #allocation0 [shape = 'u32[]', space=smem, size = 0x4, offset = 0x4, fixed_abs, tag = 'smem constant byte address 0x4 - core index']
  #allocation1 [shape = 'u32[144,128]{1,0:T(1,128)}', space=vmem, size = 0x12000, scoped, tag = 'internal scratch']
  %s0 = inlined_call_operand.vmem [shape: f32[256,64], index: 0, kind: input, shape index: {}]
  %s1 = inlined_call_operand.vmem [shape: f32[64,192], index: 1, kind: input, shape index: {}]
  %s2 = inlined_call_operand.vmem [shape: bf16[256,192], index: 2, kind: output, shape index: {}]
  %s3 = sld [smem:[#allocation0]]
  $region41: #{graph_transformer_layer.4} parent=0
    _
  %s5 = ssub.s32 1, %s3
  %s6 = scalar_select 0, %s5, %s3
  loop: start=0, step=1, limit=4
  $region2: #{graph_transformer_layer.4} parent=0 // loop_pre_header
    _
  $region3: #{graph_transformer_layer.4} parent=0 // loop_header
    %s8 = sphi 0, %s12
    %p9 = scmp.ge.s32.totalorder %s8, 4
    %s18 = sphi 0, %s20
    %s21 = sphi 0, %s18
    %s22 = sphi 0, %s21
    %s38 = sphi 0, %s22
    %s42 = sphi 0, %s42
    %s44 = sphi 0, %s42
    %s45 = sphi 0, %s44
    %s59 = sphi 0, %s45
    %s65 = sphi 0, %s67
    %s68 = sphi 0, %s65
    %s69 = sphi 0, %s68
    %s85 = sphi 0, %s69
  $region4: #{graph_transformer_layer.4} parent=0 // loop_header_branch
    %11 = sbr.rel (%p9) target = $region8
  $region5: #{graph_transformer_layer.4} parent=0 // loop_body
    %s13 = ssub.s32 %s8, 1
    %s14 = ssub.s32 %s8, 2
    %s15 = sadd.s32 %s8, 1
    %s16 = ssub.s32 %s8, %s15
    %p17 = scmp.eq.s32.totalorder %s16, 0
    %s19 = sadd.s32 %s18, 1
    %s20 = scalar_select %p17, %s18, %s19
    %p23 = pneg %p17
    %p24 = scmp.eq.s32.totalorder %s8, 1
    %p25 = por %p23, %p24
    %p26 = scmp.ne.s32.totalorder %s18, %s21
    %p27 = scmp.eq.s32.totalorder %s8, 0
    %p28 = por %p26, %p27
    %p29 = scmp.ne.s32.totalorder %s18, %s21
    %p30 = scmp.eq.s32.totalorder %s13, 1
    %p31 = por %p29, %p30
    %p32 = scmp.ne.s32.totalorder %s21, %s22
    %p33 = scmp.eq.s32.totalorder %s13, 0
    %p34 = por %p32, %p33
    %p35 = scmp.ne.s32.totalorder %s21, %s22
    %p36 = scmp.eq.s32.totalorder %s14, 1
    %p37 = por %p35, %p36
    %p39 = scmp.ne.s32.totalorder %s22, %s38
    %p40 = scmp.eq.s32.totalorder %s14, 0
    %p41 = por %p39, %p40
    %s43 = sadd.s32 %s42, 1
    %p46 = scmp.eq.s32.totalorder %s8, 1
    %p47 = scmp.ne.s32.totalorder %s42, %s44
    %p48 = scmp.eq.s32.totalorder %s8, 0
    %p49 = por %p47, %p48
    %p50 = scmp.ne.s32.totalorder %s42, %s44
    %p51 = scmp.eq.s32.totalorder %s13, 1
    %p52 = por %p50, %p51
    %p53 = scmp.ne.s32.totalorder %s44, %s45
    %p54 = scmp.eq.s32.totalorder %s13, 0
    %p55 = por %p53, %p54
    %p56 = scmp.ne.s32.totalorder %s44, %s45
    %p57 = scmp.eq.s32.totalorder %s14, 1
    %p58 = por %p56, %p57
    %p60 = scmp.ne.s32.totalorder %s45, %s59
    %p61 = scmp.eq.s32.totalorder %s14, 0
    %p62 = por %p60, %p61
    %s63 = ssub.s32 %s8, %s15
    %p64 = scmp.eq.s32.totalorder %s63, 0
    %s66 = sadd.s32 %s65, 1
    %s67 = scalar_select %p64, %s65, %s66
    %p70 = pneg %p64
    %p71 = scmp.eq.s32.totalorder %s8, 1
    %p72 = por %p70, %p71
    %p73 = scmp.ne.s32.totalorder %s65, %s68
    %p74 = scmp.eq.s32.totalorder %s8, 0
    %p75 = por %p73, %p74
    %p76 = scmp.ne.s32.totalorder %s65, %s68
    %p77 = scmp.eq.s32.totalorder %s13, 1
    %p78 = por %p76, %p77
    %p79 = scmp.ne.s32.totalorder %s68, %s69
    %p80 = scmp.eq.s32.totalorder %s13, 0
    %p81 = por %p79, %p80
    %p82 = scmp.ne.s32.totalorder %s68, %s69
    %p83 = scmp.eq.s32.totalorder %s14, 1
    %p84 = por %p82, %p83
    %p86 = scmp.ne.s32.totalorder %s69, %s85
    %p87 = scmp.eq.s32.totalorder %s14, 0
    %p88 = por %p86, %p87
    %p89 = scmp.le.s32.totalorder 1, %s8
    %p90 = scmp.lt.s32.totalorder %s8, 3
    %p91 = pnand %p89, %p90
    %p92 = pneg %p91
    // Predicated region
    $region9: #{graph_transformer_layer.4} parent=5 // pred_check
      _
    $region10: #{graph_transformer_layer.4} parent=5 // pred_check_branch
      %94 = sbr.rel (%p91) target = $region12
    $region11: #{graph_transformer_layer.4} parent=5 // pred_region
      %s95 = ssub.s32 %s8, 1
      // Predicated region
      $region13: #{graph_transformer_layer.4} parent=11 // pred_check
        %p96 = pneg %p55
      $region14: #{graph_transformer_layer.4} parent=11 // pred_check_branch
        %98 = sbr.rel (%p96) target = $region16
      $region15: #{graph_transformer_layer.4} parent=11 // pred_region
        _
      $region16: #{graph_transformer_layer.4} parent=11 // pred_fallthru
        _
    $region12: #{graph_transformer_layer.4} parent=5 // pred_fallthru
      _
    %p99 = scmp.lt.s32.totalorder %s8, 2
    // Predicated region
    $region17: #{graph_transformer_layer.4} parent=5 // pred_check
      %p100 = pneg %p99
    $region18: #{graph_transformer_layer.4} parent=5 // pred_check_branch
      %102 = sbr.rel (%p100) target = $region20
    $region19: #{graph_transformer_layer.4} parent=5 // pred_region
      // Predicated region
      $region21: #{graph_transformer_layer.4} parent=19 // pred_check
        %p103 = pneg %p28
      $region22: #{graph_transformer_layer.4} parent=19 // pred_check_branch
        %105 = sbr.rel (%p103) target = $region24
      $region23: #{graph_transformer_layer.4} parent=19 // pred_region
        %s106 = smul.u32 16, %s8
        %p107 = scmp.lt.s32.totalorder %s106, 31
        %s108 = scalar_select %p107, %s106, 31
        %s109 = smul.addr %s108, 8
        %s110 = scalar_lea.vmem %s0, %s109
        %s111 = smul.u32 16, %s8
      $region24: #{graph_transformer_layer.4} parent=19 // pred_fallthru
        _
    $region20: #{graph_transformer_layer.4} parent=5 // pred_fallthru
      _
    %p112 = scmp.le.s32.totalorder 1, %s8
    %p113 = scmp.lt.s32.totalorder %s8, 3
    %p114 = pnand %p112, %p113
    %p115 = pneg %p114
    // Predicated region
    $region25: #{graph_transformer_layer.4} parent=5 // pred_check
      _
    $region26: #{graph_transformer_layer.4} parent=5 // pred_check_branch
      %117 = sbr.rel (%p114) target = $region28
    $region27: #{graph_transformer_layer.4} parent=5 // pred_region
      %s118 = ssub.s32 %s8, 1
      %s119 = smul.u32 16, %s13
      %p120 = scmp.lt.s32.totalorder %s119, 31
      %s121 = scalar_select %p120, %s119, 31
      %s122 = smul.addr %s121, 8
      %s123 = scalar_lea.vmem %s0, %s122
      %p124 = pneg %p34
      %p125 = pneg %p31
      %p126 = pneg %p55
      %p127 = pneg %p52
      %p128 = pneg %p81
      %p129 = pneg %p78
      %s130 = smul.u32 16, %s13
      %p131 = scmp.lt.s32.totalorder %s130, 31
      %s132 = scalar_select %p131, %s130, 31
      %s133 = smul.addr %s132, 2
      %s134 = smul.addr %s133, 4
      %s135 = scalar_lea.vmem %s2, %s134
      %s136 = smul.u32 16, %s13
      %p137 = scmp.lt.s32.totalorder %s136, 31
      %s138 = scalar_select %p137, %s136, 31
      %s139 = smul.addr %s138, 8
      %s140 = scalar_lea.vmem %s0, %s139
      %s141 = smul.u32 16, %s13
      %s142 = smul.u32 16, %s13
      %p143 = scmp.lt.s32.totalorder %s142, 31
      %s144 = scalar_select %p143, %s142, 31
      %s145 = smul.addr %s144, 2
      %s146 = smul.addr %s145, 4
      %s147 = scalar_lea.vmem %s2, %s146
      %s148 = smul.u32 16, %s13
      %v149 = vld [vmem:[%s140] sm:$0xff]
      %v150 = vld [vmem:[%s140 + $0x8] sm:$0xff]
      %v151 = vld [vmem:[%s140 + $0x10] sm:$0xff]
      %v152 = vld [vmem:[%s140 + $0x18] sm:$0xff]
      %v153 = vld [vmem:[%s140 + $0x20] sm:$0xff]
      %v154 = vld [vmem:[%s140 + $0x28] sm:$0xff]
      %v155 = vld [vmem:[%s140 + $0x30] sm:$0xff]
      %v156 = vld [vmem:[%s140 + $0x38] sm:$0xff]
      %v157 = vld [vmem:[%s140 + $0x40] sm:$0xff]
      %v158 = vld [vmem:[%s140 + $0x48] sm:$0xff]
      %v159 = vld [vmem:[%s140 + $0x50] sm:$0xff]
      %v160 = vld [vmem:[%s140 + $0x58] sm:$0xff]
      %v161 = vld [vmem:[%s140 + $0x60] sm:$0xff]
      %v162 = vld [vmem:[%s140 + $0x68] sm:$0xff]
      %v163 = vld [vmem:[%s140 + $0x70] sm:$0xff]
      %v164 = vld [vmem:[%s140 + $0x78] sm:$0xff]
      %v165 = vld [vmem:[%s1] sm:$0xff]
      %v166 = vld [vmem:[%s1 + $0x8] sm:$0xff]
      %v167 = vld [vmem:[%s1 + $0x10] sm:$0xff]
      %v168 = vld [vmem:[%s1 + $0x18] sm:$0xff]
      %v169 = vld [vmem:[%s1 + $0x20] sm:$0xff]
      %v170 = vld [vmem:[%s1 + $0x28] sm:$0xff]
      %v171 = vld [vmem:[%s1 + $0x30] sm:$0xff]
      %v172 = vld [vmem:[%s1 + $0x38] sm:$0xff]
      %v173 = vld [vmem:[%s1 + $0x40] sm:$0xff]
      %v174 = vld [vmem:[%s1 + $0x48] sm:$0xff]
      %v175 = vld [vmem:[%s1 + $0x50] sm:$0xff]
      %v176 = vld [vmem:[%s1 + $0x58] sm:$0xff]
      %v177 = vld [vmem:[%s1 + $0x60] sm:$0xff]
      %v178 = vld [vmem:[%s1 + $0x68] sm:$0xff]
      %v179 = vld [vmem:[%s1 + $0x70] sm:$0xff]
      %v180 = vld [vmem:[%s1 + $0x78] sm:$0xff]
      %vm181 = vcmask 523264
      %v183 = vsel %vm181, %v149, 0
      %v186 = vsel %vm181, %v150, 0
      %v189 = vsel %vm181, %v151, 0
      %v192 = vsel %vm181, %v152, 0
      %v195 = vsel %vm181, %v153, 0
      %v198 = vsel %vm181, %v154, 0
      %v201 = vsel %vm181, %v155, 0
      %v204 = vsel %vm181, %v156, 0
      %v207 = vsel %vm181, %v157, 0
      %v210 = vsel %vm181, %v158, 0
      %v213 = vsel %vm181, %v159, 0
      %v216 = vsel %vm181, %v160, 0
      %v219 = vsel %vm181, %v161, 0
      %v222 = vsel %vm181, %v162, 0
      %v225 = vsel %vm181, %v163, 0
      %v228 = vsel %vm181, %v164, 0
      %230 = vmatprep.subr.mxu0 %v166
      %231 = vmatpush1.msra.mxu0 %v165
      %232 = vmatprep.subr.mxu0 %v168
      %233 = vmatpush1.msra.mxu0 %v167
      %234 = vmatprep.subr.mxu0 %v170
      %235 = vmatpush1.msra.mxu0 %v169
      %236 = vmatprep.subr.mxu0 %v172
      %237 = vmatpush1.msra.mxu0 %v171
      %238 = vmatprep.subr.mxu0 %v174
      %239 = vmatpush1.msra.mxu0 %v173
      %240 = vmatprep.subr.mxu0 %v176
      %241 = vmatpush1.msra.mxu0 %v175
      %242 = vmatprep.subr.mxu0 %v178
      %243 = vmatpush1.msra.mxu0 %v177
      %244 = vmatprep.subr.mxu0 %v180
      %245 = vmatpush1.msra.mxu0 %v179
      %246 = vmatprep.subr.mxu0 0.0
      %247 = vmatpush1.msra.mxu0 0.0
      %248 = vmatprep.subr.mxu0 0.0
      %249 = vmatpush1.msra.mxu0 0.0
      %250 = vmatprep.subr.mxu0 0.0
      %251 = vmatpush1.msra.mxu0 0.0
      %252 = vmatprep.subr.mxu0 0.0
      %253 = vmatpush1.msra.mxu0 0.0
      %254 = vmatprep.subr.mxu0 0.0
      %255 = vmatpush1.msra.mxu0 0.0
      %256 = vmatprep.subr.mxu0 0.0
      %257 = vmatpush1.msra.mxu0 0.0
      %258 = vmatprep.subr.mxu0 0.0
      %259 = vmatpush1.msra.mxu0 0.0
      %260 = vmatprep.subr.mxu0 0.0
      %261 = vmatpush1.msra.mxu0 0.0
      %262 = vmatprep.subr.mxu0 0.0
      %263 = vmatpush1.msra.mxu0 0.0
      %264 = vmatprep.subr.mxu0 0.0
      %265 = vmatpush1.msra.mxu0 0.0
      %266 = vmatprep.subr.mxu0 0.0
      %267 = vmatpush1.msra.mxu0 0.0
      %268 = vmatprep.subr.mxu0 0.0
      %269 = vmatpush1.msra.mxu0 0.0
      %270 = vmatprep.subr.mxu0 0.0
      %271 = vmatpush1.msra.mxu0 0.0
      %272 = vmatprep.subr.mxu0 0.0
      %273 = vmatpush1.msra.mxu0 0.0
      %274 = vmatprep.subr.mxu0 0.0
      %275 = vmatpush1.msra.mxu0 0.0
      %276 = vmatprep.subr.mxu0 0.0
      %277 = vmatpush1.msra.mxu0 0.0
      %278 = vmatprep.subr.mxu0 0.0
      %279 = vmatpush1.msra.mxu0 0.0
      %280 = vmatprep.subr.mxu0 0.0
      %281 = vmatpush1.msra.mxu0 0.0
      %282 = vmatprep.subr.mxu0 0.0
      %283 = vmatpush1.msra.mxu0 0.0
      %284 = vmatprep.subr.mxu0 0.0
      %285 = vmatpush1.msra.mxu0 0.0
      %286 = vmatprep.subr.mxu0 0.0
      %287 = vmatpush1.msra.mxu0 0.0
      %288 = vmatprep.subr.mxu0 0.0
      %289 = vmatpush1.msra.mxu0 0.0
      %290 = vmatprep.subr.mxu0 0.0
      %291 = vmatpush1.msra.mxu0 0.0
      %292 = vmatprep.subr.mxu0 0.0
      %293 = vmatpush1.msra.mxu0 0.0
      %294 = vmatprep.mubr.f32.mxu0 0.0
      %295 = vmatmul.mubr.f32.gmra.mrb[0].mxu0 %v183
      %v296 = vpop.f32.mrb[0].mxu0
      %v297 = vadd.f32 0.0, %v296
      %v298 = vpop.f32.mrb[0].mxu0
      %v299 = vadd.f32 0.0, %v298
      %300 = vmatprep.mubr.f32.mxu0 0.0
      %301 = vmatmul.mubr.f32.gmra.mrb[0].mxu0 %v186
      %v302 = vpop.f32.mrb[0].mxu0
      %v303 = vadd.f32 0.0, %v302
      %v304 = vpop.f32.mrb[0].mxu0
      %v305 = vadd.f32 0.0, %v304
      %306 = vmatprep.mubr.f32.mxu0 0.0
      %307 = vmatmul.mubr.f32.gmra.mrb[0].mxu0 %v189
      %v308 = vpop.f32.mrb[0].mxu0
      %v309 = vadd.f32 0.0, %v308
      %v310 = vpop.f32.mrb[0].mxu0
      %v311 = vadd.f32 0.0, %v310
      %312 = vmatprep.mubr.f32.mxu0 0.0
      %313 = vmatmul.mubr.f32.gmra.mrb[0].mxu0 %v192
      %v314 = vpop.f32.mrb[0].mxu0
      %v315 = vadd.f32 0.0, %v314
      %v316 = vpop.f32.mrb[0].mxu0
      %v317 = vadd.f32 0.0, %v316
      %318 = vmatprep.mubr.f32.mxu0 0.0
      %319 = vmatmul.mubr.f32.gmra.mrb[0].mxu0 %v195
      %v320 = vpop.f32.mrb[0].mxu0
      %v321 = vadd.f32 0.0, %v320
      %v322 = vpop.f32.mrb[0].mxu0
      %v323 = vadd.f32 0.0, %v322
      %324 = vmatprep.mubr.f32.mxu0 0.0
      %325 = vmatmul.mubr.f32.gmra.mrb[0].mxu0 %v198
      %v326 = vpop.f32.mrb[0].mxu0
      %v327 = vadd.f32 0.0, %v326
      %v328 = vpop.f32.mrb[0].mxu0
      %v329 = vadd.f32 0.0, %v328
      %330 = vmatprep.mubr.f32.mxu0 0.0
      %331 = vmatmul.mubr.f32.gmra.mrb[0].mxu0 %v201
      %v332 = vpop.f32.mrb[0].mxu0
      %v333 = vadd.f32 0.0, %v332
      %v334 = vpop.f32.mrb[0].mxu0
      %v335 = vadd.f32 0.0, %v334
      %336 = vmatprep.mubr.f32.mxu0 0.0
      %337 = vmatmul.mubr.f32.gmra.mrb[0].mxu0 %v204
      %v338 = vpop.f32.mrb[0].mxu0
      %v339 = vadd.f32 0.0, %v338
      %v340 = vpop.f32.mrb[0].mxu0
      %v341 = vadd.f32 0.0, %v340
      %342 = vmatprep.mubr.f32.mxu0 0.0
      %343 = vmatmul.mubr.f32.gmra.mrb[0].mxu0 %v207
      %v344 = vpop.f32.mrb[0].mxu0
      %v345 = vadd.f32 0.0, %v344
      %v346 = vpop.f32.mrb[0].mxu0
      %v347 = vadd.f32 0.0, %v346
      %348 = vmatprep.mubr.f32.mxu0 0.0
      %349 = vmatmul.mubr.f32.gmra.mrb[0].mxu0 %v210
      %v350 = vpop.f32.mrb[0].mxu0
      %v351 = vadd.f32 0.0, %v350
      %v352 = vpop.f32.mrb[0].mxu0
      %v353 = vadd.f32 0.0, %v352
      %354 = vmatprep.mubr.f32.mxu0 0.0
      %355 = vmatmul.mubr.f32.gmra.mrb[0].mxu0 %v213
      %v356 = vpop.f32.mrb[0].mxu0
      %v357 = vadd.f32 0.0, %v356
      %v358 = vpop.f32.mrb[0].mxu0
      %v359 = vadd.f32 0.0, %v358
      %360 = vmatprep.mubr.f32.mxu0 0.0
      %361 = vmatmul.mubr.f32.gmra.mrb[0].mxu0 %v216
      %v362 = vpop.f32.mrb[0].mxu0
      %v363 = vadd.f32 0.0, %v362
      %v364 = vpop.f32.mrb[0].mxu0
      %v365 = vadd.f32 0.0, %v364
      %366 = vmatprep.mubr.f32.mxu0 0.0
      %367 = vmatmul.mubr.f32.gmra.mrb[0].mxu0 %v219
      %v368 = vpop.f32.mrb[0].mxu0
      %v369 = vadd.f32 0.0, %v368
      %v370 = vpop.f32.mrb[0].mxu0
      %v371 = vadd.f32 0.0, %v370
      %372 = vmatprep.mubr.f32.mxu0 0.0
      %373 = vmatmul.mubr.f32.gmra.mrb[0].mxu0 %v222
      %v374 = vpop.f32.mrb[0].mxu0
      %v375 = vadd.f32 0.0, %v374
      %v376 = vpop.f32.mrb[0].mxu0
      %v377 = vadd.f32 0.0, %v376
      %378 = vmatprep.mubr.f32.mxu0 0.0
      %379 = vmatmul.mubr.f32.gmra.mrb[0].mxu0 %v225
      %v380 = vpop.f32.mrb[0].mxu0
      %v381 = vadd.f32 0.0, %v380
      %v382 = vpop.f32.mrb[0].mxu0
      %v383 = vadd.f32 0.0, %v382
      %384 = vmatprep.mubr.f32.mxu0 0.0
      %385 = vmatmul.mubr.f32.gmra.mrb[0].mxu0 %v228
      %v386 = vpop.f32.mrb[0].mxu0
      %v387 = vadd.f32 0.0, %v386
      %v388 = vpop.f32.mrb[0].mxu0
      %v389 = vadd.f32 0.0, %v388
      %390 = vdwg.mxu0
      %v391 = vpack.c.bf16 %v303, %v297
      %v392 = vpack.c.bf16 %v305, %v299
      %v393 = vpack.c.bf16 %v315, %v309
      %v394 = vpack.c.bf16 %v317, %v311
      %v395 = vpack.c.bf16 %v327, %v321
      %v396 = vpack.c.bf16 %v329, %v323
      %v397 = vpack.c.bf16 %v339, %v333
      %v398 = vpack.c.bf16 %v341, %v335
      %v399 = vpack.c.bf16 %v351, %v345
      %v400 = vpack.c.bf16 %v353, %v347
      %v401 = vpack.c.bf16 %v363, %v357
      %v402 = vpack.c.bf16 %v365, %v359
      %v403 = vpack.c.bf16 %v375, %v369
      %v404 = vpack.c.bf16 %v377, %v371
      %v405 = vpack.c.bf16 %v387, %v381
      %v406 = vpack.c.bf16 %v389, %v383
      %v423 = vunpack.c.l.b16 %v391
      %v424 = vunpack.c.l.b16 %v392
      %v425 = vunpack.c.h.b16 %v391
      %v426 = vunpack.c.h.b16 %v392
      %v427 = vunpack.c.l.b16 %v393
      %v428 = vunpack.c.l.b16 %v394
      %v429 = vunpack.c.h.b16 %v393
      %v430 = vunpack.c.h.b16 %v394
      %v431 = vunpack.c.l.b16 %v395
      %v432 = vunpack.c.l.b16 %v396
      %v433 = vunpack.c.h.b16 %v395
      %v434 = vunpack.c.h.b16 %v396
      %v435 = vunpack.c.l.b16 %v397
      %v436 = vunpack.c.l.b16 %v398
      %v437 = vunpack.c.h.b16 %v397
      %v438 = vunpack.c.h.b16 %v398
      %v439 = vunpack.c.l.b16 %v399
      %v440 = vunpack.c.l.b16 %v400
      %v441 = vunpack.c.h.b16 %v399
      %v442 = vunpack.c.h.b16 %v400
      %v443 = vunpack.c.l.b16 %v401
      %v444 = vunpack.c.l.b16 %v402
      %v445 = vunpack.c.h.b16 %v401
      %v446 = vunpack.c.h.b16 %v402
      %v447 = vunpack.c.l.b16 %v403
      %v448 = vunpack.c.l.b16 %v404
      %v449 = vunpack.c.h.b16 %v403
      %v450 = vunpack.c.h.b16 %v404
      %v451 = vunpack.c.l.b16 %v405
      %v452 = vunpack.c.l.b16 %v406
      %v453 = vunpack.c.h.b16 %v405
      %v454 = vunpack.c.h.b16 %v406
      %v455 = vpack.c.b16 %v424, %v423
      %v456 = vpack.c.b16 %v426, %v425
      %v457 = vpack.c.b16 %v428, %v427
      %v458 = vpack.c.b16 %v430, %v429
      %v459 = vpack.c.b16 %v432, %v431
      %v460 = vpack.c.b16 %v434, %v433
      %v461 = vpack.c.b16 %v436, %v435
      %v462 = vpack.c.b16 %v438, %v437
      %v463 = vpack.c.b16 %v440, %v439
      %v464 = vpack.c.b16 %v442, %v441
      %v465 = vpack.c.b16 %v444, %v443
      %v466 = vpack.c.b16 %v446, %v445
      %v467 = vpack.c.b16 %v448, %v447
      %v468 = vpack.c.b16 %v450, %v449
      %v469 = vpack.c.b16 %v452, %v451
      %v470 = vpack.c.b16 %v454, %v453
      %vm487 = vcmask 1043456
      %vm488 = vcmask 523268
      %vm489 = vmor %vm488, %vm487
      %490 = vst.msk [vmem:[%s147] sm:$0xff] %vm489, %v455
      %491 = vst.msk [vmem:[%s147 + $0x8] sm:$0xff] %vm489, %v456
      %492 = vst.msk [vmem:[%s147 + $0x10] sm:$0xff] %vm489, %v457
      %493 = vst.msk [vmem:[%s147 + $0x18] sm:$0xff] %vm489, %v458
      %494 = vst.msk [vmem:[%s147 + $0x20] sm:$0xff] %vm489, %v459
      %495 = vst.msk [vmem:[%s147 + $0x28] sm:$0xff] %vm489, %v460
      %496 = vst.msk [vmem:[%s147 + $0x30] sm:$0xff] %vm489, %v461
      %497 = vst.msk [vmem:[%s147 + $0x38] sm:$0xff] %vm489, %v462
      %498 = vst.msk [vmem:[%s147 + $0x40] sm:$0xff] %vm489, %v463
      %499 = vst.msk [vmem:[%s147 + $0x48] sm:$0xff] %vm489, %v464
      %500 = vst.msk [vmem:[%s147 + $0x50] sm:$0xff] %vm489, %v465
      %501 = vst.msk [vmem:[%s147 + $0x58] sm:$0xff] %vm489, %v466
      %502 = vst.msk [vmem:[%s147 + $0x60] sm:$0xff] %vm489, %v467
      %503 = vst.msk [vmem:[%s147 + $0x68] sm:$0xff] %vm489, %v468
      %504 = vst.msk [vmem:[%s147 + $0x70] sm:$0xff] %vm489, %v469
      %505 = vst.msk [vmem:[%s147 + $0x78] sm:$0xff] %vm489, %v470
      %s506 = smul.u32 16, %s13
      %p507 = scmp.lt.s32.totalorder %s506, 31
      %s508 = scalar_select %p507, %s506, 31
      %s509 = smul.addr %s508, 2
      %s510 = smul.addr %s509, 4
      %s511 = scalar_lea.vmem %s2, %s510
      // Predicated region
      $region29: #{graph_transformer_layer.4} parent=27 // pred_check
        %p512 = pneg %p78
      $region30: #{graph_transformer_layer.4} parent=27 // pred_check_branch
        %514 = sbr.rel (%p512) target = $region32
      $region31: #{graph_transformer_layer.4} parent=27 // pred_region
        %s515 = smul.u32 16, %s13
      $region32: #{graph_transformer_layer.4} parent=27 // pred_fallthru
        _
    $region28: #{graph_transformer_layer.4} parent=5 // pred_fallthru
      _
    %p516 = scmp.le.s32.totalorder 2, %s8
    // Predicated region
    $region33: #{graph_transformer_layer.4} parent=5 // pred_check
      %p517 = pneg %p516
    $region34: #{graph_transformer_layer.4} parent=5 // pred_check_branch
      %519 = sbr.rel (%p517) target = $region36
    $region35: #{graph_transformer_layer.4} parent=5 // pred_region
      %s520 = ssub.s32 %s8, 2
      // Predicated region
      $region37: #{graph_transformer_layer.4} parent=35 // pred_check
        %p521 = pneg %p84
      $region38: #{graph_transformer_layer.4} parent=35 // pred_check_branch
        %523 = sbr.rel (%p521) target = $region40
      $region39: #{graph_transformer_layer.4} parent=35 // pred_region
        %s524 = smul.u32 16, %s14
        %p525 = scmp.lt.s32.totalorder %s524, 31
        %s526 = scalar_select %p525, %s524, 31
        %s527 = smul.addr %s526, 2
        %s528 = smul.addr %s527, 4
        %s529 = scalar_lea.vmem %s2, %s528
      $region40: #{graph_transformer_layer.4} parent=35 // pred_fallthru
        _
    $region36: #{graph_transformer_layer.4} parent=5 // pred_fallthru
      _
  $region6: #{graph_transformer_layer.4} parent=0 // loop_footer
    %s12 = sadd.s32 1, %s8
  $region7: #{graph_transformer_layer.4} parent=0 // loop_footer_branch
    %7 = sbr.rel target = $region3
  $region8: #{graph_transformer_layer.4} parent=0 // loop_exit
    _

// kernel: graph_transformer_layer.7
$region0: #{graph_transformer_layer.7}
  #allocation0 [shape = 'u32[]', space=smem, size = 0x4, offset = 0x4, fixed_abs, tag = 'smem constant byte address 0x4 - core index']
  #allocation1 [shape = 'u32[144,128]{1,0:T(1,128)}', space=vmem, size = 0x12000, scoped, tag = 'internal scratch']
  %s0 = inlined_call_operand.vmem [shape: f32[256,64], index: 0, kind: input, shape index: {}]
  %s1 = inlined_call_operand.vmem [shape: f32[1,64], index: 1, kind: input, shape index: {}]
  %s2 = inlined_call_operand.vmem [shape: f32[1,64], index: 2, kind: input, shape index: {}]
  %s3 = inlined_call_operand.vmem [shape: f32[256,64], index: 3, kind: output, shape index: {}]
  %s4 = sld [smem:[#allocation0]]
  $region45: #{graph_transformer_layer.7} parent=0
    _
  %s6 = ssub.s32 1, %s4
  %s7 = scalar_select 0, %s6, %s4
  loop: start=0, step=1, limit=4
  $region2: #{graph_transformer_layer.7} parent=0 // loop_pre_header
    _
  $region3: #{graph_transformer_layer.7} parent=0 // loop_header
    %s9 = sphi 0, %s13
    %p10 = scmp.ge.s32.totalorder %s9, 4
    %s19 = sphi 0, %s21
    %s22 = sphi 0, %s19
    %s23 = sphi 0, %s22
    %s39 = sphi 0, %s23
    %s43 = sphi 0, %s43
    %s45 = sphi 0, %s43
    %s46 = sphi 0, %s45
    %s60 = sphi 0, %s46
    %s64 = sphi 0, %s64
    %s66 = sphi 0, %s64
    %s67 = sphi 0, %s66
    %s81 = sphi 0, %s67
    %s87 = sphi 0, %s89
    %s90 = sphi 0, %s87
    %s91 = sphi 0, %s90
    %s107 = sphi 0, %s91
  $region4: #{graph_transformer_layer.7} parent=0 // loop_header_branch
    %12 = sbr.rel (%p10) target = $region8
  $region5: #{graph_transformer_layer.7} parent=0 // loop_body
    %s14 = ssub.s32 %s9, 1
    %s15 = ssub.s32 %s9, 2
    %s16 = sadd.s32 %s9, 1
    %s17 = ssub.s32 %s9, %s16
    %p18 = scmp.eq.s32.totalorder %s17, 0
    %s20 = sadd.s32 %s19, 1
    %s21 = scalar_select %p18, %s19, %s20
    %p24 = pneg %p18
    %p25 = scmp.eq.s32.totalorder %s9, 1
    %p26 = por %p24, %p25
    %p27 = scmp.ne.s32.totalorder %s19, %s22
    %p28 = scmp.eq.s32.totalorder %s9, 0
    %p29 = por %p27, %p28
    %p30 = scmp.ne.s32.totalorder %s19, %s22
    %p31 = scmp.eq.s32.totalorder %s14, 1
    %p32 = por %p30, %p31
    %p33 = scmp.ne.s32.totalorder %s22, %s23
    %p34 = scmp.eq.s32.totalorder %s14, 0
    %p35 = por %p33, %p34
    %p36 = scmp.ne.s32.totalorder %s22, %s23
    %p37 = scmp.eq.s32.totalorder %s15, 1
    %p38 = por %p36, %p37
    %p40 = scmp.ne.s32.totalorder %s23, %s39
    %p41 = scmp.eq.s32.totalorder %s15, 0
    %p42 = por %p40, %p41
    %s44 = sadd.s32 %s43, 1
    %p47 = scmp.eq.s32.totalorder %s9, 1
    %p48 = scmp.ne.s32.totalorder %s43, %s45
    %p49 = scmp.eq.s32.totalorder %s9, 0
    %p50 = por %p48, %p49
    %p51 = scmp.ne.s32.totalorder %s43, %s45
    %p52 = scmp.eq.s32.totalorder %s14, 1
    %p53 = por %p51, %p52
    %p54 = scmp.ne.s32.totalorder %s45, %s46
    %p55 = scmp.eq.s32.totalorder %s14, 0
    %p56 = por %p54, %p55
    %p57 = scmp.ne.s32.totalorder %s45, %s46
    %p58 = scmp.eq.s32.totalorder %s15, 1
    %p59 = por %p57, %p58
    %p61 = scmp.ne.s32.totalorder %s46, %s60
    %p62 = scmp.eq.s32.totalorder %s15, 0
    %p63 = por %p61, %p62
    %s65 = sadd.s32 %s64, 1
    %p68 = scmp.eq.s32.totalorder %s9, 1
    %p69 = scmp.ne.s32.totalorder %s64, %s66
    %p70 = scmp.eq.s32.totalorder %s9, 0
    %p71 = por %p69, %p70
    %p72 = scmp.ne.s32.totalorder %s64, %s66
    %p73 = scmp.eq.s32.totalorder %s14, 1
    %p74 = por %p72, %p73
    %p75 = scmp.ne.s32.totalorder %s66, %s67
    %p76 = scmp.eq.s32.totalorder %s14, 0
    %p77 = por %p75, %p76
    %p78 = scmp.ne.s32.totalorder %s66, %s67
    %p79 = scmp.eq.s32.totalorder %s15, 1
    %p80 = por %p78, %p79
    %p82 = scmp.ne.s32.totalorder %s67, %s81
    %p83 = scmp.eq.s32.totalorder %s15, 0
    %p84 = por %p82, %p83
    %s85 = ssub.s32 %s9, %s16
    %p86 = scmp.eq.s32.totalorder %s85, 0
    %s88 = sadd.s32 %s87, 1
    %s89 = scalar_select %p86, %s87, %s88
    %p92 = pneg %p86
    %p93 = scmp.eq.s32.totalorder %s9, 1
    %p94 = por %p92, %p93
    %p95 = scmp.ne.s32.totalorder %s87, %s90
    %p96 = scmp.eq.s32.totalorder %s9, 0
    %p97 = por %p95, %p96
    %p98 = scmp.ne.s32.totalorder %s87, %s90
    %p99 = scmp.eq.s32.totalorder %s14, 1
    %p100 = por %p98, %p99
    %p101 = scmp.ne.s32.totalorder %s90, %s91
    %p102 = scmp.eq.s32.totalorder %s14, 0
    %p103 = por %p101, %p102
    %p104 = scmp.ne.s32.totalorder %s90, %s91
    %p105 = scmp.eq.s32.totalorder %s15, 1
    %p106 = por %p104, %p105
    %p108 = scmp.ne.s32.totalorder %s91, %s107
    %p109 = scmp.eq.s32.totalorder %s15, 0
    %p110 = por %p108, %p109
    %p111 = scmp.le.s32.totalorder 1, %s9
    %p112 = scmp.lt.s32.totalorder %s9, 3
    %p113 = pnand %p111, %p112
    %p114 = pneg %p113
    // Predicated region
    $region9: #{graph_transformer_layer.7} parent=5 // pred_check
      _
    $region10: #{graph_transformer_layer.7} parent=5 // pred_check_branch
      %116 = sbr.rel (%p113) target = $region12
    $region11: #{graph_transformer_layer.7} parent=5 // pred_region
      %s117 = ssub.s32 %s9, 1
      // Predicated region
      $region13: #{graph_transformer_layer.7} parent=11 // pred_check
        %p118 = pneg %p56
      $region14: #{graph_transformer_layer.7} parent=11 // pred_check_branch
        %120 = sbr.rel (%p118) target = $region16
      $region15: #{graph_transformer_layer.7} parent=11 // pred_region
        _
      $region16: #{graph_transformer_layer.7} parent=11 // pred_fallthru
        _
      // Predicated region
      $region17: #{graph_transformer_layer.7} parent=11 // pred_check
        %p121 = pneg %p77
      $region18: #{graph_transformer_layer.7} parent=11 // pred_check_branch
        %123 = sbr.rel (%p121) target = $region20
      $region19: #{graph_transformer_layer.7} parent=11 // pred_region
        _
      $region20: #{graph_transformer_layer.7} parent=11 // pred_fallthru
        _
    $region12: #{graph_transformer_layer.7} parent=5 // pred_fallthru
      _
    %p124 = scmp.lt.s32.totalorder %s9, 2
    // Predicated region
    $region21: #{graph_transformer_layer.7} parent=5 // pred_check
      %p125 = pneg %p124
    $region22: #{graph_transformer_layer.7} parent=5 // pred_check_branch
      %127 = sbr.rel (%p125) target = $region24
    $region23: #{graph_transformer_layer.7} parent=5 // pred_region
      // Predicated region
      $region25: #{graph_transformer_layer.7} parent=23 // pred_check
        %p128 = pneg %p29
      $region26: #{graph_transformer_layer.7} parent=23 // pred_check_branch
        %130 = sbr.rel (%p128) target = $region28
      $region27: #{graph_transformer_layer.7} parent=23 // pred_region
        %s131 = smul.u32 16, %s9
        %p132 = scmp.lt.s32.totalorder %s131, 31
        %s133 = scalar_select %p132, %s131, 31
        %s134 = smul.addr %s133, 8
        %s135 = scalar_lea.vmem %s0, %s134
        %s136 = smul.u32 16, %s9
      $region28: #{graph_transformer_layer.7} parent=23 // pred_fallthru
        _
    $region24: #{graph_transformer_layer.7} parent=5 // pred_fallthru
      _
    %p137 = scmp.le.s32.totalorder 1, %s9
    %p138 = scmp.lt.s32.totalorder %s9, 3
    %p139 = pnand %p137, %p138
    %p140 = pneg %p139
    // Predicated region
    $region29: #{graph_transformer_layer.7} parent=5 // pred_check
      _
    $region30: #{graph_transformer_layer.7} parent=5 // pred_check_branch
      %142 = sbr.rel (%p139) target = $region32
    $region31: #{graph_transformer_layer.7} parent=5 // pred_region
      %s143 = ssub.s32 %s9, 1
      %s144 = smul.u32 16, %s14
      %p145 = scmp.lt.s32.totalorder %s144, 31
      %s146 = scalar_select %p145, %s144, 31
      %s147 = smul.addr %s146, 8
      %s148 = scalar_lea.vmem %s0, %s147
      %p149 = pneg %p35
      %p150 = pneg %p32
      %p151 = pneg %p56
      %p152 = pneg %p53
      %p153 = pneg %p77
      %p154 = pneg %p74
      %p155 = pneg %p103
      %p156 = pneg %p100
      %s157 = smul.u32 16, %s14
      %p158 = scmp.lt.s32.totalorder %s157, 31
      %s159 = scalar_select %p158, %s157, 31
      %s160 = smul.addr %s159, 8
      %s161 = scalar_lea.vmem %s3, %s160
      %s162 = smul.u32 16, %s14
      %p163 = scmp.lt.s32.totalorder %s162, 31
      %s164 = scalar_select %p163, %s162, 31
      %s165 = smul.addr %s164, 8
      %s166 = scalar_lea.vmem %s0, %s165
      %s167 = smul.u32 16, %s14
      %s168 = smul.u32 16, %s14
      %p169 = scmp.lt.s32.totalorder %s168, 31
      %s170 = scalar_select %p169, %s168, 31
      %s171 = smul.addr %s170, 8
      %s172 = scalar_lea.vmem %s3, %s171
      %s173 = smul.u32 16, %s14
      %v174 = vld [vmem:[%s166] sm:$0xff]
      %v175 = vld [vmem:[%s166 + $0x8] sm:$0xff]
      %v176 = vld [vmem:[%s166 + $0x10] sm:$0xff]
      %v177 = vld [vmem:[%s166 + $0x18] sm:$0xff]
      %v178 = vld [vmem:[%s166 + $0x20] sm:$0xff]
      %v179 = vld [vmem:[%s166 + $0x28] sm:$0xff]
      %v180 = vld [vmem:[%s166 + $0x30] sm:$0xff]
      %v181 = vld [vmem:[%s166 + $0x38] sm:$0xff]
      %v182 = vld [vmem:[%s166 + $0x40] sm:$0xff]
      %v183 = vld [vmem:[%s166 + $0x48] sm:$0xff]
      %v184 = vld [vmem:[%s166 + $0x50] sm:$0xff]
      %v185 = vld [vmem:[%s166 + $0x58] sm:$0xff]
      %v186 = vld [vmem:[%s166 + $0x60] sm:$0xff]
      %v187 = vld [vmem:[%s166 + $0x68] sm:$0xff]
      %v188 = vld [vmem:[%s166 + $0x70] sm:$0xff]
      %v189 = vld [vmem:[%s166 + $0x78] sm:$0xff]
      %v190 = vld [vmem:[%s1] sm:$0x1]
      %v192 = vlaneseq
      %v193 = vshrl.u32 %v192, 7
      %v194 = vsub.s32 0, %v193
      %v195 = vrot.slane %v190, %v194
      %v197 = vmul.f32 %v174, %v195
      %v198 = vmul.f32 %v175, %v195
      %v199 = vmul.f32 %v176, %v195
      %v200 = vmul.f32 %v177, %v195
      %v201 = vmul.f32 %v178, %v195
      %v202 = vmul.f32 %v179, %v195
      %v203 = vmul.f32 %v180, %v195
      %v204 = vmul.f32 %v181, %v195
      %v205 = vmul.f32 %v182, %v195
      %v206 = vmul.f32 %v183, %v195
      %v207 = vmul.f32 %v184, %v195
      %v208 = vmul.f32 %v185, %v195
      %v209 = vmul.f32 %v186, %v195
      %v210 = vmul.f32 %v187, %v195
      %v211 = vmul.f32 %v188, %v195
      %v212 = vmul.f32 %v189, %v195
      %v213 = vld [vmem:[%s2] sm:$0x1]
      %v215 = vlaneseq
      %v216 = vshrl.u32 %v215, 7
      %v217 = vsub.s32 0, %v216
      %v218 = vrot.slane %v213, %v217
      %v220 = vadd.f32 %v197, %v218
      %v221 = vadd.f32 %v198, %v218
      %v222 = vadd.f32 %v199, %v218
      %v223 = vadd.f32 %v200, %v218
      %v224 = vadd.f32 %v201, %v218
      %v225 = vadd.f32 %v202, %v218
      %v226 = vadd.f32 %v203, %v218
      %v227 = vadd.f32 %v204, %v218
      %v228 = vadd.f32 %v205, %v218
      %v229 = vadd.f32 %v206, %v218
      %v230 = vadd.f32 %v207, %v218
      %v231 = vadd.f32 %v208, %v218
      %v232 = vadd.f32 %v209, %v218
      %v233 = vadd.f32 %v210, %v218
      %v234 = vadd.f32 %v211, %v218
      %v235 = vadd.f32 %v212, %v218
      %vm236 = vcmask 523264
      %237 = vst.msk [vmem:[%s172] sm:$0xff] %vm236, %v220
      %238 = vst.msk [vmem:[%s172 + $0x8] sm:$0xff] %vm236, %v221
      %239 = vst.msk [vmem:[%s172 + $0x10] sm:$0xff] %vm236, %v222
      %240 = vst.msk [vmem:[%s172 + $0x18] sm:$0xff] %vm236, %v223
      %241 = vst.msk [vmem:[%s172 + $0x20] sm:$0xff] %vm236, %v224
      %242 = vst.msk [vmem:[%s172 + $0x28] sm:$0xff] %vm236, %v225
      %243 = vst.msk [vmem:[%s172 + $0x30] sm:$0xff] %vm236, %v226
      %244 = vst.msk [vmem:[%s172 + $0x38] sm:$0xff] %vm236, %v227
      %245 = vst.msk [vmem:[%s172 + $0x40] sm:$0xff] %vm236, %v228
      %246 = vst.msk [vmem:[%s172 + $0x48] sm:$0xff] %vm236, %v229
      %247 = vst.msk [vmem:[%s172 + $0x50] sm:$0xff] %vm236, %v230
      %248 = vst.msk [vmem:[%s172 + $0x58] sm:$0xff] %vm236, %v231
      %249 = vst.msk [vmem:[%s172 + $0x60] sm:$0xff] %vm236, %v232
      %250 = vst.msk [vmem:[%s172 + $0x68] sm:$0xff] %vm236, %v233
      %251 = vst.msk [vmem:[%s172 + $0x70] sm:$0xff] %vm236, %v234
      %252 = vst.msk [vmem:[%s172 + $0x78] sm:$0xff] %vm236, %v235
      %s253 = smul.u32 16, %s14
      %p254 = scmp.lt.s32.totalorder %s253, 31
      %s255 = scalar_select %p254, %s253, 31
      %s256 = smul.addr %s255, 8
      %s257 = scalar_lea.vmem %s3, %s256
      // Predicated region
      $region33: #{graph_transformer_layer.7} parent=31 // pred_check
        %p258 = pneg %p100
      $region34: #{graph_transformer_layer.7} parent=31 // pred_check_branch
        %260 = sbr.rel (%p258) target = $region36
      $region35: #{graph_transformer_layer.7} parent=31 // pred_region
        %s261 = smul.u32 16, %s14
      $region36: #{graph_transformer_layer.7} parent=31 // pred_fallthru
        _
    $region32: #{graph_transformer_layer.7} parent=5 // pred_fallthru
      _
    %p262 = scmp.le.s32.totalorder 2, %s9
    // Predicated region
    $region37: #{graph_transformer_layer.7} parent=5 // pred_check
      %p263 = pneg %p262
    $region38: #{graph_transformer_layer.7} parent=5 // pred_check_branch
      %265 = sbr.rel (%p263) target = $region40
    $region39: #{graph_transformer_layer.7} parent=5 // pred_region
      %s266 = ssub.s32 %s9, 2
      // Predicated region
      $region41: #{graph_transformer_layer.7} parent=39 // pred_check
        %p267 = pneg %p106
      $region42: #{graph_transformer_layer.7} parent=39 // pred_check_branch
        %269 = sbr.rel (%p267) target = $region44
      $region43: #{graph_transformer_layer.7} parent=39 // pred_region
        %s270 = smul.u32 16, %s15
        %p271 = scmp.lt.s32.totalorder %s270, 31
        %s272 = scalar_select %p271, %s270, 31
        %s273 = smul.addr %s272, 8
        %s274 = scalar_lea.vmem %s3, %s273
      $region44: #{graph_transformer_layer.7} parent=39 // pred_fallthru
        _
    $region40: #{graph_transformer_layer.7} parent=5 // pred_fallthru
      _
  $region6: #{graph_transformer_layer.7} parent=0 // loop_footer
    %s13 = sadd.s32 1, %s9
  $region7: #{graph_transformer_layer.7} parent=0 // loop_footer_branch
    %8 = sbr.rel target = $region3
  $region8: #{graph_transformer_layer.7} parent=0 // loop_exit
    _

// kernel: graph_transformer_layer.6
$region0: #{graph_transformer_layer.6}
  #allocation0 [shape = 'u32[]', space=smem, size = 0x4, offset = 0x4, fixed_abs, tag = 'smem constant byte address 0x4 - core index']
  #allocation1 [shape = 'u32[144,128]{1,0:T(1,128)}', space=vmem, size = 0x12000, scoped, tag = 'internal scratch']
  %s0 = inlined_call_operand.vmem [shape: f32[256,64], index: 0, kind: input, shape index: {}]
  %s1 = inlined_call_operand.vmem [shape: f32[1,64], index: 1, kind: input, shape index: {}]
  %s2 = inlined_call_operand.vmem [shape: f32[1,64], index: 2, kind: input, shape index: {}]
  %s3 = inlined_call_operand.vmem [shape: f32[64,128], index: 3, kind: input, shape index: {}]
  %s4 = inlined_call_operand.vmem [shape: f32[1,128], index: 4, kind: input, shape index: {}]
  %s5 = inlined_call_operand.vmem [shape: f32[128,64], index: 5, kind: input, shape index: {}]
  %s6 = inlined_call_operand.vmem [shape: f32[1,64], index: 6, kind: input, shape index: {}]
  %s7 = inlined_call_operand.vmem [shape: f32[256,64], index: 7, kind: output, shape index: {}]
  %s8 = sld [smem:[#allocation0]]
  $region61: #{graph_transformer_layer.6} parent=0
    _
  %s10 = ssub.s32 1, %s8
  %s11 = scalar_select 0, %s10, %s8
  loop: start=0, step=1, limit=4
  $region2: #{graph_transformer_layer.6} parent=0 // loop_pre_header
    _
  $region3: #{graph_transformer_layer.6} parent=0 // loop_header
    %s13 = sphi 0, %s17
    %p14 = scmp.ge.s32.totalorder %s13, 4
    %s23 = sphi 0, %s25
    %s26 = sphi 0, %s23
    %s27 = sphi 0, %s26
    %s43 = sphi 0, %s27
    %s47 = sphi 0, %s47
    %s49 = sphi 0, %s47
    %s50 = sphi 0, %s49
    %s64 = sphi 0, %s50
    %s68 = sphi 0, %s68
    %s70 = sphi 0, %s68
    %s71 = sphi 0, %s70
    %s85 = sphi 0, %s71
    %s89 = sphi 0, %s89
    %s91 = sphi 0, %s89
    %s92 = sphi 0, %s91
    %s106 = sphi 0, %s92
    %s110 = sphi 0, %s110
    %s112 = sphi 0, %s110
    %s113 = sphi 0, %s112
    %s127 = sphi 0, %s113
    %s131 = sphi 0, %s131
    %s133 = sphi 0, %s131
    %s134 = sphi 0, %s133
    %s148 = sphi 0, %s134
    %s152 = sphi 0, %s152
    %s154 = sphi 0, %s152
    %s155 = sphi 0, %s154
    %s169 = sphi 0, %s155
    %s175 = sphi 0, %s177
    %s178 = sphi 0, %s175
    %s179 = sphi 0, %s178
    %s195 = sphi 0, %s179
  $region4: #{graph_transformer_layer.6} parent=0 // loop_header_branch
    %16 = sbr.rel (%p14) target = $region8
  $region5: #{graph_transformer_layer.6} parent=0 // loop_body
    %s18 = ssub.s32 %s13, 1
    %s19 = ssub.s32 %s13, 2
    %s20 = sadd.s32 %s13, 1
    %s21 = ssub.s32 %s13, %s20
    %p22 = scmp.eq.s32.totalorder %s21, 0
    %s24 = sadd.s32 %s23, 1
    %s25 = scalar_select %p22, %s23, %s24
    %p28 = pneg %p22
    %p29 = scmp.eq.s32.totalorder %s13, 1
    %p30 = por %p28, %p29
    %p31 = scmp.ne.s32.totalorder %s23, %s26
    %p32 = scmp.eq.s32.totalorder %s13, 0
    %p33 = por %p31, %p32
    %p34 = scmp.ne.s32.totalorder %s23, %s26
    %p35 = scmp.eq.s32.totalorder %s18, 1
    %p36 = por %p34, %p35
    %p37 = scmp.ne.s32.totalorder %s26, %s27
    %p38 = scmp.eq.s32.totalorder %s18, 0
    %p39 = por %p37, %p38
    %p40 = scmp.ne.s32.totalorder %s26, %s27
    %p41 = scmp.eq.s32.totalorder %s19, 1
    %p42 = por %p40, %p41
    %p44 = scmp.ne.s32.totalorder %s27, %s43
    %p45 = scmp.eq.s32.totalorder %s19, 0
    %p46 = por %p44, %p45
    %s48 = sadd.s32 %s47, 1
    %p51 = scmp.eq.s32.totalorder %s13, 1
    %p52 = scmp.ne.s32.totalorder %s47, %s49
    %p53 = scmp.eq.s32.totalorder %s13, 0
    %p54 = por %p52, %p53
    %p55 = scmp.ne.s32.totalorder %s47, %s49
    %p56 = scmp.eq.s32.totalorder %s18, 1
    %p57 = por %p55, %p56
    %p58 = scmp.ne.s32.totalorder %s49, %s50
    %p59 = scmp.eq.s32.totalorder %s18, 0
    %p60 = por %p58, %p59
    %p61 = scmp.ne.s32.totalorder %s49, %s50
    %p62 = scmp.eq.s32.totalorder %s19, 1
    %p63 = por %p61, %p62
    %p65 = scmp.ne.s32.totalorder %s50, %s64
    %p66 = scmp.eq.s32.totalorder %s19, 0
    %p67 = por %p65, %p66
    %s69 = sadd.s32 %s68, 1
    %p72 = scmp.eq.s32.totalorder %s13, 1
    %p73 = scmp.ne.s32.totalorder %s68, %s70
    %p74 = scmp.eq.s32.totalorder %s13, 0
    %p75 = por %p73, %p74
    %p76 = scmp.ne.s32.totalorder %s68, %s70
    %p77 = scmp.eq.s32.totalorder %s18, 1
    %p78 = por %p76, %p77
    %p79 = scmp.ne.s32.totalorder %s70, %s71
    %p80 = scmp.eq.s32.totalorder %s18, 0
    %p81 = por %p79, %p80
    %p82 = scmp.ne.s32.totalorder %s70, %s71
    %p83 = scmp.eq.s32.totalorder %s19, 1
    %p84 = por %p82, %p83
    %p86 = scmp.ne.s32.totalorder %s71, %s85
    %p87 = scmp.eq.s32.totalorder %s19, 0
    %p88 = por %p86, %p87
    %s90 = sadd.s32 %s89, 1
    %p93 = scmp.eq.s32.totalorder %s13, 1
    %p94 = scmp.ne.s32.totalorder %s89, %s91
    %p95 = scmp.eq.s32.totalorder %s13, 0
    %p96 = por %p94, %p95
    %p97 = scmp.ne.s32.totalorder %s89, %s91
    %p98 = scmp.eq.s32.totalorder %s18, 1
    %p99 = por %p97, %p98
    %p100 = scmp.ne.s32.totalorder %s91, %s92
    %p101 = scmp.eq.s32.totalorder %s18, 0
    %p102 = por %p100, %p101
    %p103 = scmp.ne.s32.totalorder %s91, %s92
    %p104 = scmp.eq.s32.totalorder %s19, 1
    %p105 = por %p103, %p104
    %p107 = scmp.ne.s32.totalorder %s92, %s106
    %p108 = scmp.eq.s32.totalorder %s19, 0
    %p109 = por %p107, %p108
    %s111 = sadd.s32 %s110, 1
    %p114 = scmp.eq.s32.totalorder %s13, 1
    %p115 = scmp.ne.s32.totalorder %s110, %s112
    %p116 = scmp.eq.s32.totalorder %s13, 0
    %p117 = por %p115, %p116
    %p118 = scmp.ne.s32.totalorder %s110, %s112
    %p119 = scmp.eq.s32.totalorder %s18, 1
    %p120 = por %p118, %p119
    %p121 = scmp.ne.s32.totalorder %s112, %s113
    %p122 = scmp.eq.s32.totalorder %s18, 0
    %p123 = por %p121, %p122
    %p124 = scmp.ne.s32.totalorder %s112, %s113
    %p125 = scmp.eq.s32.totalorder %s19, 1
    %p126 = por %p124, %p125
    %p128 = scmp.ne.s32.totalorder %s113, %s127
    %p129 = scmp.eq.s32.totalorder %s19, 0
    %p130 = por %p128, %p129
    %s132 = sadd.s32 %s131, 1
    %p135 = scmp.eq.s32.totalorder %s13, 1
    %p136 = scmp.ne.s32.totalorder %s131, %s133
    %p137 = scmp.eq.s32.totalorder %s13, 0
    %p138 = por %p136, %p137
    %p139 = scmp.ne.s32.totalorder %s131, %s133
    %p140 = scmp.eq.s32.totalorder %s18, 1
    %p141 = por %p139, %p140
    %p142 = scmp.ne.s32.totalorder %s133, %s134
    %p143 = scmp.eq.s32.totalorder %s18, 0
    %p144 = por %p142, %p143
    %p145 = scmp.ne.s32.totalorder %s133, %s134
    %p146 = scmp.eq.s32.totalorder %s19, 1
    %p147 = por %p145, %p146
    %p149 = scmp.ne.s32.totalorder %s134, %s148
    %p150 = scmp.eq.s32.totalorder %s19, 0
    %p151 = por %p149, %p150
    %s153 = sadd.s32 %s152, 1
    %p156 = scmp.eq.s32.totalorder %s13, 1
    %p157 = scmp.ne.s32.totalorder %s152, %s154
    %p158 = scmp.eq.s32.totalorder %s13, 0
    %p159 = por %p157, %p158
    %p160 = scmp.ne.s32.totalorder %s152, %s154
    %p161 = scmp.eq.s32.totalorder %s18, 1
    %p162 = por %p160, %p161
    %p163 = scmp.ne.s32.totalorder %s154, %s155
    %p164 = scmp.eq.s32.totalorder %s18, 0
    %p165 = por %p163, %p164
    %p166 = scmp.ne.s32.totalorder %s154, %s155
    %p167 = scmp.eq.s32.totalorder %s19, 1
    %p168 = por %p166, %p167
    %p170 = scmp.ne.s32.totalorder %s155, %s169
    %p171 = scmp.eq.s32.totalorder %s19, 0
    %p172 = por %p170, %p171
    %s173 = ssub.s32 %s13, %s20
    %p174 = scmp.eq.s32.totalorder %s173, 0
    %s176 = sadd.s32 %s175, 1
    %s177 = scalar_select %p174, %s175, %s176
    %p180 = pneg %p174
    %p181 = scmp.eq.s32.totalorder %s13, 1
    %p182 = por %p180, %p181
    %p183 = scmp.ne.s32.totalorder %s175, %s178
    %p184 = scmp.eq.s32.totalorder %s13, 0
    %p185 = por %p183, %p184
    %p186 = scmp.ne.s32.totalorder %s175, %s178
    %p187 = scmp.eq.s32.totalorder %s18, 1
    %p188 = por %p186, %p187
    %p189 = scmp.ne.s32.totalorder %s178, %s179
    %p190 = scmp.eq.s32.totalorder %s18, 0
    %p191 = por %p189, %p190
    %p192 = scmp.ne.s32.totalorder %s178, %s179
    %p193 = scmp.eq.s32.totalorder %s19, 1
    %p194 = por %p192, %p193
    %p196 = scmp.ne.s32.totalorder %s179, %s195
    %p197 = scmp.eq.s32.totalorder %s19, 0
    %p198 = por %p196, %p197
    %p199 = scmp.le.s32.totalorder 1, %s13
    %p200 = scmp.lt.s32.totalorder %s13, 3
    %p201 = pnand %p199, %p200
    %p202 = pneg %p201
    // Predicated region
    $region9: #{graph_transformer_layer.6} parent=5 // pred_check
      _
    $region10: #{graph_transformer_layer.6} parent=5 // pred_check_branch
      %204 = sbr.rel (%p201) target = $region12
    $region11: #{graph_transformer_layer.6} parent=5 // pred_region
      %s205 = ssub.s32 %s13, 1
      // Predicated region
      $region13: #{graph_transformer_layer.6} parent=11 // pred_check
        %p206 = pneg %p60
      $region14: #{graph_transformer_layer.6} parent=11 // pred_check_branch
        %208 = sbr.rel (%p206) target = $region16
      $region15: #{graph_transformer_layer.6} parent=11 // pred_region
        _
      $region16: #{graph_transformer_layer.6} parent=11 // pred_fallthru
        _
      // Predicated region
      $region17: #{graph_transformer_layer.6} parent=11 // pred_check
        %p209 = pneg %p81
      $region18: #{graph_transformer_layer.6} parent=11 // pred_check_branch
        %211 = sbr.rel (%p209) target = $region20
      $region19: #{graph_transformer_layer.6} parent=11 // pred_region
        _
      $region20: #{graph_transformer_layer.6} parent=11 // pred_fallthru
        _
      // Predicated region
      $region21: #{graph_transformer_layer.6} parent=11 // pred_check
        %p212 = pneg %p102
      $region22: #{graph_transformer_layer.6} parent=11 // pred_check_branch
        %214 = sbr.rel (%p212) target = $region24
      $region23: #{graph_transformer_layer.6} parent=11 // pred_region
        _
      $region24: #{graph_transformer_layer.6} parent=11 // pred_fallthru
        _
      // Predicated region
      $region25: #{graph_transformer_layer.6} parent=11 // pred_check
        %p215 = pneg %p123
      $region26: #{graph_transformer_layer.6} parent=11 // pred_check_branch
        %217 = sbr.rel (%p215) target = $region28
      $region27: #{graph_transformer_layer.6} parent=11 // pred_region
        _
      $region28: #{graph_transformer_layer.6} parent=11 // pred_fallthru
        _
      // Predicated region
      $region29: #{graph_transformer_layer.6} parent=11 // pred_check
        %p218 = pneg %p144
      $region30: #{graph_transformer_layer.6} parent=11 // pred_check_branch
        %220 = sbr.rel (%p218) target = $region32
      $region31: #{graph_transformer_layer.6} parent=11 // pred_region
        _
      $region32: #{graph_transformer_layer.6} parent=11 // pred_fallthru
        _
      // Predicated region
      $region33: #{graph_transformer_layer.6} parent=11 // pred_check
        %p221 = pneg %p165
      $region34: #{graph_transformer_layer.6} parent=11 // pred_check_branch
        %223 = sbr.rel (%p221) target = $region36
      $region35: #{graph_transformer_layer.6} parent=11 // pred_region
        _
      $region36: #{graph_transformer_layer.6} parent=11 // pred_fallthru
        _
    $region12: #{graph_transformer_layer.6} parent=5 // pred_fallthru
      _
    %p224 = scmp.lt.s32.totalorder %s13, 2
    // Predicated region
    $region37: #{graph_transformer_layer.6} parent=5 // pred_check
      %p225 = pneg %p224
    $region38: #{graph_transformer_layer.6} parent=5 // pred_check_branch
      %227 = sbr.rel (%p225) target = $region40
    $region39: #{graph_transformer_layer.6} parent=5 // pred_region
      // Predicated region
      $region41: #{graph_transformer_layer.6} parent=39 // pred_check
        %p228 = pneg %p33
      $region42: #{graph_transformer_layer.6} parent=39 // pred_check_branch
        %230 = sbr.rel (%p228) target = $region44
      $region43: #{graph_transformer_layer.6} parent=39 // pred_region
        %s231 = smul.u32 16, %s13
        %p232 = scmp.lt.s32.totalorder %s231, 31
        %s233 = scalar_select %p232, %s231, 31
        %s234 = smul.addr %s233, 8
        %s235 = scalar_lea.vmem %s0, %s234
        %s236 = smul.u32 16, %s13
      $region44: #{graph_transformer_layer.6} parent=39 // pred_fallthru
        _
    $region40: #{graph_transformer_layer.6} parent=5 // pred_fallthru
      _
    %p237 = scmp.le.s32.totalorder 1, %s13
    %p238 = scmp.lt.s32.totalorder %s13, 3
    %p239 = pnand %p237, %p238
    %p240 = pneg %p239
    // Predicated region
    $region45: #{graph_transformer_layer.6} parent=5 // pred_check
      _
    $region46: #{graph_transformer_layer.6} parent=5 // pred_check_branch
      %242 = sbr.rel (%p239) target = $region48
    $region47: #{graph_transformer_layer.6} parent=5 // pred_region
      %s243 = ssub.s32 %s13, 1
      %s244 = smul.u32 16, %s18
      %p245 = scmp.lt.s32.totalorder %s244, 31
      %s246 = scalar_select %p245, %s244, 31
      %s247 = smul.addr %s246, 8
      %s248 = scalar_lea.vmem %s0, %s247
      %p249 = pneg %p39
      %p250 = pneg %p36
      %p251 = pneg %p60
      %p252 = pneg %p57
      %p253 = pneg %p81
      %p254 = pneg %p78
      %p255 = pneg %p102
      %p256 = pneg %p99
      %p257 = pneg %p123
      %p258 = pneg %p120
      %p259 = pneg %p144
      %p260 = pneg %p141
      %p261 = pneg %p165
      %p262 = pneg %p162
      %p263 = pneg %p191
      %p264 = pneg %p188
      %s265 = smul.u32 16, %s18
      %p266 = scmp.lt.s32.totalorder %s265, 31
      %s267 = scalar_select %p266, %s265, 31
      %s268 = smul.addr %s267, 8
      %s269 = scalar_lea.vmem %s7, %s268
      %s270 = smul.u32 16, %s18
      %p271 = scmp.lt.s32.totalorder %s270, 31
      %s272 = scalar_select %p271, %s270, 31
      %s273 = smul.addr %s272, 8
      %s274 = scalar_lea.vmem %s0, %s273
      %s275 = smul.u32 16, %s18
      %s276 = smul.u32 16, %s18
      %p277 = scmp.lt.s32.totalorder %s276, 31
      %s278 = scalar_select %p277, %s276, 31
      %s279 = smul.addr %s278, 8
      %s280 = scalar_lea.vmem %s7, %s279
      %s281 = smul.u32 16, %s18
      %v282 = vld [vmem:[%s274] sm:$0xff]
      %v283 = vld [vmem:[%s274 + $0x8] sm:$0xff]
      %v284 = vld [vmem:[%s274 + $0x10] sm:$0xff]
      %v285 = vld [vmem:[%s274 + $0x18] sm:$0xff]
      %v286 = vld [vmem:[%s274 + $0x20] sm:$0xff]
      %v287 = vld [vmem:[%s274 + $0x28] sm:$0xff]
      %v288 = vld [vmem:[%s274 + $0x30] sm:$0xff]
      %v289 = vld [vmem:[%s274 + $0x38] sm:$0xff]
      %v290 = vld [vmem:[%s274 + $0x40] sm:$0xff]
      %v291 = vld [vmem:[%s274 + $0x48] sm:$0xff]
      %v292 = vld [vmem:[%s274 + $0x50] sm:$0xff]
      %v293 = vld [vmem:[%s274 + $0x58] sm:$0xff]
      %v294 = vld [vmem:[%s274 + $0x60] sm:$0xff]
      %v295 = vld [vmem:[%s274 + $0x68] sm:$0xff]
      %v296 = vld [vmem:[%s274 + $0x70] sm:$0xff]
      %v297 = vld [vmem:[%s274 + $0x78] sm:$0xff]
      %v298 = vld [vmem:[%s1] sm:$0x1]
      %v300 = vlaneseq
      %v301 = vshrl.u32 %v300, 7
      %v302 = vsub.s32 0, %v301
      %v303 = vrot.slane %v298, %v302
      %v305 = vmul.f32 %v282, %v303
      %v306 = vmul.f32 %v283, %v303
      %v307 = vmul.f32 %v284, %v303
      %v308 = vmul.f32 %v285, %v303
      %v309 = vmul.f32 %v286, %v303
      %v310 = vmul.f32 %v287, %v303
      %v311 = vmul.f32 %v288, %v303
      %v312 = vmul.f32 %v289, %v303
      %v313 = vmul.f32 %v290, %v303
      %v314 = vmul.f32 %v291, %v303
      %v315 = vmul.f32 %v292, %v303
      %v316 = vmul.f32 %v293, %v303
      %v317 = vmul.f32 %v294, %v303
      %v318 = vmul.f32 %v295, %v303
      %v319 = vmul.f32 %v296, %v303
      %v320 = vmul.f32 %v297, %v303
      %v321 = vld [vmem:[%s2] sm:$0x1]
      %v323 = vlaneseq
      %v324 = vshrl.u32 %v323, 7
      %v325 = vsub.s32 0, %v324
      %v326 = vrot.slane %v321, %v325
      %v328 = vadd.f32 %v305, %v326
      %v329 = vadd.f32 %v306, %v326
      %v330 = vadd.f32 %v307, %v326
      %v331 = vadd.f32 %v308, %v326
      %v332 = vadd.f32 %v309, %v326
      %v333 = vadd.f32 %v310, %v326
      %v334 = vadd.f32 %v311, %v326
      %v335 = vadd.f32 %v312, %v326
      %v336 = vadd.f32 %v313, %v326
      %v337 = vadd.f32 %v314, %v326
      %v338 = vadd.f32 %v315, %v326
      %v339 = vadd.f32 %v316, %v326
      %v340 = vadd.f32 %v317, %v326
      %v341 = vadd.f32 %v318, %v326
      %v342 = vadd.f32 %v319, %v326
      %v343 = vadd.f32 %v320, %v326
      %v344 = vld [vmem:[%s3] sm:$0xff]
      %v345 = vld [vmem:[%s3 + $0x8] sm:$0xff]
      %v346 = vld [vmem:[%s3 + $0x10] sm:$0xff]
      %v347 = vld [vmem:[%s3 + $0x18] sm:$0xff]
      %v348 = vld [vmem:[%s3 + $0x20] sm:$0xff]
      %v349 = vld [vmem:[%s3 + $0x28] sm:$0xff]
      %v350 = vld [vmem:[%s3 + $0x30] sm:$0xff]
      %v351 = vld [vmem:[%s3 + $0x38] sm:$0xff]
      %v352 = vld [vmem:[%s4] sm:$0x1]
      %v354 = vlaneseq
      %v355 = vshrl.u32 %v354, 7
      %v356 = vsub.s32 0, %v355
      %v357 = vrot.slane %v352, %v356
      %vm359 = vcmask 523264
      %v361 = vsel %vm359, %v328, 0
      %v364 = vsel %vm359, %v329, 0
      %v367 = vsel %vm359, %v330, 0
      %v370 = vsel %vm359, %v331, 0
      %v373 = vsel %vm359, %v332, 0
      %v376 = vsel %vm359, %v333, 0
      %v379 = vsel %vm359, %v334, 0
      %v382 = vsel %vm359, %v335, 0
      %v385 = vsel %vm359, %v336, 0
      %v388 = vsel %vm359, %v337, 0
      %v391 = vsel %vm359, %v338, 0
      %v394 = vsel %vm359, %v339, 0
      %v397 = vsel %vm359, %v340, 0
      %v400 = vsel %vm359, %v341, 0
      %v403 = vsel %vm359, %v342, 0
      %v406 = vsel %vm359, %v343, 0
      %408 = vmatprep.subr.mxu0 0.0
      %409 = vmatpush1.msra.mxu0 %v344
      %410 = vmatprep.subr.mxu0 0.0
      %411 = vmatpush1.msra.mxu0 %v345
      %412 = vmatprep.subr.mxu0 0.0
      %413 = vmatpush1.msra.mxu0 %v346
      %414 = vmatprep.subr.mxu0 0.0
      %415 = vmatpush1.msra.mxu0 %v347
      %416 = vmatprep.subr.mxu0 0.0
      %417 = vmatpush1.msra.mxu0 %v348
      %418 = vmatprep.subr.mxu0 0.0
      %419 = vmatpush1.msra.mxu0 %v349
      %420 = vmatprep.subr.mxu0 0.0
      %421 = vmatpush1.msra.mxu0 %v350
      %422 = vmatprep.subr.mxu0 0.0
      %423 = vmatpush1.msra.mxu0 %v351
      %424 = vmatprep.subr.mxu0 0.0
      %425 = vmatpush1.msra.mxu0 0.0
      %426 = vmatprep.subr.mxu0 0.0
      %427 = vmatpush1.msra.mxu0 0.0
      %428 = vmatprep.subr.mxu0 0.0
      %429 = vmatpush1.msra.mxu0 0.0
      %430 = vmatprep.subr.mxu0 0.0
      %431 = vmatpush1.msra.mxu0 0.0
      %432 = vmatprep.subr.mxu0 0.0
      %433 = vmatpush1.msra.mxu0 0.0
      %434 = vmatprep.subr.mxu0 0.0
      %435 = vmatpush1.msra.mxu0 0.0
      %436 = vmatprep.subr.mxu0 0.0
      %437 = vmatpush1.msra.mxu0 0.0
      %438 = vmatprep.subr.mxu0 0.0
      %439 = vmatpush1.msra.mxu0 0.0
      %440 = vmatprep.subr.mxu0 0.0
      %441 = vmatpush1.msra.mxu0 0.0
      %442 = vmatprep.subr.mxu0 0.0
      %443 = vmatpush1.msra.mxu0 0.0
      %444 = vmatprep.subr.mxu0 0.0
      %445 = vmatpush1.msra.mxu0 0.0
      %446 = vmatprep.subr.mxu0 0.0
      %447 = vmatpush1.msra.mxu0 0.0
      %448 = vmatprep.subr.mxu0 0.0
      %449 = vmatpush1.msra.mxu0 0.0
      %450 = vmatprep.subr.mxu0 0.0
      %451 = vmatpush1.msra.mxu0 0.0
      %452 = vmatprep.subr.mxu0 0.0
      %453 = vmatpush1.msra.mxu0 0.0
      %454 = vmatprep.subr.mxu0 0.0
      %455 = vmatpush1.msra.mxu0 0.0
      %456 = vmatprep.subr.mxu0 0.0
      %457 = vmatpush1.msra.mxu0 0.0
      %458 = vmatprep.subr.mxu0 0.0
      %459 = vmatpush1.msra.mxu0 0.0
      %460 = vmatprep.subr.mxu0 0.0
      %461 = vmatpush1.msra.mxu0 0.0
      %462 = vmatprep.subr.mxu0 0.0
      %463 = vmatpush1.msra.mxu0 0.0
      %464 = vmatprep.subr.mxu0 0.0
      %465 = vmatpush1.msra.mxu0 0.0
      %466 = vmatprep.subr.mxu0 0.0
      %467 = vmatpush1.msra.mxu0 0.0
      %468 = vmatprep.subr.mxu0 0.0
      %469 = vmatpush1.msra.mxu0 0.0
      %470 = vmatprep.subr.mxu0 0.0
      %471 = vmatpush1.msra.mxu0 0.0
      %472 = vmatprep.mubr.f32.mxu0 0.0
      %473 = vmatmul.mubr.f32.gmra.mrb[0].mxu0 %v361
      %v474 = vpop.f32.mrb[0].mxu0
      %v475 = vadd.f32 %v357, %v474
      %v476 = vpop.f32.mrb[0].mxu0
      %477 = vmatprep.mubr.f32.mxu0 0.0
      %478 = vmatmul.mubr.f32.gmra.mrb[0].mxu0 %v364
      %v479 = vpop.f32.mrb[0].mxu0
      %v480 = vadd.f32 %v357, %v479
      %v481 = vpop.f32.mrb[0].mxu0
      %482 = vmatprep.mubr.f32.mxu0 0.0
      %483 = vmatmul.mubr.f32.gmra.mrb[0].mxu0 %v367
      %v484 = vpop.f32.mrb[0].mxu0
      %v485 = vadd.f32 %v357, %v484
      %v486 = vpop.f32.mrb[0].mxu0
      %487 = vmatprep.mubr.f32.mxu0 0.0
      %488 = vmatmul.mubr.f32.gmra.mrb[0].mxu0 %v370
      %v489 = vpop.f32.mrb[0].mxu0
      %v490 = vadd.f32 %v357, %v489
      %v491 = vpop.f32.mrb[0].mxu0
      %492 = vmatprep.mubr.f32.mxu0 0.0
      %493 = vmatmul.mubr.f32.gmra.mrb[0].mxu0 %v373
      %v494 = vpop.f32.mrb[0].mxu0
      %v495 = vadd.f32 %v357, %v494
      %v496 = vpop.f32.mrb[0].mxu0
      %497 = vmatprep.mubr.f32.mxu0 0.0
      %498 = vmatmul.mubr.f32.gmra.mrb[0].mxu0 %v376
      %v499 = vpop.f32.mrb[0].mxu0
      %v500 = vadd.f32 %v357, %v499
      %v501 = vpop.f32.mrb[0].mxu0
      %502 = vmatprep.mubr.f32.mxu0 0.0
      %503 = vmatmul.mubr.f32.gmra.mrb[0].mxu0 %v379
      %v504 = vpop.f32.mrb[0].mxu0
      %v505 = vadd.f32 %v357, %v504
      %v506 = vpop.f32.mrb[0].mxu0
      %507 = vmatprep.mubr.f32.mxu0 0.0
      %508 = vmatmul.mubr.f32.gmra.mrb[0].mxu0 %v382
      %v509 = vpop.f32.mrb[0].mxu0
      %v510 = vadd.f32 %v357, %v509
      %v511 = vpop.f32.mrb[0].mxu0
      %512 = vmatprep.mubr.f32.mxu0 0.0
      %513 = vmatmul.mubr.f32.gmra.mrb[0].mxu0 %v385
      %v514 = vpop.f32.mrb[0].mxu0
      %v515 = vadd.f32 %v357, %v514
      %v516 = vpop.f32.mrb[0].mxu0
      %517 = vmatprep.mubr.f32.mxu0 0.0
      %518 = vmatmul.mubr.f32.gmra.mrb[0].mxu0 %v388
      %v519 = vpop.f32.mrb[0].mxu0
      %v520 = vadd.f32 %v357, %v519
      %v521 = vpop.f32.mrb[0].mxu0
      %522 = vmatprep.mubr.f32.mxu0 0.0
      %523 = vmatmul.mubr.f32.gmra.mrb[0].mxu0 %v391
      %v524 = vpop.f32.mrb[0].mxu0
      %v525 = vadd.f32 %v357, %v524
      %v526 = vpop.f32.mrb[0].mxu0
      %527 = vmatprep.mubr.f32.mxu0 0.0
      %528 = vmatmul.mubr.f32.gmra.mrb[0].mxu0 %v394
      %v529 = vpop.f32.mrb[0].mxu0
      %v530 = vadd.f32 %v357, %v529
      %v531 = vpop.f32.mrb[0].mxu0
      %532 = vmatprep.mubr.f32.mxu0 0.0
      %533 = vmatmul.mubr.f32.gmra.mrb[0].mxu0 %v397
      %v534 = vpop.f32.mrb[0].mxu0
      %v535 = vadd.f32 %v357, %v534
      %v536 = vpop.f32.mrb[0].mxu0
      %537 = vmatprep.mubr.f32.mxu0 0.0
      %538 = vmatmul.mubr.f32.gmra.mrb[0].mxu0 %v400
      %v539 = vpop.f32.mrb[0].mxu0
      %v540 = vadd.f32 %v357, %v539
      %v541 = vpop.f32.mrb[0].mxu0
      %542 = vmatprep.mubr.f32.mxu0 0.0
      %543 = vmatmul.mubr.f32.gmra.mrb[0].mxu0 %v403
      %v544 = vpop.f32.mrb[0].mxu0
      %v545 = vadd.f32 %v357, %v544
      %v546 = vpop.f32.mrb[0].mxu0
      %547 = vmatprep.mubr.f32.mxu0 0.0
      %548 = vmatmul.mubr.f32.gmra.mrb[0].mxu0 %v406
      %v549 = vpop.f32.mrb[0].mxu0
      %v550 = vadd.f32 %v357, %v549
      %v551 = vpop.f32.mrb[0].mxu0
      %552 = vdwg.mxu0
      %v553 = vmax.f32 %v475, 0.0
      %v554 = vmax.f32 %v480, 0.0
      %v555 = vmax.f32 %v485, 0.0
      %v556 = vmax.f32 %v490, 0.0
      %v557 = vmax.f32 %v495, 0.0
      %v558 = vmax.f32 %v500, 0.0
      %v559 = vmax.f32 %v505, 0.0
      %v560 = vmax.f32 %v510, 0.0
      %v561 = vmax.f32 %v515, 0.0
      %v562 = vmax.f32 %v520, 0.0
      %v563 = vmax.f32 %v525, 0.0
      %v564 = vmax.f32 %v530, 0.0
      %v565 = vmax.f32 %v535, 0.0
      %v566 = vmax.f32 %v540, 0.0
      %v567 = vmax.f32 %v545, 0.0
      %v568 = vmax.f32 %v550, 0.0
      %v569 = vld [vmem:[%s5] sm:$0xff]
      %v570 = vld [vmem:[%s5 + $0x8] sm:$0xff]
      %v571 = vld [vmem:[%s5 + $0x10] sm:$0xff]
      %v572 = vld [vmem:[%s5 + $0x18] sm:$0xff]
      %v573 = vld [vmem:[%s5 + $0x20] sm:$0xff]
      %v574 = vld [vmem:[%s5 + $0x28] sm:$0xff]
      %v575 = vld [vmem:[%s5 + $0x30] sm:$0xff]
      %v576 = vld [vmem:[%s5 + $0x38] sm:$0xff]
      %v577 = vld [vmem:[%s5 + $0x40] sm:$0xff]
      %v578 = vld [vmem:[%s5 + $0x48] sm:$0xff]
      %v579 = vld [vmem:[%s5 + $0x50] sm:$0xff]
      %v580 = vld [vmem:[%s5 + $0x58] sm:$0xff]
      %v581 = vld [vmem:[%s5 + $0x60] sm:$0xff]
      %v582 = vld [vmem:[%s5 + $0x68] sm:$0xff]
      %v583 = vld [vmem:[%s5 + $0x70] sm:$0xff]
      %v584 = vld [vmem:[%s5 + $0x78] sm:$0xff]
      %585 = vmatprep.subr.mxu0 0.0
      %586 = vmatpush1.msra.mxu0 %v569
      %587 = vmatprep.subr.mxu0 0.0
      %588 = vmatpush1.msra.mxu0 %v570
      %589 = vmatprep.subr.mxu0 0.0
      %590 = vmatpush1.msra.mxu0 %v571
      %591 = vmatprep.subr.mxu0 0.0
      %592 = vmatpush1.msra.mxu0 %v572
      %593 = vmatprep.subr.mxu0 0.0
      %594 = vmatpush1.msra.mxu0 %v573
      %595 = vmatprep.subr.mxu0 0.0
      %596 = vmatpush1.msra.mxu0 %v574
      %597 = vmatprep.subr.mxu0 0.0
      %598 = vmatpush1.msra.mxu0 %v575
      %599 = vmatprep.subr.mxu0 0.0
      %600 = vmatpush1.msra.mxu0 %v576
      %601 = vmatprep.subr.mxu0 0.0
      %602 = vmatpush1.msra.mxu0 %v577
      %603 = vmatprep.subr.mxu0 0.0
      %604 = vmatpush1.msra.mxu0 %v578
      %605 = vmatprep.subr.mxu0 0.0
      %606 = vmatpush1.msra.mxu0 %v579
      %607 = vmatprep.subr.mxu0 0.0
      %608 = vmatpush1.msra.mxu0 %v580
      %609 = vmatprep.subr.mxu0 0.0
      %610 = vmatpush1.msra.mxu0 %v581
      %611 = vmatprep.subr.mxu0 0.0
      %612 = vmatpush1.msra.mxu0 %v582
      %613 = vmatprep.subr.mxu0 0.0
      %614 = vmatpush1.msra.mxu0 %v583
      %615 = vmatprep.subr.mxu0 0.0
      %616 = vmatpush1.msra.mxu0 %v584
      %617 = vmatprep.subr.mxu0 0.0
      %618 = vmatpush1.msra.mxu0 0.0
      %619 = vmatprep.subr.mxu0 0.0
      %620 = vmatpush1.msra.mxu0 0.0
      %621 = vmatprep.subr.mxu0 0.0
      %622 = vmatpush1.msra.mxu0 0.0
      %623 = vmatprep.subr.mxu0 0.0
      %624 = vmatpush1.msra.mxu0 0.0
      %625 = vmatprep.subr.mxu0 0.0
      %626 = vmatpush1.msra.mxu0 0.0
      %627 = vmatprep.subr.mxu0 0.0
      %628 = vmatpush1.msra.mxu0 0.0
      %629 = vmatprep.subr.mxu0 0.0
      %630 = vmatpush1.msra.mxu0 0.0
      %631 = vmatprep.subr.mxu0 0.0
      %632 = vmatpush1.msra.mxu0 0.0
      %633 = vmatprep.subr.mxu0 0.0
      %634 = vmatpush1.msra.mxu0 0.0
      %635 = vmatprep.subr.mxu0 0.0
      %636 = vmatpush1.msra.mxu0 0.0
      %637 = vmatprep.subr.mxu0 0.0
      %638 = vmatpush1.msra.mxu0 0.0
      %639 = vmatprep.subr.mxu0 0.0
      %640 = vmatpush1.msra.mxu0 0.0
      %641 = vmatprep.subr.mxu0 0.0
      %642 = vmatpush1.msra.mxu0 0.0
      %643 = vmatprep.subr.mxu0 0.0
      %644 = vmatpush1.msra.mxu0 0.0
      %645 = vmatprep.subr.mxu0 0.0
      %646 = vmatpush1.msra.mxu0 0.0
      %647 = vmatprep.subr.mxu0 0.0
      %648 = vmatpush1.msra.mxu0 0.0
      %649 = vmatprep.mubr.f32.mxu0 0.0
      %650 = vmatmul.mubr.f32.gmra.mrb[0].mxu0 %v553
      %v651 = vpop.f32.mrb[0].mxu0
      %v652 = vadd.f32 0.0, %v651
      %v653 = vpop.f32.mrb[0].mxu0
      %654 = vmatprep.mubr.f32.mxu0 0.0
      %655 = vmatmul.mubr.f32.gmra.mrb[0].mxu0 %v554
      %v656 = vpop.f32.mrb[0].mxu0
      %v657 = vadd.f32 0.0, %v656
      %v658 = vpop.f32.mrb[0].mxu0
      %659 = vmatprep.mubr.f32.mxu0 0.0
      %660 = vmatmul.mubr.f32.gmra.mrb[0].mxu0 %v555
      %v661 = vpop.f32.mrb[0].mxu0
      %v662 = vadd.f32 0.0, %v661
      %v663 = vpop.f32.mrb[0].mxu0
      %664 = vmatprep.mubr.f32.mxu0 0.0
      %665 = vmatmul.mubr.f32.gmra.mrb[0].mxu0 %v556
      %v666 = vpop.f32.mrb[0].mxu0
      %v667 = vadd.f32 0.0, %v666
      %v668 = vpop.f32.mrb[0].mxu0
      %669 = vmatprep.mubr.f32.mxu0 0.0
      %670 = vmatmul.mubr.f32.gmra.mrb[0].mxu0 %v557
      %v671 = vpop.f32.mrb[0].mxu0
      %v672 = vadd.f32 0.0, %v671
      %v673 = vpop.f32.mrb[0].mxu0
      %674 = vmatprep.mubr.f32.mxu0 0.0
      %675 = vmatmul.mubr.f32.gmra.mrb[0].mxu0 %v558
      %v676 = vpop.f32.mrb[0].mxu0
      %v677 = vadd.f32 0.0, %v676
      %v678 = vpop.f32.mrb[0].mxu0
      %679 = vmatprep.mubr.f32.mxu0 0.0
      %680 = vmatmul.mubr.f32.gmra.mrb[0].mxu0 %v559
      %v681 = vpop.f32.mrb[0].mxu0
      %v682 = vadd.f32 0.0, %v681
      %v683 = vpop.f32.mrb[0].mxu0
      %684 = vmatprep.mubr.f32.mxu0 0.0
      %685 = vmatmul.mubr.f32.gmra.mrb[0].mxu0 %v560
      %v686 = vpop.f32.mrb[0].mxu0
      %v687 = vadd.f32 0.0, %v686
      %v688 = vpop.f32.mrb[0].mxu0
      %689 = vmatprep.mubr.f32.mxu0 0.0
      %690 = vmatmul.mubr.f32.gmra.mrb[0].mxu0 %v561
      %v691 = vpop.f32.mrb[0].mxu0
      %v692 = vadd.f32 0.0, %v691
      %v693 = vpop.f32.mrb[0].mxu0
      %694 = vmatprep.mubr.f32.mxu0 0.0
      %695 = vmatmul.mubr.f32.gmra.mrb[0].mxu0 %v562
      %v696 = vpop.f32.mrb[0].mxu0
      %v697 = vadd.f32 0.0, %v696
      %v698 = vpop.f32.mrb[0].mxu0
      %699 = vmatprep.mubr.f32.mxu0 0.0
      %700 = vmatmul.mubr.f32.gmra.mrb[0].mxu0 %v563
      %v701 = vpop.f32.mrb[0].mxu0
      %v702 = vadd.f32 0.0, %v701
      %v703 = vpop.f32.mrb[0].mxu0
      %704 = vmatprep.mubr.f32.mxu0 0.0
      %705 = vmatmul.mubr.f32.gmra.mrb[0].mxu0 %v564
      %v706 = vpop.f32.mrb[0].mxu0
      %v707 = vadd.f32 0.0, %v706
      %v708 = vpop.f32.mrb[0].mxu0
      %709 = vmatprep.mubr.f32.mxu0 0.0
      %710 = vmatmul.mubr.f32.gmra.mrb[0].mxu0 %v565
      %v711 = vpop.f32.mrb[0].mxu0
      %v712 = vadd.f32 0.0, %v711
      %v713 = vpop.f32.mrb[0].mxu0
      %714 = vmatprep.mubr.f32.mxu0 0.0
      %715 = vmatmul.mubr.f32.gmra.mrb[0].mxu0 %v566
      %v716 = vpop.f32.mrb[0].mxu0
      %v717 = vadd.f32 0.0, %v716
      %v718 = vpop.f32.mrb[0].mxu0
      %719 = vmatprep.mubr.f32.mxu0 0.0
      %720 = vmatmul.mubr.f32.gmra.mrb[0].mxu0 %v567
      %v721 = vpop.f32.mrb[0].mxu0
      %v722 = vadd.f32 0.0, %v721
      %v723 = vpop.f32.mrb[0].mxu0
      %724 = vmatprep.mubr.f32.mxu0 0.0
      %725 = vmatmul.mubr.f32.gmra.mrb[0].mxu0 %v568
      %v726 = vpop.f32.mrb[0].mxu0
      %v727 = vadd.f32 0.0, %v726
      %v728 = vpop.f32.mrb[0].mxu0
      %729 = vdwg.mxu0
      %v730 = vadd.f32 %v328, %v652
      %v731 = vadd.f32 %v329, %v657
      %v732 = vadd.f32 %v330, %v662
      %v733 = vadd.f32 %v331, %v667
      %v734 = vadd.f32 %v332, %v672
      %v735 = vadd.f32 %v333, %v677
      %v736 = vadd.f32 %v334, %v682
      %v737 = vadd.f32 %v335, %v687
      %v738 = vadd.f32 %v336, %v692
      %v739 = vadd.f32 %v337, %v697
      %v740 = vadd.f32 %v338, %v702
      %v741 = vadd.f32 %v339, %v707
      %v742 = vadd.f32 %v340, %v712
      %v743 = vadd.f32 %v341, %v717
      %v744 = vadd.f32 %v342, %v722
      %v745 = vadd.f32 %v343, %v727
      %v746 = vld [vmem:[%s6] sm:$0x1]
      %v748 = vlaneseq
      %v749 = vshrl.u32 %v748, 7
      %v750 = vsub.s32 0, %v749
      %v751 = vrot.slane %v746, %v750
      %v753 = vadd.f32 %v730, %v751
      %v754 = vadd.f32 %v731, %v751
      %v755 = vadd.f32 %v732, %v751
      %v756 = vadd.f32 %v733, %v751
      %v757 = vadd.f32 %v734, %v751
      %v758 = vadd.f32 %v735, %v751
      %v759 = vadd.f32 %v736, %v751
      %v760 = vadd.f32 %v737, %v751
      %v761 = vadd.f32 %v738, %v751
      %v762 = vadd.f32 %v739, %v751
      %v763 = vadd.f32 %v740, %v751
      %v764 = vadd.f32 %v741, %v751
      %v765 = vadd.f32 %v742, %v751
      %v766 = vadd.f32 %v743, %v751
      %v767 = vadd.f32 %v744, %v751
      %v768 = vadd.f32 %v745, %v751
      %769 = vst.msk [vmem:[%s280] sm:$0xff] %vm359, %v753
      %770 = vst.msk [vmem:[%s280 + $0x8] sm:$0xff] %vm359, %v754
      %771 = vst.msk [vmem:[%s280 + $0x10] sm:$0xff] %vm359, %v755
      %772 = vst.msk [vmem:[%s280 + $0x18] sm:$0xff] %vm359, %v756
      %773 = vst.msk [vmem:[%s280 + $0x20] sm:$0xff] %vm359, %v757
      %774 = vst.msk [vmem:[%s280 + $0x28] sm:$0xff] %vm359, %v758
      %775 = vst.msk [vmem:[%s280 + $0x30] sm:$0xff] %vm359, %v759
      %776 = vst.msk [vmem:[%s280 + $0x38] sm:$0xff] %vm359, %v760
      %777 = vst.msk [vmem:[%s280 + $0x40] sm:$0xff] %vm359, %v761
      %778 = vst.msk [vmem:[%s280 + $0x48] sm:$0xff] %vm359, %v762
      %779 = vst.msk [vmem:[%s280 + $0x50] sm:$0xff] %vm359, %v763
      %780 = vst.msk [vmem:[%s280 + $0x58] sm:$0xff] %vm359, %v764
      %781 = vst.msk [vmem:[%s280 + $0x60] sm:$0xff] %vm359, %v765
      %782 = vst.msk [vmem:[%s280 + $0x68] sm:$0xff] %vm359, %v766
      %783 = vst.msk [vmem:[%s280 + $0x70] sm:$0xff] %vm359, %v767
      %784 = vst.msk [vmem:[%s280 + $0x78] sm:$0xff] %vm359, %v768
      %s785 = smul.u32 16, %s18
      %p786 = scmp.lt.s32.totalorder %s785, 31
      %s787 = scalar_select %p786, %s785, 31
      %s788 = smul.addr %s787, 8
      %s789 = scalar_lea.vmem %s7, %s788
      // Predicated region
      $region49: #{graph_transformer_layer.6} parent=47 // pred_check
        %p790 = pneg %p188
      $region50: #{graph_transformer_layer.6} parent=47 // pred_check_branch
        %792 = sbr.rel (%p790) target = $region52
      $region51: #{graph_transformer_layer.6} parent=47 // pred_region
        %s793 = smul.u32 16, %s18
      $region52: #{graph_transformer_layer.6} parent=47 // pred_fallthru
        _
    $region48: #{graph_transformer_layer.6} parent=5 // pred_fallthru
      _
    %p794 = scmp.le.s32.totalorder 2, %s13
    // Predicated region
    $region53: #{graph_transformer_layer.6} parent=5 // pred_check
      %p795 = pneg %p794
    $region54: #{graph_transformer_layer.6} parent=5 // pred_check_branch
      %797 = sbr.rel (%p795) target = $region56
    $region55: #{graph_transformer_layer.6} parent=5 // pred_region
      %s798 = ssub.s32 %s13, 2
      // Predicated region
      $region57: #{graph_transformer_layer.6} parent=55 // pred_check
        %p799 = pneg %p194
      $region58: #{graph_transformer_layer.6} parent=55 // pred_check_branch
        %801 = sbr.rel (%p799) target = $region60
      $region59: #{graph_transformer_layer.6} parent=55 // pred_region
        %s802 = smul.u32 16, %s19
        %p803 = scmp.lt.s32.totalorder %s802, 31
        %s804 = scalar_select %p803, %s802, 31
        %s805 = smul.addr %s804, 8
        %s806 = scalar_lea.vmem %s7, %s805
      $region60: #{graph_transformer_layer.6} parent=55 // pred_fallthru
        _
    $region56: #{graph_transformer_layer.6} parent=5 // pred_fallthru
      _
  $region6: #{graph_transformer_layer.6} parent=0 // loop_footer
    %s17 = sadd.s32 1, %s13
  $region7: #{graph_transformer_layer.6} parent=0 // loop_footer_branch
    %12 = sbr.rel target = $region3
  $region8: #{graph_transformer_layer.6} parent=0 // loop_exit
    _

// kernel: graph_transformer_layer.5
$region0: #{graph_transformer_layer.5}
  #allocation0 [shape = 'u32[]', space=smem, size = 0x4, offset = 0x4, fixed_abs, tag = 'smem constant byte address 0x4 - core index']
  #allocation1 [shape = 'u32[144,128]{1,0:T(1,128)}', space=vmem, size = 0x12000, scoped, tag = 'internal scratch']
  #allocation2 [shape = 'f32[128,72]{1,0:T(8,128)}', space=vmem, size = 0x10000, scoped, tag = 'scratch operand']
  #allocation3 [shape = 's32[1]{0}', space=sflag, size = 0x4, scoped, tag = 'scoped memory for graph_transformer_layer.5']
  #allocation4 [shape = 'u8[1024]{0}', space=smem, size = 0x400, scoped, tag = 'prefetched SMEM operand 0']
  %s0 = inlined_call_operand.vmem [shape: s32[2,2], index: 0, kind: input, shape index: {}]
  %s1 = inlined_call_operand.vmem [shape: bf16[256,64], index: 1, kind: input, shape index: {}]
  %s2 = inlined_call_operand.vmem [shape: bf16[256,64], index: 2, kind: input, shape index: {}]
  %s3 = inlined_call_operand.vmem [shape: bf16[256,72], index: 3, kind: input, shape index: {}]
  %s4 = inlined_call_operand.vmem [shape: s8[256,256], index: 4, kind: input, shape index: {}]
  %s5 = inlined_call_operand.vmem [shape: f32[256,1], index: 5, kind: input, shape index: {}]
  %s6 = inlined_call_operand.vmem [shape: bf16[256,64], index: 6, kind: input, shape index: {}]
  %s7 = inlined_call_operand.vmem [shape: f32[256,64], index: 7, kind: input, shape index: {}]
  %s8 = inlined_call_operand.vmem [shape: f32[64,64], index: 8, kind: input, shape index: {}]
  %s9 = inlined_call_operand.vmem [shape: f32[1,64], index: 9, kind: input, shape index: {}]
  %s10 = inlined_call_operand.vmem [shape: f32[256,64], index: 10, kind: output, shape index: {}]
  %s11 = sld [smem:[#allocation0]]
  $region119: #{graph_transformer_layer.5} parent=0
    _
  %s13 = ssub.s32 1, %s11
  %s14 = scalar_select 0, %s13, %s11
  %s15 = sshll.u32 %s0, 4
  %s16 = int_to_ptr.vmem [resolvable:$true] %s15
  %18 = dma.vmem_to_smem %s16, 32, [#allocation4], [#allocation3]
  %19 = dma.done [#allocation3], 32
  %20 = sfence
  $region1: #{graph_transformer_layer.5} parent=0
    #allocation5 [shape = 'u8[32768]{0}', space=vmem, size = 0x8000, scoped, tag = 'input window, operand 4']
    loop: start=0, step=1, limit=6
    $region2: #{graph_transformer_layer.5} parent=1 // loop_pre_header
      _
    $region3: #{graph_transformer_layer.5} parent=1 // loop_header
      %s22 = sphi 0, %s26
      %p23 = scmp.ge.s32.totalorder %s22, 6
      %s29 = sphi 0, %s41
      %s30 = sphi 0, %s37
      %s31 = sphi 0, %s29
      %s32 = sphi 0, %s30
      %s33 = sphi 0, %s31
      %s34 = sphi 0, %s32
      %s44 = sphi 0, %s46
      %s47 = sphi 0, %s44
      %s48 = sphi 0, %s47
      %s64 = sphi 0, %s48
      %s70 = sphi 0, %s72
      %s73 = sphi 0, %s70
      %s74 = sphi 0, %s73
      %s90 = sphi 0, %s74
      %s96 = sphi 0, %s98
      %s99 = sphi 0, %s96
      %s100 = sphi 0, %s99
      %s116 = sphi 0, %s100
      %s124 = sphi 0, %s126
      %s127 = sphi 0, %s124
      %s128 = sphi 0, %s127
      %s144 = sphi 0, %s128
      %s150 = sphi 0, %s152
      %s153 = sphi 0, %s150
      %s154 = sphi 0, %s153
      %s170 = sphi 0, %s154
      %s176 = sphi 0, %s178
      %s179 = sphi 0, %s176
      %s180 = sphi 0, %s179
      %s196 = sphi 0, %s180
      %s202 = sphi 0, %s204
      %s205 = sphi 0, %s202
      %s206 = sphi 0, %s205
      %s222 = sphi 0, %s206
      %s226 = sphi 0, %s226
      %s228 = sphi 0, %s226
      %s229 = sphi 0, %s228
      %s243 = sphi 0, %s229
      %s247 = sphi 0, %s247
      %s249 = sphi 0, %s247
      %s250 = sphi 0, %s249
      %s264 = sphi 0, %s250
      %s270 = sphi 0, %s272
      %s273 = sphi 0, %s270
      %s274 = sphi 0, %s273
      %s290 = sphi 0, %s274
    $region4: #{graph_transformer_layer.5} parent=1 // loop_header_branch
      %25 = sbr.rel (%p23) target = $region8
    $region5: #{graph_transformer_layer.5} parent=1 // loop_body
      %s27 = ssub.s32 %s22, 1
      %s28 = ssub.s32 %s22, 2
      %s35 = sadd.s32 1, %s30
      %p36 = scmp.ge.s32.totalorder %s35, 2
      %s37 = scalar_select %p36, 0, %s35
      %s38 = sadd.s32 1, %s29
      %s39 = scalar_select %p36, %s38, %s29
      %p40 = scmp.ge.s32.totalorder %s39, 2
      %s41 = scalar_select %p40, 0, %s39
      %s42 = ssub.s32 %s29, %s41
      %p43 = scmp.eq.s32.totalorder %s42, 0
      %s45 = sadd.s32 %s44, 1
      %s46 = scalar_select %p43, %s44, %s45
      %p49 = pneg %p43
      %p50 = scmp.eq.s32.totalorder %s22, 3
      %p51 = por %p49, %p50
      %p52 = scmp.ne.s32.totalorder %s44, %s47
      %p53 = scmp.eq.s32.totalorder %s22, 0
      %p54 = por %p52, %p53
      %p55 = scmp.ne.s32.totalorder %s44, %s47
      %p56 = scmp.eq.s32.totalorder %s27, 3
      %p57 = por %p55, %p56
      %p58 = scmp.ne.s32.totalorder %s47, %s48
      %p59 = scmp.eq.s32.totalorder %s27, 0
      %p60 = por %p58, %p59
      %p61 = scmp.ne.s32.totalorder %s47, %s48
      %p62 = scmp.eq.s32.totalorder %s28, 3
      %p63 = por %p61, %p62
      %p65 = scmp.ne.s32.totalorder %s48, %s64
      %p66 = scmp.eq.s32.totalorder %s28, 0
      %p67 = por %p65, %p66
      %s68 = ssub.s32 %s30, %s37
      %p69 = scmp.eq.s32.totalorder %s68, 0
      %s71 = sadd.s32 %s70, 1
      %s72 = scalar_select %p69, %s70, %s71
      %p75 = pneg %p69
      %p76 = scmp.eq.s32.totalorder %s22, 3
      %p77 = por %p75, %p76
      %p78 = scmp.ne.s32.totalorder %s70, %s73
      %p79 = scmp.eq.s32.totalorder %s22, 0
      %p80 = por %p78, %p79
      %p81 = scmp.ne.s32.totalorder %s70, %s73
      %p82 = scmp.eq.s32.totalorder %s27, 3
      %p83 = por %p81, %p82
      %p84 = scmp.ne.s32.totalorder %s73, %s74
      %p85 = scmp.eq.s32.totalorder %s27, 0
      %p86 = por %p84, %p85
      %p87 = scmp.ne.s32.totalorder %s73, %s74
      %p88 = scmp.eq.s32.totalorder %s28, 3
      %p89 = por %p87, %p88
      %p91 = scmp.ne.s32.totalorder %s74, %s90
      %p92 = scmp.eq.s32.totalorder %s28, 0
      %p93 = por %p91, %p92
      %s94 = ssub.s32 %s30, %s37
      %p95 = scmp.eq.s32.totalorder %s94, 0
      %s97 = sadd.s32 %s96, 1
      %s98 = scalar_select %p95, %s96, %s97
      %p101 = pneg %p95
      %p102 = scmp.eq.s32.totalorder %s22, 3
      %p103 = por %p101, %p102
      %p104 = scmp.ne.s32.totalorder %s96, %s99
      %p105 = scmp.eq.s32.totalorder %s22, 0
      %p106 = por %p104, %p105
      %p107 = scmp.ne.s32.totalorder %s96, %s99
      %p108 = scmp.eq.s32.totalorder %s27, 3
      %p109 = por %p107, %p108
      %p110 = scmp.ne.s32.totalorder %s99, %s100
      %p111 = scmp.eq.s32.totalorder %s27, 0
      %p112 = por %p110, %p111
      %p113 = scmp.ne.s32.totalorder %s99, %s100
      %p114 = scmp.eq.s32.totalorder %s28, 3
      %p115 = por %p113, %p114
      %p117 = scmp.ne.s32.totalorder %s100, %s116
      %p118 = scmp.eq.s32.totalorder %s28, 0
      %p119 = por %p117, %p118
      %s120 = ssub.s32 %s29, %s41
      %s121 = ssub.s32 %s30, %s37
      %s122 = sor.u32 %s120, %s121
      %p123 = scmp.eq.s32.totalorder %s122, 0
      %s125 = sadd.s32 %s124, 1
      %s126 = scalar_select %p123, %s124, %s125
      %p129 = pneg %p123
      %p130 = scmp.eq.s32.totalorder %s22, 3
      %p131 = por %p129, %p130
      %p132 = scmp.ne.s32.totalorder %s124, %s127
      %p133 = scmp.eq.s32.totalorder %s22, 0
      %p134 = por %p132, %p133
      %p135 = scmp.ne.s32.totalorder %s124, %s127
      %p136 = scmp.eq.s32.totalorder %s27, 3
      %p137 = por %p135, %p136
      %p138 = scmp.ne.s32.totalorder %s127, %s128
      %p139 = scmp.eq.s32.totalorder %s27, 0
      %p140 = por %p138, %p139
      %p141 = scmp.ne.s32.totalorder %s127, %s128
      %p142 = scmp.eq.s32.totalorder %s28, 3
      %p143 = por %p141, %p142
      %p145 = scmp.ne.s32.totalorder %s128, %s144
      %p146 = scmp.eq.s32.totalorder %s28, 0
      %p147 = por %p145, %p146
      %s148 = ssub.s32 %s29, %s41
      %p149 = scmp.eq.s32.totalorder %s148, 0
      %s151 = sadd.s32 %s150, 1
      %s152 = scalar_select %p149, %s150, %s151
      %p155 = pneg %p149
      %p156 = scmp.eq.s32.totalorder %s22, 3
      %p157 = por %p155, %p156
      %p158 = scmp.ne.s32.totalorder %s150, %s153
      %p159 = scmp.eq.s32.totalorder %s22, 0
      %p160 = por %p158, %p159
      %p161 = scmp.ne.s32.totalorder %s150, %s153
      %p162 = scmp.eq.s32.totalorder %s27, 3
      %p163 = por %p161, %p162
      %p164 = scmp.ne.s32.totalorder %s153, %s154
      %p165 = scmp.eq.s32.totalorder %s27, 0
      %p166 = por %p164, %p165
      %p167 = scmp.ne.s32.totalorder %s153, %s154
      %p168 = scmp.eq.s32.totalorder %s28, 3
      %p169 = por %p167, %p168
      %p171 = scmp.ne.s32.totalorder %s154, %s170
      %p172 = scmp.eq.s32.totalorder %s28, 0
      %p173 = por %p171, %p172
      %s174 = ssub.s32 %s29, %s41
      %p175 = scmp.eq.s32.totalorder %s174, 0
      %s177 = sadd.s32 %s176, 1
      %s178 = scalar_select %p175, %s176, %s177
      %p181 = pneg %p175
      %p182 = scmp.eq.s32.totalorder %s22, 3
      %p183 = por %p181, %p182
      %p184 = scmp.ne.s32.totalorder %s176, %s179
      %p185 = scmp.eq.s32.totalorder %s22, 0
      %p186 = por %p184, %p185
      %p187 = scmp.ne.s32.totalorder %s176, %s179
      %p188 = scmp.eq.s32.totalorder %s27, 3
      %p189 = por %p187, %p188
      %p190 = scmp.ne.s32.totalorder %s179, %s180
      %p191 = scmp.eq.s32.totalorder %s27, 0
      %p192 = por %p190, %p191
      %p193 = scmp.ne.s32.totalorder %s179, %s180
      %p194 = scmp.eq.s32.totalorder %s28, 3
      %p195 = por %p193, %p194
      %p197 = scmp.ne.s32.totalorder %s180, %s196
      %p198 = scmp.eq.s32.totalorder %s28, 0
      %p199 = por %p197, %p198
      %s200 = ssub.s32 %s29, %s41
      %p201 = scmp.eq.s32.totalorder %s200, 0
      %s203 = sadd.s32 %s202, 1
      %s204 = scalar_select %p201, %s202, %s203
      %p207 = pneg %p201
      %p208 = scmp.eq.s32.totalorder %s22, 3
      %p209 = por %p207, %p208
      %p210 = scmp.ne.s32.totalorder %s202, %s205
      %p211 = scmp.eq.s32.totalorder %s22, 0
      %p212 = por %p210, %p211
      %p213 = scmp.ne.s32.totalorder %s202, %s205
      %p214 = scmp.eq.s32.totalorder %s27, 3
      %p215 = por %p213, %p214
      %p216 = scmp.ne.s32.totalorder %s205, %s206
      %p217 = scmp.eq.s32.totalorder %s27, 0
      %p218 = por %p216, %p217
      %p219 = scmp.ne.s32.totalorder %s205, %s206
      %p220 = scmp.eq.s32.totalorder %s28, 3
      %p221 = por %p219, %p220
      %p223 = scmp.ne.s32.totalorder %s206, %s222
      %p224 = scmp.eq.s32.totalorder %s28, 0
      %p225 = por %p223, %p224
      %s227 = sadd.s32 %s226, 1
      %p230 = scmp.eq.s32.totalorder %s22, 3
      %p231 = scmp.ne.s32.totalorder %s226, %s228
      %p232 = scmp.eq.s32.totalorder %s22, 0
      %p233 = por %p231, %p232
      %p234 = scmp.ne.s32.totalorder %s226, %s228
      %p235 = scmp.eq.s32.totalorder %s27, 3
      %p236 = por %p234, %p235
      %p237 = scmp.ne.s32.totalorder %s228, %s229
      %p238 = scmp.eq.s32.totalorder %s27, 0
      %p239 = por %p237, %p238
      %p240 = scmp.ne.s32.totalorder %s228, %s229
      %p241 = scmp.eq.s32.totalorder %s28, 3
      %p242 = por %p240, %p241
      %p244 = scmp.ne.s32.totalorder %s229, %s243
      %p245 = scmp.eq.s32.totalorder %s28, 0
      %p246 = por %p244, %p245
      %s248 = sadd.s32 %s247, 1
      %p251 = scmp.eq.s32.totalorder %s22, 3
      %p252 = scmp.ne.s32.totalorder %s247, %s249
      %p253 = scmp.eq.s32.totalorder %s22, 0
      %p254 = por %p252, %p253
      %p255 = scmp.ne.s32.totalorder %s247, %s249
      %p256 = scmp.eq.s32.totalorder %s27, 3
      %p257 = por %p255, %p256
      %p258 = scmp.ne.s32.totalorder %s249, %s250
      %p259 = scmp.eq.s32.totalorder %s27, 0
      %p260 = por %p258, %p259
      %p261 = scmp.ne.s32.totalorder %s249, %s250
      %p262 = scmp.eq.s32.totalorder %s28, 3
      %p263 = por %p261, %p262
      %p265 = scmp.ne.s32.totalorder %s250, %s264
      %p266 = scmp.eq.s32.totalorder %s28, 0
      %p267 = por %p265, %p266
      %s268 = ssub.s32 %s29, %s41
      %p269 = scmp.eq.s32.totalorder %s268, 0
      %s271 = sadd.s32 %s270, 1
      %s272 = scalar_select %p269, %s270, %s271
      %p275 = pneg %p269
      %p276 = scmp.eq.s32.totalorder %s22, 3
      %p277 = por %p275, %p276
      %p278 = scmp.ne.s32.totalorder %s270, %s273
      %p279 = scmp.eq.s32.totalorder %s22, 0
      %p280 = por %p278, %p279
      %p281 = scmp.ne.s32.totalorder %s270, %s273
      %p282 = scmp.eq.s32.totalorder %s27, 3
      %p283 = por %p281, %p282
      %p284 = scmp.ne.s32.totalorder %s273, %s274
      %p285 = scmp.eq.s32.totalorder %s27, 0
      %p286 = por %p284, %p285
      %p287 = scmp.ne.s32.totalorder %s273, %s274
      %p288 = scmp.eq.s32.totalorder %s28, 3
      %p289 = por %p287, %p288
      %p291 = scmp.ne.s32.totalorder %s274, %s290
      %p292 = scmp.eq.s32.totalorder %s28, 0
      %p293 = por %p291, %p292
      %p294 = scmp.le.s32.totalorder 1, %s22
      %p295 = scmp.lt.s32.totalorder %s22, 5
      %p296 = pnand %p294, %p295
      %p297 = pneg %p296
      // Predicated region
      $region9: #{graph_transformer_layer.5} parent=5 // pred_check
        _
      $region10: #{graph_transformer_layer.5} parent=5 // pred_check_branch
        %299 = sbr.rel (%p296) target = $region12
      $region11: #{graph_transformer_layer.5} parent=5 // pred_region
        %s300 = ssub.s32 %s22, 1
        // Predicated region
        $region13: #{graph_transformer_layer.5} parent=11 // pred_check
          %p301 = pneg %p239
        $region14: #{graph_transformer_layer.5} parent=11 // pred_check_branch
          %303 = sbr.rel (%p301) target = $region16
        $region15: #{graph_transformer_layer.5} parent=11 // pred_region
          _
        $region16: #{graph_transformer_layer.5} parent=11 // pred_fallthru
          _
        // Predicated region
        $region17: #{graph_transformer_layer.5} parent=11 // pred_check
          %p304 = pneg %p260
        $region18: #{graph_transformer_layer.5} parent=11 // pred_check_branch
          %306 = sbr.rel (%p304) target = $region20
        $region19: #{graph_transformer_layer.5} parent=11 // pred_region
          _
        $region20: #{graph_transformer_layer.5} parent=11 // pred_fallthru
          _
      $region12: #{graph_transformer_layer.5} parent=5 // pred_fallthru
        _
      %p307 = scmp.lt.s32.totalorder %s22, 4
      // Predicated region
      $region21: #{graph_transformer_layer.5} parent=5 // pred_check
        %p308 = pneg %p307
      $region22: #{graph_transformer_layer.5} parent=5 // pred_check_branch
        %310 = sbr.rel (%p308) target = $region24
      $region23: #{graph_transformer_layer.5} parent=5 // pred_region
        // Predicated region
        $region25: #{graph_transformer_layer.5} parent=23 // pred_check
          %p311 = pneg %p54
        $region26: #{graph_transformer_layer.5} parent=23 // pred_check_branch
          %313 = sbr.rel (%p311) target = $region28
        $region27: #{graph_transformer_layer.5} parent=23 // pred_region
          %s314 = smul.u32 16, %s29
          %p315 = scmp.lt.s32.totalorder %s314, 31
          %s316 = scalar_select %p315, %s314, 31
          %s317 = smul.addr %s316, 4
          %s318 = scalar_lea.vmem %s1, %s317
          %s319 = smul.u32 16, %s29
        $region28: #{graph_transformer_layer.5} parent=23 // pred_fallthru
          _
        // Predicated region
        $region29: #{graph_transformer_layer.5} parent=23 // pred_check
          %p320 = pneg %p80
        $region30: #{graph_transformer_layer.5} parent=23 // pred_check_branch
          %322 = sbr.rel (%p320) target = $region32
        $region31: #{graph_transformer_layer.5} parent=23 // pred_region
          %s323 = smul.u32 16, %s30
          %p324 = scmp.lt.s32.totalorder %s323, 31
          %s325 = scalar_select %p324, %s323, 31
          %s326 = smul.addr %s325, 4
          %s327 = scalar_lea.vmem %s2, %s326
          %s328 = smul.u32 16, %s30
        $region32: #{graph_transformer_layer.5} parent=23 // pred_fallthru
          _
        // Predicated region
        $region33: #{graph_transformer_layer.5} parent=23 // pred_check
          %p329 = pneg %p106
        $region34: #{graph_transformer_layer.5} parent=23 // pred_check_branch
          %331 = sbr.rel (%p329) target = $region36
        $region35: #{graph_transformer_layer.5} parent=23 // pred_region
          %s332 = smul.u32 16, %s30
          %p333 = scmp.lt.s32.totalorder %s332, 31
          %s334 = scalar_select %p333, %s332, 31
          %s335 = smul.addr %s334, 4
          %s336 = scalar_lea.vmem %s3, %s335
          %s337 = smul.u32 16, %s30
        $region36: #{graph_transformer_layer.5} parent=23 // pred_fallthru
          _
        // Predicated region
        $region37: #{graph_transformer_layer.5} parent=23 // pred_check
          %p338 = pneg %p134
        $region38: #{graph_transformer_layer.5} parent=23 // pred_check_branch
          %340 = sbr.rel (%p338) target = $region40
        $region39: #{graph_transformer_layer.5} parent=23 // pred_region
          %s341 = sand.u32 %s124, 1
          %s342 = sand.u32 %s124, 1
          %s343 = smul.addr %s342, 32
          %s344 = scalar_lea.vmem [#allocation5], %s343
          %s345 = smul.u32 4, %s29
          %s346 = smul.addr %s345, 2
          %s347 = sadd.s32 %s30, %s346
          %s348 = smul.addr %s347, 8
          %s349 = scalar_lea.vmem %s4, %s348
          // Predicated region
          $region41: #{graph_transformer_layer.5} parent=39 // pred_check
            _
          $region42: #{graph_transformer_layer.5} parent=39 // pred_check_branch
            %351 = sbr.rel (0) target = $region44
          $region43: #{graph_transformer_layer.5} parent=39 // pred_region
            // Predicated region
            $region45: #{graph_transformer_layer.5} parent=43 // pred_check
              _
            $region46: #{graph_transformer_layer.5} parent=43 // pred_check_branch
              %353 = sbr.rel (0) target = $region48
            $region47: #{graph_transformer_layer.5} parent=43 // pred_region
              // Predicated region
              $region60: #{graph_transformer_layer.5} parent=47 // pred_check
                _
              $region61: #{graph_transformer_layer.5} parent=47 // pred_check_branch
                %374 = sbr.rel (0) target = $region63
              $region62: #{graph_transformer_layer.5} parent=47 // pred_region
                loop: start=0, step=1, limit=1
                $region64: #{graph_transformer_layer.5} parent=62 // loop_pre_header
                  _
                $region65: #{graph_transformer_layer.5} parent=62 // loop_header
                  %s376 = sphi 0, %s380
                  %p377 = scmp.ge.s32.totalorder %s376, 1
                  %s381 = sphi %s349, %s349
                  %s382 = sphi %s344, %s344
                $region66: #{graph_transformer_layer.5} parent=62 // loop_header_branch
                  %379 = sbr.rel (%p377) target = $region70
                $region67: #{graph_transformer_layer.5} parent=62 // loop_body
                  %v383 = vld [vmem:[%s381] sm:$0xff]
                  %384 = vst [vmem:[%s382] sm:$0xff] %v383
                  %v385 = vld [vmem:[%s381 + $0x10] sm:$0xff]
                  %386 = vst [vmem:[%s382 + $0x8] sm:$0xff] %v385
                  %v387 = vld [vmem:[%s381 + $0x20] sm:$0xff]
                  %388 = vst [vmem:[%s382 + $0x10] sm:$0xff] %v387
                  %v389 = vld [vmem:[%s381 + $0x30] sm:$0xff]
                  %390 = vst [vmem:[%s382 + $0x18] sm:$0xff] %v389
                $region68: #{graph_transformer_layer.5} parent=62 // loop_footer
                  %s380 = sadd.s32 1, %s376
                $region69: #{graph_transformer_layer.5} parent=62 // loop_footer_branch
                  %375 = sbr.rel target = $region65
                $region70: #{graph_transformer_layer.5} parent=62 // loop_exit
                  _
              $region63: #{graph_transformer_layer.5} parent=47 // pred_fallthru
                _
              // Predicated region
              $region71: #{graph_transformer_layer.5} parent=47 // pred_check
                _
              $region72: #{graph_transformer_layer.5} parent=47 // pred_check_branch
                %392 = sbr.rel target = $region74
              $region73: #{graph_transformer_layer.5} parent=47 // pred_region
                _
              $region74: #{graph_transformer_layer.5} parent=47 // pred_fallthru
                _
            $region48: #{graph_transformer_layer.5} parent=43 // pred_fallthru
              _
            // Predicated region
            $region49: #{graph_transformer_layer.5} parent=43 // pred_check
              _
            $region50: #{graph_transformer_layer.5} parent=43 // pred_check_branch
              %355 = sbr.rel target = $region52
            $region51: #{graph_transformer_layer.5} parent=43 // pred_region
              loop: start=0, step=1, limit=1
              $region53: #{graph_transformer_layer.5} parent=51 // loop_pre_header
                _
              $region54: #{graph_transformer_layer.5} parent=51 // loop_header
                %s358 = sphi 0, %s362
                %p359 = scmp.ge.s32.totalorder %s358, 1
                %s363 = sphi %s349, %s349
                %s364 = sphi %s344, %s344
              $region55: #{graph_transformer_layer.5} parent=51 // loop_header_branch
                %361 = sbr.rel (%p359) target = $region59
              $region56: #{graph_transformer_layer.5} parent=51 // loop_body
                %v365 = vld [vmem:[%s363] sm:$0xff]
                %366 = vst [vmem:[%s364] sm:$0xff] %v365
                %v367 = vld [vmem:[%s363 + $0x10] sm:$0xff]
                %368 = vst [vmem:[%s364 + $0x8] sm:$0xff] %v367
                %v369 = vld [vmem:[%s363 + $0x20] sm:$0xff]
                %370 = vst [vmem:[%s364 + $0x10] sm:$0xff] %v369
                %v371 = vld [vmem:[%s363 + $0x30] sm:$0xff]
                %372 = vst [vmem:[%s364 + $0x18] sm:$0xff] %v371
              $region57: #{graph_transformer_layer.5} parent=51 // loop_footer
                %s362 = sadd.s32 1, %s358
              $region58: #{graph_transformer_layer.5} parent=51 // loop_footer_branch
                %357 = sbr.rel target = $region54
              $region59: #{graph_transformer_layer.5} parent=51 // loop_exit
                _
            $region52: #{graph_transformer_layer.5} parent=43 // pred_fallthru
              _
          $region44: #{graph_transformer_layer.5} parent=39 // pred_fallthru
            _
          %393 = vnop
        $region40: #{graph_transformer_layer.5} parent=23 // pred_fallthru
          _
        // Predicated region
        $region75: #{graph_transformer_layer.5} parent=23 // pred_check
          %p394 = pneg %p160
        $region76: #{graph_transformer_layer.5} parent=23 // pred_check_branch
          %396 = sbr.rel (%p394) target = $region78
        $region77: #{graph_transformer_layer.5} parent=23 // pred_region
          %s397 = smul.u32 16, %s29
          %p398 = scmp.lt.s32.totalorder %s397, 31
          %s399 = scalar_select %p398, %s397, 31
          %s400 = smul.addr %s399, 8
          %s401 = scalar_lea.vmem %s5, %s400
          %s402 = smul.u32 16, %s29
        $region78: #{graph_transformer_layer.5} parent=23 // pred_fallthru
          _
        // Predicated region
        $region79: #{graph_transformer_layer.5} parent=23 // pred_check
          %p403 = pneg %p186
        $region80: #{graph_transformer_layer.5} parent=23 // pred_check_branch
          %405 = sbr.rel (%p403) target = $region82
        $region81: #{graph_transformer_layer.5} parent=23 // pred_region
          %s406 = smul.u32 16, %s29
          %p407 = scmp.lt.s32.totalorder %s406, 31
          %s408 = scalar_select %p407, %s406, 31
          %s409 = smul.addr %s408, 4
          %s410 = scalar_lea.vmem %s6, %s409
          %s411 = smul.u32 16, %s29
        $region82: #{graph_transformer_layer.5} parent=23 // pred_fallthru
          _
        // Predicated region
        $region83: #{graph_transformer_layer.5} parent=23 // pred_check
          %p412 = pneg %p212
        $region84: #{graph_transformer_layer.5} parent=23 // pred_check_branch
          %414 = sbr.rel (%p412) target = $region86
        $region85: #{graph_transformer_layer.5} parent=23 // pred_region
          %s415 = smul.u32 16, %s29
          %p416 = scmp.lt.s32.totalorder %s415, 31
          %s417 = scalar_select %p416, %s415, 31
          %s418 = smul.addr %s417, 8
          %s419 = scalar_lea.vmem %s7, %s418
          %s420 = smul.u32 16, %s29
        $region86: #{graph_transformer_layer.5} parent=23 // pred_fallthru
          _
      $region24: #{graph_transformer_layer.5} parent=5 // pred_fallthru
        _
      %p421 = scmp.le.s32.totalorder 1, %s22
      %p422 = scmp.lt.s32.totalorder %s22, 5
      %p423 = pnand %p421, %p422
      %p424 = pneg %p423
      // Predicated region
      $region87: #{graph_transformer_layer.5} parent=5 // pred_check
        _
      $region88: #{graph_transformer_layer.5} parent=5 // pred_check_branch
        %426 = sbr.rel (%p423) target = $region90
      $region89: #{graph_transformer_layer.5} parent=5 // pred_region
        %s427 = ssub.s32 %s22, 1
        %s428 = sand.u32 %s127, 1
        %s429 = sand.u32 %s127, 1
        %s430 = smul.addr %s429, 32
        %s431 = scalar_lea.vmem [#allocation5], %s430
        // Predicated region
        $region91: #{graph_transformer_layer.5} parent=89 // pred_check
          %p432 = pneg %p140
        $region92: #{graph_transformer_layer.5} parent=89 // pred_check_branch
          %434 = sbr.rel (%p432) target = $region94
        $region93: #{graph_transformer_layer.5} parent=89 // pred_region
          _
        $region94: #{graph_transformer_layer.5} parent=89 // pred_fallthru
          _
        %s435 = smul.u32 16, %s31
        %p436 = scmp.lt.s32.totalorder %s435, 31
        %s437 = scalar_select %p436, %s435, 31
        %s438 = smul.addr %s437, 4
        %s439 = scalar_lea.vmem %s1, %s438
        %p440 = pneg %p60
        %p441 = pneg %p57
        %s442 = smul.u32 16, %s32
        %p443 = scmp.lt.s32.totalorder %s442, 31
        %s444 = scalar_select %p443, %s442, 31
        %s445 = smul.addr %s444, 4
        %s446 = scalar_lea.vmem %s2, %s445
        %p447 = pneg %p86
        %p448 = pneg %p83
        %s449 = smul.u32 16, %s32
        %p450 = scmp.lt.s32.totalorder %s449, 31
        %s451 = scalar_select %p450, %s449, 31
        %s452 = smul.addr %s451, 4
        %s453 = scalar_lea.vmem %s3, %s452
        %p454 = pneg %p112
        %p455 = pneg %p109
        %s456 = sand.u32 %s127, 1
        %s457 = sand.u32 %s127, 1
        %s458 = smul.addr %s457, 32
        %s459 = scalar_lea.vmem [#allocation5], %s458
        %p460 = pneg %p140
        %p461 = pneg %p137
        %s462 = smul.u32 16, %s31
        %p463 = scmp.lt.s32.totalorder %s462, 31
        %s464 = scalar_select %p463, %s462, 31
        %s465 = smul.addr %s464, 8
        %s466 = scalar_lea.vmem %s5, %s465
        %p467 = pneg %p166
        %p468 = pneg %p163
        %s469 = smul.u32 16, %s31
        %p470 = scmp.lt.s32.totalorder %s469, 31
        %s471 = scalar_select %p470, %s469, 31
        %s472 = smul.addr %s471, 4
        %s473 = scalar_lea.vmem %s6, %s472
        %p474 = pneg %p192
        %p475 = pneg %p189
        %s476 = smul.u32 16, %s31
        %p477 = scmp.lt.s32.totalorder %s476, 31
        %s478 = scalar_select %p477, %s476, 31
        %s479 = smul.addr %s478, 8
        %s480 = scalar_lea.vmem %s7, %s479
        %p481 = pneg %p218
        %p482 = pneg %p215
        %p483 = pneg %p239
        %p484 = pneg %p236
        %p485 = pneg %p260
        %p486 = pneg %p257
        %p487 = pneg %p286
        %p488 = pneg %p283
        %s489 = smul.u32 16, %s31
        %p490 = scmp.lt.s32.totalorder %s489, 31
        %s491 = scalar_select %p490, %s489, 31
        %s492 = smul.addr %s491, 8
        %s493 = scalar_lea.vmem %s10, %s492
        %s494 = smul.u32 16, %s31
        %p495 = scmp.lt.s32.totalorder %s494, 31
        %s496 = scalar_select %p495, %s494, 31
        %s497 = smul.addr %s496, 4
        %s498 = scalar_lea.vmem %s1, %s497
        %s499 = smul.u32 16, %s31
        %s500 = smul.u32 16, %s32
        %p501 = scmp.lt.s32.totalorder %s500, 31
        %s502 = scalar_select %p501, %s500, 31
        %s503 = smul.addr %s502, 4
        %s504 = scalar_lea.vmem %s2, %s503
        %s505 = smul.u32 16, %s32
        %s506 = smul.u32 16, %s32
        %p507 = scmp.lt.s32.totalorder %s506, 31
        %s508 = scalar_select %p507, %s506, 31
        %s509 = smul.addr %s508, 4
        %s510 = scalar_lea.vmem %s3, %s509
        %s511 = smul.u32 16, %s32
        %s512 = smul.u32 4, %s31
        %s513 = smul.u32 16, %s31
        %p514 = scmp.lt.s32.totalorder %s513, 31
        %s515 = scalar_select %p514, %s513, 31
        %s516 = smul.addr %s515, 8
        %s517 = scalar_lea.vmem %s5, %s516
        %s518 = smul.u32 16, %s31
        %s519 = smul.u32 16, %s31
        %p520 = scmp.lt.s32.totalorder %s519, 31
        %s521 = scalar_select %p520, %s519, 31
        %s522 = smul.addr %s521, 4
        %s523 = scalar_lea.vmem %s6, %s522
        %s524 = smul.u32 16, %s31
        %s525 = smul.u32 16, %s31
        %p526 = scmp.lt.s32.totalorder %s525, 31
        %s527 = scalar_select %p526, %s525, 31
        %s528 = smul.addr %s527, 8
        %s529 = scalar_lea.vmem %s7, %s528
        %s530 = smul.u32 16, %s31
        %s531 = smul.u32 16, %s31
        %p532 = scmp.lt.s32.totalorder %s531, 31
        %s533 = scalar_select %p532, %s531, 31
        %s534 = smul.addr %s533, 8
        %s535 = scalar_lea.vmem %s10, %s534
        %s536 = smul.u32 16, %s31
        %p540 = scmp.eq.s32.totalorder %s32, 0
        // Predicated region
        $region95: #{graph_transformer_layer.5} parent=89 // pred_check
          %p541 = pneg %p540
        $region96: #{graph_transformer_layer.5} parent=89 // pred_check_branch
          %543 = sbr.rel (%p541) target = $region98
        $region97: #{graph_transformer_layer.5} parent=89 // pred_region
          %vm544 = vcmask 588800
          %545 = vst.msk [vmem:[#allocation2] sm:$0xff] %vm544, 0.0
          %546 = vst.msk [vmem:[#allocation2 + $0x8] sm:$0xff] %vm544, 0.0
          %547 = vst.msk [vmem:[#allocation2 + $0x10] sm:$0xff] %vm544, 0.0
          %548 = vst.msk [vmem:[#allocation2 + $0x18] sm:$0xff] %vm544, 0.0
          %549 = vst.msk [vmem:[#allocation2 + $0x20] sm:$0xff] %vm544, 0.0
          %550 = vst.msk [vmem:[#allocation2 + $0x28] sm:$0xff] %vm544, 0.0
          %551 = vst.msk [vmem:[#allocation2 + $0x30] sm:$0xff] %vm544, 0.0
          %552 = vst.msk [vmem:[#allocation2 + $0x38] sm:$0xff] %vm544, 0.0
          %553 = vst.msk [vmem:[#allocation2 + $0x40] sm:$0xff] %vm544, 0.0
          %554 = vst.msk [vmem:[#allocation2 + $0x48] sm:$0xff] %vm544, 0.0
          %555 = vst.msk [vmem:[#allocation2 + $0x50] sm:$0xff] %vm544, 0.0
          %556 = vst.msk [vmem:[#allocation2 + $0x58] sm:$0xff] %vm544, 0.0
          %557 = vst.msk [vmem:[#allocation2 + $0x60] sm:$0xff] %vm544, 0.0
          %558 = vst.msk [vmem:[#allocation2 + $0x68] sm:$0xff] %vm544, 0.0
          %559 = vst.msk [vmem:[#allocation2 + $0x70] sm:$0xff] %vm544, 0.0
          %560 = vst.msk [vmem:[#allocation2 + $0x78] sm:$0xff] %vm544, 0.0
        $region98: #{graph_transformer_layer.5} parent=89 // pred_fallthru
          _
        %s561 = sshra.s32 %s32, 7
        %s562 = sand.u32 %s32, 127
        %s563 = sadd.s32 %s561, %s31
        %s564 = smul.u32 %s563, 128
        %s565 = sshra.s32 %s32, 7
        %s566 = sand.u32 %s32, 127
        %s567 = sadd.s32 %s564, %s566
        %s568 = sld [smem:[#allocation4 + %s567]]
        %p569 = scmp.gt.s32.totalorder %s568, 0
        // Predicated region
        $region99: #{graph_transformer_layer.5} parent=89 // pred_check
          %p570 = pneg %p569
        $region100: #{graph_transformer_layer.5} parent=89 // pred_check_branch
          %572 = sbr.rel (%p570) target = $region102
        $region101: #{graph_transformer_layer.5} parent=89 // pred_region
          %v573 = vld [vmem:[%s431] sm:$0xff]
          %v574 = vld [vmem:[%s431 + $0x8] sm:$0xff]
          %v575 = vld [vmem:[%s431 + $0x10] sm:$0xff]
          %v576 = vld [vmem:[%s431 + $0x18] sm:$0xff]
          %vm577 = vnez %v573
          %vm578 = vnez %v574
          %vm579 = vnez %v575
          %vm580 = vnez %v576
          %v581 = vld [vmem:[%s498] sm:$0xf]
          %v582 = vld [vmem:[%s498 + $0x4] sm:$0xf]
          %v583 = vld [vmem:[%s498 + $0x8] sm:$0xf]
          %v584 = vld [vmem:[%s498 + $0xc] sm:$0xf]
          %v585 = vld [vmem:[%s498 + $0x10] sm:$0xf]
          %v586 = vld [vmem:[%s498 + $0x14] sm:$0xf]
          %v587 = vld [vmem:[%s498 + $0x18] sm:$0xf]
          %v588 = vld [vmem:[%s498 + $0x1c] sm:$0xf]
          %v589 = vld [vmem:[%s498 + $0x20] sm:$0xf]
          %v590 = vld [vmem:[%s498 + $0x24] sm:$0xf]
          %v591 = vld [vmem:[%s498 + $0x28] sm:$0xf]
          %v592 = vld [vmem:[%s498 + $0x2c] sm:$0xf]
          %v593 = vld [vmem:[%s498 + $0x30] sm:$0xf]
          %v594 = vld [vmem:[%s498 + $0x34] sm:$0xf]
          %v595 = vld [vmem:[%s498 + $0x38] sm:$0xf]
          %v596 = vld [vmem:[%s498 + $0x3c] sm:$0xf]
          %v597 = vld [vmem:[%s504] sm:$0xf]
          %v598 = vld [vmem:[%s504 + $0x4] sm:$0xf]
          %v599 = vld [vmem:[%s504 + $0x8] sm:$0xf]
          %v600 = vld [vmem:[%s504 + $0xc] sm:$0xf]
          %v601 = vld [vmem:[%s504 + $0x10] sm:$0xf]
          %v602 = vld [vmem:[%s504 + $0x14] sm:$0xf]
          %v603 = vld [vmem:[%s504 + $0x18] sm:$0xf]
          %v604 = vld [vmem:[%s504 + $0x1c] sm:$0xf]
          %v605 = vld [vmem:[%s504 + $0x20] sm:$0xf]
          %v606 = vld [vmem:[%s504 + $0x24] sm:$0xf]
          %v607 = vld [vmem:[%s504 + $0x28] sm:$0xf]
          %v608 = vld [vmem:[%s504 + $0x2c] sm:$0xf]
          %v609 = vld [vmem:[%s504 + $0x30] sm:$0xf]
          %v610 = vld [vmem:[%s504 + $0x34] sm:$0xf]
          %v611 = vld [vmem:[%s504 + $0x38] sm:$0xf]
          %v612 = vld [vmem:[%s504 + $0x3c] sm:$0xf]
          %v613 = vld [vmem:[%s510] sm:$0xf]
          %v614 = vld [vmem:[%s510 + $0x4] sm:$0xf]
          %v615 = vld [vmem:[%s510 + $0x8] sm:$0xf]
          %v616 = vld [vmem:[%s510 + $0xc] sm:$0xf]
          %v617 = vld [vmem:[%s510 + $0x10] sm:$0xf]
          %v618 = vld [vmem:[%s510 + $0x14] sm:$0xf]
          %v619 = vld [vmem:[%s510 + $0x18] sm:$0xf]
          %v620 = vld [vmem:[%s510 + $0x1c] sm:$0xf]
          %v621 = vld [vmem:[%s510 + $0x20] sm:$0xf]
          %v622 = vld [vmem:[%s510 + $0x24] sm:$0xf]
          %v623 = vld [vmem:[%s510 + $0x28] sm:$0xf]
          %v624 = vld [vmem:[%s510 + $0x2c] sm:$0xf]
          %v625 = vld [vmem:[%s510 + $0x30] sm:$0xf]
          %v626 = vld [vmem:[%s510 + $0x34] sm:$0xf]
          %v627 = vld [vmem:[%s510 + $0x38] sm:$0xf]
          %v628 = vld [vmem:[%s510 + $0x3c] sm:$0xf]
          %v645 = vunpack.c.l.b16 %v581
          %v646 = vunpack.c.l.b16 %v582
          %v647 = vunpack.c.l.b16 %v583
          %v648 = vunpack.c.l.b16 %v584
          %v649 = vunpack.c.l.b16 %v585
          %v650 = vunpack.c.l.b16 %v586
          %v651 = vunpack.c.l.b16 %v587
          %v652 = vunpack.c.l.b16 %v588
          %v653 = vunpack.c.l.b16 %v589
          %v654 = vunpack.c.l.b16 %v590
          %v655 = vunpack.c.l.b16 %v591
          %v656 = vunpack.c.l.b16 %v592
          %v657 = vunpack.c.l.b16 %v593
          %v658 = vunpack.c.l.b16 %v594
          %v659 = vunpack.c.l.b16 %v595
          %v660 = vunpack.c.l.b16 %v596
          %v661 = vpack.c.b16 %v646, %v645
          %v662 = vpack.c.b16 %v648, %v647
          %v663 = vpack.c.b16 %v650, %v649
          %v664 = vpack.c.b16 %v652, %v651
          %v665 = vpack.c.b16 %v654, %v653
          %v666 = vpack.c.b16 %v656, %v655
          %v667 = vpack.c.b16 %v658, %v657
          %v668 = vpack.c.b16 %v660, %v659
          %v685 = vunpack.c.l.b16 %v597
          %v686 = vunpack.c.l.b16 %v598
          %v687 = vunpack.c.l.b16 %v599
          %v688 = vunpack.c.l.b16 %v600
          %v689 = vunpack.c.l.b16 %v601
          %v690 = vunpack.c.l.b16 %v602
          %v691 = vunpack.c.l.b16 %v603
          %v692 = vunpack.c.l.b16 %v604
          %v693 = vunpack.c.l.b16 %v605
          %v694 = vunpack.c.l.b16 %v606
          %v695 = vunpack.c.l.b16 %v607
          %v696 = vunpack.c.l.b16 %v608
          %v697 = vunpack.c.l.b16 %v609
          %v698 = vunpack.c.l.b16 %v610
          %v699 = vunpack.c.l.b16 %v611
          %v700 = vunpack.c.l.b16 %v612
          %v701 = vpack.c.b16 %v686, %v685
          %v702 = vpack.c.b16 %v688, %v687
          %v703 = vpack.c.b16 %v690, %v689
          %v704 = vpack.c.b16 %v692, %v691
          %v705 = vpack.c.b16 %v694, %v693
          %v706 = vpack.c.b16 %v696, %v695
          %v707 = vpack.c.b16 %v698, %v697
          %v708 = vpack.c.b16 %v700, %v699
          %vm709 = vcmask 64512
          %v711 = vsel %vm709, %v661, 0
          %v714 = vsel %vm709, %v662, 0
          %v717 = vsel %vm709, %v663, 0
          %v720 = vsel %vm709, %v664, 0
          %v723 = vsel %vm709, %v665, 0
          %v726 = vsel %vm709, %v666, 0
          %v729 = vsel %vm709, %v667, 0
          %v732 = vsel %vm709, %v668, 0
          %v735 = vsel %vm709, %v701, 0
          %v738 = vsel %vm709, %v702, 0
          %v741 = vsel %vm709, %v703, 0
          %v744 = vsel %vm709, %v704, 0
          %v747 = vsel %vm709, %v705, 0
          %v750 = vsel %vm709, %v706, 0
          %v753 = vsel %vm709, %v707, 0
          %v756 = vsel %vm709, %v708, 0
          %758 = vmatprep.subr.bf16.mxu0 0
          %759 = vmatpush1.bf16.xpose.msra.mxu0 %v735
          %760 = vmatprep.subr.bf16.mxu0 0
          %761 = vmatpush1.bf16.xpose.msra.mxu0 %v738
          %762 = vmatprep.subr.bf16.mxu0 0
          %763 = vmatpush1.bf16.xpose.msra.mxu0 %v741
          %764 = vmatprep.subr.bf16.mxu0 0
          %765 = vmatpush1.bf16.xpose.msra.mxu0 %v744
          %766 = vmatprep.subr.bf16.mxu0 0
          %767 = vmatpush1.bf16.xpose.msra.mxu0 %v747
          %768 = vmatprep.subr.bf16.mxu0 0
          %769 = vmatpush1.bf16.xpose.msra.mxu0 %v750
          %770 = vmatprep.subr.bf16.mxu0 0
          %771 = vmatpush1.bf16.xpose.msra.mxu0 %v753
          %772 = vmatprep.subr.bf16.mxu0 0
          %773 = vmatpush1.bf16.xpose.msra.mxu0 %v756
          %774 = vmatprep.subr.bf16.mxu0 0
          %775 = vmatpush1.bf16.xpose.msra.mxu0 0
          %776 = vmatprep.subr.bf16.mxu0 0
          %777 = vmatpush1.bf16.xpose.msra.mxu0 0
          %778 = vmatprep.subr.bf16.mxu0 0
          %779 = vmatpush1.bf16.xpose.msra.mxu0 0
          %780 = vmatprep.subr.bf16.mxu0 0
          %781 = vmatpush1.bf16.xpose.msra.mxu0 0
          %782 = vmatprep.subr.bf16.mxu0 0
          %783 = vmatpush1.bf16.xpose.msra.mxu0 0
          %784 = vmatprep.subr.bf16.mxu0 0
          %785 = vmatpush1.bf16.xpose.msra.mxu0 0
          %786 = vmatprep.subr.bf16.mxu0 0
          %787 = vmatpush1.bf16.xpose.msra.mxu0 0
          %788 = vmatprep.subr.bf16.mxu0 0
          %789 = vmatpush1.bf16.xpose.msra.mxu0 0
          %790 = vmatprep.mubr.bf16.mxu0 0
          %791 = vmatmul.mubr.bf16.gmra.mrb[0].mxu0 %v711
          %v792 = vpop.f32.mrb[0].mxu0
          %v793 = vadd.f32 0.0, %v792
          %v794 = vpop.f32.mrb[0].mxu0
          %v795 = vpop.f32.mrb[0].mxu0
          %v796 = vadd.f32 0.0, %v795
          %v797 = vpop.f32.mrb[0].mxu0
          %798 = vmatprep.mubr.bf16.mxu0 0
          %799 = vmatmul.mubr.bf16.gmra.mrb[0].mxu0 %v714
          %v800 = vpop.f32.mrb[0].mxu0
          %v801 = vadd.f32 0.0, %v800
          %v802 = vpop.f32.mrb[0].mxu0
          %v803 = vpop.f32.mrb[0].mxu0
          %v804 = vadd.f32 0.0, %v803
          %v805 = vpop.f32.mrb[0].mxu0
          %806 = vmatprep.mubr.bf16.mxu0 0
          %807 = vmatmul.mubr.bf16.gmra.mrb[0].mxu0 %v717
          %v808 = vpop.f32.mrb[0].mxu0
          %v809 = vadd.f32 0.0, %v808
          %v810 = vpop.f32.mrb[0].mxu0
          %v811 = vpop.f32.mrb[0].mxu0
          %v812 = vadd.f32 0.0, %v811
          %v813 = vpop.f32.mrb[0].mxu0
          %814 = vmatprep.mubr.bf16.mxu0 0
          %815 = vmatmul.mubr.bf16.gmra.mrb[0].mxu0 %v720
          %v816 = vpop.f32.mrb[0].mxu0
          %v817 = vadd.f32 0.0, %v816
          %v818 = vpop.f32.mrb[0].mxu0
          %v819 = vpop.f32.mrb[0].mxu0
          %v820 = vadd.f32 0.0, %v819
          %v821 = vpop.f32.mrb[0].mxu0
          %822 = vmatprep.mubr.bf16.mxu0 0
          %823 = vmatmul.mubr.bf16.gmra.mrb[0].mxu0 %v723
          %v824 = vpop.f32.mrb[0].mxu0
          %v825 = vadd.f32 0.0, %v824
          %v826 = vpop.f32.mrb[0].mxu0
          %v827 = vpop.f32.mrb[0].mxu0
          %v828 = vadd.f32 0.0, %v827
          %v829 = vpop.f32.mrb[0].mxu0
          %830 = vmatprep.mubr.bf16.mxu0 0
          %831 = vmatmul.mubr.bf16.gmra.mrb[0].mxu0 %v726
          %v832 = vpop.f32.mrb[0].mxu0
          %v833 = vadd.f32 0.0, %v832
          %v834 = vpop.f32.mrb[0].mxu0
          %v835 = vpop.f32.mrb[0].mxu0
          %v836 = vadd.f32 0.0, %v835
          %v837 = vpop.f32.mrb[0].mxu0
          %838 = vmatprep.mubr.bf16.mxu0 0
          %839 = vmatmul.mubr.bf16.gmra.mrb[0].mxu0 %v729
          %v840 = vpop.f32.mrb[0].mxu0
          %v841 = vadd.f32 0.0, %v840
          %v842 = vpop.f32.mrb[0].mxu0
          %v843 = vpop.f32.mrb[0].mxu0
          %v844 = vadd.f32 0.0, %v843
          %v845 = vpop.f32.mrb[0].mxu0
          %846 = vmatprep.mubr.bf16.mxu0 0
          %847 = vmatmul.mubr.bf16.gmra.mrb[0].mxu0 %v732
          %v848 = vpop.f32.mrb[0].mxu0
          %v849 = vadd.f32 0.0, %v848
          %v850 = vpop.f32.mrb[0].mxu0
          %v851 = vpop.f32.mrb[0].mxu0
          %v852 = vadd.f32 0.0, %v851
          %v853 = vpop.f32.mrb[0].mxu0
          %854 = vdwg.mxu0
          %v855 = vmax.f32 %v793, -5.0
          %v856 = vmax.f32 %v796, -5.0
          %v857 = vmax.f32 %v801, -5.0
          %v858 = vmax.f32 %v804, -5.0
          %v859 = vmax.f32 %v809, -5.0
          %v860 = vmax.f32 %v812, -5.0
          %v861 = vmax.f32 %v817, -5.0
          %v862 = vmax.f32 %v820, -5.0
          %v863 = vmax.f32 %v825, -5.0
          %v864 = vmax.f32 %v828, -5.0
          %v865 = vmax.f32 %v833, -5.0
          %v866 = vmax.f32 %v836, -5.0
          %v867 = vmax.f32 %v841, -5.0
          %v868 = vmax.f32 %v844, -5.0
          %v869 = vmax.f32 %v849, -5.0
          %v870 = vmax.f32 %v852, -5.0
          %v871 = vmin.f32 %v855, 5.0
          %v872 = vmin.f32 %v856, 5.0
          %v873 = vmin.f32 %v857, 5.0
          %v874 = vmin.f32 %v858, 5.0
          %v875 = vmin.f32 %v859, 5.0
          %v876 = vmin.f32 %v860, 5.0
          %v877 = vmin.f32 %v861, 5.0
          %v878 = vmin.f32 %v862, 5.0
          %v879 = vmin.f32 %v863, 5.0
          %v880 = vmin.f32 %v864, 5.0
          %v881 = vmin.f32 %v865, 5.0
          %v882 = vmin.f32 %v866, 5.0
          %v883 = vmin.f32 %v867, 5.0
          %v884 = vmin.f32 %v868, 5.0
          %v885 = vmin.f32 %v869, 5.0
          %v886 = vmin.f32 %v870, 5.0
          %v887 = vmul.f32 %v871, 1.442695
          %v888 = vpow.pop %v887
          %v889 = vmul.f32 %v872, 1.442695
          %v890 = vpow.pop %v889
          %v891 = vmul.f32 %v873, 1.442695
          %v892 = vpow.pop %v891
          %v893 = vmul.f32 %v874, 1.442695
          %v894 = vpow.pop %v893
          %v895 = vmul.f32 %v875, 1.442695
          %v896 = vpow.pop %v895
          %v897 = vmul.f32 %v876, 1.442695
          %v898 = vpow.pop %v897
          %v899 = vmul.f32 %v877, 1.442695
          %v900 = vpow.pop %v899
          %v901 = vmul.f32 %v878, 1.442695
          %v902 = vpow.pop %v901
          %v903 = vmul.f32 %v879, 1.442695
          %v904 = vpow.pop %v903
          %v905 = vmul.f32 %v880, 1.442695
          %v906 = vpow.pop %v905
          %v907 = vmul.f32 %v881, 1.442695
          %v908 = vpow.pop %v907
          %v909 = vmul.f32 %v882, 1.442695
          %v910 = vpow.pop %v909
          %v911 = vmul.f32 %v883, 1.442695
          %v912 = vpow.pop %v911
          %v913 = vmul.f32 %v884, 1.442695
          %v914 = vpow.pop %v913
          %v915 = vmul.f32 %v885, 1.442695
          %v916 = vpow.pop %v915
          %v917 = vmul.f32 %v886, 1.442695
          %v918 = vpow.pop %v917
          %v919 = vsel %vm577, 16843009, 0
          %v920 = vsel %vm578, 16843009, 0
          %v921 = vsel %vm579, 16843009, 0
          %v922 = vsel %vm580, 16843009, 0
          %v923 = vunpack.c.0.s8 %v919
          %v924 = vunpack.c.1.s8 %v919
          %v925 = vunpack.c.2.s8 %v919
          %v926 = vunpack.c.3.s8 %v919
          %v927 = vunpack.c.0.s8 %v920
          %v928 = vunpack.c.1.s8 %v920
          %v929 = vunpack.c.2.s8 %v920
          %v930 = vunpack.c.3.s8 %v920
          %v931 = vunpack.c.0.s8 %v921
          %v932 = vunpack.c.1.s8 %v921
          %v933 = vunpack.c.2.s8 %v921
          %v934 = vunpack.c.3.s8 %v921
          %v935 = vunpack.c.0.s8 %v922
          %v936 = vunpack.c.1.s8 %v922
          %v937 = vunpack.c.2.s8 %v922
          %v938 = vunpack.c.3.s8 %v922
          %v939 = vpack.c.b16 %v923, %v923
          %v940 = vpack.c.b8 %v939, %v939
          %v941 = vpack.c.b16 %v924, %v924
          %v942 = vpack.c.b8 %v941, %v941
          %v943 = vpack.c.b16 %v925, %v925
          %v944 = vpack.c.b8 %v943, %v943
          %v945 = vpack.c.b16 %v926, %v926
          %v946 = vpack.c.b8 %v945, %v945
          %v947 = vpack.c.b16 %v927, %v927
          %v948 = vpack.c.b8 %v947, %v947
          %v949 = vpack.c.b16 %v928, %v928
          %v950 = vpack.c.b8 %v949, %v949
          %v951 = vpack.c.b16 %v929, %v929
          %v952 = vpack.c.b8 %v951, %v951
          %v953 = vpack.c.b16 %v930, %v930
          %v954 = vpack.c.b8 %v953, %v953
          %v955 = vpack.c.b16 %v931, %v931
          %v956 = vpack.c.b8 %v955, %v955
          %v957 = vpack.c.b16 %v932, %v932
          %v958 = vpack.c.b8 %v957, %v957
          %v959 = vpack.c.b16 %v933, %v933
          %v960 = vpack.c.b8 %v959, %v959
          %v961 = vpack.c.b16 %v934, %v934
          %v962 = vpack.c.b8 %v961, %v961
          %v963 = vpack.c.b16 %v935, %v935
          %v964 = vpack.c.b8 %v963, %v963
          %v965 = vpack.c.b16 %v936, %v936
          %v966 = vpack.c.b8 %v965, %v965
          %v967 = vpack.c.b16 %v937, %v937
          %v968 = vpack.c.b8 %v967, %v967
          %v969 = vpack.c.b16 %v938, %v938
          %v970 = vpack.c.b8 %v969, %v969
          %vm971 = vnez %v940
          %vm972 = vnez %v942
          %vm973 = vnez %v944
          %vm974 = vnez %v946
          %vm975 = vnez %v948
          %vm976 = vnez %v950
          %vm977 = vnez %v952
          %vm978 = vnez %v954
          %vm979 = vnez %v956
          %vm980 = vnez %v958
          %vm981 = vnez %v960
          %vm982 = vnez %v962
          %vm983 = vnez %v964
          %vm984 = vnez %v966
          %vm985 = vnez %v968
          %vm986 = vnez %v970
          %v987 = vsel %vm971, 16843009, 0
          %v988 = vsel %vm972, 16843009, 0
          %v989 = vsel %vm973, 16843009, 0
          %v990 = vsel %vm974, 16843009, 0
          %v991 = vsel %vm975, 16843009, 0
          %v992 = vsel %vm976, 16843009, 0
          %v993 = vsel %vm977, 16843009, 0
          %v994 = vsel %vm978, 16843009, 0
          %v995 = vsel %vm979, 16843009, 0
          %v996 = vsel %vm980, 16843009, 0
          %v997 = vsel %vm981, 16843009, 0
          %v998 = vsel %vm982, 16843009, 0
          %v999 = vsel %vm983, 16843009, 0
          %v1000 = vsel %vm984, 16843009, 0
          %v1001 = vsel %vm985, 16843009, 0
          %v1002 = vsel %vm986, 16843009, 0
          %v1003 = vunpack.c.0.s8 %v987
          %v1004 = vunpack.c.0.s8 %v988
          %v1005 = vunpack.c.0.s8 %v989
          %v1006 = vunpack.c.0.s8 %v990
          %v1007 = vunpack.c.0.s8 %v991
          %v1008 = vunpack.c.0.s8 %v992
          %v1009 = vunpack.c.0.s8 %v993
          %v1010 = vunpack.c.0.s8 %v994
          %v1011 = vunpack.c.0.s8 %v995
          %v1012 = vunpack.c.0.s8 %v996
          %v1013 = vunpack.c.0.s8 %v997
          %v1014 = vunpack.c.0.s8 %v998
          %v1015 = vunpack.c.0.s8 %v999
          %v1016 = vunpack.c.0.s8 %v1000
          %v1017 = vunpack.c.0.s8 %v1001
          %v1018 = vunpack.c.0.s8 %v1002
          %vm1019 = vcmp.ne.s32.totalorder %v1003, 0
          %vm1020 = vcmp.ne.s32.totalorder %v1004, 0
          %vm1021 = vcmp.ne.s32.totalorder %v1005, 0
          %vm1022 = vcmp.ne.s32.totalorder %v1006, 0
          %vm1023 = vcmp.ne.s32.totalorder %v1007, 0
          %vm1024 = vcmp.ne.s32.totalorder %v1008, 0
          %vm1025 = vcmp.ne.s32.totalorder %v1009, 0
          %vm1026 = vcmp.ne.s32.totalorder %v1010, 0
          %vm1027 = vcmp.ne.s32.totalorder %v1011, 0
          %vm1028 = vcmp.ne.s32.totalorder %v1012, 0
          %vm1029 = vcmp.ne.s32.totalorder %v1013, 0
          %vm1030 = vcmp.ne.s32.totalorder %v1014, 0
          %vm1031 = vcmp.ne.s32.totalorder %v1015, 0
          %vm1032 = vcmp.ne.s32.totalorder %v1016, 0
          %vm1033 = vcmp.ne.s32.totalorder %v1017, 0
          %vm1034 = vcmp.ne.s32.totalorder %v1018, 0
          %v1035 = vsel %vm1019, %v888, 0.0
          %v1036 = vsel %vm1020, %v890, 0.0
          %v1037 = vsel %vm1021, %v892, 0.0
          %v1038 = vsel %vm1022, %v894, 0.0
          %v1039 = vsel %vm1023, %v896, 0.0
          %v1040 = vsel %vm1024, %v898, 0.0
          %v1041 = vsel %vm1025, %v900, 0.0
          %v1042 = vsel %vm1026, %v902, 0.0
          %v1043 = vsel %vm1027, %v904, 0.0
          %v1044 = vsel %vm1028, %v906, 0.0
          %v1045 = vsel %vm1029, %v908, 0.0
          %v1046 = vsel %vm1030, %v910, 0.0
          %v1047 = vsel %vm1031, %v912, 0.0
          %v1048 = vsel %vm1032, %v914, 0.0
          %v1049 = vsel %vm1033, %v916, 0.0
          %v1050 = vsel %vm1034, %v918, 0.0
          %v1051 = vpack.c.bf16 %v1036, %v1035
          %v1052 = vpack.c.bf16 %v1038, %v1037
          %v1053 = vpack.c.bf16 %v1040, %v1039
          %v1054 = vpack.c.bf16 %v1042, %v1041
          %v1055 = vpack.c.bf16 %v1044, %v1043
          %v1056 = vpack.c.bf16 %v1046, %v1045
          %v1057 = vpack.c.bf16 %v1048, %v1047
          %v1058 = vpack.c.bf16 %v1050, %v1049
          %v1075 = vunpack.c.l.b16 %v613
          %v1076 = vunpack.c.l.b16 %v614
          %v1077 = vunpack.c.l.b16 %v615
          %v1078 = vunpack.c.l.b16 %v616
          %v1079 = vunpack.c.l.b16 %v617
          %v1080 = vunpack.c.l.b16 %v618
          %v1081 = vunpack.c.l.b16 %v619
          %v1082 = vunpack.c.l.b16 %v620
          %v1083 = vunpack.c.l.b16 %v621
          %v1084 = vunpack.c.l.b16 %v622
          %v1085 = vunpack.c.l.b16 %v623
          %v1086 = vunpack.c.l.b16 %v624
          %v1087 = vunpack.c.l.b16 %v625
          %v1088 = vunpack.c.l.b16 %v626
          %v1089 = vunpack.c.l.b16 %v627
          %v1090 = vunpack.c.l.b16 %v628
          %v1091 = vpack.c.b16 %v1076, %v1075
          %v1092 = vpack.c.b16 %v1078, %v1077
          %v1093 = vpack.c.b16 %v1080, %v1079
          %v1094 = vpack.c.b16 %v1082, %v1081
          %v1095 = vpack.c.b16 %v1084, %v1083
          %v1096 = vpack.c.b16 %v1086, %v1085
          %v1097 = vpack.c.b16 %v1088, %v1087
          %v1098 = vpack.c.b16 %v1090, %v1089
          %1107 = vmatprep.subr.bf16.mxu0 0
          %1108 = vmatpush1.bf16.msra.mxu0 %v1091
          %1109 = vmatprep.subr.bf16.mxu0 0
          %1110 = vmatpush1.bf16.msra.mxu0 %v1092
          %1111 = vmatprep.subr.bf16.mxu0 0
          %1112 = vmatpush1.bf16.msra.mxu0 %v1093
          %1113 = vmatprep.subr.bf16.mxu0 0
          %1114 = vmatpush1.bf16.msra.mxu0 %v1094
          %1115 = vmatprep.subr.bf16.mxu0 0
          %1116 = vmatpush1.bf16.msra.mxu0 %v1095
          %1117 = vmatprep.subr.bf16.mxu0 0
          %1118 = vmatpush1.bf16.msra.mxu0 %v1096
          %1119 = vmatprep.subr.bf16.mxu0 0
          %1120 = vmatpush1.bf16.msra.mxu0 %v1097
          %1121 = vmatprep.subr.bf16.mxu0 0
          %1122 = vmatpush1.bf16.msra.mxu0 %v1098
          %1123 = vmatprep.subr.bf16.mxu0 0
          %1124 = vmatpush1.bf16.msra.mxu0 0
          %1125 = vmatprep.subr.bf16.mxu0 0
          %1126 = vmatpush1.bf16.msra.mxu0 0
          %1127 = vmatprep.subr.bf16.mxu0 0
          %1128 = vmatpush1.bf16.msra.mxu0 0
          %1129 = vmatprep.subr.bf16.mxu0 0
          %1130 = vmatpush1.bf16.msra.mxu0 0
          %1131 = vmatprep.subr.bf16.mxu0 0
          %1132 = vmatpush1.bf16.msra.mxu0 0
          %1133 = vmatprep.subr.bf16.mxu0 0
          %1134 = vmatpush1.bf16.msra.mxu0 0
          %1135 = vmatprep.subr.bf16.mxu0 0
          %1136 = vmatpush1.bf16.msra.mxu0 0
          %1137 = vmatprep.subr.bf16.mxu0 0
          %1138 = vmatpush1.bf16.msra.mxu0 0
          %1139 = vmatprep.mubr.bf16.mxu0 0
          %1140 = vmatmul.mubr.bf16.gmra.mrb[0].mxu0 %v1051
          %v1141 = vpop.f32.mrb[0].mxu0
          %v1142 = vadd.f32 0.0, %v1141
          %v1143 = vpop.f32.mrb[0].mxu0
          %v1144 = vpop.f32.mrb[0].mxu0
          %v1145 = vadd.f32 0.0, %v1144
          %v1146 = vpop.f32.mrb[0].mxu0
          %1147 = vmatprep.mubr.bf16.mxu0 0
          %1148 = vmatmul.mubr.bf16.gmra.mrb[0].mxu0 %v1052
          %v1149 = vpop.f32.mrb[0].mxu0
          %v1150 = vadd.f32 0.0, %v1149
          %v1151 = vpop.f32.mrb[0].mxu0
          %v1152 = vpop.f32.mrb[0].mxu0
          %v1153 = vadd.f32 0.0, %v1152
          %v1154 = vpop.f32.mrb[0].mxu0
          %1155 = vmatprep.mubr.bf16.mxu0 0
          %1156 = vmatmul.mubr.bf16.gmra.mrb[0].mxu0 %v1053
          %v1157 = vpop.f32.mrb[0].mxu0
          %v1158 = vadd.f32 0.0, %v1157
          %v1159 = vpop.f32.mrb[0].mxu0
          %v1160 = vpop.f32.mrb[0].mxu0
          %v1161 = vadd.f32 0.0, %v1160
          %v1162 = vpop.f32.mrb[0].mxu0
          %1163 = vmatprep.mubr.bf16.mxu0 0
          %1164 = vmatmul.mubr.bf16.gmra.mrb[0].mxu0 %v1054
          %v1165 = vpop.f32.mrb[0].mxu0
          %v1166 = vadd.f32 0.0, %v1165
          %v1167 = vpop.f32.mrb[0].mxu0
          %v1168 = vpop.f32.mrb[0].mxu0
          %v1169 = vadd.f32 0.0, %v1168
          %v1170 = vpop.f32.mrb[0].mxu0
          %1171 = vmatprep.mubr.bf16.mxu0 0
          %1172 = vmatmul.mubr.bf16.gmra.mrb[0].mxu0 %v1055
          %v1173 = vpop.f32.mrb[0].mxu0
          %v1174 = vadd.f32 0.0, %v1173
          %v1175 = vpop.f32.mrb[0].mxu0
          %v1176 = vpop.f32.mrb[0].mxu0
          %v1177 = vadd.f32 0.0, %v1176
          %v1178 = vpop.f32.mrb[0].mxu0
          %1179 = vmatprep.mubr.bf16.mxu0 0
          %1180 = vmatmul.mubr.bf16.gmra.mrb[0].mxu0 %v1056
          %v1181 = vpop.f32.mrb[0].mxu0
          %v1182 = vadd.f32 0.0, %v1181
          %v1183 = vpop.f32.mrb[0].mxu0
          %v1184 = vpop.f32.mrb[0].mxu0
          %v1185 = vadd.f32 0.0, %v1184
          %v1186 = vpop.f32.mrb[0].mxu0
          %1187 = vmatprep.mubr.bf16.mxu0 0
          %1188 = vmatmul.mubr.bf16.gmra.mrb[0].mxu0 %v1057
          %v1189 = vpop.f32.mrb[0].mxu0
          %v1190 = vadd.f32 0.0, %v1189
          %v1191 = vpop.f32.mrb[0].mxu0
          %v1192 = vpop.f32.mrb[0].mxu0
          %v1193 = vadd.f32 0.0, %v1192
          %v1194 = vpop.f32.mrb[0].mxu0
          %1195 = vmatprep.mubr.bf16.mxu0 0
          %1196 = vmatmul.mubr.bf16.gmra.mrb[0].mxu0 %v1058
          %v1197 = vpop.f32.mrb[0].mxu0
          %v1198 = vadd.f32 0.0, %v1197
          %v1199 = vpop.f32.mrb[0].mxu0
          %v1200 = vpop.f32.mrb[0].mxu0
          %v1201 = vadd.f32 0.0, %v1200
          %v1202 = vpop.f32.mrb[0].mxu0
          %1203 = vdwg.mxu0
          %1204 = vrot.lane.b32.xlu0 %v661, 120
          %v1205 = vpop.permute.xlu0 %1204
          %1206 = vrot.lane.b32.xlu0 %v662, 120
          %v1207 = vpop.permute.xlu0 %1206
          %1208 = vrot.lane.b32.xlu0 %v663, 120
          %v1209 = vpop.permute.xlu0 %1208
          %1210 = vrot.lane.b32.xlu0 %v664, 120
          %v1211 = vpop.permute.xlu0 %1210
          %1212 = vrot.lane.b32.xlu0 %v665, 120
          %v1213 = vpop.permute.xlu0 %1212
          %1214 = vrot.lane.b32.xlu0 %v666, 120
          %v1215 = vpop.permute.xlu0 %1214
          %1216 = vrot.lane.b32.xlu0 %v667, 120
          %v1217 = vpop.permute.xlu0 %1216
          %1218 = vrot.lane.b32.xlu0 %v668, 120
          %v1219 = vpop.permute.xlu0 %1218
          %1220 = vrot.lane.b32.xlu0 %v701, 120
          %v1221 = vpop.permute.xlu0 %1220
          %1222 = vrot.lane.b32.xlu0 %v702, 120
          %v1223 = vpop.permute.xlu0 %1222
          %1224 = vrot.lane.b32.xlu0 %v703, 120
          %v1225 = vpop.permute.xlu0 %1224
          %1226 = vrot.lane.b32.xlu0 %v704, 120
          %v1227 = vpop.permute.xlu0 %1226
          %1228 = vrot.lane.b32.xlu0 %v705, 120
          %v1229 = vpop.permute.xlu0 %1228
          %1230 = vrot.lane.b32.xlu0 %v706, 120
          %v1231 = vpop.permute.xlu0 %1230
          %1232 = vrot.lane.b32.xlu0 %v707, 120
          %v1233 = vpop.permute.xlu0 %1232
          %1234 = vrot.lane.b32.xlu0 %v708, 120
          %v1235 = vpop.permute.xlu0 %1234
          %v1237 = vsel %vm709, %v1205, 0
          %v1240 = vsel %vm709, %v1207, 0
          %v1243 = vsel %vm709, %v1209, 0
          %v1246 = vsel %vm709, %v1211, 0
          %v1249 = vsel %vm709, %v1213, 0
          %v1252 = vsel %vm709, %v1215, 0
          %v1255 = vsel %vm709, %v1217, 0
          %v1258 = vsel %vm709, %v1219, 0
          %v1261 = vsel %vm709, %v1221, 0
          %v1264 = vsel %vm709, %v1223, 0
          %v1267 = vsel %vm709, %v1225, 0
          %v1270 = vsel %vm709, %v1227, 0
          %v1273 = vsel %vm709, %v1229, 0
          %v1276 = vsel %vm709, %v1231, 0
          %v1279 = vsel %vm709, %v1233, 0
          %v1282 = vsel %vm709, %v1235, 0
          %1284 = vmatprep.subr.bf16.mxu0 0
          %1285 = vmatpush1.bf16.xpose.msra.mxu0 %v1261
          %1286 = vmatprep.subr.bf16.mxu0 0
          %1287 = vmatpush1.bf16.xpose.msra.mxu0 %v1264
          %1288 = vmatprep.subr.bf16.mxu0 0
          %1289 = vmatpush1.bf16.xpose.msra.mxu0 %v1267
          %1290 = vmatprep.subr.bf16.mxu0 0
          %1291 = vmatpush1.bf16.xpose.msra.mxu0 %v1270
          %1292 = vmatprep.subr.bf16.mxu0 0
          %1293 = vmatpush1.bf16.xpose.msra.mxu0 %v1273
          %1294 = vmatprep.subr.bf16.mxu0 0
          %1295 = vmatpush1.bf16.xpose.msra.mxu0 %v1276
          %1296 = vmatprep.subr.bf16.mxu0 0
          %1297 = vmatpush1.bf16.xpose.msra.mxu0 %v1279
          %1298 = vmatprep.subr.bf16.mxu0 0
          %1299 = vmatpush1.bf16.xpose.msra.mxu0 %v1282
          %1300 = vmatprep.subr.bf16.mxu0 0
          %1301 = vmatpush1.bf16.xpose.msra.mxu0 0
          %1302 = vmatprep.subr.bf16.mxu0 0
          %1303 = vmatpush1.bf16.xpose.msra.mxu0 0
          %1304 = vmatprep.subr.bf16.mxu0 0
          %1305 = vmatpush1.bf16.xpose.msra.mxu0 0
          %1306 = vmatprep.subr.bf16.mxu0 0
          %1307 = vmatpush1.bf16.xpose.msra.mxu0 0
          %1308 = vmatprep.subr.bf16.mxu0 0
          %1309 = vmatpush1.bf16.xpose.msra.mxu0 0
          %1310 = vmatprep.subr.bf16.mxu0 0
          %1311 = vmatpush1.bf16.xpose.msra.mxu0 0
          %1312 = vmatprep.subr.bf16.mxu0 0
          %1313 = vmatpush1.bf16.xpose.msra.mxu0 0
          %1314 = vmatprep.subr.bf16.mxu0 0
          %1315 = vmatpush1.bf16.xpose.msra.mxu0 0
          %1316 = vmatprep.mubr.bf16.mxu0 0
          %1317 = vmatmul.mubr.bf16.gmra.mrb[0].mxu0 %v1237
          %v1318 = vpop.f32.mrb[0].mxu0
          %v1319 = vadd.f32 0.0, %v1318
          %v1320 = vpop.f32.mrb[0].mxu0
          %v1321 = vpop.f32.mrb[0].mxu0
          %v1322 = vadd.f32 0.0, %v1321
          %v1323 = vpop.f32.mrb[0].mxu0
          %1324 = vmatprep.mubr.bf16.mxu0 0
          %1325 = vmatmul.mubr.bf16.gmra.mrb[0].mxu0 %v1240
          %v1326 = vpop.f32.mrb[0].mxu0
          %v1327 = vadd.f32 0.0, %v1326
          %v1328 = vpop.f32.mrb[0].mxu0
          %v1329 = vpop.f32.mrb[0].mxu0
          %v1330 = vadd.f32 0.0, %v1329
          %v1331 = vpop.f32.mrb[0].mxu0
          %1332 = vmatprep.mubr.bf16.mxu0 0
          %1333 = vmatmul.mubr.bf16.gmra.mrb[0].mxu0 %v1243
          %v1334 = vpop.f32.mrb[0].mxu0
          %v1335 = vadd.f32 0.0, %v1334
          %v1336 = vpop.f32.mrb[0].mxu0
          %v1337 = vpop.f32.mrb[0].mxu0
          %v1338 = vadd.f32 0.0, %v1337
          %v1339 = vpop.f32.mrb[0].mxu0
          %1340 = vmatprep.mubr.bf16.mxu0 0
          %1341 = vmatmul.mubr.bf16.gmra.mrb[0].mxu0 %v1246
          %v1342 = vpop.f32.mrb[0].mxu0
          %v1343 = vadd.f32 0.0, %v1342
          %v1344 = vpop.f32.mrb[0].mxu0
          %v1345 = vpop.f32.mrb[0].mxu0
          %v1346 = vadd.f32 0.0, %v1345
          %v1347 = vpop.f32.mrb[0].mxu0
          %1348 = vmatprep.mubr.bf16.mxu0 0
          %1349 = vmatmul.mubr.bf16.gmra.mrb[0].mxu0 %v1249
          %v1350 = vpop.f32.mrb[0].mxu0
          %v1351 = vadd.f32 0.0, %v1350
          %v1352 = vpop.f32.mrb[0].mxu0
          %v1353 = vpop.f32.mrb[0].mxu0
          %v1354 = vadd.f32 0.0, %v1353
          %v1355 = vpop.f32.mrb[0].mxu0
          %1356 = vmatprep.mubr.bf16.mxu0 0
          %1357 = vmatmul.mubr.bf16.gmra.mrb[0].mxu0 %v1252
          %v1358 = vpop.f32.mrb[0].mxu0
          %v1359 = vadd.f32 0.0, %v1358
          %v1360 = vpop.f32.mrb[0].mxu0
          %v1361 = vpop.f32.mrb[0].mxu0
          %v1362 = vadd.f32 0.0, %v1361
          %v1363 = vpop.f32.mrb[0].mxu0
          %1364 = vmatprep.mubr.bf16.mxu0 0
          %1365 = vmatmul.mubr.bf16.gmra.mrb[0].mxu0 %v1255
          %v1366 = vpop.f32.mrb[0].mxu0
          %v1367 = vadd.f32 0.0, %v1366
          %v1368 = vpop.f32.mrb[0].mxu0
          %v1369 = vpop.f32.mrb[0].mxu0
          %v1370 = vadd.f32 0.0, %v1369
          %v1371 = vpop.f32.mrb[0].mxu0
          %1372 = vmatprep.mubr.bf16.mxu0 0
          %1373 = vmatmul.mubr.bf16.gmra.mrb[0].mxu0 %v1258
          %v1374 = vpop.f32.mrb[0].mxu0
          %v1375 = vadd.f32 0.0, %v1374
          %v1376 = vpop.f32.mrb[0].mxu0
          %v1377 = vpop.f32.mrb[0].mxu0
          %v1378 = vadd.f32 0.0, %v1377
          %v1379 = vpop.f32.mrb[0].mxu0
          %1380 = vdwg.mxu0
          %v1381 = vmax.f32 %v1319, -5.0
          %v1382 = vmax.f32 %v1322, -5.0
          %v1383 = vmax.f32 %v1327, -5.0
          %v1384 = vmax.f32 %v1330, -5.0
          %v1385 = vmax.f32 %v1335, -5.0
          %v1386 = vmax.f32 %v1338, -5.0
          %v1387 = vmax.f32 %v1343, -5.0
          %v1388 = vmax.f32 %v1346, -5.0
          %v1389 = vmax.f32 %v1351, -5.0
          %v1390 = vmax.f32 %v1354, -5.0
          %v1391 = vmax.f32 %v1359, -5.0
          %v1392 = vmax.f32 %v1362, -5.0
          %v1393 = vmax.f32 %v1367, -5.0
          %v1394 = vmax.f32 %v1370, -5.0
          %v1395 = vmax.f32 %v1375, -5.0
          %v1396 = vmax.f32 %v1378, -5.0
          %v1397 = vmin.f32 %v1381, 5.0
          %v1398 = vmin.f32 %v1382, 5.0
          %v1399 = vmin.f32 %v1383, 5.0
          %v1400 = vmin.f32 %v1384, 5.0
          %v1401 = vmin.f32 %v1385, 5.0
          %v1402 = vmin.f32 %v1386, 5.0
          %v1403 = vmin.f32 %v1387, 5.0
          %v1404 = vmin.f32 %v1388, 5.0
          %v1405 = vmin.f32 %v1389, 5.0
          %v1406 = vmin.f32 %v1390, 5.0
          %v1407 = vmin.f32 %v1391, 5.0
          %v1408 = vmin.f32 %v1392, 5.0
          %v1409 = vmin.f32 %v1393, 5.0
          %v1410 = vmin.f32 %v1394, 5.0
          %v1411 = vmin.f32 %v1395, 5.0
          %v1412 = vmin.f32 %v1396, 5.0
          %v1413 = vmul.f32 %v1397, 1.442695
          %v1414 = vpow.pop %v1413
          %v1415 = vmul.f32 %v1398, 1.442695
          %v1416 = vpow.pop %v1415
          %v1417 = vmul.f32 %v1399, 1.442695
          %v1418 = vpow.pop %v1417
          %v1419 = vmul.f32 %v1400, 1.442695
          %v1420 = vpow.pop %v1419
          %v1421 = vmul.f32 %v1401, 1.442695
          %v1422 = vpow.pop %v1421
          %v1423 = vmul.f32 %v1402, 1.442695
          %v1424 = vpow.pop %v1423
          %v1425 = vmul.f32 %v1403, 1.442695
          %v1426 = vpow.pop %v1425
          %v1427 = vmul.f32 %v1404, 1.442695
          %v1428 = vpow.pop %v1427
          %v1429 = vmul.f32 %v1405, 1.442695
          %v1430 = vpow.pop %v1429
          %v1431 = vmul.f32 %v1406, 1.442695
          %v1432 = vpow.pop %v1431
          %v1433 = vmul.f32 %v1407, 1.442695
          %v1434 = vpow.pop %v1433
          %v1435 = vmul.f32 %v1408, 1.442695
          %v1436 = vpow.pop %v1435
          %v1437 = vmul.f32 %v1409, 1.442695
          %v1438 = vpow.pop %v1437
          %v1439 = vmul.f32 %v1410, 1.442695
          %v1440 = vpow.pop %v1439
          %v1441 = vmul.f32 %v1411, 1.442695
          %v1442 = vpow.pop %v1441
          %v1443 = vmul.f32 %v1412, 1.442695
          %v1444 = vpow.pop %v1443
          %v1445 = vsel %vm1019, %v1414, 0.0
          %v1446 = vsel %vm1020, %v1416, 0.0
          %v1447 = vsel %vm1021, %v1418, 0.0
          %v1448 = vsel %vm1022, %v1420, 0.0
          %v1449 = vsel %vm1023, %v1422, 0.0
          %v1450 = vsel %vm1024, %v1424, 0.0
          %v1451 = vsel %vm1025, %v1426, 0.0
          %v1452 = vsel %vm1026, %v1428, 0.0
          %v1453 = vsel %vm1027, %v1430, 0.0
          %v1454 = vsel %vm1028, %v1432, 0.0
          %v1455 = vsel %vm1029, %v1434, 0.0
          %v1456 = vsel %vm1030, %v1436, 0.0
          %v1457 = vsel %vm1031, %v1438, 0.0
          %v1458 = vsel %vm1032, %v1440, 0.0
          %v1459 = vsel %vm1033, %v1442, 0.0
          %v1460 = vsel %vm1034, %v1444, 0.0
          %v1461 = vpack.c.bf16 %v1446, %v1445
          %v1462 = vpack.c.bf16 %v1448, %v1447
          %v1463 = vpack.c.bf16 %v1450, %v1449
          %v1464 = vpack.c.bf16 %v1452, %v1451
          %v1465 = vpack.c.bf16 %v1454, %v1453
          %v1466 = vpack.c.bf16 %v1456, %v1455
          %v1467 = vpack.c.bf16 %v1458, %v1457
          %v1468 = vpack.c.bf16 %v1460, %v1459
          %1469 = vrot.lane.b32.xlu0 %v1091, 119
          %v1470 = vpop.permute.xlu0 %1469
          %1471 = vrot.lane.b32.xlu0 %v1092, 119
          %v1472 = vpop.permute.xlu0 %1471
          %1473 = vrot.lane.b32.xlu0 %v1093, 119
          %v1474 = vpop.permute.xlu0 %1473
          %1475 = vrot.lane.b32.xlu0 %v1094, 119
          %v1476 = vpop.permute.xlu0 %1475
          %1477 = vrot.lane.b32.xlu0 %v1095, 119
          %v1478 = vpop.permute.xlu0 %1477
          %1479 = vrot.lane.b32.xlu0 %v1096, 119
          %v1480 = vpop.permute.xlu0 %1479
          %1481 = vrot.lane.b32.xlu0 %v1097, 119
          %v1482 = vpop.permute.xlu0 %1481
          %1483 = vrot.lane.b32.xlu0 %v1098, 119
          %v1484 = vpop.permute.xlu0 %1483
          %1493 = vmatprep.subr.bf16.mxu0 0
          %1494 = vmatpush1.bf16.msra.mxu0 %v1470
          %1495 = vmatprep.subr.bf16.mxu0 0
          %1496 = vmatpush1.bf16.msra.mxu0 %v1472
          %1497 = vmatprep.subr.bf16.mxu0 0
          %1498 = vmatpush1.bf16.msra.mxu0 %v1474
          %1499 = vmatprep.subr.bf16.mxu0 0
          %1500 = vmatpush1.bf16.msra.mxu0 %v1476
          %1501 = vmatprep.subr.bf16.mxu0 0
          %1502 = vmatpush1.bf16.msra.mxu0 %v1478
          %1503 = vmatprep.subr.bf16.mxu0 0
          %1504 = vmatpush1.bf16.msra.mxu0 %v1480
          %1505 = vmatprep.subr.bf16.mxu0 0
          %1506 = vmatpush1.bf16.msra.mxu0 %v1482
          %1507 = vmatprep.subr.bf16.mxu0 0
          %1508 = vmatpush1.bf16.msra.mxu0 %v1484
          %1509 = vmatprep.subr.bf16.mxu0 0
          %1510 = vmatpush1.bf16.msra.mxu0 0
          %1511 = vmatprep.subr.bf16.mxu0 0
          %1512 = vmatpush1.bf16.msra.mxu0 0
          %1513 = vmatprep.subr.bf16.mxu0 0
          %1514 = vmatpush1.bf16.msra.mxu0 0
          %1515 = vmatprep.subr.bf16.mxu0 0
          %1516 = vmatpush1.bf16.msra.mxu0 0
          %1517 = vmatprep.subr.bf16.mxu0 0
          %1518 = vmatpush1.bf16.msra.mxu0 0
          %1519 = vmatprep.subr.bf16.mxu0 0
          %1520 = vmatpush1.bf16.msra.mxu0 0
          %1521 = vmatprep.subr.bf16.mxu0 0
          %1522 = vmatpush1.bf16.msra.mxu0 0
          %1523 = vmatprep.subr.bf16.mxu0 0
          %1524 = vmatpush1.bf16.msra.mxu0 0
          %1525 = vmatprep.mubr.bf16.mxu0 0
          %1526 = vmatmul.mubr.bf16.gmra.mrb[0].mxu0 %v1461
          %v1527 = vpop.f32.mrb[0].mxu0
          %v1528 = vadd.f32 0.0, %v1527
          %v1529 = vpop.f32.mrb[0].mxu0
          %v1530 = vpop.f32.mrb[0].mxu0
          %v1531 = vadd.f32 0.0, %v1530
          %v1532 = vpop.f32.mrb[0].mxu0
          %1533 = vmatprep.mubr.bf16.mxu0 0
          %1534 = vmatmul.mubr.bf16.gmra.mrb[0].mxu0 %v1462
          %v1535 = vpop.f32.mrb[0].mxu0
          %v1536 = vadd.f32 0.0, %v1535
          %v1537 = vpop.f32.mrb[0].mxu0
          %v1538 = vpop.f32.mrb[0].mxu0
          %v1539 = vadd.f32 0.0, %v1538
          %v1540 = vpop.f32.mrb[0].mxu0
          %1541 = vmatprep.mubr.bf16.mxu0 0
          %1542 = vmatmul.mubr.bf16.gmra.mrb[0].mxu0 %v1463
          %v1543 = vpop.f32.mrb[0].mxu0
          %v1544 = vadd.f32 0.0, %v1543
          %v1545 = vpop.f32.mrb[0].mxu0
          %v1546 = vpop.f32.mrb[0].mxu0
          %v1547 = vadd.f32 0.0, %v1546
          %v1548 = vpop.f32.mrb[0].mxu0
          %1549 = vmatprep.mubr.bf16.mxu0 0
          %1550 = vmatmul.mubr.bf16.gmra.mrb[0].mxu0 %v1464
          %v1551 = vpop.f32.mrb[0].mxu0
          %v1552 = vadd.f32 0.0, %v1551
          %v1553 = vpop.f32.mrb[0].mxu0
          %v1554 = vpop.f32.mrb[0].mxu0
          %v1555 = vadd.f32 0.0, %v1554
          %v1556 = vpop.f32.mrb[0].mxu0
          %1557 = vmatprep.mubr.bf16.mxu0 0
          %1558 = vmatmul.mubr.bf16.gmra.mrb[0].mxu0 %v1465
          %v1559 = vpop.f32.mrb[0].mxu0
          %v1560 = vadd.f32 0.0, %v1559
          %v1561 = vpop.f32.mrb[0].mxu0
          %v1562 = vpop.f32.mrb[0].mxu0
          %v1563 = vadd.f32 0.0, %v1562
          %v1564 = vpop.f32.mrb[0].mxu0
          %1565 = vmatprep.mubr.bf16.mxu0 0
          %1566 = vmatmul.mubr.bf16.gmra.mrb[0].mxu0 %v1466
          %v1567 = vpop.f32.mrb[0].mxu0
          %v1568 = vadd.f32 0.0, %v1567
          %v1569 = vpop.f32.mrb[0].mxu0
          %v1570 = vpop.f32.mrb[0].mxu0
          %v1571 = vadd.f32 0.0, %v1570
          %v1572 = vpop.f32.mrb[0].mxu0
          %1573 = vmatprep.mubr.bf16.mxu0 0
          %1574 = vmatmul.mubr.bf16.gmra.mrb[0].mxu0 %v1467
          %v1575 = vpop.f32.mrb[0].mxu0
          %v1576 = vadd.f32 0.0, %v1575
          %v1577 = vpop.f32.mrb[0].mxu0
          %v1578 = vpop.f32.mrb[0].mxu0
          %v1579 = vadd.f32 0.0, %v1578
          %v1580 = vpop.f32.mrb[0].mxu0
          %1581 = vmatprep.mubr.bf16.mxu0 0
          %1582 = vmatmul.mubr.bf16.gmra.mrb[0].mxu0 %v1468
          %v1583 = vpop.f32.mrb[0].mxu0
          %v1584 = vadd.f32 0.0, %v1583
          %v1585 = vpop.f32.mrb[0].mxu0
          %v1586 = vpop.f32.mrb[0].mxu0
          %v1587 = vadd.f32 0.0, %v1586
          %v1588 = vpop.f32.mrb[0].mxu0
          %1589 = vdwg.mxu0
          %1590 = vrot.lane.b32.xlu0 %v661, 112
          %v1591 = vpop.permute.xlu0 %1590
          %1592 = vrot.lane.b32.xlu0 %v662, 112
          %v1593 = vpop.permute.xlu0 %1592
          %1594 = vrot.lane.b32.xlu0 %v663, 112
          %v1595 = vpop.permute.xlu0 %1594
          %1596 = vrot.lane.b32.xlu0 %v664, 112
          %v1597 = vpop.permute.xlu0 %1596
          %1598 = vrot.lane.b32.xlu0 %v665, 112
          %v1599 = vpop.permute.xlu0 %1598
          %1600 = vrot.lane.b32.xlu0 %v666, 112
          %v1601 = vpop.permute.xlu0 %1600
          %1602 = vrot.lane.b32.xlu0 %v667, 112
          %v1603 = vpop.permute.xlu0 %1602
          %1604 = vrot.lane.b32.xlu0 %v668, 112
          %v1605 = vpop.permute.xlu0 %1604
          %1606 = vrot.lane.b32.xlu0 %v701, 112
          %v1607 = vpop.permute.xlu0 %1606
          %1608 = vrot.lane.b32.xlu0 %v702, 112
          %v1609 = vpop.permute.xlu0 %1608
          %1610 = vrot.lane.b32.xlu0 %v703, 112
          %v1611 = vpop.permute.xlu0 %1610
          %1612 = vrot.lane.b32.xlu0 %v704, 112
          %v1613 = vpop.permute.xlu0 %1612
          %1614 = vrot.lane.b32.xlu0 %v705, 112
          %v1615 = vpop.permute.xlu0 %1614
          %1616 = vrot.lane.b32.xlu0 %v706, 112
          %v1617 = vpop.permute.xlu0 %1616
          %1618 = vrot.lane.b32.xlu0 %v707, 112
          %v1619 = vpop.permute.xlu0 %1618
          %1620 = vrot.lane.b32.xlu0 %v708, 112
          %v1621 = vpop.permute.xlu0 %1620
          %v1623 = vsel %vm709, %v1591, 0
          %v1626 = vsel %vm709, %v1593, 0
          %v1629 = vsel %vm709, %v1595, 0
          %v1632 = vsel %vm709, %v1597, 0
          %v1635 = vsel %vm709, %v1599, 0
          %v1638 = vsel %vm709, %v1601, 0
          %v1641 = vsel %vm709, %v1603, 0
          %v1644 = vsel %vm709, %v1605, 0
          %v1647 = vsel %vm709, %v1607, 0
          %v1650 = vsel %vm709, %v1609, 0
          %v1653 = vsel %vm709, %v1611, 0
          %v1656 = vsel %vm709, %v1613, 0
          %v1659 = vsel %vm709, %v1615, 0
          %v1662 = vsel %vm709, %v1617, 0
          %v1665 = vsel %vm709, %v1619, 0
          %v1668 = vsel %vm709, %v1621, 0
          %1670 = vmatprep.subr.bf16.mxu0 0
          %1671 = vmatpush1.bf16.xpose.msra.mxu0 %v1647
          %1672 = vmatprep.subr.bf16.mxu0 0
          %1673 = vmatpush1.bf16.xpose.msra.mxu0 %v1650
          %1674 = vmatprep.subr.bf16.mxu0 0
          %1675 = vmatpush1.bf16.xpose.msra.mxu0 %v1653
          %1676 = vmatprep.subr.bf16.mxu0 0
          %1677 = vmatpush1.bf16.xpose.msra.mxu0 %v1656
          %1678 = vmatprep.subr.bf16.mxu0 0
          %1679 = vmatpush1.bf16.xpose.msra.mxu0 %v1659
          %1680 = vmatprep.subr.bf16.mxu0 0
          %1681 = vmatpush1.bf16.xpose.msra.mxu0 %v1662
          %1682 = vmatprep.subr.bf16.mxu0 0
          %1683 = vmatpush1.bf16.xpose.msra.mxu0 %v1665
          %1684 = vmatprep.subr.bf16.mxu0 0
          %1685 = vmatpush1.bf16.xpose.msra.mxu0 %v1668
          %1686 = vmatprep.subr.bf16.mxu0 0
          %1687 = vmatpush1.bf16.xpose.msra.mxu0 0
          %1688 = vmatprep.subr.bf16.mxu0 0
          %1689 = vmatpush1.bf16.xpose.msra.mxu0 0
          %1690 = vmatprep.subr.bf16.mxu0 0
          %1691 = vmatpush1.bf16.xpose.msra.mxu0 0
          %1692 = vmatprep.subr.bf16.mxu0 0
          %1693 = vmatpush1.bf16.xpose.msra.mxu0 0
          %1694 = vmatprep.subr.bf16.mxu0 0
          %1695 = vmatpush1.bf16.xpose.msra.mxu0 0
          %1696 = vmatprep.subr.bf16.mxu0 0
          %1697 = vmatpush1.bf16.xpose.msra.mxu0 0
          %1698 = vmatprep.subr.bf16.mxu0 0
          %1699 = vmatpush1.bf16.xpose.msra.mxu0 0
          %1700 = vmatprep.subr.bf16.mxu0 0
          %1701 = vmatpush1.bf16.xpose.msra.mxu0 0
          %1702 = vmatprep.mubr.bf16.mxu0 0
          %1703 = vmatmul.mubr.bf16.gmra.mrb[0].mxu0 %v1623
          %v1704 = vpop.f32.mrb[0].mxu0
          %v1705 = vadd.f32 0.0, %v1704
          %v1706 = vpop.f32.mrb[0].mxu0
          %v1707 = vpop.f32.mrb[0].mxu0
          %v1708 = vadd.f32 0.0, %v1707
          %v1709 = vpop.f32.mrb[0].mxu0
          %1710 = vmatprep.mubr.bf16.mxu0 0
          %1711 = vmatmul.mubr.bf16.gmra.mrb[0].mxu0 %v1626
          %v1712 = vpop.f32.mrb[0].mxu0
          %v1713 = vadd.f32 0.0, %v1712
          %v1714 = vpop.f32.mrb[0].mxu0
          %v1715 = vpop.f32.mrb[0].mxu0
          %v1716 = vadd.f32 0.0, %v1715
          %v1717 = vpop.f32.mrb[0].mxu0
          %1718 = vmatprep.mubr.bf16.mxu0 0
          %1719 = vmatmul.mubr.bf16.gmra.mrb[0].mxu0 %v1629
          %v1720 = vpop.f32.mrb[0].mxu0
          %v1721 = vadd.f32 0.0, %v1720
          %v1722 = vpop.f32.mrb[0].mxu0
          %v1723 = vpop.f32.mrb[0].mxu0
          %v1724 = vadd.f32 0.0, %v1723
          %v1725 = vpop.f32.mrb[0].mxu0
          %1726 = vmatprep.mubr.bf16.mxu0 0
          %1727 = vmatmul.mubr.bf16.gmra.mrb[0].mxu0 %v1632
          %v1728 = vpop.f32.mrb[0].mxu0
          %v1729 = vadd.f32 0.0, %v1728
          %v1730 = vpop.f32.mrb[0].mxu0
          %v1731 = vpop.f32.mrb[0].mxu0
          %v1732 = vadd.f32 0.0, %v1731
          %v1733 = vpop.f32.mrb[0].mxu0
          %1734 = vmatprep.mubr.bf16.mxu0 0
          %1735 = vmatmul.mubr.bf16.gmra.mrb[0].mxu0 %v1635
          %v1736 = vpop.f32.mrb[0].mxu0
          %v1737 = vadd.f32 0.0, %v1736
          %v1738 = vpop.f32.mrb[0].mxu0
          %v1739 = vpop.f32.mrb[0].mxu0
          %v1740 = vadd.f32 0.0, %v1739
          %v1741 = vpop.f32.mrb[0].mxu0
          %1742 = vmatprep.mubr.bf16.mxu0 0
          %1743 = vmatmul.mubr.bf16.gmra.mrb[0].mxu0 %v1638
          %v1744 = vpop.f32.mrb[0].mxu0
          %v1745 = vadd.f32 0.0, %v1744
          %v1746 = vpop.f32.mrb[0].mxu0
          %v1747 = vpop.f32.mrb[0].mxu0
          %v1748 = vadd.f32 0.0, %v1747
          %v1749 = vpop.f32.mrb[0].mxu0
          %1750 = vmatprep.mubr.bf16.mxu0 0
          %1751 = vmatmul.mubr.bf16.gmra.mrb[0].mxu0 %v1641
          %v1752 = vpop.f32.mrb[0].mxu0
          %v1753 = vadd.f32 0.0, %v1752
          %v1754 = vpop.f32.mrb[0].mxu0
          %v1755 = vpop.f32.mrb[0].mxu0
          %v1756 = vadd.f32 0.0, %v1755
          %v1757 = vpop.f32.mrb[0].mxu0
          %1758 = vmatprep.mubr.bf16.mxu0 0
          %1759 = vmatmul.mubr.bf16.gmra.mrb[0].mxu0 %v1644
          %v1760 = vpop.f32.mrb[0].mxu0
          %v1761 = vadd.f32 0.0, %v1760
          %v1762 = vpop.f32.mrb[0].mxu0
          %v1763 = vpop.f32.mrb[0].mxu0
          %v1764 = vadd.f32 0.0, %v1763
          %v1765 = vpop.f32.mrb[0].mxu0
          %1766 = vdwg.mxu0
          %v1767 = vmax.f32 %v1705, -5.0
          %v1768 = vmax.f32 %v1708, -5.0
          %v1769 = vmax.f32 %v1713, -5.0
          %v1770 = vmax.f32 %v1716, -5.0
          %v1771 = vmax.f32 %v1721, -5.0
          %v1772 = vmax.f32 %v1724, -5.0
          %v1773 = vmax.f32 %v1729, -5.0
          %v1774 = vmax.f32 %v1732, -5.0
          %v1775 = vmax.f32 %v1737, -5.0
          %v1776 = vmax.f32 %v1740, -5.0
          %v1777 = vmax.f32 %v1745, -5.0
          %v1778 = vmax.f32 %v1748, -5.0
          %v1779 = vmax.f32 %v1753, -5.0
          %v1780 = vmax.f32 %v1756, -5.0
          %v1781 = vmax.f32 %v1761, -5.0
          %v1782 = vmax.f32 %v1764, -5.0
          %v1783 = vmin.f32 %v1767, 5.0
          %v1784 = vmin.f32 %v1768, 5.0
          %v1785 = vmin.f32 %v1769, 5.0
          %v1786 = vmin.f32 %v1770, 5.0
          %v1787 = vmin.f32 %v1771, 5.0
          %v1788 = vmin.f32 %v1772, 5.0
          %v1789 = vmin.f32 %v1773, 5.0
          %v1790 = vmin.f32 %v1774, 5.0
          %v1791 = vmin.f32 %v1775, 5.0
          %v1792 = vmin.f32 %v1776, 5.0
          %v1793 = vmin.f32 %v1777, 5.0
          %v1794 = vmin.f32 %v1778, 5.0
          %v1795 = vmin.f32 %v1779, 5.0
          %v1796 = vmin.f32 %v1780, 5.0
          %v1797 = vmin.f32 %v1781, 5.0
          %v1798 = vmin.f32 %v1782, 5.0
          %v1799 = vmul.f32 %v1783, 1.442695
          %v1800 = vpow.pop %v1799
          %v1801 = vmul.f32 %v1784, 1.442695
          %v1802 = vpow.pop %v1801
          %v1803 = vmul.f32 %v1785, 1.442695
          %v1804 = vpow.pop %v1803
          %v1805 = vmul.f32 %v1786, 1.442695
          %v1806 = vpow.pop %v1805
          %v1807 = vmul.f32 %v1787, 1.442695
          %v1808 = vpow.pop %v1807
          %v1809 = vmul.f32 %v1788, 1.442695
          %v1810 = vpow.pop %v1809
          %v1811 = vmul.f32 %v1789, 1.442695
          %v1812 = vpow.pop %v1811
          %v1813 = vmul.f32 %v1790, 1.442695
          %v1814 = vpow.pop %v1813
          %v1815 = vmul.f32 %v1791, 1.442695
          %v1816 = vpow.pop %v1815
          %v1817 = vmul.f32 %v1792, 1.442695
          %v1818 = vpow.pop %v1817
          %v1819 = vmul.f32 %v1793, 1.442695
          %v1820 = vpow.pop %v1819
          %v1821 = vmul.f32 %v1794, 1.442695
          %v1822 = vpow.pop %v1821
          %v1823 = vmul.f32 %v1795, 1.442695
          %v1824 = vpow.pop %v1823
          %v1825 = vmul.f32 %v1796, 1.442695
          %v1826 = vpow.pop %v1825
          %v1827 = vmul.f32 %v1797, 1.442695
          %v1828 = vpow.pop %v1827
          %v1829 = vmul.f32 %v1798, 1.442695
          %v1830 = vpow.pop %v1829
          %v1831 = vsel %vm1019, %v1800, 0.0
          %v1832 = vsel %vm1020, %v1802, 0.0
          %v1833 = vsel %vm1021, %v1804, 0.0
          %v1834 = vsel %vm1022, %v1806, 0.0
          %v1835 = vsel %vm1023, %v1808, 0.0
          %v1836 = vsel %vm1024, %v1810, 0.0
          %v1837 = vsel %vm1025, %v1812, 0.0
          %v1838 = vsel %vm1026, %v1814, 0.0
          %v1839 = vsel %vm1027, %v1816, 0.0
          %v1840 = vsel %vm1028, %v1818, 0.0
          %v1841 = vsel %vm1029, %v1820, 0.0
          %v1842 = vsel %vm1030, %v1822, 0.0
          %v1843 = vsel %vm1031, %v1824, 0.0
          %v1844 = vsel %vm1032, %v1826, 0.0
          %v1845 = vsel %vm1033, %v1828, 0.0
          %v1846 = vsel %vm1034, %v1830, 0.0
          %v1847 = vpack.c.bf16 %v1832, %v1831
          %v1848 = vpack.c.bf16 %v1834, %v1833
          %v1849 = vpack.c.bf16 %v1836, %v1835
          %v1850 = vpack.c.bf16 %v1838, %v1837
          %v1851 = vpack.c.bf16 %v1840, %v1839
          %v1852 = vpack.c.bf16 %v1842, %v1841
          %v1853 = vpack.c.bf16 %v1844, %v1843
          %v1854 = vpack.c.bf16 %v1846, %v1845
          %1855 = vrot.lane.b32.xlu0 %v1091, 110
          %v1856 = vpop.permute.xlu0 %1855
          %1857 = vrot.lane.b32.xlu0 %v1092, 110
          %v1858 = vpop.permute.xlu0 %1857
          %1859 = vrot.lane.b32.xlu0 %v1093, 110
          %v1860 = vpop.permute.xlu0 %1859
          %1861 = vrot.lane.b32.xlu0 %v1094, 110
          %v1862 = vpop.permute.xlu0 %1861
          %1863 = vrot.lane.b32.xlu0 %v1095, 110
          %v1864 = vpop.permute.xlu0 %1863
          %1865 = vrot.lane.b32.xlu0 %v1096, 110
          %v1866 = vpop.permute.xlu0 %1865
          %1867 = vrot.lane.b32.xlu0 %v1097, 110
          %v1868 = vpop.permute.xlu0 %1867
          %1869 = vrot.lane.b32.xlu0 %v1098, 110
          %v1870 = vpop.permute.xlu0 %1869
          %1879 = vmatprep.subr.bf16.mxu0 0
          %1880 = vmatpush1.bf16.msra.mxu0 %v1856
          %1881 = vmatprep.subr.bf16.mxu0 0
          %1882 = vmatpush1.bf16.msra.mxu0 %v1858
          %1883 = vmatprep.subr.bf16.mxu0 0
          %1884 = vmatpush1.bf16.msra.mxu0 %v1860
          %1885 = vmatprep.subr.bf16.mxu0 0
          %1886 = vmatpush1.bf16.msra.mxu0 %v1862
          %1887 = vmatprep.subr.bf16.mxu0 0
          %1888 = vmatpush1.bf16.msra.mxu0 %v1864
          %1889 = vmatprep.subr.bf16.mxu0 0
          %1890 = vmatpush1.bf16.msra.mxu0 %v1866
          %1891 = vmatprep.subr.bf16.mxu0 0
          %1892 = vmatpush1.bf16.msra.mxu0 %v1868
          %1893 = vmatprep.subr.bf16.mxu0 0
          %1894 = vmatpush1.bf16.msra.mxu0 %v1870
          %1895 = vmatprep.subr.bf16.mxu0 0
          %1896 = vmatpush1.bf16.msra.mxu0 0
          %1897 = vmatprep.subr.bf16.mxu0 0
          %1898 = vmatpush1.bf16.msra.mxu0 0
          %1899 = vmatprep.subr.bf16.mxu0 0
          %1900 = vmatpush1.bf16.msra.mxu0 0
          %1901 = vmatprep.subr.bf16.mxu0 0
          %1902 = vmatpush1.bf16.msra.mxu0 0
          %1903 = vmatprep.subr.bf16.mxu0 0
          %1904 = vmatpush1.bf16.msra.mxu0 0
          %1905 = vmatprep.subr.bf16.mxu0 0
          %1906 = vmatpush1.bf16.msra.mxu0 0
          %1907 = vmatprep.subr.bf16.mxu0 0
          %1908 = vmatpush1.bf16.msra.mxu0 0
          %1909 = vmatprep.subr.bf16.mxu0 0
          %1910 = vmatpush1.bf16.msra.mxu0 0
          %1911 = vmatprep.mubr.bf16.mxu0 0
          %1912 = vmatmul.mubr.bf16.gmra.mrb[0].mxu0 %v1847
          %v1913 = vpop.f32.mrb[0].mxu0
          %v1914 = vadd.f32 0.0, %v1913
          %v1915 = vpop.f32.mrb[0].mxu0
          %v1916 = vpop.f32.mrb[0].mxu0
          %v1917 = vadd.f32 0.0, %v1916
          %v1918 = vpop.f32.mrb[0].mxu0
          %1919 = vmatprep.mubr.bf16.mxu0 0
          %1920 = vmatmul.mubr.bf16.gmra.mrb[0].mxu0 %v1848
          %v1921 = vpop.f32.mrb[0].mxu0
          %v1922 = vadd.f32 0.0, %v1921
          %v1923 = vpop.f32.mrb[0].mxu0
          %v1924 = vpop.f32.mrb[0].mxu0
          %v1925 = vadd.f32 0.0, %v1924
          %v1926 = vpop.f32.mrb[0].mxu0
          %1927 = vmatprep.mubr.bf16.mxu0 0
          %1928 = vmatmul.mubr.bf16.gmra.mrb[0].mxu0 %v1849
          %v1929 = vpop.f32.mrb[0].mxu0
          %v1930 = vadd.f32 0.0, %v1929
          %v1931 = vpop.f32.mrb[0].mxu0
          %v1932 = vpop.f32.mrb[0].mxu0
          %v1933 = vadd.f32 0.0, %v1932
          %v1934 = vpop.f32.mrb[0].mxu0
          %1935 = vmatprep.mubr.bf16.mxu0 0
          %1936 = vmatmul.mubr.bf16.gmra.mrb[0].mxu0 %v1850
          %v1937 = vpop.f32.mrb[0].mxu0
          %v1938 = vadd.f32 0.0, %v1937
          %v1939 = vpop.f32.mrb[0].mxu0
          %v1940 = vpop.f32.mrb[0].mxu0
          %v1941 = vadd.f32 0.0, %v1940
          %v1942 = vpop.f32.mrb[0].mxu0
          %1943 = vmatprep.mubr.bf16.mxu0 0
          %1944 = vmatmul.mubr.bf16.gmra.mrb[0].mxu0 %v1851
          %v1945 = vpop.f32.mrb[0].mxu0
          %v1946 = vadd.f32 0.0, %v1945
          %v1947 = vpop.f32.mrb[0].mxu0
          %v1948 = vpop.f32.mrb[0].mxu0
          %v1949 = vadd.f32 0.0, %v1948
          %v1950 = vpop.f32.mrb[0].mxu0
          %1951 = vmatprep.mubr.bf16.mxu0 0
          %1952 = vmatmul.mubr.bf16.gmra.mrb[0].mxu0 %v1852
          %v1953 = vpop.f32.mrb[0].mxu0
          %v1954 = vadd.f32 0.0, %v1953
          %v1955 = vpop.f32.mrb[0].mxu0
          %v1956 = vpop.f32.mrb[0].mxu0
          %v1957 = vadd.f32 0.0, %v1956
          %v1958 = vpop.f32.mrb[0].mxu0
          %1959 = vmatprep.mubr.bf16.mxu0 0
          %1960 = vmatmul.mubr.bf16.gmra.mrb[0].mxu0 %v1853
          %v1961 = vpop.f32.mrb[0].mxu0
          %v1962 = vadd.f32 0.0, %v1961
          %v1963 = vpop.f32.mrb[0].mxu0
          %v1964 = vpop.f32.mrb[0].mxu0
          %v1965 = vadd.f32 0.0, %v1964
          %v1966 = vpop.f32.mrb[0].mxu0
          %1967 = vmatprep.mubr.bf16.mxu0 0
          %1968 = vmatmul.mubr.bf16.gmra.mrb[0].mxu0 %v1854
          %v1969 = vpop.f32.mrb[0].mxu0
          %v1970 = vadd.f32 0.0, %v1969
          %v1971 = vpop.f32.mrb[0].mxu0
          %v1972 = vpop.f32.mrb[0].mxu0
          %v1973 = vadd.f32 0.0, %v1972
          %v1974 = vpop.f32.mrb[0].mxu0
          %1975 = vdwg.mxu0
          %1976 = vrot.lane.b32.xlu0 %v661, 104
          %v1977 = vpop.permute.xlu0 %1976
          %1978 = vrot.lane.b32.xlu0 %v662, 104
          %v1979 = vpop.permute.xlu0 %1978
          %1980 = vrot.lane.b32.xlu0 %v663, 104
          %v1981 = vpop.permute.xlu0 %1980
          %1982 = vrot.lane.b32.xlu0 %v664, 104
          %v1983 = vpop.permute.xlu0 %1982
          %1984 = vrot.lane.b32.xlu0 %v665, 104
          %v1985 = vpop.permute.xlu0 %1984
          %1986 = vrot.lane.b32.xlu0 %v666, 104
          %v1987 = vpop.permute.xlu0 %1986
          %1988 = vrot.lane.b32.xlu0 %v667, 104
          %v1989 = vpop.permute.xlu0 %1988
          %1990 = vrot.lane.b32.xlu0 %v668, 104
          %v1991 = vpop.permute.xlu0 %1990
          %1992 = vrot.lane.b32.xlu0 %v701, 104
          %v1993 = vpop.permute.xlu0 %1992
          %1994 = vrot.lane.b32.xlu0 %v702, 104
          %v1995 = vpop.permute.xlu0 %1994
          %1996 = vrot.lane.b32.xlu0 %v703, 104
          %v1997 = vpop.permute.xlu0 %1996
          %1998 = vrot.lane.b32.xlu0 %v704, 104
          %v1999 = vpop.permute.xlu0 %1998
          %2000 = vrot.lane.b32.xlu0 %v705, 104
          %v2001 = vpop.permute.xlu0 %2000
          %2002 = vrot.lane.b32.xlu0 %v706, 104
          %v2003 = vpop.permute.xlu0 %2002
          %2004 = vrot.lane.b32.xlu0 %v707, 104
          %v2005 = vpop.permute.xlu0 %2004
          %2006 = vrot.lane.b32.xlu0 %v708, 104
          %v2007 = vpop.permute.xlu0 %2006
          %v2009 = vsel %vm709, %v1977, 0
          %v2012 = vsel %vm709, %v1979, 0
          %v2015 = vsel %vm709, %v1981, 0
          %v2018 = vsel %vm709, %v1983, 0
          %v2021 = vsel %vm709, %v1985, 0
          %v2024 = vsel %vm709, %v1987, 0
          %v2027 = vsel %vm709, %v1989, 0
          %v2030 = vsel %vm709, %v1991, 0
          %v2033 = vsel %vm709, %v1993, 0
          %v2036 = vsel %vm709, %v1995, 0
          %v2039 = vsel %vm709, %v1997, 0
          %v2042 = vsel %vm709, %v1999, 0
          %v2045 = vsel %vm709, %v2001, 0
          %v2048 = vsel %vm709, %v2003, 0
          %v2051 = vsel %vm709, %v2005, 0
          %v2054 = vsel %vm709, %v2007, 0
          %2056 = vmatprep.subr.bf16.mxu0 0
          %2057 = vmatpush1.bf16.xpose.msra.mxu0 %v2033
          %2058 = vmatprep.subr.bf16.mxu0 0
          %2059 = vmatpush1.bf16.xpose.msra.mxu0 %v2036
          %2060 = vmatprep.subr.bf16.mxu0 0
          %2061 = vmatpush1.bf16.xpose.msra.mxu0 %v2039
          %2062 = vmatprep.subr.bf16.mxu0 0
          %2063 = vmatpush1.bf16.xpose.msra.mxu0 %v2042
          %2064 = vmatprep.subr.bf16.mxu0 0
          %2065 = vmatpush1.bf16.xpose.msra.mxu0 %v2045
          %2066 = vmatprep.subr.bf16.mxu0 0
          %2067 = vmatpush1.bf16.xpose.msra.mxu0 %v2048
          %2068 = vmatprep.subr.bf16.mxu0 0
          %2069 = vmatpush1.bf16.xpose.msra.mxu0 %v2051
          %2070 = vmatprep.subr.bf16.mxu0 0
          %2071 = vmatpush1.bf16.xpose.msra.mxu0 %v2054
          %2072 = vmatprep.subr.bf16.mxu0 0
          %2073 = vmatpush1.bf16.xpose.msra.mxu0 0
          %2074 = vmatprep.subr.bf16.mxu0 0
          %2075 = vmatpush1.bf16.xpose.msra.mxu0 0
          %2076 = vmatprep.subr.bf16.mxu0 0
          %2077 = vmatpush1.bf16.xpose.msra.mxu0 0
          %2078 = vmatprep.subr.bf16.mxu0 0
          %2079 = vmatpush1.bf16.xpose.msra.mxu0 0
          %2080 = vmatprep.subr.bf16.mxu0 0
          %2081 = vmatpush1.bf16.xpose.msra.mxu0 0
          %2082 = vmatprep.subr.bf16.mxu0 0
          %2083 = vmatpush1.bf16.xpose.msra.mxu0 0
          %2084 = vmatprep.subr.bf16.mxu0 0
          %2085 = vmatpush1.bf16.xpose.msra.mxu0 0
          %2086 = vmatprep.subr.bf16.mxu0 0
          %2087 = vmatpush1.bf16.xpose.msra.mxu0 0
          %2088 = vmatprep.mubr.bf16.mxu0 0
          %2089 = vmatmul.mubr.bf16.gmra.mrb[0].mxu0 %v2009
          %v2090 = vpop.f32.mrb[0].mxu0
          %v2091 = vadd.f32 0.0, %v2090
          %v2092 = vpop.f32.mrb[0].mxu0
          %v2093 = vpop.f32.mrb[0].mxu0
          %v2094 = vadd.f32 0.0, %v2093
          %v2095 = vpop.f32.mrb[0].mxu0
          %2096 = vmatprep.mubr.bf16.mxu0 0
          %2097 = vmatmul.mubr.bf16.gmra.mrb[0].mxu0 %v2012
          %v2098 = vpop.f32.mrb[0].mxu0
          %v2099 = vadd.f32 0.0, %v2098
          %v2100 = vpop.f32.mrb[0].mxu0
          %v2101 = vpop.f32.mrb[0].mxu0
          %v2102 = vadd.f32 0.0, %v2101
          %v2103 = vpop.f32.mrb[0].mxu0
          %2104 = vmatprep.mubr.bf16.mxu0 0
          %2105 = vmatmul.mubr.bf16.gmra.mrb[0].mxu0 %v2015
          %v2106 = vpop.f32.mrb[0].mxu0
          %v2107 = vadd.f32 0.0, %v2106
          %v2108 = vpop.f32.mrb[0].mxu0
          %v2109 = vpop.f32.mrb[0].mxu0
          %v2110 = vadd.f32 0.0, %v2109
          %v2111 = vpop.f32.mrb[0].mxu0
          %2112 = vmatprep.mubr.bf16.mxu0 0
          %2113 = vmatmul.mubr.bf16.gmra.mrb[0].mxu0 %v2018
          %v2114 = vpop.f32.mrb[0].mxu0
          %v2115 = vadd.f32 0.0, %v2114
          %v2116 = vpop.f32.mrb[0].mxu0
          %v2117 = vpop.f32.mrb[0].mxu0
          %v2118 = vadd.f32 0.0, %v2117
          %v2119 = vpop.f32.mrb[0].mxu0
          %2120 = vmatprep.mubr.bf16.mxu0 0
          %2121 = vmatmul.mubr.bf16.gmra.mrb[0].mxu0 %v2021
          %v2122 = vpop.f32.mrb[0].mxu0
          %v2123 = vadd.f32 0.0, %v2122
          %v2124 = vpop.f32.mrb[0].mxu0
          %v2125 = vpop.f32.mrb[0].mxu0
          %v2126 = vadd.f32 0.0, %v2125
          %v2127 = vpop.f32.mrb[0].mxu0
          %2128 = vmatprep.mubr.bf16.mxu0 0
          %2129 = vmatmul.mubr.bf16.gmra.mrb[0].mxu0 %v2024
          %v2130 = vpop.f32.mrb[0].mxu0
          %v2131 = vadd.f32 0.0, %v2130
          %v2132 = vpop.f32.mrb[0].mxu0
          %v2133 = vpop.f32.mrb[0].mxu0
          %v2134 = vadd.f32 0.0, %v2133
          %v2135 = vpop.f32.mrb[0].mxu0
          %2136 = vmatprep.mubr.bf16.mxu0 0
          %2137 = vmatmul.mubr.bf16.gmra.mrb[0].mxu0 %v2027
          %v2138 = vpop.f32.mrb[0].mxu0
          %v2139 = vadd.f32 0.0, %v2138
          %v2140 = vpop.f32.mrb[0].mxu0
          %v2141 = vpop.f32.mrb[0].mxu0
          %v2142 = vadd.f32 0.0, %v2141
          %v2143 = vpop.f32.mrb[0].mxu0
          %2144 = vmatprep.mubr.bf16.mxu0 0
          %2145 = vmatmul.mubr.bf16.gmra.mrb[0].mxu0 %v2030
          %v2146 = vpop.f32.mrb[0].mxu0
          %v2147 = vadd.f32 0.0, %v2146
          %v2148 = vpop.f32.mrb[0].mxu0
          %v2149 = vpop.f32.mrb[0].mxu0
          %v2150 = vadd.f32 0.0, %v2149
          %v2151 = vpop.f32.mrb[0].mxu0
          %2152 = vdwg.mxu0
          %v2153 = vmax.f32 %v2091, -5.0
          %v2154 = vmax.f32 %v2094, -5.0
          %v2155 = vmax.f32 %v2099, -5.0
          %v2156 = vmax.f32 %v2102, -5.0
          %v2157 = vmax.f32 %v2107, -5.0
          %v2158 = vmax.f32 %v2110, -5.0
          %v2159 = vmax.f32 %v2115, -5.0
          %v2160 = vmax.f32 %v2118, -5.0
          %v2161 = vmax.f32 %v2123, -5.0
          %v2162 = vmax.f32 %v2126, -5.0
          %v2163 = vmax.f32 %v2131, -5.0
          %v2164 = vmax.f32 %v2134, -5.0
          %v2165 = vmax.f32 %v2139, -5.0
          %v2166 = vmax.f32 %v2142, -5.0
          %v2167 = vmax.f32 %v2147, -5.0
          %v2168 = vmax.f32 %v2150, -5.0
          %v2169 = vmin.f32 %v2153, 5.0
          %v2170 = vmin.f32 %v2154, 5.0
          %v2171 = vmin.f32 %v2155, 5.0
          %v2172 = vmin.f32 %v2156, 5.0
          %v2173 = vmin.f32 %v2157, 5.0
          %v2174 = vmin.f32 %v2158, 5.0
          %v2175 = vmin.f32 %v2159, 5.0
          %v2176 = vmin.f32 %v2160, 5.0
          %v2177 = vmin.f32 %v2161, 5.0
          %v2178 = vmin.f32 %v2162, 5.0
          %v2179 = vmin.f32 %v2163, 5.0
          %v2180 = vmin.f32 %v2164, 5.0
          %v2181 = vmin.f32 %v2165, 5.0
          %v2182 = vmin.f32 %v2166, 5.0
          %v2183 = vmin.f32 %v2167, 5.0
          %v2184 = vmin.f32 %v2168, 5.0
          %v2185 = vmul.f32 %v2169, 1.442695
          %v2186 = vpow.pop %v2185
          %v2187 = vmul.f32 %v2170, 1.442695
          %v2188 = vpow.pop %v2187
          %v2189 = vmul.f32 %v2171, 1.442695
          %v2190 = vpow.pop %v2189
          %v2191 = vmul.f32 %v2172, 1.442695
          %v2192 = vpow.pop %v2191
          %v2193 = vmul.f32 %v2173, 1.442695
          %v2194 = vpow.pop %v2193
          %v2195 = vmul.f32 %v2174, 1.442695
          %v2196 = vpow.pop %v2195
          %v2197 = vmul.f32 %v2175, 1.442695
          %v2198 = vpow.pop %v2197
          %v2199 = vmul.f32 %v2176, 1.442695
          %v2200 = vpow.pop %v2199
          %v2201 = vmul.f32 %v2177, 1.442695
          %v2202 = vpow.pop %v2201
          %v2203 = vmul.f32 %v2178, 1.442695
          %v2204 = vpow.pop %v2203
          %v2205 = vmul.f32 %v2179, 1.442695
          %v2206 = vpow.pop %v2205
          %v2207 = vmul.f32 %v2180, 1.442695
          %v2208 = vpow.pop %v2207
          %v2209 = vmul.f32 %v2181, 1.442695
          %v2210 = vpow.pop %v2209
          %v2211 = vmul.f32 %v2182, 1.442695
          %v2212 = vpow.pop %v2211
          %v2213 = vmul.f32 %v2183, 1.442695
          %v2214 = vpow.pop %v2213
          %v2215 = vmul.f32 %v2184, 1.442695
          %v2216 = vpow.pop %v2215
          %v2217 = vsel %vm1019, %v2186, 0.0
          %v2218 = vsel %vm1020, %v2188, 0.0
          %v2219 = vsel %vm1021, %v2190, 0.0
          %v2220 = vsel %vm1022, %v2192, 0.0
          %v2221 = vsel %vm1023, %v2194, 0.0
          %v2222 = vsel %vm1024, %v2196, 0.0
          %v2223 = vsel %vm1025, %v2198, 0.0
          %v2224 = vsel %vm1026, %v2200, 0.0
          %v2225 = vsel %vm1027, %v2202, 0.0
          %v2226 = vsel %vm1028, %v2204, 0.0
          %v2227 = vsel %vm1029, %v2206, 0.0
          %v2228 = vsel %vm1030, %v2208, 0.0
          %v2229 = vsel %vm1031, %v2210, 0.0
          %v2230 = vsel %vm1032, %v2212, 0.0
          %v2231 = vsel %vm1033, %v2214, 0.0
          %v2232 = vsel %vm1034, %v2216, 0.0
          %v2233 = vpack.c.bf16 %v2218, %v2217
          %v2234 = vpack.c.bf16 %v2220, %v2219
          %v2235 = vpack.c.bf16 %v2222, %v2221
          %v2236 = vpack.c.bf16 %v2224, %v2223
          %v2237 = vpack.c.bf16 %v2226, %v2225
          %v2238 = vpack.c.bf16 %v2228, %v2227
          %v2239 = vpack.c.bf16 %v2230, %v2229
          %v2240 = vpack.c.bf16 %v2232, %v2231
          %2241 = vrot.lane.b32.xlu0 %v1091, 101
          %v2242 = vpop.permute.xlu0 %2241
          %2243 = vrot.lane.b32.xlu0 %v1092, 101
          %v2244 = vpop.permute.xlu0 %2243
          %2245 = vrot.lane.b32.xlu0 %v1093, 101
          %v2246 = vpop.permute.xlu0 %2245
          %2247 = vrot.lane.b32.xlu0 %v1094, 101
          %v2248 = vpop.permute.xlu0 %2247
          %2249 = vrot.lane.b32.xlu0 %v1095, 101
          %v2250 = vpop.permute.xlu0 %2249
          %2251 = vrot.lane.b32.xlu0 %v1096, 101
          %v2252 = vpop.permute.xlu0 %2251
          %2253 = vrot.lane.b32.xlu0 %v1097, 101
          %v2254 = vpop.permute.xlu0 %2253
          %2255 = vrot.lane.b32.xlu0 %v1098, 101
          %v2256 = vpop.permute.xlu0 %2255
          %2265 = vmatprep.subr.bf16.mxu0 0
          %2266 = vmatpush1.bf16.msra.mxu0 %v2242
          %2267 = vmatprep.subr.bf16.mxu0 0
          %2268 = vmatpush1.bf16.msra.mxu0 %v2244
          %2269 = vmatprep.subr.bf16.mxu0 0
          %2270 = vmatpush1.bf16.msra.mxu0 %v2246
          %2271 = vmatprep.subr.bf16.mxu0 0
          %2272 = vmatpush1.bf16.msra.mxu0 %v2248
          %2273 = vmatprep.subr.bf16.mxu0 0
          %2274 = vmatpush1.bf16.msra.mxu0 %v2250
          %2275 = vmatprep.subr.bf16.mxu0 0
          %2276 = vmatpush1.bf16.msra.mxu0 %v2252
          %2277 = vmatprep.subr.bf16.mxu0 0
          %2278 = vmatpush1.bf16.msra.mxu0 %v2254
          %2279 = vmatprep.subr.bf16.mxu0 0
          %2280 = vmatpush1.bf16.msra.mxu0 %v2256
          %2281 = vmatprep.subr.bf16.mxu0 0
          %2282 = vmatpush1.bf16.msra.mxu0 0
          %2283 = vmatprep.subr.bf16.mxu0 0
          %2284 = vmatpush1.bf16.msra.mxu0 0
          %2285 = vmatprep.subr.bf16.mxu0 0
          %2286 = vmatpush1.bf16.msra.mxu0 0
          %2287 = vmatprep.subr.bf16.mxu0 0
          %2288 = vmatpush1.bf16.msra.mxu0 0
          %2289 = vmatprep.subr.bf16.mxu0 0
          %2290 = vmatpush1.bf16.msra.mxu0 0
          %2291 = vmatprep.subr.bf16.mxu0 0
          %2292 = vmatpush1.bf16.msra.mxu0 0
          %2293 = vmatprep.subr.bf16.mxu0 0
          %2294 = vmatpush1.bf16.msra.mxu0 0
          %2295 = vmatprep.subr.bf16.mxu0 0
          %2296 = vmatpush1.bf16.msra.mxu0 0
          %2297 = vmatprep.mubr.bf16.mxu0 0
          %2298 = vmatmul.mubr.bf16.gmra.mrb[0].mxu0 %v2233
          %v2299 = vpop.f32.mrb[0].mxu0
          %v2300 = vadd.f32 0.0, %v2299
          %v2301 = vpop.f32.mrb[0].mxu0
          %v2302 = vpop.f32.mrb[0].mxu0
          %v2303 = vadd.f32 0.0, %v2302
          %v2304 = vpop.f32.mrb[0].mxu0
          %2305 = vmatprep.mubr.bf16.mxu0 0
          %2306 = vmatmul.mubr.bf16.gmra.mrb[0].mxu0 %v2234
          %v2307 = vpop.f32.mrb[0].mxu0
          %v2308 = vadd.f32 0.0, %v2307
          %v2309 = vpop.f32.mrb[0].mxu0
          %v2310 = vpop.f32.mrb[0].mxu0
          %v2311 = vadd.f32 0.0, %v2310
          %v2312 = vpop.f32.mrb[0].mxu0
          %2313 = vmatprep.mubr.bf16.mxu0 0
          %2314 = vmatmul.mubr.bf16.gmra.mrb[0].mxu0 %v2235
          %v2315 = vpop.f32.mrb[0].mxu0
          %v2316 = vadd.f32 0.0, %v2315
          %v2317 = vpop.f32.mrb[0].mxu0
          %v2318 = vpop.f32.mrb[0].mxu0
          %v2319 = vadd.f32 0.0, %v2318
          %v2320 = vpop.f32.mrb[0].mxu0
          %2321 = vmatprep.mubr.bf16.mxu0 0
          %2322 = vmatmul.mubr.bf16.gmra.mrb[0].mxu0 %v2236
          %v2323 = vpop.f32.mrb[0].mxu0
          %v2324 = vadd.f32 0.0, %v2323
          %v2325 = vpop.f32.mrb[0].mxu0
          %v2326 = vpop.f32.mrb[0].mxu0
          %v2327 = vadd.f32 0.0, %v2326
          %v2328 = vpop.f32.mrb[0].mxu0
          %2329 = vmatprep.mubr.bf16.mxu0 0
          %2330 = vmatmul.mubr.bf16.gmra.mrb[0].mxu0 %v2237
          %v2331 = vpop.f32.mrb[0].mxu0
          %v2332 = vadd.f32 0.0, %v2331
          %v2333 = vpop.f32.mrb[0].mxu0
          %v2334 = vpop.f32.mrb[0].mxu0
          %v2335 = vadd.f32 0.0, %v2334
          %v2336 = vpop.f32.mrb[0].mxu0
          %2337 = vmatprep.mubr.bf16.mxu0 0
          %2338 = vmatmul.mubr.bf16.gmra.mrb[0].mxu0 %v2238
          %v2339 = vpop.f32.mrb[0].mxu0
          %v2340 = vadd.f32 0.0, %v2339
          %v2341 = vpop.f32.mrb[0].mxu0
          %v2342 = vpop.f32.mrb[0].mxu0
          %v2343 = vadd.f32 0.0, %v2342
          %v2344 = vpop.f32.mrb[0].mxu0
          %2345 = vmatprep.mubr.bf16.mxu0 0
          %2346 = vmatmul.mubr.bf16.gmra.mrb[0].mxu0 %v2239
          %v2347 = vpop.f32.mrb[0].mxu0
          %v2348 = vadd.f32 0.0, %v2347
          %v2349 = vpop.f32.mrb[0].mxu0
          %v2350 = vpop.f32.mrb[0].mxu0
          %v2351 = vadd.f32 0.0, %v2350
          %v2352 = vpop.f32.mrb[0].mxu0
          %2353 = vmatprep.mubr.bf16.mxu0 0
          %2354 = vmatmul.mubr.bf16.gmra.mrb[0].mxu0 %v2240
          %v2355 = vpop.f32.mrb[0].mxu0
          %v2356 = vadd.f32 0.0, %v2355
          %v2357 = vpop.f32.mrb[0].mxu0
          %v2358 = vpop.f32.mrb[0].mxu0
          %v2359 = vadd.f32 0.0, %v2358
          %v2360 = vpop.f32.mrb[0].mxu0
          %2361 = vdwg.mxu0
          %2362 = vrot.lane.b32.xlu0 %v661, 96
          %v2363 = vpop.permute.xlu0 %2362
          %2364 = vrot.lane.b32.xlu0 %v662, 96
          %v2365 = vpop.permute.xlu0 %2364
          %2366 = vrot.lane.b32.xlu0 %v663, 96
          %v2367 = vpop.permute.xlu0 %2366
          %2368 = vrot.lane.b32.xlu0 %v664, 96
          %v2369 = vpop.permute.xlu0 %2368
          %2370 = vrot.lane.b32.xlu0 %v665, 96
          %v2371 = vpop.permute.xlu0 %2370
          %2372 = vrot.lane.b32.xlu0 %v666, 96
          %v2373 = vpop.permute.xlu0 %2372
          %2374 = vrot.lane.b32.xlu0 %v667, 96
          %v2375 = vpop.permute.xlu0 %2374
          %2376 = vrot.lane.b32.xlu0 %v668, 96
          %v2377 = vpop.permute.xlu0 %2376
          %2378 = vrot.lane.b32.xlu0 %v701, 96
          %v2379 = vpop.permute.xlu0 %2378
          %2380 = vrot.lane.b32.xlu0 %v702, 96
          %v2381 = vpop.permute.xlu0 %2380
          %2382 = vrot.lane.b32.xlu0 %v703, 96
          %v2383 = vpop.permute.xlu0 %2382
          %2384 = vrot.lane.b32.xlu0 %v704, 96
          %v2385 = vpop.permute.xlu0 %2384
          %2386 = vrot.lane.b32.xlu0 %v705, 96
          %v2387 = vpop.permute.xlu0 %2386
          %2388 = vrot.lane.b32.xlu0 %v706, 96
          %v2389 = vpop.permute.xlu0 %2388
          %2390 = vrot.lane.b32.xlu0 %v707, 96
          %v2391 = vpop.permute.xlu0 %2390
          %2392 = vrot.lane.b32.xlu0 %v708, 96
          %v2393 = vpop.permute.xlu0 %2392
          %v2395 = vsel %vm709, %v2363, 0
          %v2398 = vsel %vm709, %v2365, 0
          %v2401 = vsel %vm709, %v2367, 0
          %v2404 = vsel %vm709, %v2369, 0
          %v2407 = vsel %vm709, %v2371, 0
          %v2410 = vsel %vm709, %v2373, 0
          %v2413 = vsel %vm709, %v2375, 0
          %v2416 = vsel %vm709, %v2377, 0
          %v2419 = vsel %vm709, %v2379, 0
          %v2422 = vsel %vm709, %v2381, 0
          %v2425 = vsel %vm709, %v2383, 0
          %v2428 = vsel %vm709, %v2385, 0
          %v2431 = vsel %vm709, %v2387, 0
          %v2434 = vsel %vm709, %v2389, 0
          %v2437 = vsel %vm709, %v2391, 0
          %v2440 = vsel %vm709, %v2393, 0
          %2442 = vmatprep.subr.bf16.mxu0 0
          %2443 = vmatpush1.bf16.xpose.msra.mxu0 %v2419
          %2444 = vmatprep.subr.bf16.mxu0 0
          %2445 = vmatpush1.bf16.xpose.msra.mxu0 %v2422
          %2446 = vmatprep.subr.bf16.mxu0 0
          %2447 = vmatpush1.bf16.xpose.msra.mxu0 %v2425
          %2448 = vmatprep.subr.bf16.mxu0 0
          %2449 = vmatpush1.bf16.xpose.msra.mxu0 %v2428
          %2450 = vmatprep.subr.bf16.mxu0 0
          %2451 = vmatpush1.bf16.xpose.msra.mxu0 %v2431
          %2452 = vmatprep.subr.bf16.mxu0 0
          %2453 = vmatpush1.bf16.xpose.msra.mxu0 %v2434
          %2454 = vmatprep.subr.bf16.mxu0 0
          %2455 = vmatpush1.bf16.xpose.msra.mxu0 %v2437
          %2456 = vmatprep.subr.bf16.mxu0 0
          %2457 = vmatpush1.bf16.xpose.msra.mxu0 %v2440
          %2458 = vmatprep.subr.bf16.mxu0 0
          %2459 = vmatpush1.bf16.xpose.msra.mxu0 0
          %2460 = vmatprep.subr.bf16.mxu0 0
          %2461 = vmatpush1.bf16.xpose.msra.mxu0 0
          %2462 = vmatprep.subr.bf16.mxu0 0
          %2463 = vmatpush1.bf16.xpose.msra.mxu0 0
          %2464 = vmatprep.subr.bf16.mxu0 0
          %2465 = vmatpush1.bf16.xpose.msra.mxu0 0
          %2466 = vmatprep.subr.bf16.mxu0 0
          %2467 = vmatpush1.bf16.xpose.msra.mxu0 0
          %2468 = vmatprep.subr.bf16.mxu0 0
          %2469 = vmatpush1.bf16.xpose.msra.mxu0 0
          %2470 = vmatprep.subr.bf16.mxu0 0
          %2471 = vmatpush1.bf16.xpose.msra.mxu0 0
          %2472 = vmatprep.subr.bf16.mxu0 0
          %2473 = vmatpush1.bf16.xpose.msra.mxu0 0
          %2474 = vmatprep.mubr.bf16.mxu0 0
          %2475 = vmatmul.mubr.bf16.gmra.mrb[0].mxu0 %v2395
          %v2476 = vpop.f32.mrb[0].mxu0
          %v2477 = vadd.f32 0.0, %v2476
          %v2478 = vpop.f32.mrb[0].mxu0
          %v2479 = vpop.f32.mrb[0].mxu0
          %v2480 = vadd.f32 0.0, %v2479
          %v2481 = vpop.f32.mrb[0].mxu0
          %2482 = vmatprep.mubr.bf16.mxu0 0
          %2483 = vmatmul.mubr.bf16.gmra.mrb[0].mxu0 %v2398
          %v2484 = vpop.f32.mrb[0].mxu0
          %v2485 = vadd.f32 0.0, %v2484
          %v2486 = vpop.f32.mrb[0].mxu0
          %v2487 = vpop.f32.mrb[0].mxu0
          %v2488 = vadd.f32 0.0, %v2487
          %v2489 = vpop.f32.mrb[0].mxu0
          %2490 = vmatprep.mubr.bf16.mxu0 0
          %2491 = vmatmul.mubr.bf16.gmra.mrb[0].mxu0 %v2401
          %v2492 = vpop.f32.mrb[0].mxu0
          %v2493 = vadd.f32 0.0, %v2492
          %v2494 = vpop.f32.mrb[0].mxu0
          %v2495 = vpop.f32.mrb[0].mxu0
          %v2496 = vadd.f32 0.0, %v2495
          %v2497 = vpop.f32.mrb[0].mxu0
          %2498 = vmatprep.mubr.bf16.mxu0 0
          %2499 = vmatmul.mubr.bf16.gmra.mrb[0].mxu0 %v2404
          %v2500 = vpop.f32.mrb[0].mxu0
          %v2501 = vadd.f32 0.0, %v2500
          %v2502 = vpop.f32.mrb[0].mxu0
          %v2503 = vpop.f32.mrb[0].mxu0
          %v2504 = vadd.f32 0.0, %v2503
          %v2505 = vpop.f32.mrb[0].mxu0
          %2506 = vmatprep.mubr.bf16.mxu0 0
          %2507 = vmatmul.mubr.bf16.gmra.mrb[0].mxu0 %v2407
          %v2508 = vpop.f32.mrb[0].mxu0
          %v2509 = vadd.f32 0.0, %v2508
          %v2510 = vpop.f32.mrb[0].mxu0
          %v2511 = vpop.f32.mrb[0].mxu0
          %v2512 = vadd.f32 0.0, %v2511
          %v2513 = vpop.f32.mrb[0].mxu0
          %2514 = vmatprep.mubr.bf16.mxu0 0
          %2515 = vmatmul.mubr.bf16.gmra.mrb[0].mxu0 %v2410
          %v2516 = vpop.f32.mrb[0].mxu0
          %v2517 = vadd.f32 0.0, %v2516
          %v2518 = vpop.f32.mrb[0].mxu0
          %v2519 = vpop.f32.mrb[0].mxu0
          %v2520 = vadd.f32 0.0, %v2519
          %v2521 = vpop.f32.mrb[0].mxu0
          %2522 = vmatprep.mubr.bf16.mxu0 0
          %2523 = vmatmul.mubr.bf16.gmra.mrb[0].mxu0 %v2413
          %v2524 = vpop.f32.mrb[0].mxu0
          %v2525 = vadd.f32 0.0, %v2524
          %v2526 = vpop.f32.mrb[0].mxu0
          %v2527 = vpop.f32.mrb[0].mxu0
          %v2528 = vadd.f32 0.0, %v2527
          %v2529 = vpop.f32.mrb[0].mxu0
          %2530 = vmatprep.mubr.bf16.mxu0 0
          %2531 = vmatmul.mubr.bf16.gmra.mrb[0].mxu0 %v2416
          %v2532 = vpop.f32.mrb[0].mxu0
          %v2533 = vadd.f32 0.0, %v2532
          %v2534 = vpop.f32.mrb[0].mxu0
          %v2535 = vpop.f32.mrb[0].mxu0
          %v2536 = vadd.f32 0.0, %v2535
          %v2537 = vpop.f32.mrb[0].mxu0
          %2538 = vdwg.mxu0
          %v2539 = vmax.f32 %v2477, -5.0
          %v2540 = vmax.f32 %v2480, -5.0
          %v2541 = vmax.f32 %v2485, -5.0
          %v2542 = vmax.f32 %v2488, -5.0
          %v2543 = vmax.f32 %v2493, -5.0
          %v2544 = vmax.f32 %v2496, -5.0
          %v2545 = vmax.f32 %v2501, -5.0
          %v2546 = vmax.f32 %v2504, -5.0
          %v2547 = vmax.f32 %v2509, -5.0
          %v2548 = vmax.f32 %v2512, -5.0
          %v2549 = vmax.f32 %v2517, -5.0
          %v2550 = vmax.f32 %v2520, -5.0
          %v2551 = vmax.f32 %v2525, -5.0
          %v2552 = vmax.f32 %v2528, -5.0
          %v2553 = vmax.f32 %v2533, -5.0
          %v2554 = vmax.f32 %v2536, -5.0
          %v2555 = vmin.f32 %v2539, 5.0
          %v2556 = vmin.f32 %v2540, 5.0
          %v2557 = vmin.f32 %v2541, 5.0
          %v2558 = vmin.f32 %v2542, 5.0
          %v2559 = vmin.f32 %v2543, 5.0
          %v2560 = vmin.f32 %v2544, 5.0
          %v2561 = vmin.f32 %v2545, 5.0
          %v2562 = vmin.f32 %v2546, 5.0
          %v2563 = vmin.f32 %v2547, 5.0
          %v2564 = vmin.f32 %v2548, 5.0
          %v2565 = vmin.f32 %v2549, 5.0
          %v2566 = vmin.f32 %v2550, 5.0
          %v2567 = vmin.f32 %v2551, 5.0
          %v2568 = vmin.f32 %v2552, 5.0
          %v2569 = vmin.f32 %v2553, 5.0
          %v2570 = vmin.f32 %v2554, 5.0
          %v2571 = vmul.f32 %v2555, 1.442695
          %v2572 = vpow.pop %v2571
          %v2573 = vmul.f32 %v2556, 1.442695
          %v2574 = vpow.pop %v2573
          %v2575 = vmul.f32 %v2557, 1.442695
          %v2576 = vpow.pop %v2575
          %v2577 = vmul.f32 %v2558, 1.442695
          %v2578 = vpow.pop %v2577
          %v2579 = vmul.f32 %v2559, 1.442695
          %v2580 = vpow.pop %v2579
          %v2581 = vmul.f32 %v2560, 1.442695
          %v2582 = vpow.pop %v2581
          %v2583 = vmul.f32 %v2561, 1.442695
          %v2584 = vpow.pop %v2583
          %v2585 = vmul.f32 %v2562, 1.442695
          %v2586 = vpow.pop %v2585
          %v2587 = vmul.f32 %v2563, 1.442695
          %v2588 = vpow.pop %v2587
          %v2589 = vmul.f32 %v2564, 1.442695
          %v2590 = vpow.pop %v2589
          %v2591 = vmul.f32 %v2565, 1.442695
          %v2592 = vpow.pop %v2591
          %v2593 = vmul.f32 %v2566, 1.442695
          %v2594 = vpow.pop %v2593
          %v2595 = vmul.f32 %v2567, 1.442695
          %v2596 = vpow.pop %v2595
          %v2597 = vmul.f32 %v2568, 1.442695
          %v2598 = vpow.pop %v2597
          %v2599 = vmul.f32 %v2569, 1.442695
          %v2600 = vpow.pop %v2599
          %v2601 = vmul.f32 %v2570, 1.442695
          %v2602 = vpow.pop %v2601
          %v2603 = vsel %vm1019, %v2572, 0.0
          %v2604 = vsel %vm1020, %v2574, 0.0
          %v2605 = vsel %vm1021, %v2576, 0.0
          %v2606 = vsel %vm1022, %v2578, 0.0
          %v2607 = vsel %vm1023, %v2580, 0.0
          %v2608 = vsel %vm1024, %v2582, 0.0
          %v2609 = vsel %vm1025, %v2584, 0.0
          %v2610 = vsel %vm1026, %v2586, 0.0
          %v2611 = vsel %vm1027, %v2588, 0.0
          %v2612 = vsel %vm1028, %v2590, 0.0
          %v2613 = vsel %vm1029, %v2592, 0.0
          %v2614 = vsel %vm1030, %v2594, 0.0
          %v2615 = vsel %vm1031, %v2596, 0.0
          %v2616 = vsel %vm1032, %v2598, 0.0
          %v2617 = vsel %vm1033, %v2600, 0.0
          %v2618 = vsel %vm1034, %v2602, 0.0
          %v2619 = vpack.c.bf16 %v2604, %v2603
          %v2620 = vpack.c.bf16 %v2606, %v2605
          %v2621 = vpack.c.bf16 %v2608, %v2607
          %v2622 = vpack.c.bf16 %v2610, %v2609
          %v2623 = vpack.c.bf16 %v2612, %v2611
          %v2624 = vpack.c.bf16 %v2614, %v2613
          %v2625 = vpack.c.bf16 %v2616, %v2615
          %v2626 = vpack.c.bf16 %v2618, %v2617
          %2627 = vrot.lane.b32.xlu0 %v1091, 92
          %v2628 = vpop.permute.xlu0 %2627
          %2629 = vrot.lane.b32.xlu0 %v1092, 92
          %v2630 = vpop.permute.xlu0 %2629
          %2631 = vrot.lane.b32.xlu0 %v1093, 92
          %v2632 = vpop.permute.xlu0 %2631
          %2633 = vrot.lane.b32.xlu0 %v1094, 92
          %v2634 = vpop.permute.xlu0 %2633
          %2635 = vrot.lane.b32.xlu0 %v1095, 92
          %v2636 = vpop.permute.xlu0 %2635
          %2637 = vrot.lane.b32.xlu0 %v1096, 92
          %v2638 = vpop.permute.xlu0 %2637
          %2639 = vrot.lane.b32.xlu0 %v1097, 92
          %v2640 = vpop.permute.xlu0 %2639
          %2641 = vrot.lane.b32.xlu0 %v1098, 92
          %v2642 = vpop.permute.xlu0 %2641
          %2651 = vmatprep.subr.bf16.mxu0 0
          %2652 = vmatpush1.bf16.msra.mxu0 %v2628
          %2653 = vmatprep.subr.bf16.mxu0 0
          %2654 = vmatpush1.bf16.msra.mxu0 %v2630
          %2655 = vmatprep.subr.bf16.mxu0 0
          %2656 = vmatpush1.bf16.msra.mxu0 %v2632
          %2657 = vmatprep.subr.bf16.mxu0 0
          %2658 = vmatpush1.bf16.msra.mxu0 %v2634
          %2659 = vmatprep.subr.bf16.mxu0 0
          %2660 = vmatpush1.bf16.msra.mxu0 %v2636
          %2661 = vmatprep.subr.bf16.mxu0 0
          %2662 = vmatpush1.bf16.msra.mxu0 %v2638
          %2663 = vmatprep.subr.bf16.mxu0 0
          %2664 = vmatpush1.bf16.msra.mxu0 %v2640
          %2665 = vmatprep.subr.bf16.mxu0 0
          %2666 = vmatpush1.bf16.msra.mxu0 %v2642
          %2667 = vmatprep.subr.bf16.mxu0 0
          %2668 = vmatpush1.bf16.msra.mxu0 0
          %2669 = vmatprep.subr.bf16.mxu0 0
          %2670 = vmatpush1.bf16.msra.mxu0 0
          %2671 = vmatprep.subr.bf16.mxu0 0
          %2672 = vmatpush1.bf16.msra.mxu0 0
          %2673 = vmatprep.subr.bf16.mxu0 0
          %2674 = vmatpush1.bf16.msra.mxu0 0
          %2675 = vmatprep.subr.bf16.mxu0 0
          %2676 = vmatpush1.bf16.msra.mxu0 0
          %2677 = vmatprep.subr.bf16.mxu0 0
          %2678 = vmatpush1.bf16.msra.mxu0 0
          %2679 = vmatprep.subr.bf16.mxu0 0
          %2680 = vmatpush1.bf16.msra.mxu0 0
          %2681 = vmatprep.subr.bf16.mxu0 0
          %2682 = vmatpush1.bf16.msra.mxu0 0
          %2683 = vmatprep.mubr.bf16.mxu0 0
          %2684 = vmatmul.mubr.bf16.gmra.mrb[0].mxu0 %v2619
          %v2685 = vpop.f32.mrb[0].mxu0
          %v2686 = vadd.f32 0.0, %v2685
          %v2687 = vpop.f32.mrb[0].mxu0
          %v2688 = vpop.f32.mrb[0].mxu0
          %v2689 = vadd.f32 0.0, %v2688
          %v2690 = vpop.f32.mrb[0].mxu0
          %2691 = vmatprep.mubr.bf16.mxu0 0
          %2692 = vmatmul.mubr.bf16.gmra.mrb[0].mxu0 %v2620
          %v2693 = vpop.f32.mrb[0].mxu0
          %v2694 = vadd.f32 0.0, %v2693
          %v2695 = vpop.f32.mrb[0].mxu0
          %v2696 = vpop.f32.mrb[0].mxu0
          %v2697 = vadd.f32 0.0, %v2696
          %v2698 = vpop.f32.mrb[0].mxu0
          %2699 = vmatprep.mubr.bf16.mxu0 0
          %2700 = vmatmul.mubr.bf16.gmra.mrb[0].mxu0 %v2621
          %v2701 = vpop.f32.mrb[0].mxu0
          %v2702 = vadd.f32 0.0, %v2701
          %v2703 = vpop.f32.mrb[0].mxu0
          %v2704 = vpop.f32.mrb[0].mxu0
          %v2705 = vadd.f32 0.0, %v2704
          %v2706 = vpop.f32.mrb[0].mxu0
          %2707 = vmatprep.mubr.bf16.mxu0 0
          %2708 = vmatmul.mubr.bf16.gmra.mrb[0].mxu0 %v2622
          %v2709 = vpop.f32.mrb[0].mxu0
          %v2710 = vadd.f32 0.0, %v2709
          %v2711 = vpop.f32.mrb[0].mxu0
          %v2712 = vpop.f32.mrb[0].mxu0
          %v2713 = vadd.f32 0.0, %v2712
          %v2714 = vpop.f32.mrb[0].mxu0
          %2715 = vmatprep.mubr.bf16.mxu0 0
          %2716 = vmatmul.mubr.bf16.gmra.mrb[0].mxu0 %v2623
          %v2717 = vpop.f32.mrb[0].mxu0
          %v2718 = vadd.f32 0.0, %v2717
          %v2719 = vpop.f32.mrb[0].mxu0
          %v2720 = vpop.f32.mrb[0].mxu0
          %v2721 = vadd.f32 0.0, %v2720
          %v2722 = vpop.f32.mrb[0].mxu0
          %2723 = vmatprep.mubr.bf16.mxu0 0
          %2724 = vmatmul.mubr.bf16.gmra.mrb[0].mxu0 %v2624
          %v2725 = vpop.f32.mrb[0].mxu0
          %v2726 = vadd.f32 0.0, %v2725
          %v2727 = vpop.f32.mrb[0].mxu0
          %v2728 = vpop.f32.mrb[0].mxu0
          %v2729 = vadd.f32 0.0, %v2728
          %v2730 = vpop.f32.mrb[0].mxu0
          %2731 = vmatprep.mubr.bf16.mxu0 0
          %2732 = vmatmul.mubr.bf16.gmra.mrb[0].mxu0 %v2625
          %v2733 = vpop.f32.mrb[0].mxu0
          %v2734 = vadd.f32 0.0, %v2733
          %v2735 = vpop.f32.mrb[0].mxu0
          %v2736 = vpop.f32.mrb[0].mxu0
          %v2737 = vadd.f32 0.0, %v2736
          %v2738 = vpop.f32.mrb[0].mxu0
          %2739 = vmatprep.mubr.bf16.mxu0 0
          %2740 = vmatmul.mubr.bf16.gmra.mrb[0].mxu0 %v2626
          %v2741 = vpop.f32.mrb[0].mxu0
          %v2742 = vadd.f32 0.0, %v2741
          %v2743 = vpop.f32.mrb[0].mxu0
          %v2744 = vpop.f32.mrb[0].mxu0
          %v2745 = vadd.f32 0.0, %v2744
          %v2746 = vpop.f32.mrb[0].mxu0
          %2747 = vdwg.mxu0
          %2748 = vrot.lane.b32.xlu0 %v661, 88
          %v2749 = vpop.permute.xlu0 %2748
          %2750 = vrot.lane.b32.xlu0 %v662, 88
          %v2751 = vpop.permute.xlu0 %2750
          %2752 = vrot.lane.b32.xlu0 %v663, 88
          %v2753 = vpop.permute.xlu0 %2752
          %2754 = vrot.lane.b32.xlu0 %v664, 88
          %v2755 = vpop.permute.xlu0 %2754
          %2756 = vrot.lane.b32.xlu0 %v665, 88
          %v2757 = vpop.permute.xlu0 %2756
          %2758 = vrot.lane.b32.xlu0 %v666, 88
          %v2759 = vpop.permute.xlu0 %2758
          %2760 = vrot.lane.b32.xlu0 %v667, 88
          %v2761 = vpop.permute.xlu0 %2760
          %2762 = vrot.lane.b32.xlu0 %v668, 88
          %v2763 = vpop.permute.xlu0 %2762
          %2764 = vrot.lane.b32.xlu0 %v701, 88
          %v2765 = vpop.permute.xlu0 %2764
          %2766 = vrot.lane.b32.xlu0 %v702, 88
          %v2767 = vpop.permute.xlu0 %2766
          %2768 = vrot.lane.b32.xlu0 %v703, 88
          %v2769 = vpop.permute.xlu0 %2768
          %2770 = vrot.lane.b32.xlu0 %v704, 88
          %v2771 = vpop.permute.xlu0 %2770
          %2772 = vrot.lane.b32.xlu0 %v705, 88
          %v2773 = vpop.permute.xlu0 %2772
          %2774 = vrot.lane.b32.xlu0 %v706, 88
          %v2775 = vpop.permute.xlu0 %2774
          %2776 = vrot.lane.b32.xlu0 %v707, 88
          %v2777 = vpop.permute.xlu0 %2776
          %2778 = vrot.lane.b32.xlu0 %v708, 88
          %v2779 = vpop.permute.xlu0 %2778
          %v2781 = vsel %vm709, %v2749, 0
          %v2784 = vsel %vm709, %v2751, 0
          %v2787 = vsel %vm709, %v2753, 0
          %v2790 = vsel %vm709, %v2755, 0
          %v2793 = vsel %vm709, %v2757, 0
          %v2796 = vsel %vm709, %v2759, 0
          %v2799 = vsel %vm709, %v2761, 0
          %v2802 = vsel %vm709, %v2763, 0
          %v2805 = vsel %vm709, %v2765, 0
          %v2808 = vsel %vm709, %v2767, 0
          %v2811 = vsel %vm709, %v2769, 0
          %v2814 = vsel %vm709, %v2771, 0
          %v2817 = vsel %vm709, %v2773, 0
          %v2820 = vsel %vm709, %v2775, 0
          %v2823 = vsel %vm709, %v2777, 0
          %v2826 = vsel %vm709, %v2779, 0
          %2828 = vmatprep.subr.bf16.mxu0 0
          %2829 = vmatpush1.bf16.xpose.msra.mxu0 %v2805
          %2830 = vmatprep.subr.bf16.mxu0 0
          %2831 = vmatpush1.bf16.xpose.msra.mxu0 %v2808
          %2832 = vmatprep.subr.bf16.mxu0 0
          %2833 = vmatpush1.bf16.xpose.msra.mxu0 %v2811
          %2834 = vmatprep.subr.bf16.mxu0 0
          %2835 = vmatpush1.bf16.xpose.msra.mxu0 %v2814
          %2836 = vmatprep.subr.bf16.mxu0 0
          %2837 = vmatpush1.bf16.xpose.msra.mxu0 %v2817
          %2838 = vmatprep.subr.bf16.mxu0 0
          %2839 = vmatpush1.bf16.xpose.msra.mxu0 %v2820
          %2840 = vmatprep.subr.bf16.mxu0 0
          %2841 = vmatpush1.bf16.xpose.msra.mxu0 %v2823
          %2842 = vmatprep.subr.bf16.mxu0 0
          %2843 = vmatpush1.bf16.xpose.msra.mxu0 %v2826
          %2844 = vmatprep.subr.bf16.mxu0 0
          %2845 = vmatpush1.bf16.xpose.msra.mxu0 0
          %2846 = vmatprep.subr.bf16.mxu0 0
          %2847 = vmatpush1.bf16.xpose.msra.mxu0 0
          %2848 = vmatprep.subr.bf16.mxu0 0
          %2849 = vmatpush1.bf16.xpose.msra.mxu0 0
          %2850 = vmatprep.subr.bf16.mxu0 0
          %2851 = vmatpush1.bf16.xpose.msra.mxu0 0
          %2852 = vmatprep.subr.bf16.mxu0 0
          %2853 = vmatpush1.bf16.xpose.msra.mxu0 0
          %2854 = vmatprep.subr.bf16.mxu0 0
          %2855 = vmatpush1.bf16.xpose.msra.mxu0 0
          %2856 = vmatprep.subr.bf16.mxu0 0
          %2857 = vmatpush1.bf16.xpose.msra.mxu0 0
          %2858 = vmatprep.subr.bf16.mxu0 0
          %2859 = vmatpush1.bf16.xpose.msra.mxu0 0
          %2860 = vmatprep.mubr.bf16.mxu0 0
          %2861 = vmatmul.mubr.bf16.gmra.mrb[0].mxu0 %v2781
          %v2862 = vpop.f32.mrb[0].mxu0
          %v2863 = vadd.f32 0.0, %v2862
          %v2864 = vpop.f32.mrb[0].mxu0
          %v2865 = vpop.f32.mrb[0].mxu0
          %v2866 = vadd.f32 0.0, %v2865
          %v2867 = vpop.f32.mrb[0].mxu0
          %2868 = vmatprep.mubr.bf16.mxu0 0
          %2869 = vmatmul.mubr.bf16.gmra.mrb[0].mxu0 %v2784
          %v2870 = vpop.f32.mrb[0].mxu0
          %v2871 = vadd.f32 0.0, %v2870
          %v2872 = vpop.f32.mrb[0].mxu0
          %v2873 = vpop.f32.mrb[0].mxu0
          %v2874 = vadd.f32 0.0, %v2873
          %v2875 = vpop.f32.mrb[0].mxu0
          %2876 = vmatprep.mubr.bf16.mxu0 0
          %2877 = vmatmul.mubr.bf16.gmra.mrb[0].mxu0 %v2787
          %v2878 = vpop.f32.mrb[0].mxu0
          %v2879 = vadd.f32 0.0, %v2878
          %v2880 = vpop.f32.mrb[0].mxu0
          %v2881 = vpop.f32.mrb[0].mxu0
          %v2882 = vadd.f32 0.0, %v2881
          %v2883 = vpop.f32.mrb[0].mxu0
          %2884 = vmatprep.mubr.bf16.mxu0 0
          %2885 = vmatmul.mubr.bf16.gmra.mrb[0].mxu0 %v2790
          %v2886 = vpop.f32.mrb[0].mxu0
          %v2887 = vadd.f32 0.0, %v2886
          %v2888 = vpop.f32.mrb[0].mxu0
          %v2889 = vpop.f32.mrb[0].mxu0
          %v2890 = vadd.f32 0.0, %v2889
          %v2891 = vpop.f32.mrb[0].mxu0
          %2892 = vmatprep.mubr.bf16.mxu0 0
          %2893 = vmatmul.mubr.bf16.gmra.mrb[0].mxu0 %v2793
          %v2894 = vpop.f32.mrb[0].mxu0
          %v2895 = vadd.f32 0.0, %v2894
          %v2896 = vpop.f32.mrb[0].mxu0
          %v2897 = vpop.f32.mrb[0].mxu0
          %v2898 = vadd.f32 0.0, %v2897
          %v2899 = vpop.f32.mrb[0].mxu0
          %2900 = vmatprep.mubr.bf16.mxu0 0
          %2901 = vmatmul.mubr.bf16.gmra.mrb[0].mxu0 %v2796
          %v2902 = vpop.f32.mrb[0].mxu0
          %v2903 = vadd.f32 0.0, %v2902
          %v2904 = vpop.f32.mrb[0].mxu0
          %v2905 = vpop.f32.mrb[0].mxu0
          %v2906 = vadd.f32 0.0, %v2905
          %v2907 = vpop.f32.mrb[0].mxu0
          %2908 = vmatprep.mubr.bf16.mxu0 0
          %2909 = vmatmul.mubr.bf16.gmra.mrb[0].mxu0 %v2799
          %v2910 = vpop.f32.mrb[0].mxu0
          %v2911 = vadd.f32 0.0, %v2910
          %v2912 = vpop.f32.mrb[0].mxu0
          %v2913 = vpop.f32.mrb[0].mxu0
          %v2914 = vadd.f32 0.0, %v2913
          %v2915 = vpop.f32.mrb[0].mxu0
          %2916 = vmatprep.mubr.bf16.mxu0 0
          %2917 = vmatmul.mubr.bf16.gmra.mrb[0].mxu0 %v2802
          %v2918 = vpop.f32.mrb[0].mxu0
          %v2919 = vadd.f32 0.0, %v2918
          %v2920 = vpop.f32.mrb[0].mxu0
          %v2921 = vpop.f32.mrb[0].mxu0
          %v2922 = vadd.f32 0.0, %v2921
          %v2923 = vpop.f32.mrb[0].mxu0
          %2924 = vdwg.mxu0
          %v2925 = vmax.f32 %v2863, -5.0
          %v2926 = vmax.f32 %v2866, -5.0
          %v2927 = vmax.f32 %v2871, -5.0
          %v2928 = vmax.f32 %v2874, -5.0
          %v2929 = vmax.f32 %v2879, -5.0
          %v2930 = vmax.f32 %v2882, -5.0
          %v2931 = vmax.f32 %v2887, -5.0
          %v2932 = vmax.f32 %v2890, -5.0
          %v2933 = vmax.f32 %v2895, -5.0
          %v2934 = vmax.f32 %v2898, -5.0
          %v2935 = vmax.f32 %v2903, -5.0
          %v2936 = vmax.f32 %v2906, -5.0
          %v2937 = vmax.f32 %v2911, -5.0
          %v2938 = vmax.f32 %v2914, -5.0
          %v2939 = vmax.f32 %v2919, -5.0
          %v2940 = vmax.f32 %v2922, -5.0
          %v2941 = vmin.f32 %v2925, 5.0
          %v2942 = vmin.f32 %v2926, 5.0
          %v2943 = vmin.f32 %v2927, 5.0
          %v2944 = vmin.f32 %v2928, 5.0
          %v2945 = vmin.f32 %v2929, 5.0
          %v2946 = vmin.f32 %v2930, 5.0
          %v2947 = vmin.f32 %v2931, 5.0
          %v2948 = vmin.f32 %v2932, 5.0
          %v2949 = vmin.f32 %v2933, 5.0
          %v2950 = vmin.f32 %v2934, 5.0
          %v2951 = vmin.f32 %v2935, 5.0
          %v2952 = vmin.f32 %v2936, 5.0
          %v2953 = vmin.f32 %v2937, 5.0
          %v2954 = vmin.f32 %v2938, 5.0
          %v2955 = vmin.f32 %v2939, 5.0
          %v2956 = vmin.f32 %v2940, 5.0
          %v2957 = vmul.f32 %v2941, 1.442695
          %v2958 = vpow.pop %v2957
          %v2959 = vmul.f32 %v2942, 1.442695
          %v2960 = vpow.pop %v2959
          %v2961 = vmul.f32 %v2943, 1.442695
          %v2962 = vpow.pop %v2961
          %v2963 = vmul.f32 %v2944, 1.442695
          %v2964 = vpow.pop %v2963
          %v2965 = vmul.f32 %v2945, 1.442695
          %v2966 = vpow.pop %v2965
          %v2967 = vmul.f32 %v2946, 1.442695
          %v2968 = vpow.pop %v2967
          %v2969 = vmul.f32 %v2947, 1.442695
          %v2970 = vpow.pop %v2969
          %v2971 = vmul.f32 %v2948, 1.442695
          %v2972 = vpow.pop %v2971
          %v2973 = vmul.f32 %v2949, 1.442695
          %v2974 = vpow.pop %v2973
          %v2975 = vmul.f32 %v2950, 1.442695
          %v2976 = vpow.pop %v2975
          %v2977 = vmul.f32 %v2951, 1.442695
          %v2978 = vpow.pop %v2977
          %v2979 = vmul.f32 %v2952, 1.442695
          %v2980 = vpow.pop %v2979
          %v2981 = vmul.f32 %v2953, 1.442695
          %v2982 = vpow.pop %v2981
          %v2983 = vmul.f32 %v2954, 1.442695
          %v2984 = vpow.pop %v2983
          %v2985 = vmul.f32 %v2955, 1.442695
          %v2986 = vpow.pop %v2985
          %v2987 = vmul.f32 %v2956, 1.442695
          %v2988 = vpow.pop %v2987
          %v2989 = vsel %vm1019, %v2958, 0.0
          %v2990 = vsel %vm1020, %v2960, 0.0
          %v2991 = vsel %vm1021, %v2962, 0.0
          %v2992 = vsel %vm1022, %v2964, 0.0
          %v2993 = vsel %vm1023, %v2966, 0.0
          %v2994 = vsel %vm1024, %v2968, 0.0
          %v2995 = vsel %vm1025, %v2970, 0.0
          %v2996 = vsel %vm1026, %v2972, 0.0
          %v2997 = vsel %vm1027, %v2974, 0.0
          %v2998 = vsel %vm1028, %v2976, 0.0
          %v2999 = vsel %vm1029, %v2978, 0.0
          %v3000 = vsel %vm1030, %v2980, 0.0
          %v3001 = vsel %vm1031, %v2982, 0.0
          %v3002 = vsel %vm1032, %v2984, 0.0
          %v3003 = vsel %vm1033, %v2986, 0.0
          %v3004 = vsel %vm1034, %v2988, 0.0
          %v3005 = vpack.c.bf16 %v2990, %v2989
          %v3006 = vpack.c.bf16 %v2992, %v2991
          %v3007 = vpack.c.bf16 %v2994, %v2993
          %v3008 = vpack.c.bf16 %v2996, %v2995
          %v3009 = vpack.c.bf16 %v2998, %v2997
          %v3010 = vpack.c.bf16 %v3000, %v2999
          %v3011 = vpack.c.bf16 %v3002, %v3001
          %v3012 = vpack.c.bf16 %v3004, %v3003
          %3013 = vrot.lane.b32.xlu0 %v1091, 83
          %v3014 = vpop.permute.xlu0 %3013
          %3015 = vrot.lane.b32.xlu0 %v1092, 83
          %v3016 = vpop.permute.xlu0 %3015
          %3017 = vrot.lane.b32.xlu0 %v1093, 83
          %v3018 = vpop.permute.xlu0 %3017
          %3019 = vrot.lane.b32.xlu0 %v1094, 83
          %v3020 = vpop.permute.xlu0 %3019
          %3021 = vrot.lane.b32.xlu0 %v1095, 83
          %v3022 = vpop.permute.xlu0 %3021
          %3023 = vrot.lane.b32.xlu0 %v1096, 83
          %v3024 = vpop.permute.xlu0 %3023
          %3025 = vrot.lane.b32.xlu0 %v1097, 83
          %v3026 = vpop.permute.xlu0 %3025
          %3027 = vrot.lane.b32.xlu0 %v1098, 83
          %v3028 = vpop.permute.xlu0 %3027
          %3037 = vmatprep.subr.bf16.mxu0 0
          %3038 = vmatpush1.bf16.msra.mxu0 %v3014
          %3039 = vmatprep.subr.bf16.mxu0 0
          %3040 = vmatpush1.bf16.msra.mxu0 %v3016
          %3041 = vmatprep.subr.bf16.mxu0 0
          %3042 = vmatpush1.bf16.msra.mxu0 %v3018
          %3043 = vmatprep.subr.bf16.mxu0 0
          %3044 = vmatpush1.bf16.msra.mxu0 %v3020
          %3045 = vmatprep.subr.bf16.mxu0 0
          %3046 = vmatpush1.bf16.msra.mxu0 %v3022
          %3047 = vmatprep.subr.bf16.mxu0 0
          %3048 = vmatpush1.bf16.msra.mxu0 %v3024
          %3049 = vmatprep.subr.bf16.mxu0 0
          %3050 = vmatpush1.bf16.msra.mxu0 %v3026
          %3051 = vmatprep.subr.bf16.mxu0 0
          %3052 = vmatpush1.bf16.msra.mxu0 %v3028
          %3053 = vmatprep.subr.bf16.mxu0 0
          %3054 = vmatpush1.bf16.msra.mxu0 0
          %3055 = vmatprep.subr.bf16.mxu0 0
          %3056 = vmatpush1.bf16.msra.mxu0 0
          %3057 = vmatprep.subr.bf16.mxu0 0
          %3058 = vmatpush1.bf16.msra.mxu0 0
          %3059 = vmatprep.subr.bf16.mxu0 0
          %3060 = vmatpush1.bf16.msra.mxu0 0
          %3061 = vmatprep.subr.bf16.mxu0 0
          %3062 = vmatpush1.bf16.msra.mxu0 0
          %3063 = vmatprep.subr.bf16.mxu0 0
          %3064 = vmatpush1.bf16.msra.mxu0 0
          %3065 = vmatprep.subr.bf16.mxu0 0
          %3066 = vmatpush1.bf16.msra.mxu0 0
          %3067 = vmatprep.subr.bf16.mxu0 0
          %3068 = vmatpush1.bf16.msra.mxu0 0
          %3069 = vmatprep.mubr.bf16.mxu0 0
          %3070 = vmatmul.mubr.bf16.gmra.mrb[0].mxu0 %v3005
          %v3071 = vpop.f32.mrb[0].mxu0
          %v3072 = vadd.f32 0.0, %v3071
          %v3073 = vpop.f32.mrb[0].mxu0
          %v3074 = vpop.f32.mrb[0].mxu0
          %v3075 = vadd.f32 0.0, %v3074
          %v3076 = vpop.f32.mrb[0].mxu0
          %3077 = vmatprep.mubr.bf16.mxu0 0
          %3078 = vmatmul.mubr.bf16.gmra.mrb[0].mxu0 %v3006
          %v3079 = vpop.f32.mrb[0].mxu0
          %v3080 = vadd.f32 0.0, %v3079
          %v3081 = vpop.f32.mrb[0].mxu0
          %v3082 = vpop.f32.mrb[0].mxu0
          %v3083 = vadd.f32 0.0, %v3082
          %v3084 = vpop.f32.mrb[0].mxu0
          %3085 = vmatprep.mubr.bf16.mxu0 0
          %3086 = vmatmul.mubr.bf16.gmra.mrb[0].mxu0 %v3007
          %v3087 = vpop.f32.mrb[0].mxu0
          %v3088 = vadd.f32 0.0, %v3087
          %v3089 = vpop.f32.mrb[0].mxu0
          %v3090 = vpop.f32.mrb[0].mxu0
          %v3091 = vadd.f32 0.0, %v3090
          %v3092 = vpop.f32.mrb[0].mxu0
          %3093 = vmatprep.mubr.bf16.mxu0 0
          %3094 = vmatmul.mubr.bf16.gmra.mrb[0].mxu0 %v3008
          %v3095 = vpop.f32.mrb[0].mxu0
          %v3096 = vadd.f32 0.0, %v3095
          %v3097 = vpop.f32.mrb[0].mxu0
          %v3098 = vpop.f32.mrb[0].mxu0
          %v3099 = vadd.f32 0.0, %v3098
          %v3100 = vpop.f32.mrb[0].mxu0
          %3101 = vmatprep.mubr.bf16.mxu0 0
          %3102 = vmatmul.mubr.bf16.gmra.mrb[0].mxu0 %v3009
          %v3103 = vpop.f32.mrb[0].mxu0
          %v3104 = vadd.f32 0.0, %v3103
          %v3105 = vpop.f32.mrb[0].mxu0
          %v3106 = vpop.f32.mrb[0].mxu0
          %v3107 = vadd.f32 0.0, %v3106
          %v3108 = vpop.f32.mrb[0].mxu0
          %3109 = vmatprep.mubr.bf16.mxu0 0
          %3110 = vmatmul.mubr.bf16.gmra.mrb[0].mxu0 %v3010
          %v3111 = vpop.f32.mrb[0].mxu0
          %v3112 = vadd.f32 0.0, %v3111
          %v3113 = vpop.f32.mrb[0].mxu0
          %v3114 = vpop.f32.mrb[0].mxu0
          %v3115 = vadd.f32 0.0, %v3114
          %v3116 = vpop.f32.mrb[0].mxu0
          %3117 = vmatprep.mubr.bf16.mxu0 0
          %3118 = vmatmul.mubr.bf16.gmra.mrb[0].mxu0 %v3011
          %v3119 = vpop.f32.mrb[0].mxu0
          %v3120 = vadd.f32 0.0, %v3119
          %v3121 = vpop.f32.mrb[0].mxu0
          %v3122 = vpop.f32.mrb[0].mxu0
          %v3123 = vadd.f32 0.0, %v3122
          %v3124 = vpop.f32.mrb[0].mxu0
          %3125 = vmatprep.mubr.bf16.mxu0 0
          %3126 = vmatmul.mubr.bf16.gmra.mrb[0].mxu0 %v3012
          %v3127 = vpop.f32.mrb[0].mxu0
          %v3128 = vadd.f32 0.0, %v3127
          %v3129 = vpop.f32.mrb[0].mxu0
          %v3130 = vpop.f32.mrb[0].mxu0
          %v3131 = vadd.f32 0.0, %v3130
          %v3132 = vpop.f32.mrb[0].mxu0
          %3133 = vdwg.mxu0
          %3134 = vrot.lane.b32.xlu0 %v661, 80
          %v3135 = vpop.permute.xlu0 %3134
          %3136 = vrot.lane.b32.xlu0 %v662, 80
          %v3137 = vpop.permute.xlu0 %3136
          %3138 = vrot.lane.b32.xlu0 %v663, 80
          %v3139 = vpop.permute.xlu0 %3138
          %3140 = vrot.lane.b32.xlu0 %v664, 80
          %v3141 = vpop.permute.xlu0 %3140
          %3142 = vrot.lane.b32.xlu0 %v665, 80
          %v3143 = vpop.permute.xlu0 %3142
          %3144 = vrot.lane.b32.xlu0 %v666, 80
          %v3145 = vpop.permute.xlu0 %3144
          %3146 = vrot.lane.b32.xlu0 %v667, 80
          %v3147 = vpop.permute.xlu0 %3146
          %3148 = vrot.lane.b32.xlu0 %v668, 80
          %v3149 = vpop.permute.xlu0 %3148
          %3150 = vrot.lane.b32.xlu0 %v701, 80
          %v3151 = vpop.permute.xlu0 %3150
          %3152 = vrot.lane.b32.xlu0 %v702, 80
          %v3153 = vpop.permute.xlu0 %3152
          %3154 = vrot.lane.b32.xlu0 %v703, 80
          %v3155 = vpop.permute.xlu0 %3154
          %3156 = vrot.lane.b32.xlu0 %v704, 80
          %v3157 = vpop.permute.xlu0 %3156
          %3158 = vrot.lane.b32.xlu0 %v705, 80
          %v3159 = vpop.permute.xlu0 %3158
          %3160 = vrot.lane.b32.xlu0 %v706, 80
          %v3161 = vpop.permute.xlu0 %3160
          %3162 = vrot.lane.b32.xlu0 %v707, 80
          %v3163 = vpop.permute.xlu0 %3162
          %3164 = vrot.lane.b32.xlu0 %v708, 80
          %v3165 = vpop.permute.xlu0 %3164
          %v3167 = vsel %vm709, %v3135, 0
          %v3170 = vsel %vm709, %v3137, 0
          %v3173 = vsel %vm709, %v3139, 0
          %v3176 = vsel %vm709, %v3141, 0
          %v3179 = vsel %vm709, %v3143, 0
          %v3182 = vsel %vm709, %v3145, 0
          %v3185 = vsel %vm709, %v3147, 0
          %v3188 = vsel %vm709, %v3149, 0
          %v3191 = vsel %vm709, %v3151, 0
          %v3194 = vsel %vm709, %v3153, 0
          %v3197 = vsel %vm709, %v3155, 0
          %v3200 = vsel %vm709, %v3157, 0
          %v3203 = vsel %vm709, %v3159, 0
          %v3206 = vsel %vm709, %v3161, 0
          %v3209 = vsel %vm709, %v3163, 0
          %v3212 = vsel %vm709, %v3165, 0
          %3214 = vmatprep.subr.bf16.mxu0 0
          %3215 = vmatpush1.bf16.xpose.msra.mxu0 %v3191
          %3216 = vmatprep.subr.bf16.mxu0 0
          %3217 = vmatpush1.bf16.xpose.msra.mxu0 %v3194
          %3218 = vmatprep.subr.bf16.mxu0 0
          %3219 = vmatpush1.bf16.xpose.msra.mxu0 %v3197
          %3220 = vmatprep.subr.bf16.mxu0 0
          %3221 = vmatpush1.bf16.xpose.msra.mxu0 %v3200
          %3222 = vmatprep.subr.bf16.mxu0 0
          %3223 = vmatpush1.bf16.xpose.msra.mxu0 %v3203
          %3224 = vmatprep.subr.bf16.mxu0 0
          %3225 = vmatpush1.bf16.xpose.msra.mxu0 %v3206
          %3226 = vmatprep.subr.bf16.mxu0 0
          %3227 = vmatpush1.bf16.xpose.msra.mxu0 %v3209
          %3228 = vmatprep.subr.bf16.mxu0 0
          %3229 = vmatpush1.bf16.xpose.msra.mxu0 %v3212
          %3230 = vmatprep.subr.bf16.mxu0 0
          %3231 = vmatpush1.bf16.xpose.msra.mxu0 0
          %3232 = vmatprep.subr.bf16.mxu0 0
          %3233 = vmatpush1.bf16.xpose.msra.mxu0 0
          %3234 = vmatprep.subr.bf16.mxu0 0
          %3235 = vmatpush1.bf16.xpose.msra.mxu0 0
          %3236 = vmatprep.subr.bf16.mxu0 0
          %3237 = vmatpush1.bf16.xpose.msra.mxu0 0
          %3238 = vmatprep.subr.bf16.mxu0 0
          %3239 = vmatpush1.bf16.xpose.msra.mxu0 0
          %3240 = vmatprep.subr.bf16.mxu0 0
          %3241 = vmatpush1.bf16.xpose.msra.mxu0 0
          %3242 = vmatprep.subr.bf16.mxu0 0
          %3243 = vmatpush1.bf16.xpose.msra.mxu0 0
          %3244 = vmatprep.subr.bf16.mxu0 0
          %3245 = vmatpush1.bf16.xpose.msra.mxu0 0
          %3246 = vmatprep.mubr.bf16.mxu0 0
          %3247 = vmatmul.mubr.bf16.gmra.mrb[0].mxu0 %v3167
          %v3248 = vpop.f32.mrb[0].mxu0
          %v3249 = vadd.f32 0.0, %v3248
          %v3250 = vpop.f32.mrb[0].mxu0
          %v3251 = vpop.f32.mrb[0].mxu0
          %v3252 = vadd.f32 0.0, %v3251
          %v3253 = vpop.f32.mrb[0].mxu0
          %3254 = vmatprep.mubr.bf16.mxu0 0
          %3255 = vmatmul.mubr.bf16.gmra.mrb[0].mxu0 %v3170
          %v3256 = vpop.f32.mrb[0].mxu0
          %v3257 = vadd.f32 0.0, %v3256
          %v3258 = vpop.f32.mrb[0].mxu0
          %v3259 = vpop.f32.mrb[0].mxu0
          %v3260 = vadd.f32 0.0, %v3259
          %v3261 = vpop.f32.mrb[0].mxu0
          %3262 = vmatprep.mubr.bf16.mxu0 0
          %3263 = vmatmul.mubr.bf16.gmra.mrb[0].mxu0 %v3173
          %v3264 = vpop.f32.mrb[0].mxu0
          %v3265 = vadd.f32 0.0, %v3264
          %v3266 = vpop.f32.mrb[0].mxu0
          %v3267 = vpop.f32.mrb[0].mxu0
          %v3268 = vadd.f32 0.0, %v3267
          %v3269 = vpop.f32.mrb[0].mxu0
          %3270 = vmatprep.mubr.bf16.mxu0 0
          %3271 = vmatmul.mubr.bf16.gmra.mrb[0].mxu0 %v3176
          %v3272 = vpop.f32.mrb[0].mxu0
          %v3273 = vadd.f32 0.0, %v3272
          %v3274 = vpop.f32.mrb[0].mxu0
          %v3275 = vpop.f32.mrb[0].mxu0
          %v3276 = vadd.f32 0.0, %v3275
          %v3277 = vpop.f32.mrb[0].mxu0
          %3278 = vmatprep.mubr.bf16.mxu0 0
          %3279 = vmatmul.mubr.bf16.gmra.mrb[0].mxu0 %v3179
          %v3280 = vpop.f32.mrb[0].mxu0
          %v3281 = vadd.f32 0.0, %v3280
          %v3282 = vpop.f32.mrb[0].mxu0
          %v3283 = vpop.f32.mrb[0].mxu0
          %v3284 = vadd.f32 0.0, %v3283
          %v3285 = vpop.f32.mrb[0].mxu0
          %3286 = vmatprep.mubr.bf16.mxu0 0
          %3287 = vmatmul.mubr.bf16.gmra.mrb[0].mxu0 %v3182
          %v3288 = vpop.f32.mrb[0].mxu0
          %v3289 = vadd.f32 0.0, %v3288
          %v3290 = vpop.f32.mrb[0].mxu0
          %v3291 = vpop.f32.mrb[0].mxu0
          %v3292 = vadd.f32 0.0, %v3291
          %v3293 = vpop.f32.mrb[0].mxu0
          %3294 = vmatprep.mubr.bf16.mxu0 0
          %3295 = vmatmul.mubr.bf16.gmra.mrb[0].mxu0 %v3185
          %v3296 = vpop.f32.mrb[0].mxu0
          %v3297 = vadd.f32 0.0, %v3296
          %v3298 = vpop.f32.mrb[0].mxu0
          %v3299 = vpop.f32.mrb[0].mxu0
          %v3300 = vadd.f32 0.0, %v3299
          %v3301 = vpop.f32.mrb[0].mxu0
          %3302 = vmatprep.mubr.bf16.mxu0 0
          %3303 = vmatmul.mubr.bf16.gmra.mrb[0].mxu0 %v3188
          %v3304 = vpop.f32.mrb[0].mxu0
          %v3305 = vadd.f32 0.0, %v3304
          %v3306 = vpop.f32.mrb[0].mxu0
          %v3307 = vpop.f32.mrb[0].mxu0
          %v3308 = vadd.f32 0.0, %v3307
          %v3309 = vpop.f32.mrb[0].mxu0
          %3310 = vdwg.mxu0
          %v3311 = vmax.f32 %v3249, -5.0
          %v3312 = vmax.f32 %v3252, -5.0
          %v3313 = vmax.f32 %v3257, -5.0
          %v3314 = vmax.f32 %v3260, -5.0
          %v3315 = vmax.f32 %v3265, -5.0
          %v3316 = vmax.f32 %v3268, -5.0
          %v3317 = vmax.f32 %v3273, -5.0
          %v3318 = vmax.f32 %v3276, -5.0
          %v3319 = vmax.f32 %v3281, -5.0
          %v3320 = vmax.f32 %v3284, -5.0
          %v3321 = vmax.f32 %v3289, -5.0
          %v3322 = vmax.f32 %v3292, -5.0
          %v3323 = vmax.f32 %v3297, -5.0
          %v3324 = vmax.f32 %v3300, -5.0
          %v3325 = vmax.f32 %v3305, -5.0
          %v3326 = vmax.f32 %v3308, -5.0
          %v3327 = vmin.f32 %v3311, 5.0
          %v3328 = vmin.f32 %v3312, 5.0
          %v3329 = vmin.f32 %v3313, 5.0
          %v3330 = vmin.f32 %v3314, 5.0
          %v3331 = vmin.f32 %v3315, 5.0
          %v3332 = vmin.f32 %v3316, 5.0
          %v3333 = vmin.f32 %v3317, 5.0
          %v3334 = vmin.f32 %v3318, 5.0
          %v3335 = vmin.f32 %v3319, 5.0
          %v3336 = vmin.f32 %v3320, 5.0
          %v3337 = vmin.f32 %v3321, 5.0
          %v3338 = vmin.f32 %v3322, 5.0
          %v3339 = vmin.f32 %v3323, 5.0
          %v3340 = vmin.f32 %v3324, 5.0
          %v3341 = vmin.f32 %v3325, 5.0
          %v3342 = vmin.f32 %v3326, 5.0
          %v3343 = vmul.f32 %v3327, 1.442695
          %v3344 = vpow.pop %v3343
          %v3345 = vmul.f32 %v3328, 1.442695
          %v3346 = vpow.pop %v3345
          %v3347 = vmul.f32 %v3329, 1.442695
          %v3348 = vpow.pop %v3347
          %v3349 = vmul.f32 %v3330, 1.442695
          %v3350 = vpow.pop %v3349
          %v3351 = vmul.f32 %v3331, 1.442695
          %v3352 = vpow.pop %v3351
          %v3353 = vmul.f32 %v3332, 1.442695
          %v3354 = vpow.pop %v3353
          %v3355 = vmul.f32 %v3333, 1.442695
          %v3356 = vpow.pop %v3355
          %v3357 = vmul.f32 %v3334, 1.442695
          %v3358 = vpow.pop %v3357
          %v3359 = vmul.f32 %v3335, 1.442695
          %v3360 = vpow.pop %v3359
          %v3361 = vmul.f32 %v3336, 1.442695
          %v3362 = vpow.pop %v3361
          %v3363 = vmul.f32 %v3337, 1.442695
          %v3364 = vpow.pop %v3363
          %v3365 = vmul.f32 %v3338, 1.442695
          %v3366 = vpow.pop %v3365
          %v3367 = vmul.f32 %v3339, 1.442695
          %v3368 = vpow.pop %v3367
          %v3369 = vmul.f32 %v3340, 1.442695
          %v3370 = vpow.pop %v3369
          %v3371 = vmul.f32 %v3341, 1.442695
          %v3372 = vpow.pop %v3371
          %v3373 = vmul.f32 %v3342, 1.442695
          %v3374 = vpow.pop %v3373
          %v3375 = vsel %vm1019, %v3344, 0.0
          %v3376 = vsel %vm1020, %v3346, 0.0
          %v3377 = vsel %vm1021, %v3348, 0.0
          %v3378 = vsel %vm1022, %v3350, 0.0
          %v3379 = vsel %vm1023, %v3352, 0.0
          %v3380 = vsel %vm1024, %v3354, 0.0
          %v3381 = vsel %vm1025, %v3356, 0.0
          %v3382 = vsel %vm1026, %v3358, 0.0
          %v3383 = vsel %vm1027, %v3360, 0.0
          %v3384 = vsel %vm1028, %v3362, 0.0
          %v3385 = vsel %vm1029, %v3364, 0.0
          %v3386 = vsel %vm1030, %v3366, 0.0
          %v3387 = vsel %vm1031, %v3368, 0.0
          %v3388 = vsel %vm1032, %v3370, 0.0
          %v3389 = vsel %vm1033, %v3372, 0.0
          %v3390 = vsel %vm1034, %v3374, 0.0
          %v3391 = vpack.c.bf16 %v3376, %v3375
          %v3392 = vpack.c.bf16 %v3378, %v3377
          %v3393 = vpack.c.bf16 %v3380, %v3379
          %v3394 = vpack.c.bf16 %v3382, %v3381
          %v3395 = vpack.c.bf16 %v3384, %v3383
          %v3396 = vpack.c.bf16 %v3386, %v3385
          %v3397 = vpack.c.bf16 %v3388, %v3387
          %v3398 = vpack.c.bf16 %v3390, %v3389
          %3399 = vrot.lane.b32.xlu0 %v1091, 74
          %v3400 = vpop.permute.xlu0 %3399
          %3401 = vrot.lane.b32.xlu0 %v1092, 74
          %v3402 = vpop.permute.xlu0 %3401
          %3403 = vrot.lane.b32.xlu0 %v1093, 74
          %v3404 = vpop.permute.xlu0 %3403
          %3405 = vrot.lane.b32.xlu0 %v1094, 74
          %v3406 = vpop.permute.xlu0 %3405
          %3407 = vrot.lane.b32.xlu0 %v1095, 74
          %v3408 = vpop.permute.xlu0 %3407
          %3409 = vrot.lane.b32.xlu0 %v1096, 74
          %v3410 = vpop.permute.xlu0 %3409
          %3411 = vrot.lane.b32.xlu0 %v1097, 74
          %v3412 = vpop.permute.xlu0 %3411
          %3413 = vrot.lane.b32.xlu0 %v1098, 74
          %v3414 = vpop.permute.xlu0 %3413
          %3423 = vmatprep.subr.bf16.mxu0 0
          %3424 = vmatpush1.bf16.msra.mxu0 %v3400
          %3425 = vmatprep.subr.bf16.mxu0 0
          %3426 = vmatpush1.bf16.msra.mxu0 %v3402
          %3427 = vmatprep.subr.bf16.mxu0 0
          %3428 = vmatpush1.bf16.msra.mxu0 %v3404
          %3429 = vmatprep.subr.bf16.mxu0 0
          %3430 = vmatpush1.bf16.msra.mxu0 %v3406
          %3431 = vmatprep.subr.bf16.mxu0 0
          %3432 = vmatpush1.bf16.msra.mxu0 %v3408
          %3433 = vmatprep.subr.bf16.mxu0 0
          %3434 = vmatpush1.bf16.msra.mxu0 %v3410
          %3435 = vmatprep.subr.bf16.mxu0 0
          %3436 = vmatpush1.bf16.msra.mxu0 %v3412
          %3437 = vmatprep.subr.bf16.mxu0 0
          %3438 = vmatpush1.bf16.msra.mxu0 %v3414
          %3439 = vmatprep.subr.bf16.mxu0 0
          %3440 = vmatpush1.bf16.msra.mxu0 0
          %3441 = vmatprep.subr.bf16.mxu0 0
          %3442 = vmatpush1.bf16.msra.mxu0 0
          %3443 = vmatprep.subr.bf16.mxu0 0
          %3444 = vmatpush1.bf16.msra.mxu0 0
          %3445 = vmatprep.subr.bf16.mxu0 0
          %3446 = vmatpush1.bf16.msra.mxu0 0
          %3447 = vmatprep.subr.bf16.mxu0 0
          %3448 = vmatpush1.bf16.msra.mxu0 0
          %3449 = vmatprep.subr.bf16.mxu0 0
          %3450 = vmatpush1.bf16.msra.mxu0 0
          %3451 = vmatprep.subr.bf16.mxu0 0
          %3452 = vmatpush1.bf16.msra.mxu0 0
          %3453 = vmatprep.subr.bf16.mxu0 0
          %3454 = vmatpush1.bf16.msra.mxu0 0
          %3455 = vmatprep.mubr.bf16.mxu0 0
          %3456 = vmatmul.mubr.bf16.gmra.mrb[0].mxu0 %v3391
          %v3457 = vpop.f32.mrb[0].mxu0
          %v3458 = vadd.f32 0.0, %v3457
          %v3459 = vpop.f32.mrb[0].mxu0
          %v3460 = vpop.f32.mrb[0].mxu0
          %v3461 = vadd.f32 0.0, %v3460
          %v3462 = vpop.f32.mrb[0].mxu0
          %3463 = vmatprep.mubr.bf16.mxu0 0
          %3464 = vmatmul.mubr.bf16.gmra.mrb[0].mxu0 %v3392
          %v3465 = vpop.f32.mrb[0].mxu0
          %v3466 = vadd.f32 0.0, %v3465
          %v3467 = vpop.f32.mrb[0].mxu0
          %v3468 = vpop.f32.mrb[0].mxu0
          %v3469 = vadd.f32 0.0, %v3468
          %v3470 = vpop.f32.mrb[0].mxu0
          %3471 = vmatprep.mubr.bf16.mxu0 0
          %3472 = vmatmul.mubr.bf16.gmra.mrb[0].mxu0 %v3393
          %v3473 = vpop.f32.mrb[0].mxu0
          %v3474 = vadd.f32 0.0, %v3473
          %v3475 = vpop.f32.mrb[0].mxu0
          %v3476 = vpop.f32.mrb[0].mxu0
          %v3477 = vadd.f32 0.0, %v3476
          %v3478 = vpop.f32.mrb[0].mxu0
          %3479 = vmatprep.mubr.bf16.mxu0 0
          %3480 = vmatmul.mubr.bf16.gmra.mrb[0].mxu0 %v3394
          %v3481 = vpop.f32.mrb[0].mxu0
          %v3482 = vadd.f32 0.0, %v3481
          %v3483 = vpop.f32.mrb[0].mxu0
          %v3484 = vpop.f32.mrb[0].mxu0
          %v3485 = vadd.f32 0.0, %v3484
          %v3486 = vpop.f32.mrb[0].mxu0
          %3487 = vmatprep.mubr.bf16.mxu0 0
          %3488 = vmatmul.mubr.bf16.gmra.mrb[0].mxu0 %v3395
          %v3489 = vpop.f32.mrb[0].mxu0
          %v3490 = vadd.f32 0.0, %v3489
          %v3491 = vpop.f32.mrb[0].mxu0
          %v3492 = vpop.f32.mrb[0].mxu0
          %v3493 = vadd.f32 0.0, %v3492
          %v3494 = vpop.f32.mrb[0].mxu0
          %3495 = vmatprep.mubr.bf16.mxu0 0
          %3496 = vmatmul.mubr.bf16.gmra.mrb[0].mxu0 %v3396
          %v3497 = vpop.f32.mrb[0].mxu0
          %v3498 = vadd.f32 0.0, %v3497
          %v3499 = vpop.f32.mrb[0].mxu0
          %v3500 = vpop.f32.mrb[0].mxu0
          %v3501 = vadd.f32 0.0, %v3500
          %v3502 = vpop.f32.mrb[0].mxu0
          %3503 = vmatprep.mubr.bf16.mxu0 0
          %3504 = vmatmul.mubr.bf16.gmra.mrb[0].mxu0 %v3397
          %v3505 = vpop.f32.mrb[0].mxu0
          %v3506 = vadd.f32 0.0, %v3505
          %v3507 = vpop.f32.mrb[0].mxu0
          %v3508 = vpop.f32.mrb[0].mxu0
          %v3509 = vadd.f32 0.0, %v3508
          %v3510 = vpop.f32.mrb[0].mxu0
          %3511 = vmatprep.mubr.bf16.mxu0 0
          %3512 = vmatmul.mubr.bf16.gmra.mrb[0].mxu0 %v3398
          %v3513 = vpop.f32.mrb[0].mxu0
          %v3514 = vadd.f32 0.0, %v3513
          %v3515 = vpop.f32.mrb[0].mxu0
          %v3516 = vpop.f32.mrb[0].mxu0
          %v3517 = vadd.f32 0.0, %v3516
          %v3518 = vpop.f32.mrb[0].mxu0
          %3519 = vdwg.mxu0
          %3520 = vrot.lane.b32.xlu0 %v661, 72
          %v3521 = vpop.permute.xlu0 %3520
          %3522 = vrot.lane.b32.xlu0 %v662, 72
          %v3523 = vpop.permute.xlu0 %3522
          %3524 = vrot.lane.b32.xlu0 %v663, 72
          %v3525 = vpop.permute.xlu0 %3524
          %3526 = vrot.lane.b32.xlu0 %v664, 72
          %v3527 = vpop.permute.xlu0 %3526
          %3528 = vrot.lane.b32.xlu0 %v665, 72
          %v3529 = vpop.permute.xlu0 %3528
          %3530 = vrot.lane.b32.xlu0 %v666, 72
          %v3531 = vpop.permute.xlu0 %3530
          %3532 = vrot.lane.b32.xlu0 %v667, 72
          %v3533 = vpop.permute.xlu0 %3532
          %3534 = vrot.lane.b32.xlu0 %v668, 72
          %v3535 = vpop.permute.xlu0 %3534
          %3536 = vrot.lane.b32.xlu0 %v701, 72
          %v3537 = vpop.permute.xlu0 %3536
          %3538 = vrot.lane.b32.xlu0 %v702, 72
          %v3539 = vpop.permute.xlu0 %3538
          %3540 = vrot.lane.b32.xlu0 %v703, 72
          %v3541 = vpop.permute.xlu0 %3540
          %3542 = vrot.lane.b32.xlu0 %v704, 72
          %v3543 = vpop.permute.xlu0 %3542
          %3544 = vrot.lane.b32.xlu0 %v705, 72
          %v3545 = vpop.permute.xlu0 %3544
          %3546 = vrot.lane.b32.xlu0 %v706, 72
          %v3547 = vpop.permute.xlu0 %3546
          %3548 = vrot.lane.b32.xlu0 %v707, 72
          %v3549 = vpop.permute.xlu0 %3548
          %3550 = vrot.lane.b32.xlu0 %v708, 72
          %v3551 = vpop.permute.xlu0 %3550
          %v3553 = vsel %vm709, %v3521, 0
          %v3556 = vsel %vm709, %v3523, 0
          %v3559 = vsel %vm709, %v3525, 0
          %v3562 = vsel %vm709, %v3527, 0
          %v3565 = vsel %vm709, %v3529, 0
          %v3568 = vsel %vm709, %v3531, 0
          %v3571 = vsel %vm709, %v3533, 0
          %v3574 = vsel %vm709, %v3535, 0
          %v3577 = vsel %vm709, %v3537, 0
          %v3580 = vsel %vm709, %v3539, 0
          %v3583 = vsel %vm709, %v3541, 0
          %v3586 = vsel %vm709, %v3543, 0
          %v3589 = vsel %vm709, %v3545, 0
          %v3592 = vsel %vm709, %v3547, 0
          %v3595 = vsel %vm709, %v3549, 0
          %v3598 = vsel %vm709, %v3551, 0
          %3600 = vmatprep.subr.bf16.mxu0 0
          %3601 = vmatpush1.bf16.xpose.msra.mxu0 %v3577
          %3602 = vmatprep.subr.bf16.mxu0 0
          %3603 = vmatpush1.bf16.xpose.msra.mxu0 %v3580
          %3604 = vmatprep.subr.bf16.mxu0 0
          %3605 = vmatpush1.bf16.xpose.msra.mxu0 %v3583
          %3606 = vmatprep.subr.bf16.mxu0 0
          %3607 = vmatpush1.bf16.xpose.msra.mxu0 %v3586
          %3608 = vmatprep.subr.bf16.mxu0 0
          %3609 = vmatpush1.bf16.xpose.msra.mxu0 %v3589
          %3610 = vmatprep.subr.bf16.mxu0 0
          %3611 = vmatpush1.bf16.xpose.msra.mxu0 %v3592
          %3612 = vmatprep.subr.bf16.mxu0 0
          %3613 = vmatpush1.bf16.xpose.msra.mxu0 %v3595
          %3614 = vmatprep.subr.bf16.mxu0 0
          %3615 = vmatpush1.bf16.xpose.msra.mxu0 %v3598
          %3616 = vmatprep.subr.bf16.mxu0 0
          %3617 = vmatpush1.bf16.xpose.msra.mxu0 0
          %3618 = vmatprep.subr.bf16.mxu0 0
          %3619 = vmatpush1.bf16.xpose.msra.mxu0 0
          %3620 = vmatprep.subr.bf16.mxu0 0
          %3621 = vmatpush1.bf16.xpose.msra.mxu0 0
          %3622 = vmatprep.subr.bf16.mxu0 0
          %3623 = vmatpush1.bf16.xpose.msra.mxu0 0
          %3624 = vmatprep.subr.bf16.mxu0 0
          %3625 = vmatpush1.bf16.xpose.msra.mxu0 0
          %3626 = vmatprep.subr.bf16.mxu0 0
          %3627 = vmatpush1.bf16.xpose.msra.mxu0 0
          %3628 = vmatprep.subr.bf16.mxu0 0
          %3629 = vmatpush1.bf16.xpose.msra.mxu0 0
          %3630 = vmatprep.subr.bf16.mxu0 0
          %3631 = vmatpush1.bf16.xpose.msra.mxu0 0
          %3632 = vmatprep.mubr.bf16.mxu0 0
          %3633 = vmatmul.mubr.bf16.gmra.mrb[0].mxu0 %v3553
          %v3634 = vpop.f32.mrb[0].mxu0
          %v3635 = vadd.f32 0.0, %v3634
          %v3636 = vpop.f32.mrb[0].mxu0
          %v3637 = vpop.f32.mrb[0].mxu0
          %v3638 = vadd.f32 0.0, %v3637
          %v3639 = vpop.f32.mrb[0].mxu0
          %3640 = vmatprep.mubr.bf16.mxu0 0
          %3641 = vmatmul.mubr.bf16.gmra.mrb[0].mxu0 %v3556
          %v3642 = vpop.f32.mrb[0].mxu0
          %v3643 = vadd.f32 0.0, %v3642
          %v3644 = vpop.f32.mrb[0].mxu0
          %v3645 = vpop.f32.mrb[0].mxu0
          %v3646 = vadd.f32 0.0, %v3645
          %v3647 = vpop.f32.mrb[0].mxu0
          %3648 = vmatprep.mubr.bf16.mxu0 0
          %3649 = vmatmul.mubr.bf16.gmra.mrb[0].mxu0 %v3559
          %v3650 = vpop.f32.mrb[0].mxu0
          %v3651 = vadd.f32 0.0, %v3650
          %v3652 = vpop.f32.mrb[0].mxu0
          %v3653 = vpop.f32.mrb[0].mxu0
          %v3654 = vadd.f32 0.0, %v3653
          %v3655 = vpop.f32.mrb[0].mxu0
          %3656 = vmatprep.mubr.bf16.mxu0 0
          %3657 = vmatmul.mubr.bf16.gmra.mrb[0].mxu0 %v3562
          %v3658 = vpop.f32.mrb[0].mxu0
          %v3659 = vadd.f32 0.0, %v3658
          %v3660 = vpop.f32.mrb[0].mxu0
          %v3661 = vpop.f32.mrb[0].mxu0
          %v3662 = vadd.f32 0.0, %v3661
          %v3663 = vpop.f32.mrb[0].mxu0
          %3664 = vmatprep.mubr.bf16.mxu0 0
          %3665 = vmatmul.mubr.bf16.gmra.mrb[0].mxu0 %v3565
          %v3666 = vpop.f32.mrb[0].mxu0
          %v3667 = vadd.f32 0.0, %v3666
          %v3668 = vpop.f32.mrb[0].mxu0
          %v3669 = vpop.f32.mrb[0].mxu0
          %v3670 = vadd.f32 0.0, %v3669
          %v3671 = vpop.f32.mrb[0].mxu0
          %3672 = vmatprep.mubr.bf16.mxu0 0
          %3673 = vmatmul.mubr.bf16.gmra.mrb[0].mxu0 %v3568
          %v3674 = vpop.f32.mrb[0].mxu0
          %v3675 = vadd.f32 0.0, %v3674
          %v3676 = vpop.f32.mrb[0].mxu0
          %v3677 = vpop.f32.mrb[0].mxu0
          %v3678 = vadd.f32 0.0, %v3677
          %v3679 = vpop.f32.mrb[0].mxu0
          %3680 = vmatprep.mubr.bf16.mxu0 0
          %3681 = vmatmul.mubr.bf16.gmra.mrb[0].mxu0 %v3571
          %v3682 = vpop.f32.mrb[0].mxu0
          %v3683 = vadd.f32 0.0, %v3682
          %v3684 = vpop.f32.mrb[0].mxu0
          %v3685 = vpop.f32.mrb[0].mxu0
          %v3686 = vadd.f32 0.0, %v3685
          %v3687 = vpop.f32.mrb[0].mxu0
          %3688 = vmatprep.mubr.bf16.mxu0 0
          %3689 = vmatmul.mubr.bf16.gmra.mrb[0].mxu0 %v3574
          %v3690 = vpop.f32.mrb[0].mxu0
          %v3691 = vadd.f32 0.0, %v3690
          %v3692 = vpop.f32.mrb[0].mxu0
          %v3693 = vpop.f32.mrb[0].mxu0
          %v3694 = vadd.f32 0.0, %v3693
          %v3695 = vpop.f32.mrb[0].mxu0
          %3696 = vdwg.mxu0
          %v3697 = vmax.f32 %v3635, -5.0
          %v3698 = vmax.f32 %v3638, -5.0
          %v3699 = vmax.f32 %v3643, -5.0
          %v3700 = vmax.f32 %v3646, -5.0
          %v3701 = vmax.f32 %v3651, -5.0
          %v3702 = vmax.f32 %v3654, -5.0
          %v3703 = vmax.f32 %v3659, -5.0
          %v3704 = vmax.f32 %v3662, -5.0
          %v3705 = vmax.f32 %v3667, -5.0
          %v3706 = vmax.f32 %v3670, -5.0
          %v3707 = vmax.f32 %v3675, -5.0
          %v3708 = vmax.f32 %v3678, -5.0
          %v3709 = vmax.f32 %v3683, -5.0
          %v3710 = vmax.f32 %v3686, -5.0
          %v3711 = vmax.f32 %v3691, -5.0
          %v3712 = vmax.f32 %v3694, -5.0
          %v3713 = vmin.f32 %v3697, 5.0
          %v3714 = vmin.f32 %v3698, 5.0
          %v3715 = vmin.f32 %v3699, 5.0
          %v3716 = vmin.f32 %v3700, 5.0
          %v3717 = vmin.f32 %v3701, 5.0
          %v3718 = vmin.f32 %v3702, 5.0
          %v3719 = vmin.f32 %v3703, 5.0
          %v3720 = vmin.f32 %v3704, 5.0
          %v3721 = vmin.f32 %v3705, 5.0
          %v3722 = vmin.f32 %v3706, 5.0
          %v3723 = vmin.f32 %v3707, 5.0
          %v3724 = vmin.f32 %v3708, 5.0
          %v3725 = vmin.f32 %v3709, 5.0
          %v3726 = vmin.f32 %v3710, 5.0
          %v3727 = vmin.f32 %v3711, 5.0
          %v3728 = vmin.f32 %v3712, 5.0
          %v3729 = vmul.f32 %v3713, 1.442695
          %v3730 = vpow.pop %v3729
          %v3731 = vmul.f32 %v3714, 1.442695
          %v3732 = vpow.pop %v3731
          %v3733 = vmul.f32 %v3715, 1.442695
          %v3734 = vpow.pop %v3733
          %v3735 = vmul.f32 %v3716, 1.442695
          %v3736 = vpow.pop %v3735
          %v3737 = vmul.f32 %v3717, 1.442695
          %v3738 = vpow.pop %v3737
          %v3739 = vmul.f32 %v3718, 1.442695
          %v3740 = vpow.pop %v3739
          %v3741 = vmul.f32 %v3719, 1.442695
          %v3742 = vpow.pop %v3741
          %v3743 = vmul.f32 %v3720, 1.442695
          %v3744 = vpow.pop %v3743
          %v3745 = vmul.f32 %v3721, 1.442695
          %v3746 = vpow.pop %v3745
          %v3747 = vmul.f32 %v3722, 1.442695
          %v3748 = vpow.pop %v3747
          %v3749 = vmul.f32 %v3723, 1.442695
          %v3750 = vpow.pop %v3749
          %v3751 = vmul.f32 %v3724, 1.442695
          %v3752 = vpow.pop %v3751
          %v3753 = vmul.f32 %v3725, 1.442695
          %v3754 = vpow.pop %v3753
          %v3755 = vmul.f32 %v3726, 1.442695
          %v3756 = vpow.pop %v3755
          %v3757 = vmul.f32 %v3727, 1.442695
          %v3758 = vpow.pop %v3757
          %v3759 = vmul.f32 %v3728, 1.442695
          %v3760 = vpow.pop %v3759
          %v3761 = vsel %vm1019, %v3730, 0.0
          %v3762 = vsel %vm1020, %v3732, 0.0
          %v3763 = vsel %vm1021, %v3734, 0.0
          %v3764 = vsel %vm1022, %v3736, 0.0
          %v3765 = vsel %vm1023, %v3738, 0.0
          %v3766 = vsel %vm1024, %v3740, 0.0
          %v3767 = vsel %vm1025, %v3742, 0.0
          %v3768 = vsel %vm1026, %v3744, 0.0
          %v3769 = vsel %vm1027, %v3746, 0.0
          %v3770 = vsel %vm1028, %v3748, 0.0
          %v3771 = vsel %vm1029, %v3750, 0.0
          %v3772 = vsel %vm1030, %v3752, 0.0
          %v3773 = vsel %vm1031, %v3754, 0.0
          %v3774 = vsel %vm1032, %v3756, 0.0
          %v3775 = vsel %vm1033, %v3758, 0.0
          %v3776 = vsel %vm1034, %v3760, 0.0
          %v3777 = vpack.c.bf16 %v3762, %v3761
          %v3778 = vpack.c.bf16 %v3764, %v3763
          %v3779 = vpack.c.bf16 %v3766, %v3765
          %v3780 = vpack.c.bf16 %v3768, %v3767
          %v3781 = vpack.c.bf16 %v3770, %v3769
          %v3782 = vpack.c.bf16 %v3772, %v3771
          %v3783 = vpack.c.bf16 %v3774, %v3773
          %v3784 = vpack.c.bf16 %v3776, %v3775
          %3785 = vrot.lane.b32.xlu0 %v1091, 65
          %v3786 = vpop.permute.xlu0 %3785
          %3787 = vrot.lane.b32.xlu0 %v1092, 65
          %v3788 = vpop.permute.xlu0 %3787
          %3789 = vrot.lane.b32.xlu0 %v1093, 65
          %v3790 = vpop.permute.xlu0 %3789
          %3791 = vrot.lane.b32.xlu0 %v1094, 65
          %v3792 = vpop.permute.xlu0 %3791
          %3793 = vrot.lane.b32.xlu0 %v1095, 65
          %v3794 = vpop.permute.xlu0 %3793
          %3795 = vrot.lane.b32.xlu0 %v1096, 65
          %v3796 = vpop.permute.xlu0 %3795
          %3797 = vrot.lane.b32.xlu0 %v1097, 65
          %v3798 = vpop.permute.xlu0 %3797
          %3799 = vrot.lane.b32.xlu0 %v1098, 65
          %v3800 = vpop.permute.xlu0 %3799
          %3809 = vmatprep.subr.bf16.mxu0 0
          %3810 = vmatpush1.bf16.msra.mxu0 %v3786
          %3811 = vmatprep.subr.bf16.mxu0 0
          %3812 = vmatpush1.bf16.msra.mxu0 %v3788
          %3813 = vmatprep.subr.bf16.mxu0 0
          %3814 = vmatpush1.bf16.msra.mxu0 %v3790
          %3815 = vmatprep.subr.bf16.mxu0 0
          %3816 = vmatpush1.bf16.msra.mxu0 %v3792
          %3817 = vmatprep.subr.bf16.mxu0 0
          %3818 = vmatpush1.bf16.msra.mxu0 %v3794
          %3819 = vmatprep.subr.bf16.mxu0 0
          %3820 = vmatpush1.bf16.msra.mxu0 %v3796
          %3821 = vmatprep.subr.bf16.mxu0 0
          %3822 = vmatpush1.bf16.msra.mxu0 %v3798
          %3823 = vmatprep.subr.bf16.mxu0 0
          %3824 = vmatpush1.bf16.msra.mxu0 %v3800
          %3825 = vmatprep.subr.bf16.mxu0 0
          %3826 = vmatpush1.bf16.msra.mxu0 0
          %3827 = vmatprep.subr.bf16.mxu0 0
          %3828 = vmatpush1.bf16.msra.mxu0 0
          %3829 = vmatprep.subr.bf16.mxu0 0
          %3830 = vmatpush1.bf16.msra.mxu0 0
          %3831 = vmatprep.subr.bf16.mxu0 0
          %3832 = vmatpush1.bf16.msra.mxu0 0
          %3833 = vmatprep.subr.bf16.mxu0 0
          %3834 = vmatpush1.bf16.msra.mxu0 0
          %3835 = vmatprep.subr.bf16.mxu0 0
          %3836 = vmatpush1.bf16.msra.mxu0 0
          %3837 = vmatprep.subr.bf16.mxu0 0
          %3838 = vmatpush1.bf16.msra.mxu0 0
          %3839 = vmatprep.subr.bf16.mxu0 0
          %3840 = vmatpush1.bf16.msra.mxu0 0
          %3841 = vmatprep.mubr.bf16.mxu0 0
          %3842 = vmatmul.mubr.bf16.gmra.mrb[0].mxu0 %v3777
          %v3843 = vpop.f32.mrb[0].mxu0
          %v3844 = vadd.f32 0.0, %v3843
          %v3845 = vpop.f32.mrb[0].mxu0
          %v3846 = vpop.f32.mrb[0].mxu0
          %v3847 = vadd.f32 0.0, %v3846
          %v3848 = vpop.f32.mrb[0].mxu0
          %3849 = vmatprep.mubr.bf16.mxu0 0
          %3850 = vmatmul.mubr.bf16.gmra.mrb[0].mxu0 %v3778
          %v3851 = vpop.f32.mrb[0].mxu0
          %v3852 = vadd.f32 0.0, %v3851
          %v3853 = vpop.f32.mrb[0].mxu0
          %v3854 = vpop.f32.mrb[0].mxu0
          %v3855 = vadd.f32 0.0, %v3854
          %v3856 = vpop.f32.mrb[0].mxu0
          %3857 = vmatprep.mubr.bf16.mxu0 0
          %3858 = vmatmul.mubr.bf16.gmra.mrb[0].mxu0 %v3779
          %v3859 = vpop.f32.mrb[0].mxu0
          %v3860 = vadd.f32 0.0, %v3859
          %v3861 = vpop.f32.mrb[0].mxu0
          %v3862 = vpop.f32.mrb[0].mxu0
          %v3863 = vadd.f32 0.0, %v3862
          %v3864 = vpop.f32.mrb[0].mxu0
          %3865 = vmatprep.mubr.bf16.mxu0 0
          %3866 = vmatmul.mubr.bf16.gmra.mrb[0].mxu0 %v3780
          %v3867 = vpop.f32.mrb[0].mxu0
          %v3868 = vadd.f32 0.0, %v3867
          %v3869 = vpop.f32.mrb[0].mxu0
          %v3870 = vpop.f32.mrb[0].mxu0
          %v3871 = vadd.f32 0.0, %v3870
          %v3872 = vpop.f32.mrb[0].mxu0
          %3873 = vmatprep.mubr.bf16.mxu0 0
          %3874 = vmatmul.mubr.bf16.gmra.mrb[0].mxu0 %v3781
          %v3875 = vpop.f32.mrb[0].mxu0
          %v3876 = vadd.f32 0.0, %v3875
          %v3877 = vpop.f32.mrb[0].mxu0
          %v3878 = vpop.f32.mrb[0].mxu0
          %v3879 = vadd.f32 0.0, %v3878
          %v3880 = vpop.f32.mrb[0].mxu0
          %3881 = vmatprep.mubr.bf16.mxu0 0
          %3882 = vmatmul.mubr.bf16.gmra.mrb[0].mxu0 %v3782
          %v3883 = vpop.f32.mrb[0].mxu0
          %v3884 = vadd.f32 0.0, %v3883
          %v3885 = vpop.f32.mrb[0].mxu0
          %v3886 = vpop.f32.mrb[0].mxu0
          %v3887 = vadd.f32 0.0, %v3886
          %v3888 = vpop.f32.mrb[0].mxu0
          %3889 = vmatprep.mubr.bf16.mxu0 0
          %3890 = vmatmul.mubr.bf16.gmra.mrb[0].mxu0 %v3783
          %v3891 = vpop.f32.mrb[0].mxu0
          %v3892 = vadd.f32 0.0, %v3891
          %v3893 = vpop.f32.mrb[0].mxu0
          %v3894 = vpop.f32.mrb[0].mxu0
          %v3895 = vadd.f32 0.0, %v3894
          %v3896 = vpop.f32.mrb[0].mxu0
          %3897 = vmatprep.mubr.bf16.mxu0 0
          %3898 = vmatmul.mubr.bf16.gmra.mrb[0].mxu0 %v3784
          %v3899 = vpop.f32.mrb[0].mxu0
          %v3900 = vadd.f32 0.0, %v3899
          %v3901 = vpop.f32.mrb[0].mxu0
          %v3902 = vpop.f32.mrb[0].mxu0
          %v3903 = vadd.f32 0.0, %v3902
          %v3904 = vpop.f32.mrb[0].mxu0
          %3905 = vdwg.mxu0
          %v3906 = vld [vmem:[#allocation2] sm:$0xff]
          %v3907 = vld [vmem:[#allocation2 + $0x8] sm:$0xff]
          %v3908 = vld [vmem:[#allocation2 + $0x10] sm:$0xff]
          %v3909 = vld [vmem:[#allocation2 + $0x18] sm:$0xff]
          %v3910 = vld [vmem:[#allocation2 + $0x20] sm:$0xff]
          %v3911 = vld [vmem:[#allocation2 + $0x28] sm:$0xff]
          %v3912 = vld [vmem:[#allocation2 + $0x30] sm:$0xff]
          %v3913 = vld [vmem:[#allocation2 + $0x38] sm:$0xff]
          %v3914 = vld [vmem:[#allocation2 + $0x40] sm:$0xff]
          %v3915 = vld [vmem:[#allocation2 + $0x48] sm:$0xff]
          %v3916 = vld [vmem:[#allocation2 + $0x50] sm:$0xff]
          %v3917 = vld [vmem:[#allocation2 + $0x58] sm:$0xff]
          %v3918 = vld [vmem:[#allocation2 + $0x60] sm:$0xff]
          %v3919 = vld [vmem:[#allocation2 + $0x68] sm:$0xff]
          %v3920 = vld [vmem:[#allocation2 + $0x70] sm:$0xff]
          %v3921 = vld [vmem:[#allocation2 + $0x78] sm:$0xff]
          %3938 = vrot.lane.b32.xlu0 %v1528, 9
          %v3939 = vpop.permute.xlu0 %3938
          %3940 = vrot.lane.b32.xlu0 %v1531, 9
          %v3941 = vpop.permute.xlu0 %3940
          %3942 = vrot.lane.b32.xlu0 %v1536, 9
          %v3943 = vpop.permute.xlu0 %3942
          %3944 = vrot.lane.b32.xlu0 %v1539, 9
          %v3945 = vpop.permute.xlu0 %3944
          %3946 = vrot.lane.b32.xlu0 %v1544, 9
          %v3947 = vpop.permute.xlu0 %3946
          %3948 = vrot.lane.b32.xlu0 %v1547, 9
          %v3949 = vpop.permute.xlu0 %3948
          %3950 = vrot.lane.b32.xlu0 %v1552, 9
          %v3951 = vpop.permute.xlu0 %3950
          %3952 = vrot.lane.b32.xlu0 %v1555, 9
          %v3953 = vpop.permute.xlu0 %3952
          %3954 = vrot.lane.b32.xlu0 %v1560, 9
          %v3955 = vpop.permute.xlu0 %3954
          %3956 = vrot.lane.b32.xlu0 %v1563, 9
          %v3957 = vpop.permute.xlu0 %3956
          %3958 = vrot.lane.b32.xlu0 %v1568, 9
          %v3959 = vpop.permute.xlu0 %3958
          %3960 = vrot.lane.b32.xlu0 %v1571, 9
          %v3961 = vpop.permute.xlu0 %3960
          %3962 = vrot.lane.b32.xlu0 %v1576, 9
          %v3963 = vpop.permute.xlu0 %3962
          %3964 = vrot.lane.b32.xlu0 %v1579, 9
          %v3965 = vpop.permute.xlu0 %3964
          %3966 = vrot.lane.b32.xlu0 %v1584, 9
          %v3967 = vpop.permute.xlu0 %3966
          %3968 = vrot.lane.b32.xlu0 %v1587, 9
          %v3969 = vpop.permute.xlu0 %3968
          %4002 = vrot.lane.b32.xlu0 %v1914, 18
          %v4003 = vpop.permute.xlu0 %4002
          %4004 = vrot.lane.b32.xlu0 %v1917, 18
          %v4005 = vpop.permute.xlu0 %4004
          %4006 = vrot.lane.b32.xlu0 %v1922, 18
          %v4007 = vpop.permute.xlu0 %4006
          %4008 = vrot.lane.b32.xlu0 %v1925, 18
          %v4009 = vpop.permute.xlu0 %4008
          %4010 = vrot.lane.b32.xlu0 %v1930, 18
          %v4011 = vpop.permute.xlu0 %4010
          %4012 = vrot.lane.b32.xlu0 %v1933, 18
          %v4013 = vpop.permute.xlu0 %4012
          %4014 = vrot.lane.b32.xlu0 %v1938, 18
          %v4015 = vpop.permute.xlu0 %4014
          %4016 = vrot.lane.b32.xlu0 %v1941, 18
          %v4017 = vpop.permute.xlu0 %4016
          %4018 = vrot.lane.b32.xlu0 %v1946, 18
          %v4019 = vpop.permute.xlu0 %4018
          %4020 = vrot.lane.b32.xlu0 %v1949, 18
          %v4021 = vpop.permute.xlu0 %4020
          %4022 = vrot.lane.b32.xlu0 %v1954, 18
          %v4023 = vpop.permute.xlu0 %4022
          %4024 = vrot.lane.b32.xlu0 %v1957, 18
          %v4025 = vpop.permute.xlu0 %4024
          %4026 = vrot.lane.b32.xlu0 %v1962, 18
          %v4027 = vpop.permute.xlu0 %4026
          %4028 = vrot.lane.b32.xlu0 %v1965, 18
          %v4029 = vpop.permute.xlu0 %4028
          %4030 = vrot.lane.b32.xlu0 %v1970, 18
          %v4031 = vpop.permute.xlu0 %4030
          %4032 = vrot.lane.b32.xlu0 %v1973, 18
          %v4033 = vpop.permute.xlu0 %4032
          %4066 = vrot.lane.b32.xlu0 %v2300, 27
          %v4067 = vpop.permute.xlu0 %4066
          %4068 = vrot.lane.b32.xlu0 %v2303, 27
          %v4069 = vpop.permute.xlu0 %4068
          %4070 = vrot.lane.b32.xlu0 %v2308, 27
          %v4071 = vpop.permute.xlu0 %4070
          %4072 = vrot.lane.b32.xlu0 %v2311, 27
          %v4073 = vpop.permute.xlu0 %4072
          %4074 = vrot.lane.b32.xlu0 %v2316, 27
          %v4075 = vpop.permute.xlu0 %4074
          %4076 = vrot.lane.b32.xlu0 %v2319, 27
          %v4077 = vpop.permute.xlu0 %4076
          %4078 = vrot.lane.b32.xlu0 %v2324, 27
          %v4079 = vpop.permute.xlu0 %4078
          %4080 = vrot.lane.b32.xlu0 %v2327, 27
          %v4081 = vpop.permute.xlu0 %4080
          %4082 = vrot.lane.b32.xlu0 %v2332, 27
          %v4083 = vpop.permute.xlu0 %4082
          %4084 = vrot.lane.b32.xlu0 %v2335, 27
          %v4085 = vpop.permute.xlu0 %4084
          %4086 = vrot.lane.b32.xlu0 %v2340, 27
          %v4087 = vpop.permute.xlu0 %4086
          %4088 = vrot.lane.b32.xlu0 %v2343, 27
          %v4089 = vpop.permute.xlu0 %4088
          %4090 = vrot.lane.b32.xlu0 %v2348, 27
          %v4091 = vpop.permute.xlu0 %4090
          %4092 = vrot.lane.b32.xlu0 %v2351, 27
          %v4093 = vpop.permute.xlu0 %4092
          %4094 = vrot.lane.b32.xlu0 %v2356, 27
          %v4095 = vpop.permute.xlu0 %4094
          %4096 = vrot.lane.b32.xlu0 %v2359, 27
          %v4097 = vpop.permute.xlu0 %4096
          %4130 = vrot.lane.b32.xlu0 %v2686, 36
          %v4131 = vpop.permute.xlu0 %4130
          %4132 = vrot.lane.b32.xlu0 %v2689, 36
          %v4133 = vpop.permute.xlu0 %4132
          %4134 = vrot.lane.b32.xlu0 %v2694, 36
          %v4135 = vpop.permute.xlu0 %4134
          %4136 = vrot.lane.b32.xlu0 %v2697, 36
          %v4137 = vpop.permute.xlu0 %4136
          %4138 = vrot.lane.b32.xlu0 %v2702, 36
          %v4139 = vpop.permute.xlu0 %4138
          %4140 = vrot.lane.b32.xlu0 %v2705, 36
          %v4141 = vpop.permute.xlu0 %4140
          %4142 = vrot.lane.b32.xlu0 %v2710, 36
          %v4143 = vpop.permute.xlu0 %4142
          %4144 = vrot.lane.b32.xlu0 %v2713, 36
          %v4145 = vpop.permute.xlu0 %4144
          %4146 = vrot.lane.b32.xlu0 %v2718, 36
          %v4147 = vpop.permute.xlu0 %4146
          %4148 = vrot.lane.b32.xlu0 %v2721, 36
          %v4149 = vpop.permute.xlu0 %4148
          %4150 = vrot.lane.b32.xlu0 %v2726, 36
          %v4151 = vpop.permute.xlu0 %4150
          %4152 = vrot.lane.b32.xlu0 %v2729, 36
          %v4153 = vpop.permute.xlu0 %4152
          %4154 = vrot.lane.b32.xlu0 %v2734, 36
          %v4155 = vpop.permute.xlu0 %4154
          %4156 = vrot.lane.b32.xlu0 %v2737, 36
          %v4157 = vpop.permute.xlu0 %4156
          %4158 = vrot.lane.b32.xlu0 %v2742, 36
          %v4159 = vpop.permute.xlu0 %4158
          %4160 = vrot.lane.b32.xlu0 %v2745, 36
          %v4161 = vpop.permute.xlu0 %4160
          %4194 = vrot.lane.b32.xlu0 %v3072, 45
          %v4195 = vpop.permute.xlu0 %4194
          %4196 = vrot.lane.b32.xlu0 %v3075, 45
          %v4197 = vpop.permute.xlu0 %4196
          %4198 = vrot.lane.b32.xlu0 %v3080, 45
          %v4199 = vpop.permute.xlu0 %4198
          %4200 = vrot.lane.b32.xlu0 %v3083, 45
          %v4201 = vpop.permute.xlu0 %4200
          %4202 = vrot.lane.b32.xlu0 %v3088, 45
          %v4203 = vpop.permute.xlu0 %4202
          %4204 = vrot.lane.b32.xlu0 %v3091, 45
          %v4205 = vpop.permute.xlu0 %4204
          %4206 = vrot.lane.b32.xlu0 %v3096, 45
          %v4207 = vpop.permute.xlu0 %4206
          %4208 = vrot.lane.b32.xlu0 %v3099, 45
          %v4209 = vpop.permute.xlu0 %4208
          %4210 = vrot.lane.b32.xlu0 %v3104, 45
          %v4211 = vpop.permute.xlu0 %4210
          %4212 = vrot.lane.b32.xlu0 %v3107, 45
          %v4213 = vpop.permute.xlu0 %4212
          %4214 = vrot.lane.b32.xlu0 %v3112, 45
          %v4215 = vpop.permute.xlu0 %4214
          %4216 = vrot.lane.b32.xlu0 %v3115, 45
          %v4217 = vpop.permute.xlu0 %4216
          %4218 = vrot.lane.b32.xlu0 %v3120, 45
          %v4219 = vpop.permute.xlu0 %4218
          %4220 = vrot.lane.b32.xlu0 %v3123, 45
          %v4221 = vpop.permute.xlu0 %4220
          %4222 = vrot.lane.b32.xlu0 %v3128, 45
          %v4223 = vpop.permute.xlu0 %4222
          %4224 = vrot.lane.b32.xlu0 %v3131, 45
          %v4225 = vpop.permute.xlu0 %4224
          %4258 = vrot.lane.b32.xlu0 %v3458, 54
          %v4259 = vpop.permute.xlu0 %4258
          %4260 = vrot.lane.b32.xlu0 %v3461, 54
          %v4261 = vpop.permute.xlu0 %4260
          %4262 = vrot.lane.b32.xlu0 %v3466, 54
          %v4263 = vpop.permute.xlu0 %4262
          %4264 = vrot.lane.b32.xlu0 %v3469, 54
          %v4265 = vpop.permute.xlu0 %4264
          %4266 = vrot.lane.b32.xlu0 %v3474, 54
          %v4267 = vpop.permute.xlu0 %4266
          %4268 = vrot.lane.b32.xlu0 %v3477, 54
          %v4269 = vpop.permute.xlu0 %4268
          %4270 = vrot.lane.b32.xlu0 %v3482, 54
          %v4271 = vpop.permute.xlu0 %4270
          %4272 = vrot.lane.b32.xlu0 %v3485, 54
          %v4273 = vpop.permute.xlu0 %4272
          %4274 = vrot.lane.b32.xlu0 %v3490, 54
          %v4275 = vpop.permute.xlu0 %4274
          %4276 = vrot.lane.b32.xlu0 %v3493, 54
          %v4277 = vpop.permute.xlu0 %4276
          %4278 = vrot.lane.b32.xlu0 %v3498, 54
          %v4279 = vpop.permute.xlu0 %4278
          %4280 = vrot.lane.b32.xlu0 %v3501, 54
          %v4281 = vpop.permute.xlu0 %4280
          %4282 = vrot.lane.b32.xlu0 %v3506, 54
          %v4283 = vpop.permute.xlu0 %4282
          %4284 = vrot.lane.b32.xlu0 %v3509, 54
          %v4285 = vpop.permute.xlu0 %4284
          %4286 = vrot.lane.b32.xlu0 %v3514, 54
          %v4287 = vpop.permute.xlu0 %4286
          %4288 = vrot.lane.b32.xlu0 %v3517, 54
          %v4289 = vpop.permute.xlu0 %4288
          %4322 = vrot.lane.b32.xlu0 %v3844, 63
          %v4323 = vpop.permute.xlu0 %4322
          %4324 = vrot.lane.b32.xlu0 %v3847, 63
          %v4325 = vpop.permute.xlu0 %4324
          %4326 = vrot.lane.b32.xlu0 %v3852, 63
          %v4327 = vpop.permute.xlu0 %4326
          %4328 = vrot.lane.b32.xlu0 %v3855, 63
          %v4329 = vpop.permute.xlu0 %4328
          %4330 = vrot.lane.b32.xlu0 %v3860, 63
          %v4331 = vpop.permute.xlu0 %4330
          %4332 = vrot.lane.b32.xlu0 %v3863, 63
          %v4333 = vpop.permute.xlu0 %4332
          %4334 = vrot.lane.b32.xlu0 %v3868, 63
          %v4335 = vpop.permute.xlu0 %4334
          %4336 = vrot.lane.b32.xlu0 %v3871, 63
          %v4337 = vpop.permute.xlu0 %4336
          %4338 = vrot.lane.b32.xlu0 %v3876, 63
          %v4339 = vpop.permute.xlu0 %4338
          %4340 = vrot.lane.b32.xlu0 %v3879, 63
          %v4341 = vpop.permute.xlu0 %4340
          %4342 = vrot.lane.b32.xlu0 %v3884, 63
          %v4343 = vpop.permute.xlu0 %4342
          %4344 = vrot.lane.b32.xlu0 %v3887, 63
          %v4345 = vpop.permute.xlu0 %4344
          %4346 = vrot.lane.b32.xlu0 %v3892, 63
          %v4347 = vpop.permute.xlu0 %4346
          %4348 = vrot.lane.b32.xlu0 %v3895, 63
          %v4349 = vpop.permute.xlu0 %4348
          %4350 = vrot.lane.b32.xlu0 %v3900, 63
          %v4351 = vpop.permute.xlu0 %4350
          %4352 = vrot.lane.b32.xlu0 %v3903, 63
          %v4353 = vpop.permute.xlu0 %4352
          %vm4370 = vcmask 72704
          %v4371 = vsel %vm4370, %v1142, %v3939
          %v4372 = vsel %vm4370, %v1145, %v3941
          %v4373 = vsel %vm4370, %v1150, %v3943
          %v4374 = vsel %vm4370, %v1153, %v3945
          %v4375 = vsel %vm4370, %v1158, %v3947
          %v4376 = vsel %vm4370, %v1161, %v3949
          %v4377 = vsel %vm4370, %v1166, %v3951
          %v4378 = vsel %vm4370, %v1169, %v3953
          %v4379 = vsel %vm4370, %v1174, %v3955
          %v4380 = vsel %vm4370, %v1177, %v3957
          %v4381 = vsel %vm4370, %v1182, %v3959
          %v4382 = vsel %vm4370, %v1185, %v3961
          %v4383 = vsel %vm4370, %v1190, %v3963
          %v4384 = vsel %vm4370, %v1193, %v3965
          %v4385 = vsel %vm4370, %v1198, %v3967
          %v4386 = vsel %vm4370, %v1201, %v3969
          %vm4387 = vcmask 146432
          %v4388 = vsel %vm4387, %v4371, %v4003
          %v4389 = vsel %vm4387, %v4372, %v4005
          %v4390 = vsel %vm4387, %v4373, %v4007
          %v4391 = vsel %vm4387, %v4374, %v4009
          %v4392 = vsel %vm4387, %v4375, %v4011
          %v4393 = vsel %vm4387, %v4376, %v4013
          %v4394 = vsel %vm4387, %v4377, %v4015
          %v4395 = vsel %vm4387, %v4378, %v4017
          %v4396 = vsel %vm4387, %v4379, %v4019
          %v4397 = vsel %vm4387, %v4380, %v4021
          %v4398 = vsel %vm4387, %v4381, %v4023
          %v4399 = vsel %vm4387, %v4382, %v4025
          %v4400 = vsel %vm4387, %v4383, %v4027
          %v4401 = vsel %vm4387, %v4384, %v4029
          %v4402 = vsel %vm4387, %v4385, %v4031
          %v4403 = vsel %vm4387, %v4386, %v4033
          %vm4404 = vcmask 220160
          %v4405 = vsel %vm4404, %v4388, %v4067
          %v4406 = vsel %vm4404, %v4389, %v4069
          %v4407 = vsel %vm4404, %v4390, %v4071
          %v4408 = vsel %vm4404, %v4391, %v4073
          %v4409 = vsel %vm4404, %v4392, %v4075
          %v4410 = vsel %vm4404, %v4393, %v4077
          %v4411 = vsel %vm4404, %v4394, %v4079
          %v4412 = vsel %vm4404, %v4395, %v4081
          %v4413 = vsel %vm4404, %v4396, %v4083
          %v4414 = vsel %vm4404, %v4397, %v4085
          %v4415 = vsel %vm4404, %v4398, %v4087
          %v4416 = vsel %vm4404, %v4399, %v4089
          %v4417 = vsel %vm4404, %v4400, %v4091
          %v4418 = vsel %vm4404, %v4401, %v4093
          %v4419 = vsel %vm4404, %v4402, %v4095
          %v4420 = vsel %vm4404, %v4403, %v4097
          %vm4421 = vcmask 293888
          %v4422 = vsel %vm4421, %v4405, %v4131
          %v4423 = vsel %vm4421, %v4406, %v4133
          %v4424 = vsel %vm4421, %v4407, %v4135
          %v4425 = vsel %vm4421, %v4408, %v4137
          %v4426 = vsel %vm4421, %v4409, %v4139
          %v4427 = vsel %vm4421, %v4410, %v4141
          %v4428 = vsel %vm4421, %v4411, %v4143
          %v4429 = vsel %vm4421, %v4412, %v4145
          %v4430 = vsel %vm4421, %v4413, %v4147
          %v4431 = vsel %vm4421, %v4414, %v4149
          %v4432 = vsel %vm4421, %v4415, %v4151
          %v4433 = vsel %vm4421, %v4416, %v4153
          %v4434 = vsel %vm4421, %v4417, %v4155
          %v4435 = vsel %vm4421, %v4418, %v4157
          %v4436 = vsel %vm4421, %v4419, %v4159
          %v4437 = vsel %vm4421, %v4420, %v4161
          %vm4438 = vcmask 367616
          %v4439 = vsel %vm4438, %v4422, %v4195
          %v4440 = vsel %vm4438, %v4423, %v4197
          %v4441 = vsel %vm4438, %v4424, %v4199
          %v4442 = vsel %vm4438, %v4425, %v4201
          %v4443 = vsel %vm4438, %v4426, %v4203
          %v4444 = vsel %vm4438, %v4427, %v4205
          %v4445 = vsel %vm4438, %v4428, %v4207
          %v4446 = vsel %vm4438, %v4429, %v4209
          %v4447 = vsel %vm4438, %v4430, %v4211
          %v4448 = vsel %vm4438, %v4431, %v4213
          %v4449 = vsel %vm4438, %v4432, %v4215
          %v4450 = vsel %vm4438, %v4433, %v4217
          %v4451 = vsel %vm4438, %v4434, %v4219
          %v4452 = vsel %vm4438, %v4435, %v4221
          %v4453 = vsel %vm4438, %v4436, %v4223
          %v4454 = vsel %vm4438, %v4437, %v4225
          %vm4455 = vcmask 441344
          %v4456 = vsel %vm4455, %v4439, %v4259
          %v4457 = vsel %vm4455, %v4440, %v4261
          %v4458 = vsel %vm4455, %v4441, %v4263
          %v4459 = vsel %vm4455, %v4442, %v4265
          %v4460 = vsel %vm4455, %v4443, %v4267
          %v4461 = vsel %vm4455, %v4444, %v4269
          %v4462 = vsel %vm4455, %v4445, %v4271
          %v4463 = vsel %vm4455, %v4446, %v4273
          %v4464 = vsel %vm4455, %v4447, %v4275
          %v4465 = vsel %vm4455, %v4448, %v4277
          %v4466 = vsel %vm4455, %v4449, %v4279
          %v4467 = vsel %vm4455, %v4450, %v4281
          %v4468 = vsel %vm4455, %v4451, %v4283
          %v4469 = vsel %vm4455, %v4452, %v4285
          %v4470 = vsel %vm4455, %v4453, %v4287
          %v4471 = vsel %vm4455, %v4454, %v4289
          %vm4472 = vcmask 515072
          %v4473 = vsel %vm4472, %v4456, %v4323
          %v4474 = vsel %vm4472, %v4457, %v4325
          %v4475 = vsel %vm4472, %v4458, %v4327
          %v4476 = vsel %vm4472, %v4459, %v4329
          %v4477 = vsel %vm4472, %v4460, %v4331
          %v4478 = vsel %vm4472, %v4461, %v4333
          %v4479 = vsel %vm4472, %v4462, %v4335
          %v4480 = vsel %vm4472, %v4463, %v4337
          %v4481 = vsel %vm4472, %v4464, %v4339
          %v4482 = vsel %vm4472, %v4465, %v4341
          %v4483 = vsel %vm4472, %v4466, %v4343
          %v4484 = vsel %vm4472, %v4467, %v4345
          %v4485 = vsel %vm4472, %v4468, %v4347
          %v4486 = vsel %vm4472, %v4469, %v4349
          %v4487 = vsel %vm4472, %v4470, %v4351
          %v4488 = vsel %vm4472, %v4471, %v4353
          %v4489 = vadd.f32 %v3906, %v4473
          %v4490 = vadd.f32 %v3907, %v4474
          %v4491 = vadd.f32 %v3908, %v4475
          %v4492 = vadd.f32 %v3909, %v4476
          %v4493 = vadd.f32 %v3910, %v4477
          %v4494 = vadd.f32 %v3911, %v4478
          %v4495 = vadd.f32 %v3912, %v4479
          %v4496 = vadd.f32 %v3913, %v4480
          %v4497 = vadd.f32 %v3914, %v4481
          %v4498 = vadd.f32 %v3915, %v4482
          %v4499 = vadd.f32 %v3916, %v4483
          %v4500 = vadd.f32 %v3917, %v4484
          %v4501 = vadd.f32 %v3918, %v4485
          %v4502 = vadd.f32 %v3919, %v4486
          %v4503 = vadd.f32 %v3920, %v4487
          %v4504 = vadd.f32 %v3921, %v4488
          %vm4505 = vcmask 588800
          %4506 = vst.msk [vmem:[#allocation2] sm:$0xff] %vm4505, %v4489
          %4507 = vst.msk [vmem:[#allocation2 + $0x8] sm:$0xff] %vm4505, %v4490
          %4508 = vst.msk [vmem:[#allocation2 + $0x10] sm:$0xff] %vm4505, %v4491
          %4509 = vst.msk [vmem:[#allocation2 + $0x18] sm:$0xff] %vm4505, %v4492
          %4510 = vst.msk [vmem:[#allocation2 + $0x20] sm:$0xff] %vm4505, %v4493
          %4511 = vst.msk [vmem:[#allocation2 + $0x28] sm:$0xff] %vm4505, %v4494
          %4512 = vst.msk [vmem:[#allocation2 + $0x30] sm:$0xff] %vm4505, %v4495
          %4513 = vst.msk [vmem:[#allocation2 + $0x38] sm:$0xff] %vm4505, %v4496
          %4514 = vst.msk [vmem:[#allocation2 + $0x40] sm:$0xff] %vm4505, %v4497
          %4515 = vst.msk [vmem:[#allocation2 + $0x48] sm:$0xff] %vm4505, %v4498
          %4516 = vst.msk [vmem:[#allocation2 + $0x50] sm:$0xff] %vm4505, %v4499
          %4517 = vst.msk [vmem:[#allocation2 + $0x58] sm:$0xff] %vm4505, %v4500
          %4518 = vst.msk [vmem:[#allocation2 + $0x60] sm:$0xff] %vm4505, %v4501
          %4519 = vst.msk [vmem:[#allocation2 + $0x68] sm:$0xff] %vm4505, %v4502
          %4520 = vst.msk [vmem:[#allocation2 + $0x70] sm:$0xff] %vm4505, %v4503
          %4521 = vst.msk [vmem:[#allocation2 + $0x78] sm:$0xff] %vm4505, %v4504
        $region102: #{graph_transformer_layer.5} parent=89 // pred_fallthru
          _
        %p4522 = scmp.eq.s32.totalorder %s32, 1
        // Predicated region
        $region103: #{graph_transformer_layer.5} parent=89 // pred_check
          %p4523 = pneg %p4522
        $region104: #{graph_transformer_layer.5} parent=89 // pred_check_branch
          %4525 = sbr.rel (%p4523) target = $region106
        $region105: #{graph_transformer_layer.5} parent=89 // pred_region
          %v4526 = vld [vmem:[%s517] sm:$0xff]
          %v4527 = vld [vmem:[%s517 + $0x8] sm:$0xff]
          %v4528 = vld [vmem:[%s517 + $0x10] sm:$0xff]
          %v4529 = vld [vmem:[%s517 + $0x18] sm:$0xff]
          %v4530 = vld [vmem:[%s517 + $0x20] sm:$0xff]
          %v4531 = vld [vmem:[%s517 + $0x28] sm:$0xff]
          %v4532 = vld [vmem:[%s517 + $0x30] sm:$0xff]
          %v4533 = vld [vmem:[%s517 + $0x38] sm:$0xff]
          %v4534 = vld [vmem:[%s517 + $0x40] sm:$0xff]
          %v4535 = vld [vmem:[%s517 + $0x48] sm:$0xff]
          %v4536 = vld [vmem:[%s517 + $0x50] sm:$0xff]
          %v4537 = vld [vmem:[%s517 + $0x58] sm:$0xff]
          %v4538 = vld [vmem:[%s517 + $0x60] sm:$0xff]
          %v4539 = vld [vmem:[%s517 + $0x68] sm:$0xff]
          %v4540 = vld [vmem:[%s517 + $0x70] sm:$0xff]
          %v4541 = vld [vmem:[%s517 + $0x78] sm:$0xff]
          %v4542 = vld [vmem:[%s523] sm:$0xf]
          %v4543 = vld [vmem:[%s523 + $0x4] sm:$0xf]
          %v4544 = vld [vmem:[%s523 + $0x8] sm:$0xf]
          %v4545 = vld [vmem:[%s523 + $0xc] sm:$0xf]
          %v4546 = vld [vmem:[%s523 + $0x10] sm:$0xf]
          %v4547 = vld [vmem:[%s523 + $0x14] sm:$0xf]
          %v4548 = vld [vmem:[%s523 + $0x18] sm:$0xf]
          %v4549 = vld [vmem:[%s523 + $0x1c] sm:$0xf]
          %v4550 = vld [vmem:[%s523 + $0x20] sm:$0xf]
          %v4551 = vld [vmem:[%s523 + $0x24] sm:$0xf]
          %v4552 = vld [vmem:[%s523 + $0x28] sm:$0xf]
          %v4553 = vld [vmem:[%s523 + $0x2c] sm:$0xf]
          %v4554 = vld [vmem:[%s523 + $0x30] sm:$0xf]
          %v4555 = vld [vmem:[%s523 + $0x34] sm:$0xf]
          %v4556 = vld [vmem:[%s523 + $0x38] sm:$0xf]
          %v4557 = vld [vmem:[%s523 + $0x3c] sm:$0xf]
          %v4558 = vunpack.c.l.bf16 %v4542
          %v4559 = vunpack.c.l.bf16 %v4543
          %v4560 = vunpack.c.l.bf16 %v4544
          %v4561 = vunpack.c.l.bf16 %v4545
          %v4562 = vunpack.c.l.bf16 %v4546
          %v4563 = vunpack.c.l.bf16 %v4547
          %v4564 = vunpack.c.l.bf16 %v4548
          %v4565 = vunpack.c.l.bf16 %v4549
          %v4566 = vunpack.c.l.bf16 %v4550
          %v4567 = vunpack.c.l.bf16 %v4551
          %v4568 = vunpack.c.l.bf16 %v4552
          %v4569 = vunpack.c.l.bf16 %v4553
          %v4570 = vunpack.c.l.bf16 %v4554
          %v4571 = vunpack.c.l.bf16 %v4555
          %v4572 = vunpack.c.l.bf16 %v4556
          %v4573 = vunpack.c.l.bf16 %v4557
          %v4574 = vld [vmem:[#allocation2] sm:$0xff]
          %v4575 = vld [vmem:[#allocation2 + $0x8] sm:$0xff]
          %v4576 = vld [vmem:[#allocation2 + $0x10] sm:$0xff]
          %v4577 = vld [vmem:[#allocation2 + $0x18] sm:$0xff]
          %v4578 = vld [vmem:[#allocation2 + $0x20] sm:$0xff]
          %v4579 = vld [vmem:[#allocation2 + $0x28] sm:$0xff]
          %v4580 = vld [vmem:[#allocation2 + $0x30] sm:$0xff]
          %v4581 = vld [vmem:[#allocation2 + $0x38] sm:$0xff]
          %v4582 = vld [vmem:[#allocation2 + $0x40] sm:$0xff]
          %v4583 = vld [vmem:[#allocation2 + $0x48] sm:$0xff]
          %v4584 = vld [vmem:[#allocation2 + $0x50] sm:$0xff]
          %v4585 = vld [vmem:[#allocation2 + $0x58] sm:$0xff]
          %v4586 = vld [vmem:[#allocation2 + $0x60] sm:$0xff]
          %v4587 = vld [vmem:[#allocation2 + $0x68] sm:$0xff]
          %v4588 = vld [vmem:[#allocation2 + $0x70] sm:$0xff]
          %v4589 = vld [vmem:[#allocation2 + $0x78] sm:$0xff]
          %v4590 = vld [vmem:[%s8] sm:$0xff]
          %v4591 = vld [vmem:[%s8 + $0x8] sm:$0xff]
          %v4592 = vld [vmem:[%s8 + $0x10] sm:$0xff]
          %v4593 = vld [vmem:[%s8 + $0x18] sm:$0xff]
          %v4594 = vld [vmem:[%s8 + $0x20] sm:$0xff]
          %v4595 = vld [vmem:[%s8 + $0x28] sm:$0xff]
          %v4596 = vld [vmem:[%s8 + $0x30] sm:$0xff]
          %v4597 = vld [vmem:[%s8 + $0x38] sm:$0xff]
          %4599 = vset.pattern.permute.xlu0 0
          %4600 = vperm.xlu0 %4599, %v4526
          %v4601 = vpop.permute.xlu0 %4600
          %4604 = vset.pattern.permute.xlu0 0
          %4605 = vperm.xlu0 %4604, %v4527
          %v4606 = vpop.permute.xlu0 %4605
          %4609 = vset.pattern.permute.xlu0 0
          %4610 = vperm.xlu0 %4609, %v4528
          %v4611 = vpop.permute.xlu0 %4610
          %4614 = vset.pattern.permute.xlu0 0
          %4615 = vperm.xlu0 %4614, %v4529
          %v4616 = vpop.permute.xlu0 %4615
          %4619 = vset.pattern.permute.xlu0 0
          %4620 = vperm.xlu0 %4619, %v4530
          %v4621 = vpop.permute.xlu0 %4620
          %4624 = vset.pattern.permute.xlu0 0
          %4625 = vperm.xlu0 %4624, %v4531
          %v4626 = vpop.permute.xlu0 %4625
          %4629 = vset.pattern.permute.xlu0 0
          %4630 = vperm.xlu0 %4629, %v4532
          %v4631 = vpop.permute.xlu0 %4630
          %4634 = vset.pattern.permute.xlu0 0
          %4635 = vperm.xlu0 %4634, %v4533
          %v4636 = vpop.permute.xlu0 %4635
          %4639 = vset.pattern.permute.xlu0 0
          %4640 = vperm.xlu0 %4639, %v4534
          %v4641 = vpop.permute.xlu0 %4640
          %4644 = vset.pattern.permute.xlu0 0
          %4645 = vperm.xlu0 %4644, %v4535
          %v4646 = vpop.permute.xlu0 %4645
          %4649 = vset.pattern.permute.xlu0 0
          %4650 = vperm.xlu0 %4649, %v4536
          %v4651 = vpop.permute.xlu0 %4650
          %4654 = vset.pattern.permute.xlu0 0
          %4655 = vperm.xlu0 %4654, %v4537
          %v4656 = vpop.permute.xlu0 %4655
          %4659 = vset.pattern.permute.xlu0 0
          %4660 = vperm.xlu0 %4659, %v4538
          %v4661 = vpop.permute.xlu0 %4660
          %4664 = vset.pattern.permute.xlu0 0
          %4665 = vperm.xlu0 %4664, %v4539
          %v4666 = vpop.permute.xlu0 %4665
          %4669 = vset.pattern.permute.xlu0 0
          %4670 = vperm.xlu0 %4669, %v4540
          %v4671 = vpop.permute.xlu0 %4670
          %4674 = vset.pattern.permute.xlu0 0
          %4675 = vperm.xlu0 %4674, %v4541
          %v4676 = vpop.permute.xlu0 %4675
          %v4678 = vmul.f32 %v4601, %v4558
          %v4679 = vmul.f32 %v4606, %v4559
          %v4680 = vmul.f32 %v4611, %v4560
          %v4681 = vmul.f32 %v4616, %v4561
          %v4682 = vmul.f32 %v4621, %v4562
          %v4683 = vmul.f32 %v4626, %v4563
          %v4684 = vmul.f32 %v4631, %v4564
          %v4685 = vmul.f32 %v4636, %v4565
          %v4686 = vmul.f32 %v4641, %v4566
          %v4687 = vmul.f32 %v4646, %v4567
          %v4688 = vmul.f32 %v4651, %v4568
          %v4689 = vmul.f32 %v4656, %v4569
          %v4690 = vmul.f32 %v4661, %v4570
          %v4691 = vmul.f32 %v4666, %v4571
          %v4692 = vmul.f32 %v4671, %v4572
          %v4693 = vmul.f32 %v4676, %v4573
          %v4694 = vadd.f32 %v4574, %v4678
          %v4695 = vadd.f32 %v4575, %v4679
          %v4696 = vadd.f32 %v4576, %v4680
          %v4697 = vadd.f32 %v4577, %v4681
          %v4698 = vadd.f32 %v4578, %v4682
          %v4699 = vadd.f32 %v4579, %v4683
          %v4700 = vadd.f32 %v4580, %v4684
          %v4701 = vadd.f32 %v4581, %v4685
          %v4702 = vadd.f32 %v4582, %v4686
          %v4703 = vadd.f32 %v4583, %v4687
          %v4704 = vadd.f32 %v4584, %v4688
          %v4705 = vadd.f32 %v4585, %v4689
          %v4706 = vadd.f32 %v4586, %v4690
          %v4707 = vadd.f32 %v4587, %v4691
          %v4708 = vadd.f32 %v4588, %v4692
          %v4709 = vadd.f32 %v4589, %v4693
          %4710 = vrot.lane.b32.xlu0 %v4526, 8
          %v4711 = vpop.permute.xlu0 %4710
          %4712 = vrot.lane.b32.xlu0 %v4527, 8
          %v4713 = vpop.permute.xlu0 %4712
          %4714 = vrot.lane.b32.xlu0 %v4528, 8
          %v4715 = vpop.permute.xlu0 %4714
          %4716 = vrot.lane.b32.xlu0 %v4529, 8
          %v4717 = vpop.permute.xlu0 %4716
          %4718 = vrot.lane.b32.xlu0 %v4530, 8
          %v4719 = vpop.permute.xlu0 %4718
          %4720 = vrot.lane.b32.xlu0 %v4531, 8
          %v4721 = vpop.permute.xlu0 %4720
          %4722 = vrot.lane.b32.xlu0 %v4532, 8
          %v4723 = vpop.permute.xlu0 %4722
          %4724 = vrot.lane.b32.xlu0 %v4533, 8
          %v4725 = vpop.permute.xlu0 %4724
          %4726 = vrot.lane.b32.xlu0 %v4534, 8
          %v4727 = vpop.permute.xlu0 %4726
          %4728 = vrot.lane.b32.xlu0 %v4535, 8
          %v4729 = vpop.permute.xlu0 %4728
          %4730 = vrot.lane.b32.xlu0 %v4536, 8
          %v4731 = vpop.permute.xlu0 %4730
          %4732 = vrot.lane.b32.xlu0 %v4537, 8
          %v4733 = vpop.permute.xlu0 %4732
          %4734 = vrot.lane.b32.xlu0 %v4538, 8
          %v4735 = vpop.permute.xlu0 %4734
          %4736 = vrot.lane.b32.xlu0 %v4539, 8
          %v4737 = vpop.permute.xlu0 %4736
          %4738 = vrot.lane.b32.xlu0 %v4540, 8
          %v4739 = vpop.permute.xlu0 %4738
          %4740 = vrot.lane.b32.xlu0 %v4541, 8
          %v4741 = vpop.permute.xlu0 %4740
          %v4758 = vadd.f32 %v4574, %v4711
          %v4759 = vadd.f32 %v4575, %v4713
          %v4760 = vadd.f32 %v4576, %v4715
          %v4761 = vadd.f32 %v4577, %v4717
          %v4762 = vadd.f32 %v4578, %v4719
          %v4763 = vadd.f32 %v4579, %v4721
          %v4764 = vadd.f32 %v4580, %v4723
          %v4765 = vadd.f32 %v4581, %v4725
          %v4766 = vadd.f32 %v4582, %v4727
          %v4767 = vadd.f32 %v4583, %v4729
          %v4768 = vadd.f32 %v4584, %v4731
          %v4769 = vadd.f32 %v4585, %v4733
          %v4770 = vadd.f32 %v4586, %v4735
          %v4771 = vadd.f32 %v4587, %v4737
          %v4772 = vadd.f32 %v4588, %v4739
          %v4773 = vadd.f32 %v4589, %v4741
          %v4774 = vadd.f32 %v4758, 1e-06
          %v4775 = vadd.f32 %v4759, 1e-06
          %v4776 = vadd.f32 %v4760, 1e-06
          %v4777 = vadd.f32 %v4761, 1e-06
          %v4778 = vadd.f32 %v4762, 1e-06
          %v4779 = vadd.f32 %v4763, 1e-06
          %v4780 = vadd.f32 %v4764, 1e-06
          %v4781 = vadd.f32 %v4765, 1e-06
          %v4782 = vadd.f32 %v4766, 1e-06
          %v4783 = vadd.f32 %v4767, 1e-06
          %v4784 = vadd.f32 %v4768, 1e-06
          %v4785 = vadd.f32 %v4769, 1e-06
          %v4786 = vadd.f32 %v4770, 1e-06
          %v4787 = vadd.f32 %v4771, 1e-06
          %v4788 = vadd.f32 %v4772, 1e-06
          %v4789 = vadd.f32 %v4773, 1e-06
          %v4790 = vrcp.pop %v4774
          %v4791 = vrcp.pop %v4775
          %v4792 = vrcp.pop %v4776
          %v4793 = vrcp.pop %v4777
          %v4794 = vrcp.pop %v4778
          %v4795 = vrcp.pop %v4779
          %v4796 = vrcp.pop %v4780
          %v4797 = vrcp.pop %v4781
          %v4798 = vrcp.pop %v4782
          %v4799 = vrcp.pop %v4783
          %v4800 = vrcp.pop %v4784
          %v4801 = vrcp.pop %v4785
          %v4802 = vrcp.pop %v4786
          %v4803 = vrcp.pop %v4787
          %v4804 = vrcp.pop %v4788
          %v4805 = vrcp.pop %v4789
          %4807 = vset.pattern.permute.xlu0 8
          %4808 = vperm.xlu0 %4807, %v4790
          %v4809 = vpop.permute.xlu0 %4808
          %4812 = vset.pattern.permute.xlu0 8
          %4813 = vperm.xlu0 %4812, %v4791
          %v4814 = vpop.permute.xlu0 %4813
          %4817 = vset.pattern.permute.xlu0 8
          %4818 = vperm.xlu0 %4817, %v4792
          %v4819 = vpop.permute.xlu0 %4818
          %4822 = vset.pattern.permute.xlu0 8
          %4823 = vperm.xlu0 %4822, %v4793
          %v4824 = vpop.permute.xlu0 %4823
          %4827 = vset.pattern.permute.xlu0 8
          %4828 = vperm.xlu0 %4827, %v4794
          %v4829 = vpop.permute.xlu0 %4828
          %4832 = vset.pattern.permute.xlu0 8
          %4833 = vperm.xlu0 %4832, %v4795
          %v4834 = vpop.permute.xlu0 %4833
          %4837 = vset.pattern.permute.xlu0 8
          %4838 = vperm.xlu0 %4837, %v4796
          %v4839 = vpop.permute.xlu0 %4838
          %4842 = vset.pattern.permute.xlu0 8
          %4843 = vperm.xlu0 %4842, %v4797
          %v4844 = vpop.permute.xlu0 %4843
          %4847 = vset.pattern.permute.xlu0 8
          %4848 = vperm.xlu0 %4847, %v4798
          %v4849 = vpop.permute.xlu0 %4848
          %4852 = vset.pattern.permute.xlu0 8
          %4853 = vperm.xlu0 %4852, %v4799
          %v4854 = vpop.permute.xlu0 %4853
          %4857 = vset.pattern.permute.xlu0 8
          %4858 = vperm.xlu0 %4857, %v4800
          %v4859 = vpop.permute.xlu0 %4858
          %4862 = vset.pattern.permute.xlu0 8
          %4863 = vperm.xlu0 %4862, %v4801
          %v4864 = vpop.permute.xlu0 %4863
          %4867 = vset.pattern.permute.xlu0 8
          %4868 = vperm.xlu0 %4867, %v4802
          %v4869 = vpop.permute.xlu0 %4868
          %4872 = vset.pattern.permute.xlu0 8
          %4873 = vperm.xlu0 %4872, %v4803
          %v4874 = vpop.permute.xlu0 %4873
          %4877 = vset.pattern.permute.xlu0 8
          %4878 = vperm.xlu0 %4877, %v4804
          %v4879 = vpop.permute.xlu0 %4878
          %4882 = vset.pattern.permute.xlu0 8
          %4883 = vperm.xlu0 %4882, %v4805
          %v4884 = vpop.permute.xlu0 %4883
          %v4886 = vmul.f32 %v4694, %v4809
          %v4887 = vmul.f32 %v4695, %v4814
          %v4888 = vmul.f32 %v4696, %v4819
          %v4889 = vmul.f32 %v4697, %v4824
          %v4890 = vmul.f32 %v4698, %v4829
          %v4891 = vmul.f32 %v4699, %v4834
          %v4892 = vmul.f32 %v4700, %v4839
          %v4893 = vmul.f32 %v4701, %v4844
          %v4894 = vmul.f32 %v4702, %v4849
          %v4895 = vmul.f32 %v4703, %v4854
          %v4896 = vmul.f32 %v4704, %v4859
          %v4897 = vmul.f32 %v4705, %v4864
          %v4898 = vmul.f32 %v4706, %v4869
          %v4899 = vmul.f32 %v4707, %v4874
          %v4900 = vmul.f32 %v4708, %v4879
          %v4901 = vmul.f32 %v4709, %v4884
          %4918 = vrot.lane.b32.xlu0 %v4678, 1
          %v4919 = vpop.permute.xlu0 %4918
          %4920 = vrot.lane.b32.xlu0 %v4679, 1
          %v4921 = vpop.permute.xlu0 %4920
          %4922 = vrot.lane.b32.xlu0 %v4680, 1
          %v4923 = vpop.permute.xlu0 %4922
          %4924 = vrot.lane.b32.xlu0 %v4681, 1
          %v4925 = vpop.permute.xlu0 %4924
          %4926 = vrot.lane.b32.xlu0 %v4682, 1
          %v4927 = vpop.permute.xlu0 %4926
          %4928 = vrot.lane.b32.xlu0 %v4683, 1
          %v4929 = vpop.permute.xlu0 %4928
          %4930 = vrot.lane.b32.xlu0 %v4684, 1
          %v4931 = vpop.permute.xlu0 %4930
          %4932 = vrot.lane.b32.xlu0 %v4685, 1
          %v4933 = vpop.permute.xlu0 %4932
          %4934 = vrot.lane.b32.xlu0 %v4686, 1
          %v4935 = vpop.permute.xlu0 %4934
          %4936 = vrot.lane.b32.xlu0 %v4687, 1
          %v4937 = vpop.permute.xlu0 %4936
          %4938 = vrot.lane.b32.xlu0 %v4688, 1
          %v4939 = vpop.permute.xlu0 %4938
          %4940 = vrot.lane.b32.xlu0 %v4689, 1
          %v4941 = vpop.permute.xlu0 %4940
          %4942 = vrot.lane.b32.xlu0 %v4690, 1
          %v4943 = vpop.permute.xlu0 %4942
          %4944 = vrot.lane.b32.xlu0 %v4691, 1
          %v4945 = vpop.permute.xlu0 %4944
          %4946 = vrot.lane.b32.xlu0 %v4692, 1
          %v4947 = vpop.permute.xlu0 %4946
          %4948 = vrot.lane.b32.xlu0 %v4693, 1
          %v4949 = vpop.permute.xlu0 %4948
          %v4966 = vadd.f32 %v4574, %v4919
          %v4967 = vadd.f32 %v4575, %v4921
          %v4968 = vadd.f32 %v4576, %v4923
          %v4969 = vadd.f32 %v4577, %v4925
          %v4970 = vadd.f32 %v4578, %v4927
          %v4971 = vadd.f32 %v4579, %v4929
          %v4972 = vadd.f32 %v4580, %v4931
          %v4973 = vadd.f32 %v4581, %v4933
          %v4974 = vadd.f32 %v4582, %v4935
          %v4975 = vadd.f32 %v4583, %v4937
          %v4976 = vadd.f32 %v4584, %v4939
          %v4977 = vadd.f32 %v4585, %v4941
          %v4978 = vadd.f32 %v4586, %v4943
          %v4979 = vadd.f32 %v4587, %v4945
          %v4980 = vadd.f32 %v4588, %v4947
          %v4981 = vadd.f32 %v4589, %v4949
          %4982 = vrot.lane.b32.xlu0 %v4526, 17
          %v4983 = vpop.permute.xlu0 %4982
          %4984 = vrot.lane.b32.xlu0 %v4527, 17
          %v4985 = vpop.permute.xlu0 %4984
          %4986 = vrot.lane.b32.xlu0 %v4528, 17
          %v4987 = vpop.permute.xlu0 %4986
          %4988 = vrot.lane.b32.xlu0 %v4529, 17
          %v4989 = vpop.permute.xlu0 %4988
          %4990 = vrot.lane.b32.xlu0 %v4530, 17
          %v4991 = vpop.permute.xlu0 %4990
          %4992 = vrot.lane.b32.xlu0 %v4531, 17
          %v4993 = vpop.permute.xlu0 %4992
          %4994 = vrot.lane.b32.xlu0 %v4532, 17
          %v4995 = vpop.permute.xlu0 %4994
          %4996 = vrot.lane.b32.xlu0 %v4533, 17
          %v4997 = vpop.permute.xlu0 %4996
          %4998 = vrot.lane.b32.xlu0 %v4534, 17
          %v4999 = vpop.permute.xlu0 %4998
          %5000 = vrot.lane.b32.xlu0 %v4535, 17
          %v5001 = vpop.permute.xlu0 %5000
          %5002 = vrot.lane.b32.xlu0 %v4536, 17
          %v5003 = vpop.permute.xlu0 %5002
          %5004 = vrot.lane.b32.xlu0 %v4537, 17
          %v5005 = vpop.permute.xlu0 %5004
          %5006 = vrot.lane.b32.xlu0 %v4538, 17
          %v5007 = vpop.permute.xlu0 %5006
          %5008 = vrot.lane.b32.xlu0 %v4539, 17
          %v5009 = vpop.permute.xlu0 %5008
          %5010 = vrot.lane.b32.xlu0 %v4540, 17
          %v5011 = vpop.permute.xlu0 %5010
          %5012 = vrot.lane.b32.xlu0 %v4541, 17
          %v5013 = vpop.permute.xlu0 %5012
          %v5030 = vadd.f32 %v4574, %v4983
          %v5031 = vadd.f32 %v4575, %v4985
          %v5032 = vadd.f32 %v4576, %v4987
          %v5033 = vadd.f32 %v4577, %v4989
          %v5034 = vadd.f32 %v4578, %v4991
          %v5035 = vadd.f32 %v4579, %v4993
          %v5036 = vadd.f32 %v4580, %v4995
          %v5037 = vadd.f32 %v4581, %v4997
          %v5038 = vadd.f32 %v4582, %v4999
          %v5039 = vadd.f32 %v4583, %v5001
          %v5040 = vadd.f32 %v4584, %v5003
          %v5041 = vadd.f32 %v4585, %v5005
          %v5042 = vadd.f32 %v4586, %v5007
          %v5043 = vadd.f32 %v4587, %v5009
          %v5044 = vadd.f32 %v4588, %v5011
          %v5045 = vadd.f32 %v4589, %v5013
          %v5046 = vadd.f32 %v5030, 1e-06
          %v5047 = vadd.f32 %v5031, 1e-06
          %v5048 = vadd.f32 %v5032, 1e-06
          %v5049 = vadd.f32 %v5033, 1e-06
          %v5050 = vadd.f32 %v5034, 1e-06
          %v5051 = vadd.f32 %v5035, 1e-06
          %v5052 = vadd.f32 %v5036, 1e-06
          %v5053 = vadd.f32 %v5037, 1e-06
          %v5054 = vadd.f32 %v5038, 1e-06
          %v5055 = vadd.f32 %v5039, 1e-06
          %v5056 = vadd.f32 %v5040, 1e-06
          %v5057 = vadd.f32 %v5041, 1e-06
          %v5058 = vadd.f32 %v5042, 1e-06
          %v5059 = vadd.f32 %v5043, 1e-06
          %v5060 = vadd.f32 %v5044, 1e-06
          %v5061 = vadd.f32 %v5045, 1e-06
          %v5062 = vrcp.pop %v5046
          %v5063 = vrcp.pop %v5047
          %v5064 = vrcp.pop %v5048
          %v5065 = vrcp.pop %v5049
          %v5066 = vrcp.pop %v5050
          %v5067 = vrcp.pop %v5051
          %v5068 = vrcp.pop %v5052
          %v5069 = vrcp.pop %v5053
          %v5070 = vrcp.pop %v5054
          %v5071 = vrcp.pop %v5055
          %v5072 = vrcp.pop %v5056
          %v5073 = vrcp.pop %v5057
          %v5074 = vrcp.pop %v5058
          %v5075 = vrcp.pop %v5059
          %v5076 = vrcp.pop %v5060
          %v5077 = vrcp.pop %v5061
          %5079 = vset.pattern.permute.xlu0 17
          %5080 = vperm.xlu0 %5079, %v5062
          %v5081 = vpop.permute.xlu0 %5080
          %5084 = vset.pattern.permute.xlu0 17
          %5085 = vperm.xlu0 %5084, %v5063
          %v5086 = vpop.permute.xlu0 %5085
          %5089 = vset.pattern.permute.xlu0 17
          %5090 = vperm.xlu0 %5089, %v5064
          %v5091 = vpop.permute.xlu0 %5090
          %5094 = vset.pattern.permute.xlu0 17
          %5095 = vperm.xlu0 %5094, %v5065
          %v5096 = vpop.permute.xlu0 %5095
          %5099 = vset.pattern.permute.xlu0 17
          %5100 = vperm.xlu0 %5099, %v5066
          %v5101 = vpop.permute.xlu0 %5100
          %5104 = vset.pattern.permute.xlu0 17
          %5105 = vperm.xlu0 %5104, %v5067
          %v5106 = vpop.permute.xlu0 %5105
          %5109 = vset.pattern.permute.xlu0 17
          %5110 = vperm.xlu0 %5109, %v5068
          %v5111 = vpop.permute.xlu0 %5110
          %5114 = vset.pattern.permute.xlu0 17
          %5115 = vperm.xlu0 %5114, %v5069
          %v5116 = vpop.permute.xlu0 %5115
          %5119 = vset.pattern.permute.xlu0 17
          %5120 = vperm.xlu0 %5119, %v5070
          %v5121 = vpop.permute.xlu0 %5120
          %5124 = vset.pattern.permute.xlu0 17
          %5125 = vperm.xlu0 %5124, %v5071
          %v5126 = vpop.permute.xlu0 %5125
          %5129 = vset.pattern.permute.xlu0 17
          %5130 = vperm.xlu0 %5129, %v5072
          %v5131 = vpop.permute.xlu0 %5130
          %5134 = vset.pattern.permute.xlu0 17
          %5135 = vperm.xlu0 %5134, %v5073
          %v5136 = vpop.permute.xlu0 %5135
          %5139 = vset.pattern.permute.xlu0 17
          %5140 = vperm.xlu0 %5139, %v5074
          %v5141 = vpop.permute.xlu0 %5140
          %5144 = vset.pattern.permute.xlu0 17
          %5145 = vperm.xlu0 %5144, %v5075
          %v5146 = vpop.permute.xlu0 %5145
          %5149 = vset.pattern.permute.xlu0 17
          %5150 = vperm.xlu0 %5149, %v5076
          %v5151 = vpop.permute.xlu0 %5150
          %5154 = vset.pattern.permute.xlu0 17
          %5155 = vperm.xlu0 %5154, %v5077
          %v5156 = vpop.permute.xlu0 %5155
          %v5158 = vmul.f32 %v4966, %v5081
          %v5159 = vmul.f32 %v4967, %v5086
          %v5160 = vmul.f32 %v4968, %v5091
          %v5161 = vmul.f32 %v4969, %v5096
          %v5162 = vmul.f32 %v4970, %v5101
          %v5163 = vmul.f32 %v4971, %v5106
          %v5164 = vmul.f32 %v4972, %v5111
          %v5165 = vmul.f32 %v4973, %v5116
          %v5166 = vmul.f32 %v4974, %v5121
          %v5167 = vmul.f32 %v4975, %v5126
          %v5168 = vmul.f32 %v4976, %v5131
          %v5169 = vmul.f32 %v4977, %v5136
          %v5170 = vmul.f32 %v4978, %v5141
          %v5171 = vmul.f32 %v4979, %v5146
          %v5172 = vmul.f32 %v4980, %v5151
          %v5173 = vmul.f32 %v4981, %v5156
          %5190 = vrot.lane.b32.xlu0 %v5158, 119
          %v5191 = vpop.permute.xlu0 %5190
          %5192 = vrot.lane.b32.xlu0 %v5159, 119
          %v5193 = vpop.permute.xlu0 %5192
          %5194 = vrot.lane.b32.xlu0 %v5160, 119
          %v5195 = vpop.permute.xlu0 %5194
          %5196 = vrot.lane.b32.xlu0 %v5161, 119
          %v5197 = vpop.permute.xlu0 %5196
          %5198 = vrot.lane.b32.xlu0 %v5162, 119
          %v5199 = vpop.permute.xlu0 %5198
          %5200 = vrot.lane.b32.xlu0 %v5163, 119
          %v5201 = vpop.permute.xlu0 %5200
          %5202 = vrot.lane.b32.xlu0 %v5164, 119
          %v5203 = vpop.permute.xlu0 %5202
          %5204 = vrot.lane.b32.xlu0 %v5165, 119
          %v5205 = vpop.permute.xlu0 %5204
          %5206 = vrot.lane.b32.xlu0 %v5166, 119
          %v5207 = vpop.permute.xlu0 %5206
          %5208 = vrot.lane.b32.xlu0 %v5167, 119
          %v5209 = vpop.permute.xlu0 %5208
          %5210 = vrot.lane.b32.xlu0 %v5168, 119
          %v5211 = vpop.permute.xlu0 %5210
          %5212 = vrot.lane.b32.xlu0 %v5169, 119
          %v5213 = vpop.permute.xlu0 %5212
          %5214 = vrot.lane.b32.xlu0 %v5170, 119
          %v5215 = vpop.permute.xlu0 %5214
          %5216 = vrot.lane.b32.xlu0 %v5171, 119
          %v5217 = vpop.permute.xlu0 %5216
          %5218 = vrot.lane.b32.xlu0 %v5172, 119
          %v5219 = vpop.permute.xlu0 %5218
          %5220 = vrot.lane.b32.xlu0 %v5173, 119
          %v5221 = vpop.permute.xlu0 %5220
          %vm5222 = vcmask 64512
          %v5223 = vsel %vm5222, %v5191, 0
          %v5225 = vsel %vm5222, %v5193, 0
          %v5227 = vsel %vm5222, %v5195, 0
          %v5229 = vsel %vm5222, %v5197, 0
          %v5231 = vsel %vm5222, %v5199, 0
          %v5233 = vsel %vm5222, %v5201, 0
          %v5235 = vsel %vm5222, %v5203, 0
          %v5237 = vsel %vm5222, %v5205, 0
          %v5239 = vsel %vm5222, %v5207, 0
          %v5241 = vsel %vm5222, %v5209, 0
          %v5243 = vsel %vm5222, %v5211, 0
          %v5245 = vsel %vm5222, %v5213, 0
          %v5247 = vsel %vm5222, %v5215, 0
          %v5249 = vsel %vm5222, %v5217, 0
          %v5251 = vsel %vm5222, %v5219, 0
          %v5253 = vsel %vm5222, %v5221, 0
          %5255 = vmatprep.subr.mxu0 0.0
          %5256 = vmatpush1.msra.mxu0 %v4591
          %5257 = vmatprep.subr.mxu0 0.0
          %5258 = vmatpush1.msra.mxu0 0.0
          %5259 = vmatprep.subr.mxu0 0.0
          %5260 = vmatpush1.msra.mxu0 0.0
          %5261 = vmatprep.subr.mxu0 0.0
          %5262 = vmatpush1.msra.mxu0 0.0
          %5263 = vmatprep.subr.mxu0 0.0
          %5264 = vmatpush1.msra.mxu0 0.0
          %5265 = vmatprep.subr.mxu0 0.0
          %5266 = vmatpush1.msra.mxu0 0.0
          %5267 = vmatprep.subr.mxu0 0.0
          %5268 = vmatpush1.msra.mxu0 0.0
          %5269 = vmatprep.subr.mxu0 0.0
          %5270 = vmatpush1.msra.mxu0 0.0
          %5271 = vmatprep.subr.mxu0 0.0
          %5272 = vmatpush1.msra.mxu0 0.0
          %5273 = vmatprep.subr.mxu0 0.0
          %5274 = vmatpush1.msra.mxu0 0.0
          %5275 = vmatprep.subr.mxu0 0.0
          %5276 = vmatpush1.msra.mxu0 0.0
          %5277 = vmatprep.subr.mxu0 0.0
          %5278 = vmatpush1.msra.mxu0 0.0
          %5279 = vmatprep.subr.mxu0 0.0
          %5280 = vmatpush1.msra.mxu0 0.0
          %5281 = vmatprep.subr.mxu0 0.0
          %5282 = vmatpush1.msra.mxu0 0.0
          %5283 = vmatprep.subr.mxu0 0.0
          %5284 = vmatpush1.msra.mxu0 0.0
          %5285 = vmatprep.subr.mxu0 0.0
          %5286 = vmatpush1.msra.mxu0 0.0
          %5287 = vmatprep.subr.mxu0 0.0
          %5288 = vmatpush1.msra.mxu0 0.0
          %5289 = vmatprep.subr.mxu0 0.0
          %5290 = vmatpush1.msra.mxu0 0.0
          %5291 = vmatprep.subr.mxu0 0.0
          %5292 = vmatpush1.msra.mxu0 0.0
          %5293 = vmatprep.subr.mxu0 0.0
          %5294 = vmatpush1.msra.mxu0 0.0
          %5295 = vmatprep.subr.mxu0 0.0
          %5296 = vmatpush1.msra.mxu0 0.0
          %5297 = vmatprep.subr.mxu0 0.0
          %5298 = vmatpush1.msra.mxu0 0.0
          %5299 = vmatprep.subr.mxu0 0.0
          %5300 = vmatpush1.msra.mxu0 0.0
          %5301 = vmatprep.subr.mxu0 0.0
          %5302 = vmatpush1.msra.mxu0 0.0
          %5303 = vmatprep.subr.mxu0 0.0
          %5304 = vmatpush1.msra.mxu0 0.0
          %5305 = vmatprep.subr.mxu0 0.0
          %5306 = vmatpush1.msra.mxu0 0.0
          %5307 = vmatprep.subr.mxu0 0.0
          %5308 = vmatpush1.msra.mxu0 0.0
          %5309 = vmatprep.subr.mxu0 0.0
          %5310 = vmatpush1.msra.mxu0 0.0
          %5311 = vmatprep.subr.mxu0 0.0
          %5312 = vmatpush1.msra.mxu0 0.0
          %5313 = vmatprep.subr.mxu0 0.0
          %5314 = vmatpush1.msra.mxu0 0.0
          %5315 = vmatprep.subr.mxu0 0.0
          %5316 = vmatpush1.msra.mxu0 0.0
          %5317 = vmatprep.subr.mxu0 0.0
          %5318 = vmatpush1.msra.mxu0 0.0
          %5319 = vmatprep.mubr.f32.mxu0 0.0
          %5320 = vmatmul.mubr.f32.gmra.mrb[0].mxu0 %v5223
          %v5321 = vpop.f32.mrb[0].mxu0
          %v5322 = vadd.f32 0.0, %v5321
          %v5323 = vpop.f32.mrb[0].mxu0
          %5324 = vmatprep.mubr.f32.mxu0 0.0
          %5325 = vmatmul.mubr.f32.gmra.mrb[0].mxu0 %v5225
          %v5326 = vpop.f32.mrb[0].mxu0
          %v5327 = vadd.f32 0.0, %v5326
          %v5328 = vpop.f32.mrb[0].mxu0
          %5329 = vmatprep.mubr.f32.mxu0 0.0
          %5330 = vmatmul.mubr.f32.gmra.mrb[0].mxu0 %v5227
          %v5331 = vpop.f32.mrb[0].mxu0
          %v5332 = vadd.f32 0.0, %v5331
          %v5333 = vpop.f32.mrb[0].mxu0
          %5334 = vmatprep.mubr.f32.mxu0 0.0
          %5335 = vmatmul.mubr.f32.gmra.mrb[0].mxu0 %v5229
          %v5336 = vpop.f32.mrb[0].mxu0
          %v5337 = vadd.f32 0.0, %v5336
          %v5338 = vpop.f32.mrb[0].mxu0
          %5339 = vmatprep.mubr.f32.mxu0 0.0
          %5340 = vmatmul.mubr.f32.gmra.mrb[0].mxu0 %v5231
          %v5341 = vpop.f32.mrb[0].mxu0
          %v5342 = vadd.f32 0.0, %v5341
          %v5343 = vpop.f32.mrb[0].mxu0
          %5344 = vmatprep.mubr.f32.mxu0 0.0
          %5345 = vmatmul.mubr.f32.gmra.mrb[0].mxu0 %v5233
          %v5346 = vpop.f32.mrb[0].mxu0
          %v5347 = vadd.f32 0.0, %v5346
          %v5348 = vpop.f32.mrb[0].mxu0
          %5349 = vmatprep.mubr.f32.mxu0 0.0
          %5350 = vmatmul.mubr.f32.gmra.mrb[0].mxu0 %v5235
          %v5351 = vpop.f32.mrb[0].mxu0
          %v5352 = vadd.f32 0.0, %v5351
          %v5353 = vpop.f32.mrb[0].mxu0
          %5354 = vmatprep.mubr.f32.mxu0 0.0
          %5355 = vmatmul.mubr.f32.gmra.mrb[0].mxu0 %v5237
          %v5356 = vpop.f32.mrb[0].mxu0
          %v5357 = vadd.f32 0.0, %v5356
          %v5358 = vpop.f32.mrb[0].mxu0
          %5359 = vmatprep.mubr.f32.mxu0 0.0
          %5360 = vmatmul.mubr.f32.gmra.mrb[0].mxu0 %v5239
          %v5361 = vpop.f32.mrb[0].mxu0
          %v5362 = vadd.f32 0.0, %v5361
          %v5363 = vpop.f32.mrb[0].mxu0
          %5364 = vmatprep.mubr.f32.mxu0 0.0
          %5365 = vmatmul.mubr.f32.gmra.mrb[0].mxu0 %v5241
          %v5366 = vpop.f32.mrb[0].mxu0
          %v5367 = vadd.f32 0.0, %v5366
          %v5368 = vpop.f32.mrb[0].mxu0
          %5369 = vmatprep.mubr.f32.mxu0 0.0
          %5370 = vmatmul.mubr.f32.gmra.mrb[0].mxu0 %v5243
          %v5371 = vpop.f32.mrb[0].mxu0
          %v5372 = vadd.f32 0.0, %v5371
          %v5373 = vpop.f32.mrb[0].mxu0
          %5374 = vmatprep.mubr.f32.mxu0 0.0
          %5375 = vmatmul.mubr.f32.gmra.mrb[0].mxu0 %v5245
          %v5376 = vpop.f32.mrb[0].mxu0
          %v5377 = vadd.f32 0.0, %v5376
          %v5378 = vpop.f32.mrb[0].mxu0
          %5379 = vmatprep.mubr.f32.mxu0 0.0
          %5380 = vmatmul.mubr.f32.gmra.mrb[0].mxu0 %v5247
          %v5381 = vpop.f32.mrb[0].mxu0
          %v5382 = vadd.f32 0.0, %v5381
          %v5383 = vpop.f32.mrb[0].mxu0
          %5384 = vmatprep.mubr.f32.mxu0 0.0
          %5385 = vmatmul.mubr.f32.gmra.mrb[0].mxu0 %v5249
          %v5386 = vpop.f32.mrb[0].mxu0
          %v5387 = vadd.f32 0.0, %v5386
          %v5388 = vpop.f32.mrb[0].mxu0
          %5389 = vmatprep.mubr.f32.mxu0 0.0
          %5390 = vmatmul.mubr.f32.gmra.mrb[0].mxu0 %v5251
          %v5391 = vpop.f32.mrb[0].mxu0
          %v5392 = vadd.f32 0.0, %v5391
          %v5393 = vpop.f32.mrb[0].mxu0
          %5394 = vmatprep.mubr.f32.mxu0 0.0
          %5395 = vmatmul.mubr.f32.gmra.mrb[0].mxu0 %v5253
          %v5396 = vpop.f32.mrb[0].mxu0
          %v5397 = vadd.f32 0.0, %v5396
          %v5398 = vpop.f32.mrb[0].mxu0
          %5399 = vdwg.mxu0
          %v5401 = vsel %vm5222, %v4886, 0
          %v5404 = vsel %vm5222, %v4887, 0
          %v5407 = vsel %vm5222, %v4888, 0
          %v5410 = vsel %vm5222, %v4889, 0
          %v5413 = vsel %vm5222, %v4890, 0
          %v5416 = vsel %vm5222, %v4891, 0
          %v5419 = vsel %vm5222, %v4892, 0
          %v5422 = vsel %vm5222, %v4893, 0
          %v5425 = vsel %vm5222, %v4894, 0
          %v5428 = vsel %vm5222, %v4895, 0
          %v5431 = vsel %vm5222, %v4896, 0
          %v5434 = vsel %vm5222, %v4897, 0
          %v5437 = vsel %vm5222, %v4898, 0
          %v5440 = vsel %vm5222, %v4899, 0
          %v5443 = vsel %vm5222, %v4900, 0
          %v5446 = vsel %vm5222, %v4901, 0
          %5448 = vmatprep.subr.mxu0 0.0
          %5449 = vmatpush1.msra.mxu0 %v4590
          %5450 = vmatprep.subr.mxu0 0.0
          %5451 = vmatpush1.msra.mxu0 0.0
          %5452 = vmatprep.subr.mxu0 0.0
          %5453 = vmatpush1.msra.mxu0 0.0
          %5454 = vmatprep.subr.mxu0 0.0
          %5455 = vmatpush1.msra.mxu0 0.0
          %5456 = vmatprep.subr.mxu0 0.0
          %5457 = vmatpush1.msra.mxu0 0.0
          %5458 = vmatprep.subr.mxu0 0.0
          %5459 = vmatpush1.msra.mxu0 0.0
          %5460 = vmatprep.subr.mxu0 0.0
          %5461 = vmatpush1.msra.mxu0 0.0
          %5462 = vmatprep.subr.mxu0 0.0
          %5463 = vmatpush1.msra.mxu0 0.0
          %5464 = vmatprep.subr.mxu0 0.0
          %5465 = vmatpush1.msra.mxu0 0.0
          %5466 = vmatprep.subr.mxu0 0.0
          %5467 = vmatpush1.msra.mxu0 0.0
          %5468 = vmatprep.subr.mxu0 0.0
          %5469 = vmatpush1.msra.mxu0 0.0
          %5470 = vmatprep.subr.mxu0 0.0
          %5471 = vmatpush1.msra.mxu0 0.0
          %5472 = vmatprep.subr.mxu0 0.0
          %5473 = vmatpush1.msra.mxu0 0.0
          %5474 = vmatprep.subr.mxu0 0.0
          %5475 = vmatpush1.msra.mxu0 0.0
          %5476 = vmatprep.subr.mxu0 0.0
          %5477 = vmatpush1.msra.mxu0 0.0
          %5478 = vmatprep.subr.mxu0 0.0
          %5479 = vmatpush1.msra.mxu0 0.0
          %5480 = vmatprep.subr.mxu0 0.0
          %5481 = vmatpush1.msra.mxu0 0.0
          %5482 = vmatprep.subr.mxu0 0.0
          %5483 = vmatpush1.msra.mxu0 0.0
          %5484 = vmatprep.subr.mxu0 0.0
          %5485 = vmatpush1.msra.mxu0 0.0
          %5486 = vmatprep.subr.mxu0 0.0
          %5487 = vmatpush1.msra.mxu0 0.0
          %5488 = vmatprep.subr.mxu0 0.0
          %5489 = vmatpush1.msra.mxu0 0.0
          %5490 = vmatprep.subr.mxu0 0.0
          %5491 = vmatpush1.msra.mxu0 0.0
          %5492 = vmatprep.subr.mxu0 0.0
          %5493 = vmatpush1.msra.mxu0 0.0
          %5494 = vmatprep.subr.mxu0 0.0
          %5495 = vmatpush1.msra.mxu0 0.0
          %5496 = vmatprep.subr.mxu0 0.0
          %5497 = vmatpush1.msra.mxu0 0.0
          %5498 = vmatprep.subr.mxu0 0.0
          %5499 = vmatpush1.msra.mxu0 0.0
          %5500 = vmatprep.subr.mxu0 0.0
          %5501 = vmatpush1.msra.mxu0 0.0
          %5502 = vmatprep.subr.mxu0 0.0
          %5503 = vmatpush1.msra.mxu0 0.0
          %5504 = vmatprep.subr.mxu0 0.0
          %5505 = vmatpush1.msra.mxu0 0.0
          %5506 = vmatprep.subr.mxu0 0.0
          %5507 = vmatpush1.msra.mxu0 0.0
          %5508 = vmatprep.subr.mxu0 0.0
          %5509 = vmatpush1.msra.mxu0 0.0
          %5510 = vmatprep.subr.mxu0 0.0
          %5511 = vmatpush1.msra.mxu0 0.0
          %5512 = vmatprep.mubr.f32.mxu0 0.0
          %5513 = vmatmul.mubr.f32.gmra.mrb[0].mxu0 %v5401
          %v5514 = vpop.f32.mrb[0].mxu0
          %v5515 = vadd.f32 %v5322, %v5514
          %v5516 = vpop.f32.mrb[0].mxu0
          %5517 = vmatprep.mubr.f32.mxu0 0.0
          %5518 = vmatmul.mubr.f32.gmra.mrb[0].mxu0 %v5404
          %v5519 = vpop.f32.mrb[0].mxu0
          %v5520 = vadd.f32 %v5327, %v5519
          %v5521 = vpop.f32.mrb[0].mxu0
          %5522 = vmatprep.mubr.f32.mxu0 0.0
          %5523 = vmatmul.mubr.f32.gmra.mrb[0].mxu0 %v5407
          %v5524 = vpop.f32.mrb[0].mxu0
          %v5525 = vadd.f32 %v5332, %v5524
          %v5526 = vpop.f32.mrb[0].mxu0
          %5527 = vmatprep.mubr.f32.mxu0 0.0
          %5528 = vmatmul.mubr.f32.gmra.mrb[0].mxu0 %v5410
          %v5529 = vpop.f32.mrb[0].mxu0
          %v5530 = vadd.f32 %v5337, %v5529
          %v5531 = vpop.f32.mrb[0].mxu0
          %5532 = vmatprep.mubr.f32.mxu0 0.0
          %5533 = vmatmul.mubr.f32.gmra.mrb[0].mxu0 %v5413
          %v5534 = vpop.f32.mrb[0].mxu0
          %v5535 = vadd.f32 %v5342, %v5534
          %v5536 = vpop.f32.mrb[0].mxu0
          %5537 = vmatprep.mubr.f32.mxu0 0.0
          %5538 = vmatmul.mubr.f32.gmra.mrb[0].mxu0 %v5416
          %v5539 = vpop.f32.mrb[0].mxu0
          %v5540 = vadd.f32 %v5347, %v5539
          %v5541 = vpop.f32.mrb[0].mxu0
          %5542 = vmatprep.mubr.f32.mxu0 0.0
          %5543 = vmatmul.mubr.f32.gmra.mrb[0].mxu0 %v5419
          %v5544 = vpop.f32.mrb[0].mxu0
          %v5545 = vadd.f32 %v5352, %v5544
          %v5546 = vpop.f32.mrb[0].mxu0
          %5547 = vmatprep.mubr.f32.mxu0 0.0
          %5548 = vmatmul.mubr.f32.gmra.mrb[0].mxu0 %v5422
          %v5549 = vpop.f32.mrb[0].mxu0
          %v5550 = vadd.f32 %v5357, %v5549
          %v5551 = vpop.f32.mrb[0].mxu0
          %5552 = vmatprep.mubr.f32.mxu0 0.0
          %5553 = vmatmul.mubr.f32.gmra.mrb[0].mxu0 %v5425
          %v5554 = vpop.f32.mrb[0].mxu0
          %v5555 = vadd.f32 %v5362, %v5554
          %v5556 = vpop.f32.mrb[0].mxu0
          %5557 = vmatprep.mubr.f32.mxu0 0.0
          %5558 = vmatmul.mubr.f32.gmra.mrb[0].mxu0 %v5428
          %v5559 = vpop.f32.mrb[0].mxu0
          %v5560 = vadd.f32 %v5367, %v5559
          %v5561 = vpop.f32.mrb[0].mxu0
          %5562 = vmatprep.mubr.f32.mxu0 0.0
          %5563 = vmatmul.mubr.f32.gmra.mrb[0].mxu0 %v5431
          %v5564 = vpop.f32.mrb[0].mxu0
          %v5565 = vadd.f32 %v5372, %v5564
          %v5566 = vpop.f32.mrb[0].mxu0
          %5567 = vmatprep.mubr.f32.mxu0 0.0
          %5568 = vmatmul.mubr.f32.gmra.mrb[0].mxu0 %v5434
          %v5569 = vpop.f32.mrb[0].mxu0
          %v5570 = vadd.f32 %v5377, %v5569
          %v5571 = vpop.f32.mrb[0].mxu0
          %5572 = vmatprep.mubr.f32.mxu0 0.0
          %5573 = vmatmul.mubr.f32.gmra.mrb[0].mxu0 %v5437
          %v5574 = vpop.f32.mrb[0].mxu0
          %v5575 = vadd.f32 %v5382, %v5574
          %v5576 = vpop.f32.mrb[0].mxu0
          %5577 = vmatprep.mubr.f32.mxu0 0.0
          %5578 = vmatmul.mubr.f32.gmra.mrb[0].mxu0 %v5440
          %v5579 = vpop.f32.mrb[0].mxu0
          %v5580 = vadd.f32 %v5387, %v5579
          %v5581 = vpop.f32.mrb[0].mxu0
          %5582 = vmatprep.mubr.f32.mxu0 0.0
          %5583 = vmatmul.mubr.f32.gmra.mrb[0].mxu0 %v5443
          %v5584 = vpop.f32.mrb[0].mxu0
          %v5585 = vadd.f32 %v5392, %v5584
          %v5586 = vpop.f32.mrb[0].mxu0
          %5587 = vmatprep.mubr.f32.mxu0 0.0
          %5588 = vmatmul.mubr.f32.gmra.mrb[0].mxu0 %v5446
          %v5589 = vpop.f32.mrb[0].mxu0
          %v5590 = vadd.f32 %v5397, %v5589
          %v5591 = vpop.f32.mrb[0].mxu0
          %5592 = vdwg.mxu0
          %5593 = vrot.lane.b32.xlu0 %v4678, 2
          %v5594 = vpop.permute.xlu0 %5593
          %5595 = vrot.lane.b32.xlu0 %v4679, 2
          %v5596 = vpop.permute.xlu0 %5595
          %5597 = vrot.lane.b32.xlu0 %v4680, 2
          %v5598 = vpop.permute.xlu0 %5597
          %5599 = vrot.lane.b32.xlu0 %v4681, 2
          %v5600 = vpop.permute.xlu0 %5599
          %5601 = vrot.lane.b32.xlu0 %v4682, 2
          %v5602 = vpop.permute.xlu0 %5601
          %5603 = vrot.lane.b32.xlu0 %v4683, 2
          %v5604 = vpop.permute.xlu0 %5603
          %5605 = vrot.lane.b32.xlu0 %v4684, 2
          %v5606 = vpop.permute.xlu0 %5605
          %5607 = vrot.lane.b32.xlu0 %v4685, 2
          %v5608 = vpop.permute.xlu0 %5607
          %5609 = vrot.lane.b32.xlu0 %v4686, 2
          %v5610 = vpop.permute.xlu0 %5609
          %5611 = vrot.lane.b32.xlu0 %v4687, 2
          %v5612 = vpop.permute.xlu0 %5611
          %5613 = vrot.lane.b32.xlu0 %v4688, 2
          %v5614 = vpop.permute.xlu0 %5613
          %5615 = vrot.lane.b32.xlu0 %v4689, 2
          %v5616 = vpop.permute.xlu0 %5615
          %5617 = vrot.lane.b32.xlu0 %v4690, 2
          %v5618 = vpop.permute.xlu0 %5617
          %5619 = vrot.lane.b32.xlu0 %v4691, 2
          %v5620 = vpop.permute.xlu0 %5619
          %5621 = vrot.lane.b32.xlu0 %v4692, 2
          %v5622 = vpop.permute.xlu0 %5621
          %5623 = vrot.lane.b32.xlu0 %v4693, 2
          %v5624 = vpop.permute.xlu0 %5623
          %v5641 = vadd.f32 %v4574, %v5594
          %v5642 = vadd.f32 %v4575, %v5596
          %v5643 = vadd.f32 %v4576, %v5598
          %v5644 = vadd.f32 %v4577, %v5600
          %v5645 = vadd.f32 %v4578, %v5602
          %v5646 = vadd.f32 %v4579, %v5604
          %v5647 = vadd.f32 %v4580, %v5606
          %v5648 = vadd.f32 %v4581, %v5608
          %v5649 = vadd.f32 %v4582, %v5610
          %v5650 = vadd.f32 %v4583, %v5612
          %v5651 = vadd.f32 %v4584, %v5614
          %v5652 = vadd.f32 %v4585, %v5616
          %v5653 = vadd.f32 %v4586, %v5618
          %v5654 = vadd.f32 %v4587, %v5620
          %v5655 = vadd.f32 %v4588, %v5622
          %v5656 = vadd.f32 %v4589, %v5624
          %5657 = vrot.lane.b32.xlu0 %v4526, 26
          %v5658 = vpop.permute.xlu0 %5657
          %5659 = vrot.lane.b32.xlu0 %v4527, 26
          %v5660 = vpop.permute.xlu0 %5659
          %5661 = vrot.lane.b32.xlu0 %v4528, 26
          %v5662 = vpop.permute.xlu0 %5661
          %5663 = vrot.lane.b32.xlu0 %v4529, 26
          %v5664 = vpop.permute.xlu0 %5663
          %5665 = vrot.lane.b32.xlu0 %v4530, 26
          %v5666 = vpop.permute.xlu0 %5665
          %5667 = vrot.lane.b32.xlu0 %v4531, 26
          %v5668 = vpop.permute.xlu0 %5667
          %5669 = vrot.lane.b32.xlu0 %v4532, 26
          %v5670 = vpop.permute.xlu0 %5669
          %5671 = vrot.lane.b32.xlu0 %v4533, 26
          %v5672 = vpop.permute.xlu0 %5671
          %5673 = vrot.lane.b32.xlu0 %v4534, 26
          %v5674 = vpop.permute.xlu0 %5673
          %5675 = vrot.lane.b32.xlu0 %v4535, 26
          %v5676 = vpop.permute.xlu0 %5675
          %5677 = vrot.lane.b32.xlu0 %v4536, 26
          %v5678 = vpop.permute.xlu0 %5677
          %5679 = vrot.lane.b32.xlu0 %v4537, 26
          %v5680 = vpop.permute.xlu0 %5679
          %5681 = vrot.lane.b32.xlu0 %v4538, 26
          %v5682 = vpop.permute.xlu0 %5681
          %5683 = vrot.lane.b32.xlu0 %v4539, 26
          %v5684 = vpop.permute.xlu0 %5683
          %5685 = vrot.lane.b32.xlu0 %v4540, 26
          %v5686 = vpop.permute.xlu0 %5685
          %5687 = vrot.lane.b32.xlu0 %v4541, 26
          %v5688 = vpop.permute.xlu0 %5687
          %v5705 = vadd.f32 %v4574, %v5658
          %v5706 = vadd.f32 %v4575, %v5660
          %v5707 = vadd.f32 %v4576, %v5662
          %v5708 = vadd.f32 %v4577, %v5664
          %v5709 = vadd.f32 %v4578, %v5666
          %v5710 = vadd.f32 %v4579, %v5668
          %v5711 = vadd.f32 %v4580, %v5670
          %v5712 = vadd.f32 %v4581, %v5672
          %v5713 = vadd.f32 %v4582, %v5674
          %v5714 = vadd.f32 %v4583, %v5676
          %v5715 = vadd.f32 %v4584, %v5678
          %v5716 = vadd.f32 %v4585, %v5680
          %v5717 = vadd.f32 %v4586, %v5682
          %v5718 = vadd.f32 %v4587, %v5684
          %v5719 = vadd.f32 %v4588, %v5686
          %v5720 = vadd.f32 %v4589, %v5688
          %v5721 = vadd.f32 %v5705, 1e-06
          %v5722 = vadd.f32 %v5706, 1e-06
          %v5723 = vadd.f32 %v5707, 1e-06
          %v5724 = vadd.f32 %v5708, 1e-06
          %v5725 = vadd.f32 %v5709, 1e-06
          %v5726 = vadd.f32 %v5710, 1e-06
          %v5727 = vadd.f32 %v5711, 1e-06
          %v5728 = vadd.f32 %v5712, 1e-06
          %v5729 = vadd.f32 %v5713, 1e-06
          %v5730 = vadd.f32 %v5714, 1e-06
          %v5731 = vadd.f32 %v5715, 1e-06
          %v5732 = vadd.f32 %v5716, 1e-06
          %v5733 = vadd.f32 %v5717, 1e-06
          %v5734 = vadd.f32 %v5718, 1e-06
          %v5735 = vadd.f32 %v5719, 1e-06
          %v5736 = vadd.f32 %v5720, 1e-06
          %v5737 = vrcp.pop %v5721
          %v5738 = vrcp.pop %v5722
          %v5739 = vrcp.pop %v5723
          %v5740 = vrcp.pop %v5724
          %v5741 = vrcp.pop %v5725
          %v5742 = vrcp.pop %v5726
          %v5743 = vrcp.pop %v5727
          %v5744 = vrcp.pop %v5728
          %v5745 = vrcp.pop %v5729
          %v5746 = vrcp.pop %v5730
          %v5747 = vrcp.pop %v5731
          %v5748 = vrcp.pop %v5732
          %v5749 = vrcp.pop %v5733
          %v5750 = vrcp.pop %v5734
          %v5751 = vrcp.pop %v5735
          %v5752 = vrcp.pop %v5736
          %5754 = vset.pattern.permute.xlu0 26
          %5755 = vperm.xlu0 %5754, %v5737
          %v5756 = vpop.permute.xlu0 %5755
          %5759 = vset.pattern.permute.xlu0 26
          %5760 = vperm.xlu0 %5759, %v5738
          %v5761 = vpop.permute.xlu0 %5760
          %5764 = vset.pattern.permute.xlu0 26
          %5765 = vperm.xlu0 %5764, %v5739
          %v5766 = vpop.permute.xlu0 %5765
          %5769 = vset.pattern.permute.xlu0 26
          %5770 = vperm.xlu0 %5769, %v5740
          %v5771 = vpop.permute.xlu0 %5770
          %5774 = vset.pattern.permute.xlu0 26
          %5775 = vperm.xlu0 %5774, %v5741
          %v5776 = vpop.permute.xlu0 %5775
          %5779 = vset.pattern.permute.xlu0 26
          %5780 = vperm.xlu0 %5779, %v5742
          %v5781 = vpop.permute.xlu0 %5780
          %5784 = vset.pattern.permute.xlu0 26
          %5785 = vperm.xlu0 %5784, %v5743
          %v5786 = vpop.permute.xlu0 %5785
          %5789 = vset.pattern.permute.xlu0 26
          %5790 = vperm.xlu0 %5789, %v5744
          %v5791 = vpop.permute.xlu0 %5790
          %5794 = vset.pattern.permute.xlu0 26
          %5795 = vperm.xlu0 %5794, %v5745
          %v5796 = vpop.permute.xlu0 %5795
          %5799 = vset.pattern.permute.xlu0 26
          %5800 = vperm.xlu0 %5799, %v5746
          %v5801 = vpop.permute.xlu0 %5800
          %5804 = vset.pattern.permute.xlu0 26
          %5805 = vperm.xlu0 %5804, %v5747
          %v5806 = vpop.permute.xlu0 %5805
          %5809 = vset.pattern.permute.xlu0 26
          %5810 = vperm.xlu0 %5809, %v5748
          %v5811 = vpop.permute.xlu0 %5810
          %5814 = vset.pattern.permute.xlu0 26
          %5815 = vperm.xlu0 %5814, %v5749
          %v5816 = vpop.permute.xlu0 %5815
          %5819 = vset.pattern.permute.xlu0 26
          %5820 = vperm.xlu0 %5819, %v5750
          %v5821 = vpop.permute.xlu0 %5820
          %5824 = vset.pattern.permute.xlu0 26
          %5825 = vperm.xlu0 %5824, %v5751
          %v5826 = vpop.permute.xlu0 %5825
          %5829 = vset.pattern.permute.xlu0 26
          %5830 = vperm.xlu0 %5829, %v5752
          %v5831 = vpop.permute.xlu0 %5830
          %v5833 = vmul.f32 %v5641, %v5756
          %v5834 = vmul.f32 %v5642, %v5761
          %v5835 = vmul.f32 %v5643, %v5766
          %v5836 = vmul.f32 %v5644, %v5771
          %v5837 = vmul.f32 %v5645, %v5776
          %v5838 = vmul.f32 %v5646, %v5781
          %v5839 = vmul.f32 %v5647, %v5786
          %v5840 = vmul.f32 %v5648, %v5791
          %v5841 = vmul.f32 %v5649, %v5796
          %v5842 = vmul.f32 %v5650, %v5801
          %v5843 = vmul.f32 %v5651, %v5806
          %v5844 = vmul.f32 %v5652, %v5811
          %v5845 = vmul.f32 %v5653, %v5816
          %v5846 = vmul.f32 %v5654, %v5821
          %v5847 = vmul.f32 %v5655, %v5826
          %v5848 = vmul.f32 %v5656, %v5831
          %5865 = vrot.lane.b32.xlu0 %v5833, 110
          %v5866 = vpop.permute.xlu0 %5865
          %5867 = vrot.lane.b32.xlu0 %v5834, 110
          %v5868 = vpop.permute.xlu0 %5867
          %5869 = vrot.lane.b32.xlu0 %v5835, 110
          %v5870 = vpop.permute.xlu0 %5869
          %5871 = vrot.lane.b32.xlu0 %v5836, 110
          %v5872 = vpop.permute.xlu0 %5871
          %5873 = vrot.lane.b32.xlu0 %v5837, 110
          %v5874 = vpop.permute.xlu0 %5873
          %5875 = vrot.lane.b32.xlu0 %v5838, 110
          %v5876 = vpop.permute.xlu0 %5875
          %5877 = vrot.lane.b32.xlu0 %v5839, 110
          %v5878 = vpop.permute.xlu0 %5877
          %5879 = vrot.lane.b32.xlu0 %v5840, 110
          %v5880 = vpop.permute.xlu0 %5879
          %5881 = vrot.lane.b32.xlu0 %v5841, 110
          %v5882 = vpop.permute.xlu0 %5881
          %5883 = vrot.lane.b32.xlu0 %v5842, 110
          %v5884 = vpop.permute.xlu0 %5883
          %5885 = vrot.lane.b32.xlu0 %v5843, 110
          %v5886 = vpop.permute.xlu0 %5885
          %5887 = vrot.lane.b32.xlu0 %v5844, 110
          %v5888 = vpop.permute.xlu0 %5887
          %5889 = vrot.lane.b32.xlu0 %v5845, 110
          %v5890 = vpop.permute.xlu0 %5889
          %5891 = vrot.lane.b32.xlu0 %v5846, 110
          %v5892 = vpop.permute.xlu0 %5891
          %5893 = vrot.lane.b32.xlu0 %v5847, 110
          %v5894 = vpop.permute.xlu0 %5893
          %5895 = vrot.lane.b32.xlu0 %v5848, 110
          %v5896 = vpop.permute.xlu0 %5895
          %v5897 = vsel %vm5222, %v5866, 0
          %v5899 = vsel %vm5222, %v5868, 0
          %v5901 = vsel %vm5222, %v5870, 0
          %v5903 = vsel %vm5222, %v5872, 0
          %v5905 = vsel %vm5222, %v5874, 0
          %v5907 = vsel %vm5222, %v5876, 0
          %v5909 = vsel %vm5222, %v5878, 0
          %v5911 = vsel %vm5222, %v5880, 0
          %v5913 = vsel %vm5222, %v5882, 0
          %v5915 = vsel %vm5222, %v5884, 0
          %v5917 = vsel %vm5222, %v5886, 0
          %v5919 = vsel %vm5222, %v5888, 0
          %v5921 = vsel %vm5222, %v5890, 0
          %v5923 = vsel %vm5222, %v5892, 0
          %v5925 = vsel %vm5222, %v5894, 0
          %v5927 = vsel %vm5222, %v5896, 0
          %5929 = vmatprep.subr.mxu0 0.0
          %5930 = vmatpush1.msra.mxu0 %v4592
          %5931 = vmatprep.subr.mxu0 0.0
          %5932 = vmatpush1.msra.mxu0 0.0
          %5933 = vmatprep.subr.mxu0 0.0
          %5934 = vmatpush1.msra.mxu0 0.0
          %5935 = vmatprep.subr.mxu0 0.0
          %5936 = vmatpush1.msra.mxu0 0.0
          %5937 = vmatprep.subr.mxu0 0.0
          %5938 = vmatpush1.msra.mxu0 0.0
          %5939 = vmatprep.subr.mxu0 0.0
          %5940 = vmatpush1.msra.mxu0 0.0
          %5941 = vmatprep.subr.mxu0 0.0
          %5942 = vmatpush1.msra.mxu0 0.0
          %5943 = vmatprep.subr.mxu0 0.0
          %5944 = vmatpush1.msra.mxu0 0.0
          %5945 = vmatprep.subr.mxu0 0.0
          %5946 = vmatpush1.msra.mxu0 0.0
          %5947 = vmatprep.subr.mxu0 0.0
          %5948 = vmatpush1.msra.mxu0 0.0
          %5949 = vmatprep.subr.mxu0 0.0
          %5950 = vmatpush1.msra.mxu0 0.0
          %5951 = vmatprep.subr.mxu0 0.0
          %5952 = vmatpush1.msra.mxu0 0.0
          %5953 = vmatprep.subr.mxu0 0.0
          %5954 = vmatpush1.msra.mxu0 0.0
          %5955 = vmatprep.subr.mxu0 0.0
          %5956 = vmatpush1.msra.mxu0 0.0
          %5957 = vmatprep.subr.mxu0 0.0
          %5958 = vmatpush1.msra.mxu0 0.0
          %5959 = vmatprep.subr.mxu0 0.0
          %5960 = vmatpush1.msra.mxu0 0.0
          %5961 = vmatprep.subr.mxu0 0.0
          %5962 = vmatpush1.msra.mxu0 0.0
          %5963 = vmatprep.subr.mxu0 0.0
          %5964 = vmatpush1.msra.mxu0 0.0
          %5965 = vmatprep.subr.mxu0 0.0
          %5966 = vmatpush1.msra.mxu0 0.0
          %5967 = vmatprep.subr.mxu0 0.0
          %5968 = vmatpush1.msra.mxu0 0.0
          %5969 = vmatprep.subr.mxu0 0.0
          %5970 = vmatpush1.msra.mxu0 0.0
          %5971 = vmatprep.subr.mxu0 0.0
          %5972 = vmatpush1.msra.mxu0 0.0
          %5973 = vmatprep.subr.mxu0 0.0
          %5974 = vmatpush1.msra.mxu0 0.0
          %5975 = vmatprep.subr.mxu0 0.0
          %5976 = vmatpush1.msra.mxu0 0.0
          %5977 = vmatprep.subr.mxu0 0.0
          %5978 = vmatpush1.msra.mxu0 0.0
          %5979 = vmatprep.subr.mxu0 0.0
          %5980 = vmatpush1.msra.mxu0 0.0
          %5981 = vmatprep.subr.mxu0 0.0
          %5982 = vmatpush1.msra.mxu0 0.0
          %5983 = vmatprep.subr.mxu0 0.0
          %5984 = vmatpush1.msra.mxu0 0.0
          %5985 = vmatprep.subr.mxu0 0.0
          %5986 = vmatpush1.msra.mxu0 0.0
          %5987 = vmatprep.subr.mxu0 0.0
          %5988 = vmatpush1.msra.mxu0 0.0
          %5989 = vmatprep.subr.mxu0 0.0
          %5990 = vmatpush1.msra.mxu0 0.0
          %5991 = vmatprep.subr.mxu0 0.0
          %5992 = vmatpush1.msra.mxu0 0.0
          %5993 = vmatprep.mubr.f32.mxu0 0.0
          %5994 = vmatmul.mubr.f32.gmra.mrb[0].mxu0 %v5897
          %v5995 = vpop.f32.mrb[0].mxu0
          %v5996 = vadd.f32 0.0, %v5995
          %v5997 = vpop.f32.mrb[0].mxu0
          %5998 = vmatprep.mubr.f32.mxu0 0.0
          %5999 = vmatmul.mubr.f32.gmra.mrb[0].mxu0 %v5899
          %v6000 = vpop.f32.mrb[0].mxu0
          %v6001 = vadd.f32 0.0, %v6000
          %v6002 = vpop.f32.mrb[0].mxu0
          %6003 = vmatprep.mubr.f32.mxu0 0.0
          %6004 = vmatmul.mubr.f32.gmra.mrb[0].mxu0 %v5901
          %v6005 = vpop.f32.mrb[0].mxu0
          %v6006 = vadd.f32 0.0, %v6005
          %v6007 = vpop.f32.mrb[0].mxu0
          %6008 = vmatprep.mubr.f32.mxu0 0.0
          %6009 = vmatmul.mubr.f32.gmra.mrb[0].mxu0 %v5903
          %v6010 = vpop.f32.mrb[0].mxu0
          %v6011 = vadd.f32 0.0, %v6010
          %v6012 = vpop.f32.mrb[0].mxu0
          %6013 = vmatprep.mubr.f32.mxu0 0.0
          %6014 = vmatmul.mubr.f32.gmra.mrb[0].mxu0 %v5905
          %v6015 = vpop.f32.mrb[0].mxu0
          %v6016 = vadd.f32 0.0, %v6015
          %v6017 = vpop.f32.mrb[0].mxu0
          %6018 = vmatprep.mubr.f32.mxu0 0.0
          %6019 = vmatmul.mubr.f32.gmra.mrb[0].mxu0 %v5907
          %v6020 = vpop.f32.mrb[0].mxu0
          %v6021 = vadd.f32 0.0, %v6020
          %v6022 = vpop.f32.mrb[0].mxu0
          %6023 = vmatprep.mubr.f32.mxu0 0.0
          %6024 = vmatmul.mubr.f32.gmra.mrb[0].mxu0 %v5909
          %v6025 = vpop.f32.mrb[0].mxu0
          %v6026 = vadd.f32 0.0, %v6025
          %v6027 = vpop.f32.mrb[0].mxu0
          %6028 = vmatprep.mubr.f32.mxu0 0.0
          %6029 = vmatmul.mubr.f32.gmra.mrb[0].mxu0 %v5911
          %v6030 = vpop.f32.mrb[0].mxu0
          %v6031 = vadd.f32 0.0, %v6030
          %v6032 = vpop.f32.mrb[0].mxu0
          %6033 = vmatprep.mubr.f32.mxu0 0.0
          %6034 = vmatmul.mubr.f32.gmra.mrb[0].mxu0 %v5913
          %v6035 = vpop.f32.mrb[0].mxu0
          %v6036 = vadd.f32 0.0, %v6035
          %v6037 = vpop.f32.mrb[0].mxu0
          %6038 = vmatprep.mubr.f32.mxu0 0.0
          %6039 = vmatmul.mubr.f32.gmra.mrb[0].mxu0 %v5915
          %v6040 = vpop.f32.mrb[0].mxu0
          %v6041 = vadd.f32 0.0, %v6040
          %v6042 = vpop.f32.mrb[0].mxu0
          %6043 = vmatprep.mubr.f32.mxu0 0.0
          %6044 = vmatmul.mubr.f32.gmra.mrb[0].mxu0 %v5917
          %v6045 = vpop.f32.mrb[0].mxu0
          %v6046 = vadd.f32 0.0, %v6045
          %v6047 = vpop.f32.mrb[0].mxu0
          %6048 = vmatprep.mubr.f32.mxu0 0.0
          %6049 = vmatmul.mubr.f32.gmra.mrb[0].mxu0 %v5919
          %v6050 = vpop.f32.mrb[0].mxu0
          %v6051 = vadd.f32 0.0, %v6050
          %v6052 = vpop.f32.mrb[0].mxu0
          %6053 = vmatprep.mubr.f32.mxu0 0.0
          %6054 = vmatmul.mubr.f32.gmra.mrb[0].mxu0 %v5921
          %v6055 = vpop.f32.mrb[0].mxu0
          %v6056 = vadd.f32 0.0, %v6055
          %v6057 = vpop.f32.mrb[0].mxu0
          %6058 = vmatprep.mubr.f32.mxu0 0.0
          %6059 = vmatmul.mubr.f32.gmra.mrb[0].mxu0 %v5923
          %v6060 = vpop.f32.mrb[0].mxu0
          %v6061 = vadd.f32 0.0, %v6060
          %v6062 = vpop.f32.mrb[0].mxu0
          %6063 = vmatprep.mubr.f32.mxu0 0.0
          %6064 = vmatmul.mubr.f32.gmra.mrb[0].mxu0 %v5925
          %v6065 = vpop.f32.mrb[0].mxu0
          %v6066 = vadd.f32 0.0, %v6065
          %v6067 = vpop.f32.mrb[0].mxu0
          %6068 = vmatprep.mubr.f32.mxu0 0.0
          %6069 = vmatmul.mubr.f32.gmra.mrb[0].mxu0 %v5927
          %v6070 = vpop.f32.mrb[0].mxu0
          %v6071 = vadd.f32 0.0, %v6070
          %v6072 = vpop.f32.mrb[0].mxu0
          %6073 = vdwg.mxu0
          %v6074 = vadd.f32 %v5515, %v5996
          %v6075 = vadd.f32 %v5520, %v6001
          %v6076 = vadd.f32 %v5525, %v6006
          %v6077 = vadd.f32 %v5530, %v6011
          %v6078 = vadd.f32 %v5535, %v6016
          %v6079 = vadd.f32 %v5540, %v6021
          %v6080 = vadd.f32 %v5545, %v6026
          %v6081 = vadd.f32 %v5550, %v6031
          %v6082 = vadd.f32 %v5555, %v6036
          %v6083 = vadd.f32 %v5560, %v6041
          %v6084 = vadd.f32 %v5565, %v6046
          %v6085 = vadd.f32 %v5570, %v6051
          %v6086 = vadd.f32 %v5575, %v6056
          %v6087 = vadd.f32 %v5580, %v6061
          %v6088 = vadd.f32 %v5585, %v6066
          %v6089 = vadd.f32 %v5590, %v6071
          %6090 = vrot.lane.b32.xlu0 %v4678, 3
          %v6091 = vpop.permute.xlu0 %6090
          %6092 = vrot.lane.b32.xlu0 %v4679, 3
          %v6093 = vpop.permute.xlu0 %6092
          %6094 = vrot.lane.b32.xlu0 %v4680, 3
          %v6095 = vpop.permute.xlu0 %6094
          %6096 = vrot.lane.b32.xlu0 %v4681, 3
          %v6097 = vpop.permute.xlu0 %6096
          %6098 = vrot.lane.b32.xlu0 %v4682, 3
          %v6099 = vpop.permute.xlu0 %6098
          %6100 = vrot.lane.b32.xlu0 %v4683, 3
          %v6101 = vpop.permute.xlu0 %6100
          %6102 = vrot.lane.b32.xlu0 %v4684, 3
          %v6103 = vpop.permute.xlu0 %6102
          %6104 = vrot.lane.b32.xlu0 %v4685, 3
          %v6105 = vpop.permute.xlu0 %6104
          %6106 = vrot.lane.b32.xlu0 %v4686, 3
          %v6107 = vpop.permute.xlu0 %6106
          %6108 = vrot.lane.b32.xlu0 %v4687, 3
          %v6109 = vpop.permute.xlu0 %6108
          %6110 = vrot.lane.b32.xlu0 %v4688, 3
          %v6111 = vpop.permute.xlu0 %6110
          %6112 = vrot.lane.b32.xlu0 %v4689, 3
          %v6113 = vpop.permute.xlu0 %6112
          %6114 = vrot.lane.b32.xlu0 %v4690, 3
          %v6115 = vpop.permute.xlu0 %6114
          %6116 = vrot.lane.b32.xlu0 %v4691, 3
          %v6117 = vpop.permute.xlu0 %6116
          %6118 = vrot.lane.b32.xlu0 %v4692, 3
          %v6119 = vpop.permute.xlu0 %6118
          %6120 = vrot.lane.b32.xlu0 %v4693, 3
          %v6121 = vpop.permute.xlu0 %6120
          %v6138 = vadd.f32 %v4574, %v6091
          %v6139 = vadd.f32 %v4575, %v6093
          %v6140 = vadd.f32 %v4576, %v6095
          %v6141 = vadd.f32 %v4577, %v6097
          %v6142 = vadd.f32 %v4578, %v6099
          %v6143 = vadd.f32 %v4579, %v6101
          %v6144 = vadd.f32 %v4580, %v6103
          %v6145 = vadd.f32 %v4581, %v6105
          %v6146 = vadd.f32 %v4582, %v6107
          %v6147 = vadd.f32 %v4583, %v6109
          %v6148 = vadd.f32 %v4584, %v6111
          %v6149 = vadd.f32 %v4585, %v6113
          %v6150 = vadd.f32 %v4586, %v6115
          %v6151 = vadd.f32 %v4587, %v6117
          %v6152 = vadd.f32 %v4588, %v6119
          %v6153 = vadd.f32 %v4589, %v6121
          %6154 = vrot.lane.b32.xlu0 %v4526, 35
          %v6155 = vpop.permute.xlu0 %6154
          %6156 = vrot.lane.b32.xlu0 %v4527, 35
          %v6157 = vpop.permute.xlu0 %6156
          %6158 = vrot.lane.b32.xlu0 %v4528, 35
          %v6159 = vpop.permute.xlu0 %6158
          %6160 = vrot.lane.b32.xlu0 %v4529, 35
          %v6161 = vpop.permute.xlu0 %6160
          %6162 = vrot.lane.b32.xlu0 %v4530, 35
          %v6163 = vpop.permute.xlu0 %6162
          %6164 = vrot.lane.b32.xlu0 %v4531, 35
          %v6165 = vpop.permute.xlu0 %6164
          %6166 = vrot.lane.b32.xlu0 %v4532, 35
          %v6167 = vpop.permute.xlu0 %6166
          %6168 = vrot.lane.b32.xlu0 %v4533, 35
          %v6169 = vpop.permute.xlu0 %6168
          %6170 = vrot.lane.b32.xlu0 %v4534, 35
          %v6171 = vpop.permute.xlu0 %6170
          %6172 = vrot.lane.b32.xlu0 %v4535, 35
          %v6173 = vpop.permute.xlu0 %6172
          %6174 = vrot.lane.b32.xlu0 %v4536, 35
          %v6175 = vpop.permute.xlu0 %6174
          %6176 = vrot.lane.b32.xlu0 %v4537, 35
          %v6177 = vpop.permute.xlu0 %6176
          %6178 = vrot.lane.b32.xlu0 %v4538, 35
          %v6179 = vpop.permute.xlu0 %6178
          %6180 = vrot.lane.b32.xlu0 %v4539, 35
          %v6181 = vpop.permute.xlu0 %6180
          %6182 = vrot.lane.b32.xlu0 %v4540, 35
          %v6183 = vpop.permute.xlu0 %6182
          %6184 = vrot.lane.b32.xlu0 %v4541, 35
          %v6185 = vpop.permute.xlu0 %6184
          %v6202 = vadd.f32 %v4574, %v6155
          %v6203 = vadd.f32 %v4575, %v6157
          %v6204 = vadd.f32 %v4576, %v6159
          %v6205 = vadd.f32 %v4577, %v6161
          %v6206 = vadd.f32 %v4578, %v6163
          %v6207 = vadd.f32 %v4579, %v6165
          %v6208 = vadd.f32 %v4580, %v6167
          %v6209 = vadd.f32 %v4581, %v6169
          %v6210 = vadd.f32 %v4582, %v6171
          %v6211 = vadd.f32 %v4583, %v6173
          %v6212 = vadd.f32 %v4584, %v6175
          %v6213 = vadd.f32 %v4585, %v6177
          %v6214 = vadd.f32 %v4586, %v6179
          %v6215 = vadd.f32 %v4587, %v6181
          %v6216 = vadd.f32 %v4588, %v6183
          %v6217 = vadd.f32 %v4589, %v6185
          %v6218 = vadd.f32 %v6202, 1e-06
          %v6219 = vadd.f32 %v6203, 1e-06
          %v6220 = vadd.f32 %v6204, 1e-06
          %v6221 = vadd.f32 %v6205, 1e-06
          %v6222 = vadd.f32 %v6206, 1e-06
          %v6223 = vadd.f32 %v6207, 1e-06
          %v6224 = vadd.f32 %v6208, 1e-06
          %v6225 = vadd.f32 %v6209, 1e-06
          %v6226 = vadd.f32 %v6210, 1e-06
          %v6227 = vadd.f32 %v6211, 1e-06
          %v6228 = vadd.f32 %v6212, 1e-06
          %v6229 = vadd.f32 %v6213, 1e-06
          %v6230 = vadd.f32 %v6214, 1e-06
          %v6231 = vadd.f32 %v6215, 1e-06
          %v6232 = vadd.f32 %v6216, 1e-06
          %v6233 = vadd.f32 %v6217, 1e-06
          %v6234 = vrcp.pop %v6218
          %v6235 = vrcp.pop %v6219
          %v6236 = vrcp.pop %v6220
          %v6237 = vrcp.pop %v6221
          %v6238 = vrcp.pop %v6222
          %v6239 = vrcp.pop %v6223
          %v6240 = vrcp.pop %v6224
          %v6241 = vrcp.pop %v6225
          %v6242 = vrcp.pop %v6226
          %v6243 = vrcp.pop %v6227
          %v6244 = vrcp.pop %v6228
          %v6245 = vrcp.pop %v6229
          %v6246 = vrcp.pop %v6230
          %v6247 = vrcp.pop %v6231
          %v6248 = vrcp.pop %v6232
          %v6249 = vrcp.pop %v6233
          %6251 = vset.pattern.permute.xlu0 35
          %6252 = vperm.xlu0 %6251, %v6234
          %v6253 = vpop.permute.xlu0 %6252
          %6256 = vset.pattern.permute.xlu0 35
          %6257 = vperm.xlu0 %6256, %v6235
          %v6258 = vpop.permute.xlu0 %6257
          %6261 = vset.pattern.permute.xlu0 35
          %6262 = vperm.xlu0 %6261, %v6236
          %v6263 = vpop.permute.xlu0 %6262
          %6266 = vset.pattern.permute.xlu0 35
          %6267 = vperm.xlu0 %6266, %v6237
          %v6268 = vpop.permute.xlu0 %6267
          %6271 = vset.pattern.permute.xlu0 35
          %6272 = vperm.xlu0 %6271, %v6238
          %v6273 = vpop.permute.xlu0 %6272
          %6276 = vset.pattern.permute.xlu0 35
          %6277 = vperm.xlu0 %6276, %v6239
          %v6278 = vpop.permute.xlu0 %6277
          %6281 = vset.pattern.permute.xlu0 35
          %6282 = vperm.xlu0 %6281, %v6240
          %v6283 = vpop.permute.xlu0 %6282
          %6286 = vset.pattern.permute.xlu0 35
          %6287 = vperm.xlu0 %6286, %v6241
          %v6288 = vpop.permute.xlu0 %6287
          %6291 = vset.pattern.permute.xlu0 35
          %6292 = vperm.xlu0 %6291, %v6242
          %v6293 = vpop.permute.xlu0 %6292
          %6296 = vset.pattern.permute.xlu0 35
          %6297 = vperm.xlu0 %6296, %v6243
          %v6298 = vpop.permute.xlu0 %6297
          %6301 = vset.pattern.permute.xlu0 35
          %6302 = vperm.xlu0 %6301, %v6244
          %v6303 = vpop.permute.xlu0 %6302
          %6306 = vset.pattern.permute.xlu0 35
          %6307 = vperm.xlu0 %6306, %v6245
          %v6308 = vpop.permute.xlu0 %6307
          %6311 = vset.pattern.permute.xlu0 35
          %6312 = vperm.xlu0 %6311, %v6246
          %v6313 = vpop.permute.xlu0 %6312
          %6316 = vset.pattern.permute.xlu0 35
          %6317 = vperm.xlu0 %6316, %v6247
          %v6318 = vpop.permute.xlu0 %6317
          %6321 = vset.pattern.permute.xlu0 35
          %6322 = vperm.xlu0 %6321, %v6248
          %v6323 = vpop.permute.xlu0 %6322
          %6326 = vset.pattern.permute.xlu0 35
          %6327 = vperm.xlu0 %6326, %v6249
          %v6328 = vpop.permute.xlu0 %6327
          %v6330 = vmul.f32 %v6138, %v6253
          %v6331 = vmul.f32 %v6139, %v6258
          %v6332 = vmul.f32 %v6140, %v6263
          %v6333 = vmul.f32 %v6141, %v6268
          %v6334 = vmul.f32 %v6142, %v6273
          %v6335 = vmul.f32 %v6143, %v6278
          %v6336 = vmul.f32 %v6144, %v6283
          %v6337 = vmul.f32 %v6145, %v6288
          %v6338 = vmul.f32 %v6146, %v6293
          %v6339 = vmul.f32 %v6147, %v6298
          %v6340 = vmul.f32 %v6148, %v6303
          %v6341 = vmul.f32 %v6149, %v6308
          %v6342 = vmul.f32 %v6150, %v6313
          %v6343 = vmul.f32 %v6151, %v6318
          %v6344 = vmul.f32 %v6152, %v6323
          %v6345 = vmul.f32 %v6153, %v6328
          %6362 = vrot.lane.b32.xlu0 %v6330, 101
          %v6363 = vpop.permute.xlu0 %6362
          %6364 = vrot.lane.b32.xlu0 %v6331, 101
          %v6365 = vpop.permute.xlu0 %6364
          %6366 = vrot.lane.b32.xlu0 %v6332, 101
          %v6367 = vpop.permute.xlu0 %6366
          %6368 = vrot.lane.b32.xlu0 %v6333, 101
          %v6369 = vpop.permute.xlu0 %6368
          %6370 = vrot.lane.b32.xlu0 %v6334, 101
          %v6371 = vpop.permute.xlu0 %6370
          %6372 = vrot.lane.b32.xlu0 %v6335, 101
          %v6373 = vpop.permute.xlu0 %6372
          %6374 = vrot.lane.b32.xlu0 %v6336, 101
          %v6375 = vpop.permute.xlu0 %6374
          %6376 = vrot.lane.b32.xlu0 %v6337, 101
          %v6377 = vpop.permute.xlu0 %6376
          %6378 = vrot.lane.b32.xlu0 %v6338, 101
          %v6379 = vpop.permute.xlu0 %6378
          %6380 = vrot.lane.b32.xlu0 %v6339, 101
          %v6381 = vpop.permute.xlu0 %6380
          %6382 = vrot.lane.b32.xlu0 %v6340, 101
          %v6383 = vpop.permute.xlu0 %6382
          %6384 = vrot.lane.b32.xlu0 %v6341, 101
          %v6385 = vpop.permute.xlu0 %6384
          %6386 = vrot.lane.b32.xlu0 %v6342, 101
          %v6387 = vpop.permute.xlu0 %6386
          %6388 = vrot.lane.b32.xlu0 %v6343, 101
          %v6389 = vpop.permute.xlu0 %6388
          %6390 = vrot.lane.b32.xlu0 %v6344, 101
          %v6391 = vpop.permute.xlu0 %6390
          %6392 = vrot.lane.b32.xlu0 %v6345, 101
          %v6393 = vpop.permute.xlu0 %6392
          %v6394 = vsel %vm5222, %v6363, 0
          %v6396 = vsel %vm5222, %v6365, 0
          %v6398 = vsel %vm5222, %v6367, 0
          %v6400 = vsel %vm5222, %v6369, 0
          %v6402 = vsel %vm5222, %v6371, 0
          %v6404 = vsel %vm5222, %v6373, 0
          %v6406 = vsel %vm5222, %v6375, 0
          %v6408 = vsel %vm5222, %v6377, 0
          %v6410 = vsel %vm5222, %v6379, 0
          %v6412 = vsel %vm5222, %v6381, 0
          %v6414 = vsel %vm5222, %v6383, 0
          %v6416 = vsel %vm5222, %v6385, 0
          %v6418 = vsel %vm5222, %v6387, 0
          %v6420 = vsel %vm5222, %v6389, 0
          %v6422 = vsel %vm5222, %v6391, 0
          %v6424 = vsel %vm5222, %v6393, 0
          %6426 = vmatprep.subr.mxu0 0.0
          %6427 = vmatpush1.msra.mxu0 %v4593
          %6428 = vmatprep.subr.mxu0 0.0
          %6429 = vmatpush1.msra.mxu0 0.0
          %6430 = vmatprep.subr.mxu0 0.0
          %6431 = vmatpush1.msra.mxu0 0.0
          %6432 = vmatprep.subr.mxu0 0.0
          %6433 = vmatpush1.msra.mxu0 0.0
          %6434 = vmatprep.subr.mxu0 0.0
          %6435 = vmatpush1.msra.mxu0 0.0
          %6436 = vmatprep.subr.mxu0 0.0
          %6437 = vmatpush1.msra.mxu0 0.0
          %6438 = vmatprep.subr.mxu0 0.0
          %6439 = vmatpush1.msra.mxu0 0.0
          %6440 = vmatprep.subr.mxu0 0.0
          %6441 = vmatpush1.msra.mxu0 0.0
          %6442 = vmatprep.subr.mxu0 0.0
          %6443 = vmatpush1.msra.mxu0 0.0
          %6444 = vmatprep.subr.mxu0 0.0
          %6445 = vmatpush1.msra.mxu0 0.0
          %6446 = vmatprep.subr.mxu0 0.0
          %6447 = vmatpush1.msra.mxu0 0.0
          %6448 = vmatprep.subr.mxu0 0.0
          %6449 = vmatpush1.msra.mxu0 0.0
          %6450 = vmatprep.subr.mxu0 0.0
          %6451 = vmatpush1.msra.mxu0 0.0
          %6452 = vmatprep.subr.mxu0 0.0
          %6453 = vmatpush1.msra.mxu0 0.0
          %6454 = vmatprep.subr.mxu0 0.0
          %6455 = vmatpush1.msra.mxu0 0.0
          %6456 = vmatprep.subr.mxu0 0.0
          %6457 = vmatpush1.msra.mxu0 0.0
          %6458 = vmatprep.subr.mxu0 0.0
          %6459 = vmatpush1.msra.mxu0 0.0
          %6460 = vmatprep.subr.mxu0 0.0
          %6461 = vmatpush1.msra.mxu0 0.0
          %6462 = vmatprep.subr.mxu0 0.0
          %6463 = vmatpush1.msra.mxu0 0.0
          %6464 = vmatprep.subr.mxu0 0.0
          %6465 = vmatpush1.msra.mxu0 0.0
          %6466 = vmatprep.subr.mxu0 0.0
          %6467 = vmatpush1.msra.mxu0 0.0
          %6468 = vmatprep.subr.mxu0 0.0
          %6469 = vmatpush1.msra.mxu0 0.0
          %6470 = vmatprep.subr.mxu0 0.0
          %6471 = vmatpush1.msra.mxu0 0.0
          %6472 = vmatprep.subr.mxu0 0.0
          %6473 = vmatpush1.msra.mxu0 0.0
          %6474 = vmatprep.subr.mxu0 0.0
          %6475 = vmatpush1.msra.mxu0 0.0
          %6476 = vmatprep.subr.mxu0 0.0
          %6477 = vmatpush1.msra.mxu0 0.0
          %6478 = vmatprep.subr.mxu0 0.0
          %6479 = vmatpush1.msra.mxu0 0.0
          %6480 = vmatprep.subr.mxu0 0.0
          %6481 = vmatpush1.msra.mxu0 0.0
          %6482 = vmatprep.subr.mxu0 0.0
          %6483 = vmatpush1.msra.mxu0 0.0
          %6484 = vmatprep.subr.mxu0 0.0
          %6485 = vmatpush1.msra.mxu0 0.0
          %6486 = vmatprep.subr.mxu0 0.0
          %6487 = vmatpush1.msra.mxu0 0.0
          %6488 = vmatprep.subr.mxu0 0.0
          %6489 = vmatpush1.msra.mxu0 0.0
          %6490 = vmatprep.mubr.f32.mxu0 0.0
          %6491 = vmatmul.mubr.f32.gmra.mrb[0].mxu0 %v6394
          %v6492 = vpop.f32.mrb[0].mxu0
          %v6493 = vadd.f32 0.0, %v6492
          %v6494 = vpop.f32.mrb[0].mxu0
          %6495 = vmatprep.mubr.f32.mxu0 0.0
          %6496 = vmatmul.mubr.f32.gmra.mrb[0].mxu0 %v6396
          %v6497 = vpop.f32.mrb[0].mxu0
          %v6498 = vadd.f32 0.0, %v6497
          %v6499 = vpop.f32.mrb[0].mxu0
          %6500 = vmatprep.mubr.f32.mxu0 0.0
          %6501 = vmatmul.mubr.f32.gmra.mrb[0].mxu0 %v6398
          %v6502 = vpop.f32.mrb[0].mxu0
          %v6503 = vadd.f32 0.0, %v6502
          %v6504 = vpop.f32.mrb[0].mxu0
          %6505 = vmatprep.mubr.f32.mxu0 0.0
          %6506 = vmatmul.mubr.f32.gmra.mrb[0].mxu0 %v6400
          %v6507 = vpop.f32.mrb[0].mxu0
          %v6508 = vadd.f32 0.0, %v6507
          %v6509 = vpop.f32.mrb[0].mxu0
          %6510 = vmatprep.mubr.f32.mxu0 0.0
          %6511 = vmatmul.mubr.f32.gmra.mrb[0].mxu0 %v6402
          %v6512 = vpop.f32.mrb[0].mxu0
          %v6513 = vadd.f32 0.0, %v6512
          %v6514 = vpop.f32.mrb[0].mxu0
          %6515 = vmatprep.mubr.f32.mxu0 0.0
          %6516 = vmatmul.mubr.f32.gmra.mrb[0].mxu0 %v6404
          %v6517 = vpop.f32.mrb[0].mxu0
          %v6518 = vadd.f32 0.0, %v6517
          %v6519 = vpop.f32.mrb[0].mxu0
          %6520 = vmatprep.mubr.f32.mxu0 0.0
          %6521 = vmatmul.mubr.f32.gmra.mrb[0].mxu0 %v6406
          %v6522 = vpop.f32.mrb[0].mxu0
          %v6523 = vadd.f32 0.0, %v6522
          %v6524 = vpop.f32.mrb[0].mxu0
          %6525 = vmatprep.mubr.f32.mxu0 0.0
          %6526 = vmatmul.mubr.f32.gmra.mrb[0].mxu0 %v6408
          %v6527 = vpop.f32.mrb[0].mxu0
          %v6528 = vadd.f32 0.0, %v6527
          %v6529 = vpop.f32.mrb[0].mxu0
          %6530 = vmatprep.mubr.f32.mxu0 0.0
          %6531 = vmatmul.mubr.f32.gmra.mrb[0].mxu0 %v6410
          %v6532 = vpop.f32.mrb[0].mxu0
          %v6533 = vadd.f32 0.0, %v6532
          %v6534 = vpop.f32.mrb[0].mxu0
          %6535 = vmatprep.mubr.f32.mxu0 0.0
          %6536 = vmatmul.mubr.f32.gmra.mrb[0].mxu0 %v6412
          %v6537 = vpop.f32.mrb[0].mxu0
          %v6538 = vadd.f32 0.0, %v6537
          %v6539 = vpop.f32.mrb[0].mxu0
          %6540 = vmatprep.mubr.f32.mxu0 0.0
          %6541 = vmatmul.mubr.f32.gmra.mrb[0].mxu0 %v6414
          %v6542 = vpop.f32.mrb[0].mxu0
          %v6543 = vadd.f32 0.0, %v6542
          %v6544 = vpop.f32.mrb[0].mxu0
          %6545 = vmatprep.mubr.f32.mxu0 0.0
          %6546 = vmatmul.mubr.f32.gmra.mrb[0].mxu0 %v6416
          %v6547 = vpop.f32.mrb[0].mxu0
          %v6548 = vadd.f32 0.0, %v6547
          %v6549 = vpop.f32.mrb[0].mxu0
          %6550 = vmatprep.mubr.f32.mxu0 0.0
          %6551 = vmatmul.mubr.f32.gmra.mrb[0].mxu0 %v6418
          %v6552 = vpop.f32.mrb[0].mxu0
          %v6553 = vadd.f32 0.0, %v6552
          %v6554 = vpop.f32.mrb[0].mxu0
          %6555 = vmatprep.mubr.f32.mxu0 0.0
          %6556 = vmatmul.mubr.f32.gmra.mrb[0].mxu0 %v6420
          %v6557 = vpop.f32.mrb[0].mxu0
          %v6558 = vadd.f32 0.0, %v6557
          %v6559 = vpop.f32.mrb[0].mxu0
          %6560 = vmatprep.mubr.f32.mxu0 0.0
          %6561 = vmatmul.mubr.f32.gmra.mrb[0].mxu0 %v6422
          %v6562 = vpop.f32.mrb[0].mxu0
          %v6563 = vadd.f32 0.0, %v6562
          %v6564 = vpop.f32.mrb[0].mxu0
          %6565 = vmatprep.mubr.f32.mxu0 0.0
          %6566 = vmatmul.mubr.f32.gmra.mrb[0].mxu0 %v6424
          %v6567 = vpop.f32.mrb[0].mxu0
          %v6568 = vadd.f32 0.0, %v6567
          %v6569 = vpop.f32.mrb[0].mxu0
          %6570 = vdwg.mxu0
          %v6571 = vadd.f32 %v6074, %v6493
          %v6572 = vadd.f32 %v6075, %v6498
          %v6573 = vadd.f32 %v6076, %v6503
          %v6574 = vadd.f32 %v6077, %v6508
          %v6575 = vadd.f32 %v6078, %v6513
          %v6576 = vadd.f32 %v6079, %v6518
          %v6577 = vadd.f32 %v6080, %v6523
          %v6578 = vadd.f32 %v6081, %v6528
          %v6579 = vadd.f32 %v6082, %v6533
          %v6580 = vadd.f32 %v6083, %v6538
          %v6581 = vadd.f32 %v6084, %v6543
          %v6582 = vadd.f32 %v6085, %v6548
          %v6583 = vadd.f32 %v6086, %v6553
          %v6584 = vadd.f32 %v6087, %v6558
          %v6585 = vadd.f32 %v6088, %v6563
          %v6586 = vadd.f32 %v6089, %v6568
          %6587 = vrot.lane.b32.xlu0 %v4678, 4
          %v6588 = vpop.permute.xlu0 %6587
          %6589 = vrot.lane.b32.xlu0 %v4679, 4
          %v6590 = vpop.permute.xlu0 %6589
          %6591 = vrot.lane.b32.xlu0 %v4680, 4
          %v6592 = vpop.permute.xlu0 %6591
          %6593 = vrot.lane.b32.xlu0 %v4681, 4
          %v6594 = vpop.permute.xlu0 %6593
          %6595 = vrot.lane.b32.xlu0 %v4682, 4
          %v6596 = vpop.permute.xlu0 %6595
          %6597 = vrot.lane.b32.xlu0 %v4683, 4
          %v6598 = vpop.permute.xlu0 %6597
          %6599 = vrot.lane.b32.xlu0 %v4684, 4
          %v6600 = vpop.permute.xlu0 %6599
          %6601 = vrot.lane.b32.xlu0 %v4685, 4
          %v6602 = vpop.permute.xlu0 %6601
          %6603 = vrot.lane.b32.xlu0 %v4686, 4
          %v6604 = vpop.permute.xlu0 %6603
          %6605 = vrot.lane.b32.xlu0 %v4687, 4
          %v6606 = vpop.permute.xlu0 %6605
          %6607 = vrot.lane.b32.xlu0 %v4688, 4
          %v6608 = vpop.permute.xlu0 %6607
          %6609 = vrot.lane.b32.xlu0 %v4689, 4
          %v6610 = vpop.permute.xlu0 %6609
          %6611 = vrot.lane.b32.xlu0 %v4690, 4
          %v6612 = vpop.permute.xlu0 %6611
          %6613 = vrot.lane.b32.xlu0 %v4691, 4
          %v6614 = vpop.permute.xlu0 %6613
          %6615 = vrot.lane.b32.xlu0 %v4692, 4
          %v6616 = vpop.permute.xlu0 %6615
          %6617 = vrot.lane.b32.xlu0 %v4693, 4
          %v6618 = vpop.permute.xlu0 %6617
          %v6635 = vadd.f32 %v4574, %v6588
          %v6636 = vadd.f32 %v4575, %v6590
          %v6637 = vadd.f32 %v4576, %v6592
          %v6638 = vadd.f32 %v4577, %v6594
          %v6639 = vadd.f32 %v4578, %v6596
          %v6640 = vadd.f32 %v4579, %v6598
          %v6641 = vadd.f32 %v4580, %v6600
          %v6642 = vadd.f32 %v4581, %v6602
          %v6643 = vadd.f32 %v4582, %v6604
          %v6644 = vadd.f32 %v4583, %v6606
          %v6645 = vadd.f32 %v4584, %v6608
          %v6646 = vadd.f32 %v4585, %v6610
          %v6647 = vadd.f32 %v4586, %v6612
          %v6648 = vadd.f32 %v4587, %v6614
          %v6649 = vadd.f32 %v4588, %v6616
          %v6650 = vadd.f32 %v4589, %v6618
          %6651 = vrot.lane.b32.xlu0 %v4526, 44
          %v6652 = vpop.permute.xlu0 %6651
          %6653 = vrot.lane.b32.xlu0 %v4527, 44
          %v6654 = vpop.permute.xlu0 %6653
          %6655 = vrot.lane.b32.xlu0 %v4528, 44
          %v6656 = vpop.permute.xlu0 %6655
          %6657 = vrot.lane.b32.xlu0 %v4529, 44
          %v6658 = vpop.permute.xlu0 %6657
          %6659 = vrot.lane.b32.xlu0 %v4530, 44
          %v6660 = vpop.permute.xlu0 %6659
          %6661 = vrot.lane.b32.xlu0 %v4531, 44
          %v6662 = vpop.permute.xlu0 %6661
          %6663 = vrot.lane.b32.xlu0 %v4532, 44
          %v6664 = vpop.permute.xlu0 %6663
          %6665 = vrot.lane.b32.xlu0 %v4533, 44
          %v6666 = vpop.permute.xlu0 %6665
          %6667 = vrot.lane.b32.xlu0 %v4534, 44
          %v6668 = vpop.permute.xlu0 %6667
          %6669 = vrot.lane.b32.xlu0 %v4535, 44
          %v6670 = vpop.permute.xlu0 %6669
          %6671 = vrot.lane.b32.xlu0 %v4536, 44
          %v6672 = vpop.permute.xlu0 %6671
          %6673 = vrot.lane.b32.xlu0 %v4537, 44
          %v6674 = vpop.permute.xlu0 %6673
          %6675 = vrot.lane.b32.xlu0 %v4538, 44
          %v6676 = vpop.permute.xlu0 %6675
          %6677 = vrot.lane.b32.xlu0 %v4539, 44
          %v6678 = vpop.permute.xlu0 %6677
          %6679 = vrot.lane.b32.xlu0 %v4540, 44
          %v6680 = vpop.permute.xlu0 %6679
          %6681 = vrot.lane.b32.xlu0 %v4541, 44
          %v6682 = vpop.permute.xlu0 %6681
          %v6699 = vadd.f32 %v4574, %v6652
          %v6700 = vadd.f32 %v4575, %v6654
          %v6701 = vadd.f32 %v4576, %v6656
          %v6702 = vadd.f32 %v4577, %v6658
          %v6703 = vadd.f32 %v4578, %v6660
          %v6704 = vadd.f32 %v4579, %v6662
          %v6705 = vadd.f32 %v4580, %v6664
          %v6706 = vadd.f32 %v4581, %v6666
          %v6707 = vadd.f32 %v4582, %v6668
          %v6708 = vadd.f32 %v4583, %v6670
          %v6709 = vadd.f32 %v4584, %v6672
          %v6710 = vadd.f32 %v4585, %v6674
          %v6711 = vadd.f32 %v4586, %v6676
          %v6712 = vadd.f32 %v4587, %v6678
          %v6713 = vadd.f32 %v4588, %v6680
          %v6714 = vadd.f32 %v4589, %v6682
          %v6715 = vadd.f32 %v6699, 1e-06
          %v6716 = vadd.f32 %v6700, 1e-06
          %v6717 = vadd.f32 %v6701, 1e-06
          %v6718 = vadd.f32 %v6702, 1e-06
          %v6719 = vadd.f32 %v6703, 1e-06
          %v6720 = vadd.f32 %v6704, 1e-06
          %v6721 = vadd.f32 %v6705, 1e-06
          %v6722 = vadd.f32 %v6706, 1e-06
          %v6723 = vadd.f32 %v6707, 1e-06
          %v6724 = vadd.f32 %v6708, 1e-06
          %v6725 = vadd.f32 %v6709, 1e-06
          %v6726 = vadd.f32 %v6710, 1e-06
          %v6727 = vadd.f32 %v6711, 1e-06
          %v6728 = vadd.f32 %v6712, 1e-06
          %v6729 = vadd.f32 %v6713, 1e-06
          %v6730 = vadd.f32 %v6714, 1e-06
          %v6731 = vrcp.pop %v6715
          %v6732 = vrcp.pop %v6716
          %v6733 = vrcp.pop %v6717
          %v6734 = vrcp.pop %v6718
          %v6735 = vrcp.pop %v6719
          %v6736 = vrcp.pop %v6720
          %v6737 = vrcp.pop %v6721
          %v6738 = vrcp.pop %v6722
          %v6739 = vrcp.pop %v6723
          %v6740 = vrcp.pop %v6724
          %v6741 = vrcp.pop %v6725
          %v6742 = vrcp.pop %v6726
          %v6743 = vrcp.pop %v6727
          %v6744 = vrcp.pop %v6728
          %v6745 = vrcp.pop %v6729
          %v6746 = vrcp.pop %v6730
          %6748 = vset.pattern.permute.xlu0 44
          %6749 = vperm.xlu0 %6748, %v6731
          %v6750 = vpop.permute.xlu0 %6749
          %6753 = vset.pattern.permute.xlu0 44
          %6754 = vperm.xlu0 %6753, %v6732
          %v6755 = vpop.permute.xlu0 %6754
          %6758 = vset.pattern.permute.xlu0 44
          %6759 = vperm.xlu0 %6758, %v6733
          %v6760 = vpop.permute.xlu0 %6759
          %6763 = vset.pattern.permute.xlu0 44
          %6764 = vperm.xlu0 %6763, %v6734
          %v6765 = vpop.permute.xlu0 %6764
          %6768 = vset.pattern.permute.xlu0 44
          %6769 = vperm.xlu0 %6768, %v6735
          %v6770 = vpop.permute.xlu0 %6769
          %6773 = vset.pattern.permute.xlu0 44
          %6774 = vperm.xlu0 %6773, %v6736
          %v6775 = vpop.permute.xlu0 %6774
          %6778 = vset.pattern.permute.xlu0 44
          %6779 = vperm.xlu0 %6778, %v6737
          %v6780 = vpop.permute.xlu0 %6779
          %6783 = vset.pattern.permute.xlu0 44
          %6784 = vperm.xlu0 %6783, %v6738
          %v6785 = vpop.permute.xlu0 %6784
          %6788 = vset.pattern.permute.xlu0 44
          %6789 = vperm.xlu0 %6788, %v6739
          %v6790 = vpop.permute.xlu0 %6789
          %6793 = vset.pattern.permute.xlu0 44
          %6794 = vperm.xlu0 %6793, %v6740
          %v6795 = vpop.permute.xlu0 %6794
          %6798 = vset.pattern.permute.xlu0 44
          %6799 = vperm.xlu0 %6798, %v6741
          %v6800 = vpop.permute.xlu0 %6799
          %6803 = vset.pattern.permute.xlu0 44
          %6804 = vperm.xlu0 %6803, %v6742
          %v6805 = vpop.permute.xlu0 %6804
          %6808 = vset.pattern.permute.xlu0 44
          %6809 = vperm.xlu0 %6808, %v6743
          %v6810 = vpop.permute.xlu0 %6809
          %6813 = vset.pattern.permute.xlu0 44
          %6814 = vperm.xlu0 %6813, %v6744
          %v6815 = vpop.permute.xlu0 %6814
          %6818 = vset.pattern.permute.xlu0 44
          %6819 = vperm.xlu0 %6818, %v6745
          %v6820 = vpop.permute.xlu0 %6819
          %6823 = vset.pattern.permute.xlu0 44
          %6824 = vperm.xlu0 %6823, %v6746
          %v6825 = vpop.permute.xlu0 %6824
          %v6827 = vmul.f32 %v6635, %v6750
          %v6828 = vmul.f32 %v6636, %v6755
          %v6829 = vmul.f32 %v6637, %v6760
          %v6830 = vmul.f32 %v6638, %v6765
          %v6831 = vmul.f32 %v6639, %v6770
          %v6832 = vmul.f32 %v6640, %v6775
          %v6833 = vmul.f32 %v6641, %v6780
          %v6834 = vmul.f32 %v6642, %v6785
          %v6835 = vmul.f32 %v6643, %v6790
          %v6836 = vmul.f32 %v6644, %v6795
          %v6837 = vmul.f32 %v6645, %v6800
          %v6838 = vmul.f32 %v6646, %v6805
          %v6839 = vmul.f32 %v6647, %v6810
          %v6840 = vmul.f32 %v6648, %v6815
          %v6841 = vmul.f32 %v6649, %v6820
          %v6842 = vmul.f32 %v6650, %v6825
          %6859 = vrot.lane.b32.xlu0 %v6827, 92
          %v6860 = vpop.permute.xlu0 %6859
          %6861 = vrot.lane.b32.xlu0 %v6828, 92
          %v6862 = vpop.permute.xlu0 %6861
          %6863 = vrot.lane.b32.xlu0 %v6829, 92
          %v6864 = vpop.permute.xlu0 %6863
          %6865 = vrot.lane.b32.xlu0 %v6830, 92
          %v6866 = vpop.permute.xlu0 %6865
          %6867 = vrot.lane.b32.xlu0 %v6831, 92
          %v6868 = vpop.permute.xlu0 %6867
          %6869 = vrot.lane.b32.xlu0 %v6832, 92
          %v6870 = vpop.permute.xlu0 %6869
          %6871 = vrot.lane.b32.xlu0 %v6833, 92
          %v6872 = vpop.permute.xlu0 %6871
          %6873 = vrot.lane.b32.xlu0 %v6834, 92
          %v6874 = vpop.permute.xlu0 %6873
          %6875 = vrot.lane.b32.xlu0 %v6835, 92
          %v6876 = vpop.permute.xlu0 %6875
          %6877 = vrot.lane.b32.xlu0 %v6836, 92
          %v6878 = vpop.permute.xlu0 %6877
          %6879 = vrot.lane.b32.xlu0 %v6837, 92
          %v6880 = vpop.permute.xlu0 %6879
          %6881 = vrot.lane.b32.xlu0 %v6838, 92
          %v6882 = vpop.permute.xlu0 %6881
          %6883 = vrot.lane.b32.xlu0 %v6839, 92
          %v6884 = vpop.permute.xlu0 %6883
          %6885 = vrot.lane.b32.xlu0 %v6840, 92
          %v6886 = vpop.permute.xlu0 %6885
          %6887 = vrot.lane.b32.xlu0 %v6841, 92
          %v6888 = vpop.permute.xlu0 %6887
          %6889 = vrot.lane.b32.xlu0 %v6842, 92
          %v6890 = vpop.permute.xlu0 %6889
          %v6891 = vsel %vm5222, %v6860, 0
          %v6893 = vsel %vm5222, %v6862, 0
          %v6895 = vsel %vm5222, %v6864, 0
          %v6897 = vsel %vm5222, %v6866, 0
          %v6899 = vsel %vm5222, %v6868, 0
          %v6901 = vsel %vm5222, %v6870, 0
          %v6903 = vsel %vm5222, %v6872, 0
          %v6905 = vsel %vm5222, %v6874, 0
          %v6907 = vsel %vm5222, %v6876, 0
          %v6909 = vsel %vm5222, %v6878, 0
          %v6911 = vsel %vm5222, %v6880, 0
          %v6913 = vsel %vm5222, %v6882, 0
          %v6915 = vsel %vm5222, %v6884, 0
          %v6917 = vsel %vm5222, %v6886, 0
          %v6919 = vsel %vm5222, %v6888, 0
          %v6921 = vsel %vm5222, %v6890, 0
          %6923 = vmatprep.subr.mxu0 0.0
          %6924 = vmatpush1.msra.mxu0 %v4594
          %6925 = vmatprep.subr.mxu0 0.0
          %6926 = vmatpush1.msra.mxu0 0.0
          %6927 = vmatprep.subr.mxu0 0.0
          %6928 = vmatpush1.msra.mxu0 0.0
          %6929 = vmatprep.subr.mxu0 0.0
          %6930 = vmatpush1.msra.mxu0 0.0
          %6931 = vmatprep.subr.mxu0 0.0
          %6932 = vmatpush1.msra.mxu0 0.0
          %6933 = vmatprep.subr.mxu0 0.0
          %6934 = vmatpush1.msra.mxu0 0.0
          %6935 = vmatprep.subr.mxu0 0.0
          %6936 = vmatpush1.msra.mxu0 0.0
          %6937 = vmatprep.subr.mxu0 0.0
          %6938 = vmatpush1.msra.mxu0 0.0
          %6939 = vmatprep.subr.mxu0 0.0
          %6940 = vmatpush1.msra.mxu0 0.0
          %6941 = vmatprep.subr.mxu0 0.0
          %6942 = vmatpush1.msra.mxu0 0.0
          %6943 = vmatprep.subr.mxu0 0.0
          %6944 = vmatpush1.msra.mxu0 0.0
          %6945 = vmatprep.subr.mxu0 0.0
          %6946 = vmatpush1.msra.mxu0 0.0
          %6947 = vmatprep.subr.mxu0 0.0
          %6948 = vmatpush1.msra.mxu0 0.0
          %6949 = vmatprep.subr.mxu0 0.0
          %6950 = vmatpush1.msra.mxu0 0.0
          %6951 = vmatprep.subr.mxu0 0.0
          %6952 = vmatpush1.msra.mxu0 0.0
          %6953 = vmatprep.subr.mxu0 0.0
          %6954 = vmatpush1.msra.mxu0 0.0
          %6955 = vmatprep.subr.mxu0 0.0
          %6956 = vmatpush1.msra.mxu0 0.0
          %6957 = vmatprep.subr.mxu0 0.0
          %6958 = vmatpush1.msra.mxu0 0.0
          %6959 = vmatprep.subr.mxu0 0.0
          %6960 = vmatpush1.msra.mxu0 0.0
          %6961 = vmatprep.subr.mxu0 0.0
          %6962 = vmatpush1.msra.mxu0 0.0
          %6963 = vmatprep.subr.mxu0 0.0
          %6964 = vmatpush1.msra.mxu0 0.0
          %6965 = vmatprep.subr.mxu0 0.0
          %6966 = vmatpush1.msra.mxu0 0.0
          %6967 = vmatprep.subr.mxu0 0.0
          %6968 = vmatpush1.msra.mxu0 0.0
          %6969 = vmatprep.subr.mxu0 0.0
          %6970 = vmatpush1.msra.mxu0 0.0
          %6971 = vmatprep.subr.mxu0 0.0
          %6972 = vmatpush1.msra.mxu0 0.0
          %6973 = vmatprep.subr.mxu0 0.0
          %6974 = vmatpush1.msra.mxu0 0.0
          %6975 = vmatprep.subr.mxu0 0.0
          %6976 = vmatpush1.msra.mxu0 0.0
          %6977 = vmatprep.subr.mxu0 0.0
          %6978 = vmatpush1.msra.mxu0 0.0
          %6979 = vmatprep.subr.mxu0 0.0
          %6980 = vmatpush1.msra.mxu0 0.0
          %6981 = vmatprep.subr.mxu0 0.0
          %6982 = vmatpush1.msra.mxu0 0.0
          %6983 = vmatprep.subr.mxu0 0.0
          %6984 = vmatpush1.msra.mxu0 0.0
          %6985 = vmatprep.subr.mxu0 0.0
          %6986 = vmatpush1.msra.mxu0 0.0
          %6987 = vmatprep.mubr.f32.mxu0 0.0
          %6988 = vmatmul.mubr.f32.gmra.mrb[0].mxu0 %v6891
          %v6989 = vpop.f32.mrb[0].mxu0
          %v6990 = vadd.f32 0.0, %v6989
          %v6991 = vpop.f32.mrb[0].mxu0
          %6992 = vmatprep.mubr.f32.mxu0 0.0
          %6993 = vmatmul.mubr.f32.gmra.mrb[0].mxu0 %v6893
          %v6994 = vpop.f32.mrb[0].mxu0
          %v6995 = vadd.f32 0.0, %v6994
          %v6996 = vpop.f32.mrb[0].mxu0
          %6997 = vmatprep.mubr.f32.mxu0 0.0
          %6998 = vmatmul.mubr.f32.gmra.mrb[0].mxu0 %v6895
          %v6999 = vpop.f32.mrb[0].mxu0
          %v7000 = vadd.f32 0.0, %v6999
          %v7001 = vpop.f32.mrb[0].mxu0
          %7002 = vmatprep.mubr.f32.mxu0 0.0
          %7003 = vmatmul.mubr.f32.gmra.mrb[0].mxu0 %v6897
          %v7004 = vpop.f32.mrb[0].mxu0
          %v7005 = vadd.f32 0.0, %v7004
          %v7006 = vpop.f32.mrb[0].mxu0
          %7007 = vmatprep.mubr.f32.mxu0 0.0
          %7008 = vmatmul.mubr.f32.gmra.mrb[0].mxu0 %v6899
          %v7009 = vpop.f32.mrb[0].mxu0
          %v7010 = vadd.f32 0.0, %v7009
          %v7011 = vpop.f32.mrb[0].mxu0
          %7012 = vmatprep.mubr.f32.mxu0 0.0
          %7013 = vmatmul.mubr.f32.gmra.mrb[0].mxu0 %v6901
          %v7014 = vpop.f32.mrb[0].mxu0
          %v7015 = vadd.f32 0.0, %v7014
          %v7016 = vpop.f32.mrb[0].mxu0
          %7017 = vmatprep.mubr.f32.mxu0 0.0
          %7018 = vmatmul.mubr.f32.gmra.mrb[0].mxu0 %v6903
          %v7019 = vpop.f32.mrb[0].mxu0
          %v7020 = vadd.f32 0.0, %v7019
          %v7021 = vpop.f32.mrb[0].mxu0
          %7022 = vmatprep.mubr.f32.mxu0 0.0
          %7023 = vmatmul.mubr.f32.gmra.mrb[0].mxu0 %v6905
          %v7024 = vpop.f32.mrb[0].mxu0
          %v7025 = vadd.f32 0.0, %v7024
          %v7026 = vpop.f32.mrb[0].mxu0
          %7027 = vmatprep.mubr.f32.mxu0 0.0
          %7028 = vmatmul.mubr.f32.gmra.mrb[0].mxu0 %v6907
          %v7029 = vpop.f32.mrb[0].mxu0
          %v7030 = vadd.f32 0.0, %v7029
          %v7031 = vpop.f32.mrb[0].mxu0
          %7032 = vmatprep.mubr.f32.mxu0 0.0
          %7033 = vmatmul.mubr.f32.gmra.mrb[0].mxu0 %v6909
          %v7034 = vpop.f32.mrb[0].mxu0
          %v7035 = vadd.f32 0.0, %v7034
          %v7036 = vpop.f32.mrb[0].mxu0
          %7037 = vmatprep.mubr.f32.mxu0 0.0
          %7038 = vmatmul.mubr.f32.gmra.mrb[0].mxu0 %v6911
          %v7039 = vpop.f32.mrb[0].mxu0
          %v7040 = vadd.f32 0.0, %v7039
          %v7041 = vpop.f32.mrb[0].mxu0
          %7042 = vmatprep.mubr.f32.mxu0 0.0
          %7043 = vmatmul.mubr.f32.gmra.mrb[0].mxu0 %v6913
          %v7044 = vpop.f32.mrb[0].mxu0
          %v7045 = vadd.f32 0.0, %v7044
          %v7046 = vpop.f32.mrb[0].mxu0
          %7047 = vmatprep.mubr.f32.mxu0 0.0
          %7048 = vmatmul.mubr.f32.gmra.mrb[0].mxu0 %v6915
          %v7049 = vpop.f32.mrb[0].mxu0
          %v7050 = vadd.f32 0.0, %v7049
          %v7051 = vpop.f32.mrb[0].mxu0
          %7052 = vmatprep.mubr.f32.mxu0 0.0
          %7053 = vmatmul.mubr.f32.gmra.mrb[0].mxu0 %v6917
          %v7054 = vpop.f32.mrb[0].mxu0
          %v7055 = vadd.f32 0.0, %v7054
          %v7056 = vpop.f32.mrb[0].mxu0
          %7057 = vmatprep.mubr.f32.mxu0 0.0
          %7058 = vmatmul.mubr.f32.gmra.mrb[0].mxu0 %v6919
          %v7059 = vpop.f32.mrb[0].mxu0
          %v7060 = vadd.f32 0.0, %v7059
          %v7061 = vpop.f32.mrb[0].mxu0
          %7062 = vmatprep.mubr.f32.mxu0 0.0
          %7063 = vmatmul.mubr.f32.gmra.mrb[0].mxu0 %v6921
          %v7064 = vpop.f32.mrb[0].mxu0
          %v7065 = vadd.f32 0.0, %v7064
          %v7066 = vpop.f32.mrb[0].mxu0
          %7067 = vdwg.mxu0
          %v7068 = vadd.f32 %v6571, %v6990
          %v7069 = vadd.f32 %v6572, %v6995
          %v7070 = vadd.f32 %v6573, %v7000
          %v7071 = vadd.f32 %v6574, %v7005
          %v7072 = vadd.f32 %v6575, %v7010
          %v7073 = vadd.f32 %v6576, %v7015
          %v7074 = vadd.f32 %v6577, %v7020
          %v7075 = vadd.f32 %v6578, %v7025
          %v7076 = vadd.f32 %v6579, %v7030
          %v7077 = vadd.f32 %v6580, %v7035
          %v7078 = vadd.f32 %v6581, %v7040
          %v7079 = vadd.f32 %v6582, %v7045
          %v7080 = vadd.f32 %v6583, %v7050
          %v7081 = vadd.f32 %v6584, %v7055
          %v7082 = vadd.f32 %v6585, %v7060
          %v7083 = vadd.f32 %v6586, %v7065
          %7084 = vrot.lane.b32.xlu0 %v4678, 5
          %v7085 = vpop.permute.xlu0 %7084
          %7086 = vrot.lane.b32.xlu0 %v4679, 5
          %v7087 = vpop.permute.xlu0 %7086
          %7088 = vrot.lane.b32.xlu0 %v4680, 5
          %v7089 = vpop.permute.xlu0 %7088
          %7090 = vrot.lane.b32.xlu0 %v4681, 5
          %v7091 = vpop.permute.xlu0 %7090
          %7092 = vrot.lane.b32.xlu0 %v4682, 5
          %v7093 = vpop.permute.xlu0 %7092
          %7094 = vrot.lane.b32.xlu0 %v4683, 5
          %v7095 = vpop.permute.xlu0 %7094
          %7096 = vrot.lane.b32.xlu0 %v4684, 5
          %v7097 = vpop.permute.xlu0 %7096
          %7098 = vrot.lane.b32.xlu0 %v4685, 5
          %v7099 = vpop.permute.xlu0 %7098
          %7100 = vrot.lane.b32.xlu0 %v4686, 5
          %v7101 = vpop.permute.xlu0 %7100
          %7102 = vrot.lane.b32.xlu0 %v4687, 5
          %v7103 = vpop.permute.xlu0 %7102
          %7104 = vrot.lane.b32.xlu0 %v4688, 5
          %v7105 = vpop.permute.xlu0 %7104
          %7106 = vrot.lane.b32.xlu0 %v4689, 5
          %v7107 = vpop.permute.xlu0 %7106
          %7108 = vrot.lane.b32.xlu0 %v4690, 5
          %v7109 = vpop.permute.xlu0 %7108
          %7110 = vrot.lane.b32.xlu0 %v4691, 5
          %v7111 = vpop.permute.xlu0 %7110
          %7112 = vrot.lane.b32.xlu0 %v4692, 5
          %v7113 = vpop.permute.xlu0 %7112
          %7114 = vrot.lane.b32.xlu0 %v4693, 5
          %v7115 = vpop.permute.xlu0 %7114
          %v7132 = vadd.f32 %v4574, %v7085
          %v7133 = vadd.f32 %v4575, %v7087
          %v7134 = vadd.f32 %v4576, %v7089
          %v7135 = vadd.f32 %v4577, %v7091
          %v7136 = vadd.f32 %v4578, %v7093
          %v7137 = vadd.f32 %v4579, %v7095
          %v7138 = vadd.f32 %v4580, %v7097
          %v7139 = vadd.f32 %v4581, %v7099
          %v7140 = vadd.f32 %v4582, %v7101
          %v7141 = vadd.f32 %v4583, %v7103
          %v7142 = vadd.f32 %v4584, %v7105
          %v7143 = vadd.f32 %v4585, %v7107
          %v7144 = vadd.f32 %v4586, %v7109
          %v7145 = vadd.f32 %v4587, %v7111
          %v7146 = vadd.f32 %v4588, %v7113
          %v7147 = vadd.f32 %v4589, %v7115
          %7148 = vrot.lane.b32.xlu0 %v4526, 53
          %v7149 = vpop.permute.xlu0 %7148
          %7150 = vrot.lane.b32.xlu0 %v4527, 53
          %v7151 = vpop.permute.xlu0 %7150
          %7152 = vrot.lane.b32.xlu0 %v4528, 53
          %v7153 = vpop.permute.xlu0 %7152
          %7154 = vrot.lane.b32.xlu0 %v4529, 53
          %v7155 = vpop.permute.xlu0 %7154
          %7156 = vrot.lane.b32.xlu0 %v4530, 53
          %v7157 = vpop.permute.xlu0 %7156
          %7158 = vrot.lane.b32.xlu0 %v4531, 53
          %v7159 = vpop.permute.xlu0 %7158
          %7160 = vrot.lane.b32.xlu0 %v4532, 53
          %v7161 = vpop.permute.xlu0 %7160
          %7162 = vrot.lane.b32.xlu0 %v4533, 53
          %v7163 = vpop.permute.xlu0 %7162
          %7164 = vrot.lane.b32.xlu0 %v4534, 53
          %v7165 = vpop.permute.xlu0 %7164
          %7166 = vrot.lane.b32.xlu0 %v4535, 53
          %v7167 = vpop.permute.xlu0 %7166
          %7168 = vrot.lane.b32.xlu0 %v4536, 53
          %v7169 = vpop.permute.xlu0 %7168
          %7170 = vrot.lane.b32.xlu0 %v4537, 53
          %v7171 = vpop.permute.xlu0 %7170
          %7172 = vrot.lane.b32.xlu0 %v4538, 53
          %v7173 = vpop.permute.xlu0 %7172
          %7174 = vrot.lane.b32.xlu0 %v4539, 53
          %v7175 = vpop.permute.xlu0 %7174
          %7176 = vrot.lane.b32.xlu0 %v4540, 53
          %v7177 = vpop.permute.xlu0 %7176
          %7178 = vrot.lane.b32.xlu0 %v4541, 53
          %v7179 = vpop.permute.xlu0 %7178
          %v7196 = vadd.f32 %v4574, %v7149
          %v7197 = vadd.f32 %v4575, %v7151
          %v7198 = vadd.f32 %v4576, %v7153
          %v7199 = vadd.f32 %v4577, %v7155
          %v7200 = vadd.f32 %v4578, %v7157
          %v7201 = vadd.f32 %v4579, %v7159
          %v7202 = vadd.f32 %v4580, %v7161
          %v7203 = vadd.f32 %v4581, %v7163
          %v7204 = vadd.f32 %v4582, %v7165
          %v7205 = vadd.f32 %v4583, %v7167
          %v7206 = vadd.f32 %v4584, %v7169
          %v7207 = vadd.f32 %v4585, %v7171
          %v7208 = vadd.f32 %v4586, %v7173
          %v7209 = vadd.f32 %v4587, %v7175
          %v7210 = vadd.f32 %v4588, %v7177
          %v7211 = vadd.f32 %v4589, %v7179
          %v7212 = vadd.f32 %v7196, 1e-06
          %v7213 = vadd.f32 %v7197, 1e-06
          %v7214 = vadd.f32 %v7198, 1e-06
          %v7215 = vadd.f32 %v7199, 1e-06
          %v7216 = vadd.f32 %v7200, 1e-06
          %v7217 = vadd.f32 %v7201, 1e-06
          %v7218 = vadd.f32 %v7202, 1e-06
          %v7219 = vadd.f32 %v7203, 1e-06
          %v7220 = vadd.f32 %v7204, 1e-06
          %v7221 = vadd.f32 %v7205, 1e-06
          %v7222 = vadd.f32 %v7206, 1e-06
          %v7223 = vadd.f32 %v7207, 1e-06
          %v7224 = vadd.f32 %v7208, 1e-06
          %v7225 = vadd.f32 %v7209, 1e-06
          %v7226 = vadd.f32 %v7210, 1e-06
          %v7227 = vadd.f32 %v7211, 1e-06
          %v7228 = vrcp.pop %v7212
          %v7229 = vrcp.pop %v7213
          %v7230 = vrcp.pop %v7214
          %v7231 = vrcp.pop %v7215
          %v7232 = vrcp.pop %v7216
          %v7233 = vrcp.pop %v7217
          %v7234 = vrcp.pop %v7218
          %v7235 = vrcp.pop %v7219
          %v7236 = vrcp.pop %v7220
          %v7237 = vrcp.pop %v7221
          %v7238 = vrcp.pop %v7222
          %v7239 = vrcp.pop %v7223
          %v7240 = vrcp.pop %v7224
          %v7241 = vrcp.pop %v7225
          %v7242 = vrcp.pop %v7226
          %v7243 = vrcp.pop %v7227
          %7245 = vset.pattern.permute.xlu0 53
          %7246 = vperm.xlu0 %7245, %v7228
          %v7247 = vpop.permute.xlu0 %7246
          %7250 = vset.pattern.permute.xlu0 53
          %7251 = vperm.xlu0 %7250, %v7229
          %v7252 = vpop.permute.xlu0 %7251
          %7255 = vset.pattern.permute.xlu0 53
          %7256 = vperm.xlu0 %7255, %v7230
          %v7257 = vpop.permute.xlu0 %7256
          %7260 = vset.pattern.permute.xlu0 53
          %7261 = vperm.xlu0 %7260, %v7231
          %v7262 = vpop.permute.xlu0 %7261
          %7265 = vset.pattern.permute.xlu0 53
          %7266 = vperm.xlu0 %7265, %v7232
          %v7267 = vpop.permute.xlu0 %7266
          %7270 = vset.pattern.permute.xlu0 53
          %7271 = vperm.xlu0 %7270, %v7233
          %v7272 = vpop.permute.xlu0 %7271
          %7275 = vset.pattern.permute.xlu0 53
          %7276 = vperm.xlu0 %7275, %v7234
          %v7277 = vpop.permute.xlu0 %7276
          %7280 = vset.pattern.permute.xlu0 53
          %7281 = vperm.xlu0 %7280, %v7235
          %v7282 = vpop.permute.xlu0 %7281
          %7285 = vset.pattern.permute.xlu0 53
          %7286 = vperm.xlu0 %7285, %v7236
          %v7287 = vpop.permute.xlu0 %7286
          %7290 = vset.pattern.permute.xlu0 53
          %7291 = vperm.xlu0 %7290, %v7237
          %v7292 = vpop.permute.xlu0 %7291
          %7295 = vset.pattern.permute.xlu0 53
          %7296 = vperm.xlu0 %7295, %v7238
          %v7297 = vpop.permute.xlu0 %7296
          %7300 = vset.pattern.permute.xlu0 53
          %7301 = vperm.xlu0 %7300, %v7239
          %v7302 = vpop.permute.xlu0 %7301
          %7305 = vset.pattern.permute.xlu0 53
          %7306 = vperm.xlu0 %7305, %v7240
          %v7307 = vpop.permute.xlu0 %7306
          %7310 = vset.pattern.permute.xlu0 53
          %7311 = vperm.xlu0 %7310, %v7241
          %v7312 = vpop.permute.xlu0 %7311
          %7315 = vset.pattern.permute.xlu0 53
          %7316 = vperm.xlu0 %7315, %v7242
          %v7317 = vpop.permute.xlu0 %7316
          %7320 = vset.pattern.permute.xlu0 53
          %7321 = vperm.xlu0 %7320, %v7243
          %v7322 = vpop.permute.xlu0 %7321
          %v7324 = vmul.f32 %v7132, %v7247
          %v7325 = vmul.f32 %v7133, %v7252
          %v7326 = vmul.f32 %v7134, %v7257
          %v7327 = vmul.f32 %v7135, %v7262
          %v7328 = vmul.f32 %v7136, %v7267
          %v7329 = vmul.f32 %v7137, %v7272
          %v7330 = vmul.f32 %v7138, %v7277
          %v7331 = vmul.f32 %v7139, %v7282
          %v7332 = vmul.f32 %v7140, %v7287
          %v7333 = vmul.f32 %v7141, %v7292
          %v7334 = vmul.f32 %v7142, %v7297
          %v7335 = vmul.f32 %v7143, %v7302
          %v7336 = vmul.f32 %v7144, %v7307
          %v7337 = vmul.f32 %v7145, %v7312
          %v7338 = vmul.f32 %v7146, %v7317
          %v7339 = vmul.f32 %v7147, %v7322
          %7356 = vrot.lane.b32.xlu0 %v7324, 83
          %v7357 = vpop.permute.xlu0 %7356
          %7358 = vrot.lane.b32.xlu0 %v7325, 83
          %v7359 = vpop.permute.xlu0 %7358
          %7360 = vrot.lane.b32.xlu0 %v7326, 83
          %v7361 = vpop.permute.xlu0 %7360
          %7362 = vrot.lane.b32.xlu0 %v7327, 83
          %v7363 = vpop.permute.xlu0 %7362
          %7364 = vrot.lane.b32.xlu0 %v7328, 83
          %v7365 = vpop.permute.xlu0 %7364
          %7366 = vrot.lane.b32.xlu0 %v7329, 83
          %v7367 = vpop.permute.xlu0 %7366
          %7368 = vrot.lane.b32.xlu0 %v7330, 83
          %v7369 = vpop.permute.xlu0 %7368
          %7370 = vrot.lane.b32.xlu0 %v7331, 83
          %v7371 = vpop.permute.xlu0 %7370
          %7372 = vrot.lane.b32.xlu0 %v7332, 83
          %v7373 = vpop.permute.xlu0 %7372
          %7374 = vrot.lane.b32.xlu0 %v7333, 83
          %v7375 = vpop.permute.xlu0 %7374
          %7376 = vrot.lane.b32.xlu0 %v7334, 83
          %v7377 = vpop.permute.xlu0 %7376
          %7378 = vrot.lane.b32.xlu0 %v7335, 83
          %v7379 = vpop.permute.xlu0 %7378
          %7380 = vrot.lane.b32.xlu0 %v7336, 83
          %v7381 = vpop.permute.xlu0 %7380
          %7382 = vrot.lane.b32.xlu0 %v7337, 83
          %v7383 = vpop.permute.xlu0 %7382
          %7384 = vrot.lane.b32.xlu0 %v7338, 83
          %v7385 = vpop.permute.xlu0 %7384
          %7386 = vrot.lane.b32.xlu0 %v7339, 83
          %v7387 = vpop.permute.xlu0 %7386
          %v7388 = vsel %vm5222, %v7357, 0
          %v7390 = vsel %vm5222, %v7359, 0
          %v7392 = vsel %vm5222, %v7361, 0
          %v7394 = vsel %vm5222, %v7363, 0
          %v7396 = vsel %vm5222, %v7365, 0
          %v7398 = vsel %vm5222, %v7367, 0
          %v7400 = vsel %vm5222, %v7369, 0
          %v7402 = vsel %vm5222, %v7371, 0
          %v7404 = vsel %vm5222, %v7373, 0
          %v7406 = vsel %vm5222, %v7375, 0
          %v7408 = vsel %vm5222, %v7377, 0
          %v7410 = vsel %vm5222, %v7379, 0
          %v7412 = vsel %vm5222, %v7381, 0
          %v7414 = vsel %vm5222, %v7383, 0
          %v7416 = vsel %vm5222, %v7385, 0
          %v7418 = vsel %vm5222, %v7387, 0
          %7420 = vmatprep.subr.mxu0 0.0
          %7421 = vmatpush1.msra.mxu0 %v4595
          %7422 = vmatprep.subr.mxu0 0.0
          %7423 = vmatpush1.msra.mxu0 0.0
          %7424 = vmatprep.subr.mxu0 0.0
          %7425 = vmatpush1.msra.mxu0 0.0
          %7426 = vmatprep.subr.mxu0 0.0
          %7427 = vmatpush1.msra.mxu0 0.0
          %7428 = vmatprep.subr.mxu0 0.0
          %7429 = vmatpush1.msra.mxu0 0.0
          %7430 = vmatprep.subr.mxu0 0.0
          %7431 = vmatpush1.msra.mxu0 0.0
          %7432 = vmatprep.subr.mxu0 0.0
          %7433 = vmatpush1.msra.mxu0 0.0
          %7434 = vmatprep.subr.mxu0 0.0
          %7435 = vmatpush1.msra.mxu0 0.0
          %7436 = vmatprep.subr.mxu0 0.0
          %7437 = vmatpush1.msra.mxu0 0.0
          %7438 = vmatprep.subr.mxu0 0.0
          %7439 = vmatpush1.msra.mxu0 0.0
          %7440 = vmatprep.subr.mxu0 0.0
          %7441 = vmatpush1.msra.mxu0 0.0
          %7442 = vmatprep.subr.mxu0 0.0
          %7443 = vmatpush1.msra.mxu0 0.0
          %7444 = vmatprep.subr.mxu0 0.0
          %7445 = vmatpush1.msra.mxu0 0.0
          %7446 = vmatprep.subr.mxu0 0.0
          %7447 = vmatpush1.msra.mxu0 0.0
          %7448 = vmatprep.subr.mxu0 0.0
          %7449 = vmatpush1.msra.mxu0 0.0
          %7450 = vmatprep.subr.mxu0 0.0
          %7451 = vmatpush1.msra.mxu0 0.0
          %7452 = vmatprep.subr.mxu0 0.0
          %7453 = vmatpush1.msra.mxu0 0.0
          %7454 = vmatprep.subr.mxu0 0.0
          %7455 = vmatpush1.msra.mxu0 0.0
          %7456 = vmatprep.subr.mxu0 0.0
          %7457 = vmatpush1.msra.mxu0 0.0
          %7458 = vmatprep.subr.mxu0 0.0
          %7459 = vmatpush1.msra.mxu0 0.0
          %7460 = vmatprep.subr.mxu0 0.0
          %7461 = vmatpush1.msra.mxu0 0.0
          %7462 = vmatprep.subr.mxu0 0.0
          %7463 = vmatpush1.msra.mxu0 0.0
          %7464 = vmatprep.subr.mxu0 0.0
          %7465 = vmatpush1.msra.mxu0 0.0
          %7466 = vmatprep.subr.mxu0 0.0
          %7467 = vmatpush1.msra.mxu0 0.0
          %7468 = vmatprep.subr.mxu0 0.0
          %7469 = vmatpush1.msra.mxu0 0.0
          %7470 = vmatprep.subr.mxu0 0.0
          %7471 = vmatpush1.msra.mxu0 0.0
          %7472 = vmatprep.subr.mxu0 0.0
          %7473 = vmatpush1.msra.mxu0 0.0
          %7474 = vmatprep.subr.mxu0 0.0
          %7475 = vmatpush1.msra.mxu0 0.0
          %7476 = vmatprep.subr.mxu0 0.0
          %7477 = vmatpush1.msra.mxu0 0.0
          %7478 = vmatprep.subr.mxu0 0.0
          %7479 = vmatpush1.msra.mxu0 0.0
          %7480 = vmatprep.subr.mxu0 0.0
          %7481 = vmatpush1.msra.mxu0 0.0
          %7482 = vmatprep.subr.mxu0 0.0
          %7483 = vmatpush1.msra.mxu0 0.0
          %7484 = vmatprep.mubr.f32.mxu0 0.0
          %7485 = vmatmul.mubr.f32.gmra.mrb[0].mxu0 %v7388
          %v7486 = vpop.f32.mrb[0].mxu0
          %v7487 = vadd.f32 0.0, %v7486
          %v7488 = vpop.f32.mrb[0].mxu0
          %7489 = vmatprep.mubr.f32.mxu0 0.0
          %7490 = vmatmul.mubr.f32.gmra.mrb[0].mxu0 %v7390
          %v7491 = vpop.f32.mrb[0].mxu0
          %v7492 = vadd.f32 0.0, %v7491
          %v7493 = vpop.f32.mrb[0].mxu0
          %7494 = vmatprep.mubr.f32.mxu0 0.0
          %7495 = vmatmul.mubr.f32.gmra.mrb[0].mxu0 %v7392
          %v7496 = vpop.f32.mrb[0].mxu0
          %v7497 = vadd.f32 0.0, %v7496
          %v7498 = vpop.f32.mrb[0].mxu0
          %7499 = vmatprep.mubr.f32.mxu0 0.0
          %7500 = vmatmul.mubr.f32.gmra.mrb[0].mxu0 %v7394
          %v7501 = vpop.f32.mrb[0].mxu0
          %v7502 = vadd.f32 0.0, %v7501
          %v7503 = vpop.f32.mrb[0].mxu0
          %7504 = vmatprep.mubr.f32.mxu0 0.0
          %7505 = vmatmul.mubr.f32.gmra.mrb[0].mxu0 %v7396
          %v7506 = vpop.f32.mrb[0].mxu0
          %v7507 = vadd.f32 0.0, %v7506
          %v7508 = vpop.f32.mrb[0].mxu0
          %7509 = vmatprep.mubr.f32.mxu0 0.0
          %7510 = vmatmul.mubr.f32.gmra.mrb[0].mxu0 %v7398
          %v7511 = vpop.f32.mrb[0].mxu0
          %v7512 = vadd.f32 0.0, %v7511
          %v7513 = vpop.f32.mrb[0].mxu0
          %7514 = vmatprep.mubr.f32.mxu0 0.0
          %7515 = vmatmul.mubr.f32.gmra.mrb[0].mxu0 %v7400
          %v7516 = vpop.f32.mrb[0].mxu0
          %v7517 = vadd.f32 0.0, %v7516
          %v7518 = vpop.f32.mrb[0].mxu0
          %7519 = vmatprep.mubr.f32.mxu0 0.0
          %7520 = vmatmul.mubr.f32.gmra.mrb[0].mxu0 %v7402
          %v7521 = vpop.f32.mrb[0].mxu0
          %v7522 = vadd.f32 0.0, %v7521
          %v7523 = vpop.f32.mrb[0].mxu0
          %7524 = vmatprep.mubr.f32.mxu0 0.0
          %7525 = vmatmul.mubr.f32.gmra.mrb[0].mxu0 %v7404
          %v7526 = vpop.f32.mrb[0].mxu0
          %v7527 = vadd.f32 0.0, %v7526
          %v7528 = vpop.f32.mrb[0].mxu0
          %7529 = vmatprep.mubr.f32.mxu0 0.0
          %7530 = vmatmul.mubr.f32.gmra.mrb[0].mxu0 %v7406
          %v7531 = vpop.f32.mrb[0].mxu0
          %v7532 = vadd.f32 0.0, %v7531
          %v7533 = vpop.f32.mrb[0].mxu0
          %7534 = vmatprep.mubr.f32.mxu0 0.0
          %7535 = vmatmul.mubr.f32.gmra.mrb[0].mxu0 %v7408
          %v7536 = vpop.f32.mrb[0].mxu0
          %v7537 = vadd.f32 0.0, %v7536
          %v7538 = vpop.f32.mrb[0].mxu0
          %7539 = vmatprep.mubr.f32.mxu0 0.0
          %7540 = vmatmul.mubr.f32.gmra.mrb[0].mxu0 %v7410
          %v7541 = vpop.f32.mrb[0].mxu0
          %v7542 = vadd.f32 0.0, %v7541
          %v7543 = vpop.f32.mrb[0].mxu0
          %7544 = vmatprep.mubr.f32.mxu0 0.0
          %7545 = vmatmul.mubr.f32.gmra.mrb[0].mxu0 %v7412
          %v7546 = vpop.f32.mrb[0].mxu0
          %v7547 = vadd.f32 0.0, %v7546
          %v7548 = vpop.f32.mrb[0].mxu0
          %7549 = vmatprep.mubr.f32.mxu0 0.0
          %7550 = vmatmul.mubr.f32.gmra.mrb[0].mxu0 %v7414
          %v7551 = vpop.f32.mrb[0].mxu0
          %v7552 = vadd.f32 0.0, %v7551
          %v7553 = vpop.f32.mrb[0].mxu0
          %7554 = vmatprep.mubr.f32.mxu0 0.0
          %7555 = vmatmul.mubr.f32.gmra.mrb[0].mxu0 %v7416
          %v7556 = vpop.f32.mrb[0].mxu0
          %v7557 = vadd.f32 0.0, %v7556
          %v7558 = vpop.f32.mrb[0].mxu0
          %7559 = vmatprep.mubr.f32.mxu0 0.0
          %7560 = vmatmul.mubr.f32.gmra.mrb[0].mxu0 %v7418
          %v7561 = vpop.f32.mrb[0].mxu0
          %v7562 = vadd.f32 0.0, %v7561
          %v7563 = vpop.f32.mrb[0].mxu0
          %7564 = vdwg.mxu0
          %v7565 = vadd.f32 %v7068, %v7487
          %v7566 = vadd.f32 %v7069, %v7492
          %v7567 = vadd.f32 %v7070, %v7497
          %v7568 = vadd.f32 %v7071, %v7502
          %v7569 = vadd.f32 %v7072, %v7507
          %v7570 = vadd.f32 %v7073, %v7512
          %v7571 = vadd.f32 %v7074, %v7517
          %v7572 = vadd.f32 %v7075, %v7522
          %v7573 = vadd.f32 %v7076, %v7527
          %v7574 = vadd.f32 %v7077, %v7532
          %v7575 = vadd.f32 %v7078, %v7537
          %v7576 = vadd.f32 %v7079, %v7542
          %v7577 = vadd.f32 %v7080, %v7547
          %v7578 = vadd.f32 %v7081, %v7552
          %v7579 = vadd.f32 %v7082, %v7557
          %v7580 = vadd.f32 %v7083, %v7562
          %7581 = vrot.lane.b32.xlu0 %v4678, 6
          %v7582 = vpop.permute.xlu0 %7581
          %7583 = vrot.lane.b32.xlu0 %v4679, 6
          %v7584 = vpop.permute.xlu0 %7583
          %7585 = vrot.lane.b32.xlu0 %v4680, 6
          %v7586 = vpop.permute.xlu0 %7585
          %7587 = vrot.lane.b32.xlu0 %v4681, 6
          %v7588 = vpop.permute.xlu0 %7587
          %7589 = vrot.lane.b32.xlu0 %v4682, 6
          %v7590 = vpop.permute.xlu0 %7589
          %7591 = vrot.lane.b32.xlu0 %v4683, 6
          %v7592 = vpop.permute.xlu0 %7591
          %7593 = vrot.lane.b32.xlu0 %v4684, 6
          %v7594 = vpop.permute.xlu0 %7593
          %7595 = vrot.lane.b32.xlu0 %v4685, 6
          %v7596 = vpop.permute.xlu0 %7595
          %7597 = vrot.lane.b32.xlu0 %v4686, 6
          %v7598 = vpop.permute.xlu0 %7597
          %7599 = vrot.lane.b32.xlu0 %v4687, 6
          %v7600 = vpop.permute.xlu0 %7599
          %7601 = vrot.lane.b32.xlu0 %v4688, 6
          %v7602 = vpop.permute.xlu0 %7601
          %7603 = vrot.lane.b32.xlu0 %v4689, 6
          %v7604 = vpop.permute.xlu0 %7603
          %7605 = vrot.lane.b32.xlu0 %v4690, 6
          %v7606 = vpop.permute.xlu0 %7605
          %7607 = vrot.lane.b32.xlu0 %v4691, 6
          %v7608 = vpop.permute.xlu0 %7607
          %7609 = vrot.lane.b32.xlu0 %v4692, 6
          %v7610 = vpop.permute.xlu0 %7609
          %7611 = vrot.lane.b32.xlu0 %v4693, 6
          %v7612 = vpop.permute.xlu0 %7611
          %v7629 = vadd.f32 %v4574, %v7582
          %v7630 = vadd.f32 %v4575, %v7584
          %v7631 = vadd.f32 %v4576, %v7586
          %v7632 = vadd.f32 %v4577, %v7588
          %v7633 = vadd.f32 %v4578, %v7590
          %v7634 = vadd.f32 %v4579, %v7592
          %v7635 = vadd.f32 %v4580, %v7594
          %v7636 = vadd.f32 %v4581, %v7596
          %v7637 = vadd.f32 %v4582, %v7598
          %v7638 = vadd.f32 %v4583, %v7600
          %v7639 = vadd.f32 %v4584, %v7602
          %v7640 = vadd.f32 %v4585, %v7604
          %v7641 = vadd.f32 %v4586, %v7606
          %v7642 = vadd.f32 %v4587, %v7608
          %v7643 = vadd.f32 %v4588, %v7610
          %v7644 = vadd.f32 %v4589, %v7612
          %7645 = vrot.lane.b32.xlu0 %v4526, 62
          %v7646 = vpop.permute.xlu0 %7645
          %7647 = vrot.lane.b32.xlu0 %v4527, 62
          %v7648 = vpop.permute.xlu0 %7647
          %7649 = vrot.lane.b32.xlu0 %v4528, 62
          %v7650 = vpop.permute.xlu0 %7649
          %7651 = vrot.lane.b32.xlu0 %v4529, 62
          %v7652 = vpop.permute.xlu0 %7651
          %7653 = vrot.lane.b32.xlu0 %v4530, 62
          %v7654 = vpop.permute.xlu0 %7653
          %7655 = vrot.lane.b32.xlu0 %v4531, 62
          %v7656 = vpop.permute.xlu0 %7655
          %7657 = vrot.lane.b32.xlu0 %v4532, 62
          %v7658 = vpop.permute.xlu0 %7657
          %7659 = vrot.lane.b32.xlu0 %v4533, 62
          %v7660 = vpop.permute.xlu0 %7659
          %7661 = vrot.lane.b32.xlu0 %v4534, 62
          %v7662 = vpop.permute.xlu0 %7661
          %7663 = vrot.lane.b32.xlu0 %v4535, 62
          %v7664 = vpop.permute.xlu0 %7663
          %7665 = vrot.lane.b32.xlu0 %v4536, 62
          %v7666 = vpop.permute.xlu0 %7665
          %7667 = vrot.lane.b32.xlu0 %v4537, 62
          %v7668 = vpop.permute.xlu0 %7667
          %7669 = vrot.lane.b32.xlu0 %v4538, 62
          %v7670 = vpop.permute.xlu0 %7669
          %7671 = vrot.lane.b32.xlu0 %v4539, 62
          %v7672 = vpop.permute.xlu0 %7671
          %7673 = vrot.lane.b32.xlu0 %v4540, 62
          %v7674 = vpop.permute.xlu0 %7673
          %7675 = vrot.lane.b32.xlu0 %v4541, 62
          %v7676 = vpop.permute.xlu0 %7675
          %v7693 = vadd.f32 %v4574, %v7646
          %v7694 = vadd.f32 %v4575, %v7648
          %v7695 = vadd.f32 %v4576, %v7650
          %v7696 = vadd.f32 %v4577, %v7652
          %v7697 = vadd.f32 %v4578, %v7654
          %v7698 = vadd.f32 %v4579, %v7656
          %v7699 = vadd.f32 %v4580, %v7658
          %v7700 = vadd.f32 %v4581, %v7660
          %v7701 = vadd.f32 %v4582, %v7662
          %v7702 = vadd.f32 %v4583, %v7664
          %v7703 = vadd.f32 %v4584, %v7666
          %v7704 = vadd.f32 %v4585, %v7668
          %v7705 = vadd.f32 %v4586, %v7670
          %v7706 = vadd.f32 %v4587, %v7672
          %v7707 = vadd.f32 %v4588, %v7674
          %v7708 = vadd.f32 %v4589, %v7676
          %v7709 = vadd.f32 %v7693, 1e-06
          %v7710 = vadd.f32 %v7694, 1e-06
          %v7711 = vadd.f32 %v7695, 1e-06
          %v7712 = vadd.f32 %v7696, 1e-06
          %v7713 = vadd.f32 %v7697, 1e-06
          %v7714 = vadd.f32 %v7698, 1e-06
          %v7715 = vadd.f32 %v7699, 1e-06
          %v7716 = vadd.f32 %v7700, 1e-06
          %v7717 = vadd.f32 %v7701, 1e-06
          %v7718 = vadd.f32 %v7702, 1e-06
          %v7719 = vadd.f32 %v7703, 1e-06
          %v7720 = vadd.f32 %v7704, 1e-06
          %v7721 = vadd.f32 %v7705, 1e-06
          %v7722 = vadd.f32 %v7706, 1e-06
          %v7723 = vadd.f32 %v7707, 1e-06
          %v7724 = vadd.f32 %v7708, 1e-06
          %v7725 = vrcp.pop %v7709
          %v7726 = vrcp.pop %v7710
          %v7727 = vrcp.pop %v7711
          %v7728 = vrcp.pop %v7712
          %v7729 = vrcp.pop %v7713
          %v7730 = vrcp.pop %v7714
          %v7731 = vrcp.pop %v7715
          %v7732 = vrcp.pop %v7716
          %v7733 = vrcp.pop %v7717
          %v7734 = vrcp.pop %v7718
          %v7735 = vrcp.pop %v7719
          %v7736 = vrcp.pop %v7720
          %v7737 = vrcp.pop %v7721
          %v7738 = vrcp.pop %v7722
          %v7739 = vrcp.pop %v7723
          %v7740 = vrcp.pop %v7724
          %7742 = vset.pattern.permute.xlu0 62
          %7743 = vperm.xlu0 %7742, %v7725
          %v7744 = vpop.permute.xlu0 %7743
          %7747 = vset.pattern.permute.xlu0 62
          %7748 = vperm.xlu0 %7747, %v7726
          %v7749 = vpop.permute.xlu0 %7748
          %7752 = vset.pattern.permute.xlu0 62
          %7753 = vperm.xlu0 %7752, %v7727
          %v7754 = vpop.permute.xlu0 %7753
          %7757 = vset.pattern.permute.xlu0 62
          %7758 = vperm.xlu0 %7757, %v7728
          %v7759 = vpop.permute.xlu0 %7758
          %7762 = vset.pattern.permute.xlu0 62
          %7763 = vperm.xlu0 %7762, %v7729
          %v7764 = vpop.permute.xlu0 %7763
          %7767 = vset.pattern.permute.xlu0 62
          %7768 = vperm.xlu0 %7767, %v7730
          %v7769 = vpop.permute.xlu0 %7768
          %7772 = vset.pattern.permute.xlu0 62
          %7773 = vperm.xlu0 %7772, %v7731
          %v7774 = vpop.permute.xlu0 %7773
          %7777 = vset.pattern.permute.xlu0 62
          %7778 = vperm.xlu0 %7777, %v7732
          %v7779 = vpop.permute.xlu0 %7778
          %7782 = vset.pattern.permute.xlu0 62
          %7783 = vperm.xlu0 %7782, %v7733
          %v7784 = vpop.permute.xlu0 %7783
          %7787 = vset.pattern.permute.xlu0 62
          %7788 = vperm.xlu0 %7787, %v7734
          %v7789 = vpop.permute.xlu0 %7788
          %7792 = vset.pattern.permute.xlu0 62
          %7793 = vperm.xlu0 %7792, %v7735
          %v7794 = vpop.permute.xlu0 %7793
          %7797 = vset.pattern.permute.xlu0 62
          %7798 = vperm.xlu0 %7797, %v7736
          %v7799 = vpop.permute.xlu0 %7798
          %7802 = vset.pattern.permute.xlu0 62
          %7803 = vperm.xlu0 %7802, %v7737
          %v7804 = vpop.permute.xlu0 %7803
          %7807 = vset.pattern.permute.xlu0 62
          %7808 = vperm.xlu0 %7807, %v7738
          %v7809 = vpop.permute.xlu0 %7808
          %7812 = vset.pattern.permute.xlu0 62
          %7813 = vperm.xlu0 %7812, %v7739
          %v7814 = vpop.permute.xlu0 %7813
          %7817 = vset.pattern.permute.xlu0 62
          %7818 = vperm.xlu0 %7817, %v7740
          %v7819 = vpop.permute.xlu0 %7818
          %v7821 = vmul.f32 %v7629, %v7744
          %v7822 = vmul.f32 %v7630, %v7749
          %v7823 = vmul.f32 %v7631, %v7754
          %v7824 = vmul.f32 %v7632, %v7759
          %v7825 = vmul.f32 %v7633, %v7764
          %v7826 = vmul.f32 %v7634, %v7769
          %v7827 = vmul.f32 %v7635, %v7774
          %v7828 = vmul.f32 %v7636, %v7779
          %v7829 = vmul.f32 %v7637, %v7784
          %v7830 = vmul.f32 %v7638, %v7789
          %v7831 = vmul.f32 %v7639, %v7794
          %v7832 = vmul.f32 %v7640, %v7799
          %v7833 = vmul.f32 %v7641, %v7804
          %v7834 = vmul.f32 %v7642, %v7809
          %v7835 = vmul.f32 %v7643, %v7814
          %v7836 = vmul.f32 %v7644, %v7819
          %7853 = vrot.lane.b32.xlu0 %v7821, 74
          %v7854 = vpop.permute.xlu0 %7853
          %7855 = vrot.lane.b32.xlu0 %v7822, 74
          %v7856 = vpop.permute.xlu0 %7855
          %7857 = vrot.lane.b32.xlu0 %v7823, 74
          %v7858 = vpop.permute.xlu0 %7857
          %7859 = vrot.lane.b32.xlu0 %v7824, 74
          %v7860 = vpop.permute.xlu0 %7859
          %7861 = vrot.lane.b32.xlu0 %v7825, 74
          %v7862 = vpop.permute.xlu0 %7861
          %7863 = vrot.lane.b32.xlu0 %v7826, 74
          %v7864 = vpop.permute.xlu0 %7863
          %7865 = vrot.lane.b32.xlu0 %v7827, 74
          %v7866 = vpop.permute.xlu0 %7865
          %7867 = vrot.lane.b32.xlu0 %v7828, 74
          %v7868 = vpop.permute.xlu0 %7867
          %7869 = vrot.lane.b32.xlu0 %v7829, 74
          %v7870 = vpop.permute.xlu0 %7869
          %7871 = vrot.lane.b32.xlu0 %v7830, 74
          %v7872 = vpop.permute.xlu0 %7871
          %7873 = vrot.lane.b32.xlu0 %v7831, 74
          %v7874 = vpop.permute.xlu0 %7873
          %7875 = vrot.lane.b32.xlu0 %v7832, 74
          %v7876 = vpop.permute.xlu0 %7875
          %7877 = vrot.lane.b32.xlu0 %v7833, 74
          %v7878 = vpop.permute.xlu0 %7877
          %7879 = vrot.lane.b32.xlu0 %v7834, 74
          %v7880 = vpop.permute.xlu0 %7879
          %7881 = vrot.lane.b32.xlu0 %v7835, 74
          %v7882 = vpop.permute.xlu0 %7881
          %7883 = vrot.lane.b32.xlu0 %v7836, 74
          %v7884 = vpop.permute.xlu0 %7883
          %v7885 = vsel %vm5222, %v7854, 0
          %v7887 = vsel %vm5222, %v7856, 0
          %v7889 = vsel %vm5222, %v7858, 0
          %v7891 = vsel %vm5222, %v7860, 0
          %v7893 = vsel %vm5222, %v7862, 0
          %v7895 = vsel %vm5222, %v7864, 0
          %v7897 = vsel %vm5222, %v7866, 0
          %v7899 = vsel %vm5222, %v7868, 0
          %v7901 = vsel %vm5222, %v7870, 0
          %v7903 = vsel %vm5222, %v7872, 0
          %v7905 = vsel %vm5222, %v7874, 0
          %v7907 = vsel %vm5222, %v7876, 0
          %v7909 = vsel %vm5222, %v7878, 0
          %v7911 = vsel %vm5222, %v7880, 0
          %v7913 = vsel %vm5222, %v7882, 0
          %v7915 = vsel %vm5222, %v7884, 0
          %7917 = vmatprep.subr.mxu0 0.0
          %7918 = vmatpush1.msra.mxu0 %v4596
          %7919 = vmatprep.subr.mxu0 0.0
          %7920 = vmatpush1.msra.mxu0 0.0
          %7921 = vmatprep.subr.mxu0 0.0
          %7922 = vmatpush1.msra.mxu0 0.0
          %7923 = vmatprep.subr.mxu0 0.0
          %7924 = vmatpush1.msra.mxu0 0.0
          %7925 = vmatprep.subr.mxu0 0.0
          %7926 = vmatpush1.msra.mxu0 0.0
          %7927 = vmatprep.subr.mxu0 0.0
          %7928 = vmatpush1.msra.mxu0 0.0
          %7929 = vmatprep.subr.mxu0 0.0
          %7930 = vmatpush1.msra.mxu0 0.0
          %7931 = vmatprep.subr.mxu0 0.0
          %7932 = vmatpush1.msra.mxu0 0.0
          %7933 = vmatprep.subr.mxu0 0.0
          %7934 = vmatpush1.msra.mxu0 0.0
          %7935 = vmatprep.subr.mxu0 0.0
          %7936 = vmatpush1.msra.mxu0 0.0
          %7937 = vmatprep.subr.mxu0 0.0
          %7938 = vmatpush1.msra.mxu0 0.0
          %7939 = vmatprep.subr.mxu0 0.0
          %7940 = vmatpush1.msra.mxu0 0.0
          %7941 = vmatprep.subr.mxu0 0.0
          %7942 = vmatpush1.msra.mxu0 0.0
          %7943 = vmatprep.subr.mxu0 0.0
          %7944 = vmatpush1.msra.mxu0 0.0
          %7945 = vmatprep.subr.mxu0 0.0
          %7946 = vmatpush1.msra.mxu0 0.0
          %7947 = vmatprep.subr.mxu0 0.0
          %7948 = vmatpush1.msra.mxu0 0.0
          %7949 = vmatprep.subr.mxu0 0.0
          %7950 = vmatpush1.msra.mxu0 0.0
          %7951 = vmatprep.subr.mxu0 0.0
          %7952 = vmatpush1.msra.mxu0 0.0
          %7953 = vmatprep.subr.mxu0 0.0
          %7954 = vmatpush1.msra.mxu0 0.0
          %7955 = vmatprep.subr.mxu0 0.0
          %7956 = vmatpush1.msra.mxu0 0.0
          %7957 = vmatprep.subr.mxu0 0.0
          %7958 = vmatpush1.msra.mxu0 0.0
          %7959 = vmatprep.subr.mxu0 0.0
          %7960 = vmatpush1.msra.mxu0 0.0
          %7961 = vmatprep.subr.mxu0 0.0
          %7962 = vmatpush1.msra.mxu0 0.0
          %7963 = vmatprep.subr.mxu0 0.0
          %7964 = vmatpush1.msra.mxu0 0.0
          %7965 = vmatprep.subr.mxu0 0.0
          %7966 = vmatpush1.msra.mxu0 0.0
          %7967 = vmatprep.subr.mxu0 0.0
          %7968 = vmatpush1.msra.mxu0 0.0
          %7969 = vmatprep.subr.mxu0 0.0
          %7970 = vmatpush1.msra.mxu0 0.0
          %7971 = vmatprep.subr.mxu0 0.0
          %7972 = vmatpush1.msra.mxu0 0.0
          %7973 = vmatprep.subr.mxu0 0.0
          %7974 = vmatpush1.msra.mxu0 0.0
          %7975 = vmatprep.subr.mxu0 0.0
          %7976 = vmatpush1.msra.mxu0 0.0
          %7977 = vmatprep.subr.mxu0 0.0
          %7978 = vmatpush1.msra.mxu0 0.0
          %7979 = vmatprep.subr.mxu0 0.0
          %7980 = vmatpush1.msra.mxu0 0.0
          %7981 = vmatprep.mubr.f32.mxu0 0.0
          %7982 = vmatmul.mubr.f32.gmra.mrb[0].mxu0 %v7885
          %v7983 = vpop.f32.mrb[0].mxu0
          %v7984 = vadd.f32 0.0, %v7983
          %v7985 = vpop.f32.mrb[0].mxu0
          %7986 = vmatprep.mubr.f32.mxu0 0.0
          %7987 = vmatmul.mubr.f32.gmra.mrb[0].mxu0 %v7887
          %v7988 = vpop.f32.mrb[0].mxu0
          %v7989 = vadd.f32 0.0, %v7988
          %v7990 = vpop.f32.mrb[0].mxu0
          %7991 = vmatprep.mubr.f32.mxu0 0.0
          %7992 = vmatmul.mubr.f32.gmra.mrb[0].mxu0 %v7889
          %v7993 = vpop.f32.mrb[0].mxu0
          %v7994 = vadd.f32 0.0, %v7993
          %v7995 = vpop.f32.mrb[0].mxu0
          %7996 = vmatprep.mubr.f32.mxu0 0.0
          %7997 = vmatmul.mubr.f32.gmra.mrb[0].mxu0 %v7891
          %v7998 = vpop.f32.mrb[0].mxu0
          %v7999 = vadd.f32 0.0, %v7998
          %v8000 = vpop.f32.mrb[0].mxu0
          %8001 = vmatprep.mubr.f32.mxu0 0.0
          %8002 = vmatmul.mubr.f32.gmra.mrb[0].mxu0 %v7893
          %v8003 = vpop.f32.mrb[0].mxu0
          %v8004 = vadd.f32 0.0, %v8003
          %v8005 = vpop.f32.mrb[0].mxu0
          %8006 = vmatprep.mubr.f32.mxu0 0.0
          %8007 = vmatmul.mubr.f32.gmra.mrb[0].mxu0 %v7895
          %v8008 = vpop.f32.mrb[0].mxu0
          %v8009 = vadd.f32 0.0, %v8008
          %v8010 = vpop.f32.mrb[0].mxu0
          %8011 = vmatprep.mubr.f32.mxu0 0.0
          %8012 = vmatmul.mubr.f32.gmra.mrb[0].mxu0 %v7897
          %v8013 = vpop.f32.mrb[0].mxu0
          %v8014 = vadd.f32 0.0, %v8013
          %v8015 = vpop.f32.mrb[0].mxu0
          %8016 = vmatprep.mubr.f32.mxu0 0.0
          %8017 = vmatmul.mubr.f32.gmra.mrb[0].mxu0 %v7899
          %v8018 = vpop.f32.mrb[0].mxu0
          %v8019 = vadd.f32 0.0, %v8018
          %v8020 = vpop.f32.mrb[0].mxu0
          %8021 = vmatprep.mubr.f32.mxu0 0.0
          %8022 = vmatmul.mubr.f32.gmra.mrb[0].mxu0 %v7901
          %v8023 = vpop.f32.mrb[0].mxu0
          %v8024 = vadd.f32 0.0, %v8023
          %v8025 = vpop.f32.mrb[0].mxu0
          %8026 = vmatprep.mubr.f32.mxu0 0.0
          %8027 = vmatmul.mubr.f32.gmra.mrb[0].mxu0 %v7903
          %v8028 = vpop.f32.mrb[0].mxu0
          %v8029 = vadd.f32 0.0, %v8028
          %v8030 = vpop.f32.mrb[0].mxu0
          %8031 = vmatprep.mubr.f32.mxu0 0.0
          %8032 = vmatmul.mubr.f32.gmra.mrb[0].mxu0 %v7905
          %v8033 = vpop.f32.mrb[0].mxu0
          %v8034 = vadd.f32 0.0, %v8033
          %v8035 = vpop.f32.mrb[0].mxu0
          %8036 = vmatprep.mubr.f32.mxu0 0.0
          %8037 = vmatmul.mubr.f32.gmra.mrb[0].mxu0 %v7907
          %v8038 = vpop.f32.mrb[0].mxu0
          %v8039 = vadd.f32 0.0, %v8038
          %v8040 = vpop.f32.mrb[0].mxu0
          %8041 = vmatprep.mubr.f32.mxu0 0.0
          %8042 = vmatmul.mubr.f32.gmra.mrb[0].mxu0 %v7909
          %v8043 = vpop.f32.mrb[0].mxu0
          %v8044 = vadd.f32 0.0, %v8043
          %v8045 = vpop.f32.mrb[0].mxu0
          %8046 = vmatprep.mubr.f32.mxu0 0.0
          %8047 = vmatmul.mubr.f32.gmra.mrb[0].mxu0 %v7911
          %v8048 = vpop.f32.mrb[0].mxu0
          %v8049 = vadd.f32 0.0, %v8048
          %v8050 = vpop.f32.mrb[0].mxu0
          %8051 = vmatprep.mubr.f32.mxu0 0.0
          %8052 = vmatmul.mubr.f32.gmra.mrb[0].mxu0 %v7913
          %v8053 = vpop.f32.mrb[0].mxu0
          %v8054 = vadd.f32 0.0, %v8053
          %v8055 = vpop.f32.mrb[0].mxu0
          %8056 = vmatprep.mubr.f32.mxu0 0.0
          %8057 = vmatmul.mubr.f32.gmra.mrb[0].mxu0 %v7915
          %v8058 = vpop.f32.mrb[0].mxu0
          %v8059 = vadd.f32 0.0, %v8058
          %v8060 = vpop.f32.mrb[0].mxu0
          %8061 = vdwg.mxu0
          %v8062 = vadd.f32 %v7565, %v7984
          %v8063 = vadd.f32 %v7566, %v7989
          %v8064 = vadd.f32 %v7567, %v7994
          %v8065 = vadd.f32 %v7568, %v7999
          %v8066 = vadd.f32 %v7569, %v8004
          %v8067 = vadd.f32 %v7570, %v8009
          %v8068 = vadd.f32 %v7571, %v8014
          %v8069 = vadd.f32 %v7572, %v8019
          %v8070 = vadd.f32 %v7573, %v8024
          %v8071 = vadd.f32 %v7574, %v8029
          %v8072 = vadd.f32 %v7575, %v8034
          %v8073 = vadd.f32 %v7576, %v8039
          %v8074 = vadd.f32 %v7577, %v8044
          %v8075 = vadd.f32 %v7578, %v8049
          %v8076 = vadd.f32 %v7579, %v8054
          %v8077 = vadd.f32 %v7580, %v8059
          %8078 = vrot.lane.b32.xlu0 %v4678, 7
          %v8079 = vpop.permute.xlu0 %8078
          %8080 = vrot.lane.b32.xlu0 %v4679, 7
          %v8081 = vpop.permute.xlu0 %8080
          %8082 = vrot.lane.b32.xlu0 %v4680, 7
          %v8083 = vpop.permute.xlu0 %8082
          %8084 = vrot.lane.b32.xlu0 %v4681, 7
          %v8085 = vpop.permute.xlu0 %8084
          %8086 = vrot.lane.b32.xlu0 %v4682, 7
          %v8087 = vpop.permute.xlu0 %8086
          %8088 = vrot.lane.b32.xlu0 %v4683, 7
          %v8089 = vpop.permute.xlu0 %8088
          %8090 = vrot.lane.b32.xlu0 %v4684, 7
          %v8091 = vpop.permute.xlu0 %8090
          %8092 = vrot.lane.b32.xlu0 %v4685, 7
          %v8093 = vpop.permute.xlu0 %8092
          %8094 = vrot.lane.b32.xlu0 %v4686, 7
          %v8095 = vpop.permute.xlu0 %8094
          %8096 = vrot.lane.b32.xlu0 %v4687, 7
          %v8097 = vpop.permute.xlu0 %8096
          %8098 = vrot.lane.b32.xlu0 %v4688, 7
          %v8099 = vpop.permute.xlu0 %8098
          %8100 = vrot.lane.b32.xlu0 %v4689, 7
          %v8101 = vpop.permute.xlu0 %8100
          %8102 = vrot.lane.b32.xlu0 %v4690, 7
          %v8103 = vpop.permute.xlu0 %8102
          %8104 = vrot.lane.b32.xlu0 %v4691, 7
          %v8105 = vpop.permute.xlu0 %8104
          %8106 = vrot.lane.b32.xlu0 %v4692, 7
          %v8107 = vpop.permute.xlu0 %8106
          %8108 = vrot.lane.b32.xlu0 %v4693, 7
          %v8109 = vpop.permute.xlu0 %8108
          %v8126 = vadd.f32 %v4574, %v8079
          %v8127 = vadd.f32 %v4575, %v8081
          %v8128 = vadd.f32 %v4576, %v8083
          %v8129 = vadd.f32 %v4577, %v8085
          %v8130 = vadd.f32 %v4578, %v8087
          %v8131 = vadd.f32 %v4579, %v8089
          %v8132 = vadd.f32 %v4580, %v8091
          %v8133 = vadd.f32 %v4581, %v8093
          %v8134 = vadd.f32 %v4582, %v8095
          %v8135 = vadd.f32 %v4583, %v8097
          %v8136 = vadd.f32 %v4584, %v8099
          %v8137 = vadd.f32 %v4585, %v8101
          %v8138 = vadd.f32 %v4586, %v8103
          %v8139 = vadd.f32 %v4587, %v8105
          %v8140 = vadd.f32 %v4588, %v8107
          %v8141 = vadd.f32 %v4589, %v8109
          %8142 = vrot.lane.b32.xlu0 %v4526, 71
          %v8143 = vpop.permute.xlu0 %8142
          %8144 = vrot.lane.b32.xlu0 %v4527, 71
          %v8145 = vpop.permute.xlu0 %8144
          %8146 = vrot.lane.b32.xlu0 %v4528, 71
          %v8147 = vpop.permute.xlu0 %8146
          %8148 = vrot.lane.b32.xlu0 %v4529, 71
          %v8149 = vpop.permute.xlu0 %8148
          %8150 = vrot.lane.b32.xlu0 %v4530, 71
          %v8151 = vpop.permute.xlu0 %8150
          %8152 = vrot.lane.b32.xlu0 %v4531, 71
          %v8153 = vpop.permute.xlu0 %8152
          %8154 = vrot.lane.b32.xlu0 %v4532, 71
          %v8155 = vpop.permute.xlu0 %8154
          %8156 = vrot.lane.b32.xlu0 %v4533, 71
          %v8157 = vpop.permute.xlu0 %8156
          %8158 = vrot.lane.b32.xlu0 %v4534, 71
          %v8159 = vpop.permute.xlu0 %8158
          %8160 = vrot.lane.b32.xlu0 %v4535, 71
          %v8161 = vpop.permute.xlu0 %8160
          %8162 = vrot.lane.b32.xlu0 %v4536, 71
          %v8163 = vpop.permute.xlu0 %8162
          %8164 = vrot.lane.b32.xlu0 %v4537, 71
          %v8165 = vpop.permute.xlu0 %8164
          %8166 = vrot.lane.b32.xlu0 %v4538, 71
          %v8167 = vpop.permute.xlu0 %8166
          %8168 = vrot.lane.b32.xlu0 %v4539, 71
          %v8169 = vpop.permute.xlu0 %8168
          %8170 = vrot.lane.b32.xlu0 %v4540, 71
          %v8171 = vpop.permute.xlu0 %8170
          %8172 = vrot.lane.b32.xlu0 %v4541, 71
          %v8173 = vpop.permute.xlu0 %8172
          %v8190 = vadd.f32 %v4574, %v8143
          %v8191 = vadd.f32 %v4575, %v8145
          %v8192 = vadd.f32 %v4576, %v8147
          %v8193 = vadd.f32 %v4577, %v8149
          %v8194 = vadd.f32 %v4578, %v8151
          %v8195 = vadd.f32 %v4579, %v8153
          %v8196 = vadd.f32 %v4580, %v8155
          %v8197 = vadd.f32 %v4581, %v8157
          %v8198 = vadd.f32 %v4582, %v8159
          %v8199 = vadd.f32 %v4583, %v8161
          %v8200 = vadd.f32 %v4584, %v8163
          %v8201 = vadd.f32 %v4585, %v8165
          %v8202 = vadd.f32 %v4586, %v8167
          %v8203 = vadd.f32 %v4587, %v8169
          %v8204 = vadd.f32 %v4588, %v8171
          %v8205 = vadd.f32 %v4589, %v8173
          %v8206 = vadd.f32 %v8190, 1e-06
          %v8207 = vadd.f32 %v8191, 1e-06
          %v8208 = vadd.f32 %v8192, 1e-06
          %v8209 = vadd.f32 %v8193, 1e-06
          %v8210 = vadd.f32 %v8194, 1e-06
          %v8211 = vadd.f32 %v8195, 1e-06
          %v8212 = vadd.f32 %v8196, 1e-06
          %v8213 = vadd.f32 %v8197, 1e-06
          %v8214 = vadd.f32 %v8198, 1e-06
          %v8215 = vadd.f32 %v8199, 1e-06
          %v8216 = vadd.f32 %v8200, 1e-06
          %v8217 = vadd.f32 %v8201, 1e-06
          %v8218 = vadd.f32 %v8202, 1e-06
          %v8219 = vadd.f32 %v8203, 1e-06
          %v8220 = vadd.f32 %v8204, 1e-06
          %v8221 = vadd.f32 %v8205, 1e-06
          %v8222 = vrcp.pop %v8206
          %v8223 = vrcp.pop %v8207
          %v8224 = vrcp.pop %v8208
          %v8225 = vrcp.pop %v8209
          %v8226 = vrcp.pop %v8210
          %v8227 = vrcp.pop %v8211
          %v8228 = vrcp.pop %v8212
          %v8229 = vrcp.pop %v8213
          %v8230 = vrcp.pop %v8214
          %v8231 = vrcp.pop %v8215
          %v8232 = vrcp.pop %v8216
          %v8233 = vrcp.pop %v8217
          %v8234 = vrcp.pop %v8218
          %v8235 = vrcp.pop %v8219
          %v8236 = vrcp.pop %v8220
          %v8237 = vrcp.pop %v8221
          %8239 = vset.pattern.permute.xlu0 71
          %8240 = vperm.xlu0 %8239, %v8222
          %v8241 = vpop.permute.xlu0 %8240
          %8244 = vset.pattern.permute.xlu0 71
          %8245 = vperm.xlu0 %8244, %v8223
          %v8246 = vpop.permute.xlu0 %8245
          %8249 = vset.pattern.permute.xlu0 71
          %8250 = vperm.xlu0 %8249, %v8224
          %v8251 = vpop.permute.xlu0 %8250
          %8254 = vset.pattern.permute.xlu0 71
          %8255 = vperm.xlu0 %8254, %v8225
          %v8256 = vpop.permute.xlu0 %8255
          %8259 = vset.pattern.permute.xlu0 71
          %8260 = vperm.xlu0 %8259, %v8226
          %v8261 = vpop.permute.xlu0 %8260
          %8264 = vset.pattern.permute.xlu0 71
          %8265 = vperm.xlu0 %8264, %v8227
          %v8266 = vpop.permute.xlu0 %8265
          %8269 = vset.pattern.permute.xlu0 71
          %8270 = vperm.xlu0 %8269, %v8228
          %v8271 = vpop.permute.xlu0 %8270
          %8274 = vset.pattern.permute.xlu0 71
          %8275 = vperm.xlu0 %8274, %v8229
          %v8276 = vpop.permute.xlu0 %8275
          %8279 = vset.pattern.permute.xlu0 71
          %8280 = vperm.xlu0 %8279, %v8230
          %v8281 = vpop.permute.xlu0 %8280
          %8284 = vset.pattern.permute.xlu0 71
          %8285 = vperm.xlu0 %8284, %v8231
          %v8286 = vpop.permute.xlu0 %8285
          %8289 = vset.pattern.permute.xlu0 71
          %8290 = vperm.xlu0 %8289, %v8232
          %v8291 = vpop.permute.xlu0 %8290
          %8294 = vset.pattern.permute.xlu0 71
          %8295 = vperm.xlu0 %8294, %v8233
          %v8296 = vpop.permute.xlu0 %8295
          %8299 = vset.pattern.permute.xlu0 71
          %8300 = vperm.xlu0 %8299, %v8234
          %v8301 = vpop.permute.xlu0 %8300
          %8304 = vset.pattern.permute.xlu0 71
          %8305 = vperm.xlu0 %8304, %v8235
          %v8306 = vpop.permute.xlu0 %8305
          %8309 = vset.pattern.permute.xlu0 71
          %8310 = vperm.xlu0 %8309, %v8236
          %v8311 = vpop.permute.xlu0 %8310
          %8314 = vset.pattern.permute.xlu0 71
          %8315 = vperm.xlu0 %8314, %v8237
          %v8316 = vpop.permute.xlu0 %8315
          %v8318 = vmul.f32 %v8126, %v8241
          %v8319 = vmul.f32 %v8127, %v8246
          %v8320 = vmul.f32 %v8128, %v8251
          %v8321 = vmul.f32 %v8129, %v8256
          %v8322 = vmul.f32 %v8130, %v8261
          %v8323 = vmul.f32 %v8131, %v8266
          %v8324 = vmul.f32 %v8132, %v8271
          %v8325 = vmul.f32 %v8133, %v8276
          %v8326 = vmul.f32 %v8134, %v8281
          %v8327 = vmul.f32 %v8135, %v8286
          %v8328 = vmul.f32 %v8136, %v8291
          %v8329 = vmul.f32 %v8137, %v8296
          %v8330 = vmul.f32 %v8138, %v8301
          %v8331 = vmul.f32 %v8139, %v8306
          %v8332 = vmul.f32 %v8140, %v8311
          %v8333 = vmul.f32 %v8141, %v8316
          %8350 = vrot.lane.b32.xlu0 %v8318, 65
          %v8351 = vpop.permute.xlu0 %8350
          %8352 = vrot.lane.b32.xlu0 %v8319, 65
          %v8353 = vpop.permute.xlu0 %8352
          %8354 = vrot.lane.b32.xlu0 %v8320, 65
          %v8355 = vpop.permute.xlu0 %8354
          %8356 = vrot.lane.b32.xlu0 %v8321, 65
          %v8357 = vpop.permute.xlu0 %8356
          %8358 = vrot.lane.b32.xlu0 %v8322, 65
          %v8359 = vpop.permute.xlu0 %8358
          %8360 = vrot.lane.b32.xlu0 %v8323, 65
          %v8361 = vpop.permute.xlu0 %8360
          %8362 = vrot.lane.b32.xlu0 %v8324, 65
          %v8363 = vpop.permute.xlu0 %8362
          %8364 = vrot.lane.b32.xlu0 %v8325, 65
          %v8365 = vpop.permute.xlu0 %8364
          %8366 = vrot.lane.b32.xlu0 %v8326, 65
          %v8367 = vpop.permute.xlu0 %8366
          %8368 = vrot.lane.b32.xlu0 %v8327, 65
          %v8369 = vpop.permute.xlu0 %8368
          %8370 = vrot.lane.b32.xlu0 %v8328, 65
          %v8371 = vpop.permute.xlu0 %8370
          %8372 = vrot.lane.b32.xlu0 %v8329, 65
          %v8373 = vpop.permute.xlu0 %8372
          %8374 = vrot.lane.b32.xlu0 %v8330, 65
          %v8375 = vpop.permute.xlu0 %8374
          %8376 = vrot.lane.b32.xlu0 %v8331, 65
          %v8377 = vpop.permute.xlu0 %8376
          %8378 = vrot.lane.b32.xlu0 %v8332, 65
          %v8379 = vpop.permute.xlu0 %8378
          %8380 = vrot.lane.b32.xlu0 %v8333, 65
          %v8381 = vpop.permute.xlu0 %8380
          %v8382 = vsel %vm5222, %v8351, 0
          %v8384 = vsel %vm5222, %v8353, 0
          %v8386 = vsel %vm5222, %v8355, 0
          %v8388 = vsel %vm5222, %v8357, 0
          %v8390 = vsel %vm5222, %v8359, 0
          %v8392 = vsel %vm5222, %v8361, 0
          %v8394 = vsel %vm5222, %v8363, 0
          %v8396 = vsel %vm5222, %v8365, 0
          %v8398 = vsel %vm5222, %v8367, 0
          %v8400 = vsel %vm5222, %v8369, 0
          %v8402 = vsel %vm5222, %v8371, 0
          %v8404 = vsel %vm5222, %v8373, 0
          %v8406 = vsel %vm5222, %v8375, 0
          %v8408 = vsel %vm5222, %v8377, 0
          %v8410 = vsel %vm5222, %v8379, 0
          %v8412 = vsel %vm5222, %v8381, 0
          %8414 = vmatprep.subr.mxu0 0.0
          %8415 = vmatpush1.msra.mxu0 %v4597
          %8416 = vmatprep.subr.mxu0 0.0
          %8417 = vmatpush1.msra.mxu0 0.0
          %8418 = vmatprep.subr.mxu0 0.0
          %8419 = vmatpush1.msra.mxu0 0.0
          %8420 = vmatprep.subr.mxu0 0.0
          %8421 = vmatpush1.msra.mxu0 0.0
          %8422 = vmatprep.subr.mxu0 0.0
          %8423 = vmatpush1.msra.mxu0 0.0
          %8424 = vmatprep.subr.mxu0 0.0
          %8425 = vmatpush1.msra.mxu0 0.0
          %8426 = vmatprep.subr.mxu0 0.0
          %8427 = vmatpush1.msra.mxu0 0.0
          %8428 = vmatprep.subr.mxu0 0.0
          %8429 = vmatpush1.msra.mxu0 0.0
          %8430 = vmatprep.subr.mxu0 0.0
          %8431 = vmatpush1.msra.mxu0 0.0
          %8432 = vmatprep.subr.mxu0 0.0
          %8433 = vmatpush1.msra.mxu0 0.0
          %8434 = vmatprep.subr.mxu0 0.0
          %8435 = vmatpush1.msra.mxu0 0.0
          %8436 = vmatprep.subr.mxu0 0.0
          %8437 = vmatpush1.msra.mxu0 0.0
          %8438 = vmatprep.subr.mxu0 0.0
          %8439 = vmatpush1.msra.mxu0 0.0
          %8440 = vmatprep.subr.mxu0 0.0
          %8441 = vmatpush1.msra.mxu0 0.0
          %8442 = vmatprep.subr.mxu0 0.0
          %8443 = vmatpush1.msra.mxu0 0.0
          %8444 = vmatprep.subr.mxu0 0.0
          %8445 = vmatpush1.msra.mxu0 0.0
          %8446 = vmatprep.subr.mxu0 0.0
          %8447 = vmatpush1.msra.mxu0 0.0
          %8448 = vmatprep.subr.mxu0 0.0
          %8449 = vmatpush1.msra.mxu0 0.0
          %8450 = vmatprep.subr.mxu0 0.0
          %8451 = vmatpush1.msra.mxu0 0.0
          %8452 = vmatprep.subr.mxu0 0.0
          %8453 = vmatpush1.msra.mxu0 0.0
          %8454 = vmatprep.subr.mxu0 0.0
          %8455 = vmatpush1.msra.mxu0 0.0
          %8456 = vmatprep.subr.mxu0 0.0
          %8457 = vmatpush1.msra.mxu0 0.0
          %8458 = vmatprep.subr.mxu0 0.0
          %8459 = vmatpush1.msra.mxu0 0.0
          %8460 = vmatprep.subr.mxu0 0.0
          %8461 = vmatpush1.msra.mxu0 0.0
          %8462 = vmatprep.subr.mxu0 0.0
          %8463 = vmatpush1.msra.mxu0 0.0
          %8464 = vmatprep.subr.mxu0 0.0
          %8465 = vmatpush1.msra.mxu0 0.0
          %8466 = vmatprep.subr.mxu0 0.0
          %8467 = vmatpush1.msra.mxu0 0.0
          %8468 = vmatprep.subr.mxu0 0.0
          %8469 = vmatpush1.msra.mxu0 0.0
          %8470 = vmatprep.subr.mxu0 0.0
          %8471 = vmatpush1.msra.mxu0 0.0
          %8472 = vmatprep.subr.mxu0 0.0
          %8473 = vmatpush1.msra.mxu0 0.0
          %8474 = vmatprep.subr.mxu0 0.0
          %8475 = vmatpush1.msra.mxu0 0.0
          %8476 = vmatprep.subr.mxu0 0.0
          %8477 = vmatpush1.msra.mxu0 0.0
          %8478 = vmatprep.mubr.f32.mxu0 0.0
          %8479 = vmatmul.mubr.f32.gmra.mrb[0].mxu0 %v8382
          %v8480 = vpop.f32.mrb[0].mxu0
          %v8481 = vadd.f32 0.0, %v8480
          %v8482 = vpop.f32.mrb[0].mxu0
          %8483 = vmatprep.mubr.f32.mxu0 0.0
          %8484 = vmatmul.mubr.f32.gmra.mrb[0].mxu0 %v8384
          %v8485 = vpop.f32.mrb[0].mxu0
          %v8486 = vadd.f32 0.0, %v8485
          %v8487 = vpop.f32.mrb[0].mxu0
          %8488 = vmatprep.mubr.f32.mxu0 0.0
          %8489 = vmatmul.mubr.f32.gmra.mrb[0].mxu0 %v8386
          %v8490 = vpop.f32.mrb[0].mxu0
          %v8491 = vadd.f32 0.0, %v8490
          %v8492 = vpop.f32.mrb[0].mxu0
          %8493 = vmatprep.mubr.f32.mxu0 0.0
          %8494 = vmatmul.mubr.f32.gmra.mrb[0].mxu0 %v8388
          %v8495 = vpop.f32.mrb[0].mxu0
          %v8496 = vadd.f32 0.0, %v8495
          %v8497 = vpop.f32.mrb[0].mxu0
          %8498 = vmatprep.mubr.f32.mxu0 0.0
          %8499 = vmatmul.mubr.f32.gmra.mrb[0].mxu0 %v8390
          %v8500 = vpop.f32.mrb[0].mxu0
          %v8501 = vadd.f32 0.0, %v8500
          %v8502 = vpop.f32.mrb[0].mxu0
          %8503 = vmatprep.mubr.f32.mxu0 0.0
          %8504 = vmatmul.mubr.f32.gmra.mrb[0].mxu0 %v8392
          %v8505 = vpop.f32.mrb[0].mxu0
          %v8506 = vadd.f32 0.0, %v8505
          %v8507 = vpop.f32.mrb[0].mxu0
          %8508 = vmatprep.mubr.f32.mxu0 0.0
          %8509 = vmatmul.mubr.f32.gmra.mrb[0].mxu0 %v8394
          %v8510 = vpop.f32.mrb[0].mxu0
          %v8511 = vadd.f32 0.0, %v8510
          %v8512 = vpop.f32.mrb[0].mxu0
          %8513 = vmatprep.mubr.f32.mxu0 0.0
          %8514 = vmatmul.mubr.f32.gmra.mrb[0].mxu0 %v8396
          %v8515 = vpop.f32.mrb[0].mxu0
          %v8516 = vadd.f32 0.0, %v8515
          %v8517 = vpop.f32.mrb[0].mxu0
          %8518 = vmatprep.mubr.f32.mxu0 0.0
          %8519 = vmatmul.mubr.f32.gmra.mrb[0].mxu0 %v8398
          %v8520 = vpop.f32.mrb[0].mxu0
          %v8521 = vadd.f32 0.0, %v8520
          %v8522 = vpop.f32.mrb[0].mxu0
          %8523 = vmatprep.mubr.f32.mxu0 0.0
          %8524 = vmatmul.mubr.f32.gmra.mrb[0].mxu0 %v8400
          %v8525 = vpop.f32.mrb[0].mxu0
          %v8526 = vadd.f32 0.0, %v8525
          %v8527 = vpop.f32.mrb[0].mxu0
          %8528 = vmatprep.mubr.f32.mxu0 0.0
          %8529 = vmatmul.mubr.f32.gmra.mrb[0].mxu0 %v8402
          %v8530 = vpop.f32.mrb[0].mxu0
          %v8531 = vadd.f32 0.0, %v8530
          %v8532 = vpop.f32.mrb[0].mxu0
          %8533 = vmatprep.mubr.f32.mxu0 0.0
          %8534 = vmatmul.mubr.f32.gmra.mrb[0].mxu0 %v8404
          %v8535 = vpop.f32.mrb[0].mxu0
          %v8536 = vadd.f32 0.0, %v8535
          %v8537 = vpop.f32.mrb[0].mxu0
          %8538 = vmatprep.mubr.f32.mxu0 0.0
          %8539 = vmatmul.mubr.f32.gmra.mrb[0].mxu0 %v8406
          %v8540 = vpop.f32.mrb[0].mxu0
          %v8541 = vadd.f32 0.0, %v8540
          %v8542 = vpop.f32.mrb[0].mxu0
          %8543 = vmatprep.mubr.f32.mxu0 0.0
          %8544 = vmatmul.mubr.f32.gmra.mrb[0].mxu0 %v8408
          %v8545 = vpop.f32.mrb[0].mxu0
          %v8546 = vadd.f32 0.0, %v8545
          %v8547 = vpop.f32.mrb[0].mxu0
          %8548 = vmatprep.mubr.f32.mxu0 0.0
          %8549 = vmatmul.mubr.f32.gmra.mrb[0].mxu0 %v8410
          %v8550 = vpop.f32.mrb[0].mxu0
          %v8551 = vadd.f32 0.0, %v8550
          %v8552 = vpop.f32.mrb[0].mxu0
          %8553 = vmatprep.mubr.f32.mxu0 0.0
          %8554 = vmatmul.mubr.f32.gmra.mrb[0].mxu0 %v8412
          %v8555 = vpop.f32.mrb[0].mxu0
          %v8556 = vadd.f32 0.0, %v8555
          %v8557 = vpop.f32.mrb[0].mxu0
          %8558 = vdwg.mxu0
          %v8559 = vadd.f32 %v8062, %v8481
          %v8560 = vadd.f32 %v8063, %v8486
          %v8561 = vadd.f32 %v8064, %v8491
          %v8562 = vadd.f32 %v8065, %v8496
          %v8563 = vadd.f32 %v8066, %v8501
          %v8564 = vadd.f32 %v8067, %v8506
          %v8565 = vadd.f32 %v8068, %v8511
          %v8566 = vadd.f32 %v8069, %v8516
          %v8567 = vadd.f32 %v8070, %v8521
          %v8568 = vadd.f32 %v8071, %v8526
          %v8569 = vadd.f32 %v8072, %v8531
          %v8570 = vadd.f32 %v8073, %v8536
          %v8571 = vadd.f32 %v8074, %v8541
          %v8572 = vadd.f32 %v8075, %v8546
          %v8573 = vadd.f32 %v8076, %v8551
          %v8574 = vadd.f32 %v8077, %v8556
          %v8575 = vld [vmem:[%s529] sm:$0xff]
          %v8576 = vld [vmem:[%s529 + $0x8] sm:$0xff]
          %v8577 = vld [vmem:[%s529 + $0x10] sm:$0xff]
          %v8578 = vld [vmem:[%s529 + $0x18] sm:$0xff]
          %v8579 = vld [vmem:[%s529 + $0x20] sm:$0xff]
          %v8580 = vld [vmem:[%s529 + $0x28] sm:$0xff]
          %v8581 = vld [vmem:[%s529 + $0x30] sm:$0xff]
          %v8582 = vld [vmem:[%s529 + $0x38] sm:$0xff]
          %v8583 = vld [vmem:[%s529 + $0x40] sm:$0xff]
          %v8584 = vld [vmem:[%s529 + $0x48] sm:$0xff]
          %v8585 = vld [vmem:[%s529 + $0x50] sm:$0xff]
          %v8586 = vld [vmem:[%s529 + $0x58] sm:$0xff]
          %v8587 = vld [vmem:[%s529 + $0x60] sm:$0xff]
          %v8588 = vld [vmem:[%s529 + $0x68] sm:$0xff]
          %v8589 = vld [vmem:[%s529 + $0x70] sm:$0xff]
          %v8590 = vld [vmem:[%s529 + $0x78] sm:$0xff]
          %v8591 = vadd.f32 %v8575, %v8559
          %v8592 = vadd.f32 %v8576, %v8560
          %v8593 = vadd.f32 %v8577, %v8561
          %v8594 = vadd.f32 %v8578, %v8562
          %v8595 = vadd.f32 %v8579, %v8563
          %v8596 = vadd.f32 %v8580, %v8564
          %v8597 = vadd.f32 %v8581, %v8565
          %v8598 = vadd.f32 %v8582, %v8566
          %v8599 = vadd.f32 %v8583, %v8567
          %v8600 = vadd.f32 %v8584, %v8568
          %v8601 = vadd.f32 %v8585, %v8569
          %v8602 = vadd.f32 %v8586, %v8570
          %v8603 = vadd.f32 %v8587, %v8571
          %v8604 = vadd.f32 %v8588, %v8572
          %v8605 = vadd.f32 %v8589, %v8573
          %v8606 = vadd.f32 %v8590, %v8574
          %v8607 = vld [vmem:[%s9] sm:$0x1]
          %v8609 = vlaneseq
          %v8610 = vshrl.u32 %v8609, 7
          %v8611 = vsub.s32 0, %v8610
          %v8612 = vrot.slane %v8607, %v8611
          %v8614 = vadd.f32 %v8591, %v8612
          %v8615 = vadd.f32 %v8592, %v8612
          %v8616 = vadd.f32 %v8593, %v8612
          %v8617 = vadd.f32 %v8594, %v8612
          %v8618 = vadd.f32 %v8595, %v8612
          %v8619 = vadd.f32 %v8596, %v8612
          %v8620 = vadd.f32 %v8597, %v8612
          %v8621 = vadd.f32 %v8598, %v8612
          %v8622 = vadd.f32 %v8599, %v8612
          %v8623 = vadd.f32 %v8600, %v8612
          %v8624 = vadd.f32 %v8601, %v8612
          %v8625 = vadd.f32 %v8602, %v8612
          %v8626 = vadd.f32 %v8603, %v8612
          %v8627 = vadd.f32 %v8604, %v8612
          %v8628 = vadd.f32 %v8605, %v8612
          %v8629 = vadd.f32 %v8606, %v8612
          %vm8630 = vcmask 523264
          %8631 = vst.msk [vmem:[%s535] sm:$0xff] %vm8630, %v8614
          %8632 = vst.msk [vmem:[%s535 + $0x8] sm:$0xff] %vm8630, %v8615
          %8633 = vst.msk [vmem:[%s535 + $0x10] sm:$0xff] %vm8630, %v8616
          %8634 = vst.msk [vmem:[%s535 + $0x18] sm:$0xff] %vm8630, %v8617
          %8635 = vst.msk [vmem:[%s535 + $0x20] sm:$0xff] %vm8630, %v8618
          %8636 = vst.msk [vmem:[%s535 + $0x28] sm:$0xff] %vm8630, %v8619
          %8637 = vst.msk [vmem:[%s535 + $0x30] sm:$0xff] %vm8630, %v8620
          %8638 = vst.msk [vmem:[%s535 + $0x38] sm:$0xff] %vm8630, %v8621
          %8639 = vst.msk [vmem:[%s535 + $0x40] sm:$0xff] %vm8630, %v8622
          %8640 = vst.msk [vmem:[%s535 + $0x48] sm:$0xff] %vm8630, %v8623
          %8641 = vst.msk [vmem:[%s535 + $0x50] sm:$0xff] %vm8630, %v8624
          %8642 = vst.msk [vmem:[%s535 + $0x58] sm:$0xff] %vm8630, %v8625
          %8643 = vst.msk [vmem:[%s535 + $0x60] sm:$0xff] %vm8630, %v8626
          %8644 = vst.msk [vmem:[%s535 + $0x68] sm:$0xff] %vm8630, %v8627
          %8645 = vst.msk [vmem:[%s535 + $0x70] sm:$0xff] %vm8630, %v8628
          %8646 = vst.msk [vmem:[%s535 + $0x78] sm:$0xff] %vm8630, %v8629
        $region106: #{graph_transformer_layer.5} parent=89 // pred_fallthru
          _
        %s8647 = smul.u32 16, %s31
        %p8648 = scmp.lt.s32.totalorder %s8647, 31
        %s8649 = scalar_select %p8648, %s8647, 31
        %s8650 = smul.addr %s8649, 8
        %s8651 = scalar_lea.vmem %s10, %s8650
        // Predicated region
        $region107: #{graph_transformer_layer.5} parent=89 // pred_check
          %p8652 = pneg %p283
        $region108: #{graph_transformer_layer.5} parent=89 // pred_check_branch
          %8654 = sbr.rel (%p8652) target = $region110
        $region109: #{graph_transformer_layer.5} parent=89 // pred_region
          %s8655 = smul.u32 16, %s31
        $region110: #{graph_transformer_layer.5} parent=89 // pred_fallthru
          _
      $region90: #{graph_transformer_layer.5} parent=5 // pred_fallthru
        _
      %p8656 = scmp.le.s32.totalorder 2, %s22
      // Predicated region
      $region111: #{graph_transformer_layer.5} parent=5 // pred_check
        %p8657 = pneg %p8656
      $region112: #{graph_transformer_layer.5} parent=5 // pred_check_branch
        %8659 = sbr.rel (%p8657) target = $region114
      $region113: #{graph_transformer_layer.5} parent=5 // pred_region
        %s8660 = ssub.s32 %s22, 2
        // Predicated region
        $region115: #{graph_transformer_layer.5} parent=113 // pred_check
          %p8661 = pneg %p289
        $region116: #{graph_transformer_layer.5} parent=113 // pred_check_branch
          %8663 = sbr.rel (%p8661) target = $region118
        $region117: #{graph_transformer_layer.5} parent=113 // pred_region
          %s8664 = smul.u32 16, %s33
          %p8665 = scmp.lt.s32.totalorder %s8664, 31
          %s8666 = scalar_select %p8665, %s8664, 31
          %s8667 = smul.addr %s8666, 8
          %s8668 = scalar_lea.vmem %s10, %s8667
        $region118: #{graph_transformer_layer.5} parent=113 // pred_fallthru
          _
      $region114: #{graph_transformer_layer.5} parent=5 // pred_fallthru
        _
    $region6: #{graph_transformer_layer.5} parent=1 // loop_footer
      %s26 = sadd.s32 1, %s22
    $region7: #{graph_transformer_layer.5} parent=1 // loop_footer_branch
      %21 = sbr.rel target = $region3
    $region8: #{graph_transformer_layer.5} parent=1 // loop_exit
      _

</llo_original>
